<compile_context>
chip_gen: v7x
topology: tpu7x:2x2x1
jax: 0.10.0
libtpu: 0.0.40
codegen_flags: <defaults>
</compile_context>

<pallas_src>
import functools

import jax
import jax.numpy as jnp
from jax.experimental import pallas as pl
from jax.experimental.pallas import tpu as pltpu

_VMEM = pl.BlockSpec(memory_space=pltpu.MemorySpace.VMEM)
_HI = jax.lax.Precision.HIGHEST

# synthetic-mini backbone channel widths
_C1, _C2, _C3 = 8, 16, 32

# Lane padding of every activation slab: a multiple of the 128-lane tile (so
# all interior stores are lane-aligned) and >= W+1 (so every 3x3 tap window is
# a plain, in-bounds static slice -- no roll / wraparound handling needed).
_LANE_PAD = 128


# ----------------------- init-time parameter transforms -------------------- #

def _conv_w_to_taps(w):
    """(3,3,cin,cout) -> (9*cout, cin): rows grouped by tap, block t = W[kh,kw]^T."""
    cout, cin = w.shape[3], w.shape[2]
    return jnp.transpose(w, (0, 1, 3, 2)).reshape(9 * cout, cin)


def _conv_border_masks(n, h, w):
    """(9, n*h*w) {0,1} masks: tap (dh,dw) is valid iff its source pixel lies
    inside the same image (emulates 'same' zero padding without materialising
    it, and kills cross-row / cross-image leakage of the flat lane layout)."""
    idx = jnp.arange(n * h * w)
    i = (idx % (h * w)) // w
    j = idx % w
    rows = []
    for dh in (-1, 0, 1):
        for dw in (-1, 0, 1):
            ok = (i + dh >= 0) & (i + dh < h) & (j + dw >= 0) & (j + dw < w)
            rows.append(ok.astype(jnp.float32))
    return jnp.stack(rows)


def _pool_select(n, h, w):
    """(n*h*w, n*(h/2)*(w/2)) 0/1 matrix selecting each 2x2 block's top-left."""
    ho, wo = h // 2, w // 2
    q = jnp.arange(n * ho * wo)
    src = (q // (ho * wo)) * h * w + 2 * ((q % (ho * wo)) // wo) * w + 2 * (q % wo)
    return (jnp.arange(n * h * w)[:, None] == src[None, :]).astype(jnp.float32)


def _upsample_select(n, hs, ws):
    """(n*hs*ws, n*2hs*2ws) 0/1 matrix for nearest-neighbour 2x upsampling."""
    hb, wb = 2 * hs, 2 * ws
    p = jnp.arange(n * hb * wb)
    src = (p // (hb * wb)) * hs * ws + ((p % (hb * wb)) // wb // 2) * ws + (p % wb) // 2
    return (jnp.arange(n * hs * ws)[:, None] == src[None, :]).astype(jnp.float32)


def _init_conv(key, kh, kw, cin, cout):
    kw_, kb_ = jax.random.split(key)
    fan_in = kh * kw * cin
    wgt = jax.random.normal(kw_, (kh, kw, cin, cout), jnp.float32) * (2.0 / fan_in) ** 0.5
    b = jax.random.normal(kb_, (cout,), jnp.float32) * 0.01
    return wgt, b


def init_unet_params(cfg, seed=0):
    """Original-layout parameters (also consumed by the pure-JAX reference)."""
    ks = jax.random.split(jax.random.PRNGKey(seed), 6)
    nc = cfg["num_classes"]
    p = {
        "enc1": _init_conv(ks[0], 3, 3, cfg["in_channels"], _C1),
        "enc2": _init_conv(ks[1], 3, 3, _C1, _C2),
        "bott": _init_conv(ks[2], 3, 3, _C2, _C3),
        "dec2": _init_conv(ks[3], 3, 3, _C3 + _C2, _C2),
        "dec1": _init_conv(ks[4], 3, 3, _C2 + _C1, _C1),
    }
    wh, bh = _init_conv(ks[5], 1, 1, _C1, nc)
    p["head"] = (wh.reshape(_C1, nc), bh)
    return p


def prepare_kernel_params(params, *, n, h, w):
    """One-time weight re-layout + precomputed masks / selection matrices
    (hoisted out of the per-call hot path)."""
    w_e1, b_e1 = params["enc1"]
    w_e2, b_e2 = params["enc2"]
    w_bt, b_bt = params["bott"]
    w_d2, b_d2 = params["dec2"]
    w_d1, b_d1 = params["dec1"]
    w_hd, b_hd = params["head"]            # (C1, num_classes), (num_classes,)
    return {
        "w_e1": _conv_w_to_taps(w_e1), "b_e1": b_e1.reshape(-1, 1),
        "w_e2": _conv_w_to_taps(w_e2), "b_e2": b_e2.reshape(-1, 1),
        "w_bt": _conv_w_to_taps(w_bt), "b_bt": b_bt.reshape(-1, 1),
        # decoder convs consume concat([upsampled, skip]); split the weight so
        # the concat never has to be materialised inside the kernel.
        "w_d2a": _conv_w_to_taps(w_d2[:, :, :_C3, :]),
        "w_d2b": _conv_w_to_taps(w_d2[:, :, _C3:, :]),
        "b_d2": b_d2.reshape(-1, 1),
        "w_d1a": _conv_w_to_taps(w_d1[:, :, :_C2, :]),
        "w_d1b": _conv_w_to_taps(w_d1[:, :, _C2:, :]),
        "b_d1": b_d1.reshape(-1, 1),
        "w_hd": w_hd.T,                    # (num_classes, C1)
        "b_hd": b_hd.reshape(-1, 1),
        "m0": _conv_border_masks(n, h, w),
        "m1": _conv_border_masks(n, h // 2, w // 2),
        "m2": _conv_border_masks(n, h // 4, w // 4),
        "pool0": _pool_select(n, h, w),
        "pool1": _pool_select(n, h // 2, w // 2),
        "up1": _upsample_select(n, h // 4, w // 4),
        "up0": _upsample_select(n, h // 2, w // 2),
    }


# ----------------------------- fused Pallas kernel ------------------------- #

def unet_pallas_forward(kp, x_nchw, *, num_classes):
    """Single fused Pallas kernel for the whole U-Net forward (NCHW in/out)."""
    n, cin, h, w = x_nchw.shape
    assert h % 4 == 0 and w % 4 == 0 and w + 1 <= _LANE_PAD
    f32 = jnp.float32
    pad = _LANE_PAD
    w0, w1, w2 = w, w // 2, w // 4
    r0, r1, r2 = n * h * w, n * (h // 2) * w1, n * (h // 4) * w2
    c1, c2, c3 = _C1, _C2, _C3

    def kernel(x0_ref,
               w_e1_ref, b_e1_ref, w_e2_ref, b_e2_ref, w_bt_ref, b_bt_ref,
               w_d2a_ref, w_d2b_ref, b_d2_ref,
               w_d1a_ref, w_d1b_ref, b_d1_ref,
               w_hd_ref, b_hd_ref,
               m0_ref, m1_ref, m2_ref,
               pool0_ref, pool1_ref, up1_ref, up0_ref,
               o_ref,
               e1_slab, p1_slab, e2_slab, p2_slab, u2_slab, u1_slab):

        def conv3x3(slab_ref, w_ref, mask_ref, wl, r, cout):
            # 9 shifted-window dot-accumulates on a lane-padded slab: no im2col
            # materialisation; the (cout, r) accumulator keeps pixels on lanes.
            acc = None
            for t in range(9):
                dh, dw = t // 3 - 1, t % 3 - 1
                off = pad + dh * wl + dw
                xs = slab_ref[:, off:off + r]                         # (cin, r)
                term = jnp.dot(w_ref[t * cout:(t + 1) * cout, :], xs,
                               preferred_element_type=f32)            # (cout, r)
                if t != 4:                            # centre tap: mask == 1
                    term = term * mask_ref[t:t + 1, :]
                acc = term if acc is None else acc + term
            return acc

        def fill_slab(slab_ref, val, r):
            # embed an unpadded (c, r) activation into its zero lane-padded slab
            slab_ref[...] = jnp.zeros(slab_ref.shape, slab_ref.dtype)
            slab_ref[:, pad:pad + r] = val

        def maxpool2(slab_ref, pool_ref, wl, r):
            # elementwise max over each 2x2 block, then gather the stride-2
            # block corners with a 0/1 selection matmul (gather via MXU).
            mx = jnp.maximum(
                jnp.maximum(slab_ref[:, pad:pad + r],
                            slab_ref[:, pad + 1:pad + 1 + r]),
                jnp.maximum(slab_ref[:, pad + wl:pad + wl + r],
                            slab_ref[:, pad + wl + 1:pad + wl + 1 + r]))
            return jnp.dot(mx, pool_ref[...], preferred_element_type=f32)

        def recip(den):
            # EUP approx reciprocal + one Newton-Raphson refinement: keeps the
            # divide off the VALU critical path while making probabilities sum
            # to 1 within ~1e-5 (raw vrcp alone is only ~4e-3 accurate).
            inv = pl.reciprocal(den, approx=True)
            return inv * (2.0 - den * inv)

        relu = lambda v: jnp.maximum(v, 0.0)

        # ------------------------------ encoder ------------------------------
        e1 = relu(conv3x3(x0_ref, w_e1_ref, m0_ref, w0, r0, c1) + b_e1_ref[...])
        fill_slab(e1_slab, e1, r0)

        p1 = maxpool2(e1_slab, pool0_ref, w0, r0)
        fill_slab(p1_slab, p1, r1)
        e2 = relu(conv3x3(p1_slab, w_e2_ref, m1_ref, w1, r1, c2) + b_e2_ref[...])
        fill_slab(e2_slab, e2, r1)

        p2 = maxpool2(e2_slab, pool1_ref, w1, r1)
        fill_slab(p2_slab, p2, r2)
        bt = relu(conv3x3(p2_slab, w_bt_ref, m2_ref, w2, r2, c3) + b_bt_ref[...])

        # ------------------------------ decoder ------------------------------
        u2 = jnp.dot(bt, up1_ref[...], preferred_element_type=f32)   # 4x4 -> 8x8
        fill_slab(u2_slab, u2, r1)
        d2 = relu(conv3x3(u2_slab, w_d2a_ref, m1_ref, w1, r1, c2)
                  + conv3x3(e2_slab, w_d2b_ref, m1_ref, w1, r1, c2)
                  + b_d2_ref[...])

        u1 = jnp.dot(d2, up0_ref[...], preferred_element_type=f32)   # 8x8 -> 16x16
        fill_slab(u1_slab, u1, r0)
        d1 = relu(conv3x3(u1_slab, w_d1a_ref, m0_ref, w0, r0, c1)
                  + conv3x3(e1_slab, w_d1b_ref, m0_ref, w0, r0, c1)
                  + b_d1_ref[...])

        # ---------------- fused 1x1 head + softmax / sigmoid -----------------
        # unrolled over the tiny class axis: full-lane (1, r0) vregs, no
        # cross-lane reduction.
        logit = [jnp.dot(w_hd_ref[c:c + 1, :], d1, preferred_element_type=f32)
                 + b_hd_ref[c:c + 1, :] for c in range(num_classes)]
        if num_classes > 1:
            mx = logit[0]
            for lc in logit[1:]:
                mx = jnp.maximum(mx, lc)
            exps = [jnp.exp(lc - mx) for lc in logit]
            den = exps[0]
            for ex in exps[1:]:
                den = den + ex
            inv = recip(den)
            for c in range(num_classes):
                o_ref[c:c + 1, :] = exps[c] * inv
        else:
            o_ref[0:1, :] = recip(1.0 + jnp.exp(-logit[0]))

    # ---- tiny per-call prep (all heavy transforms were done at init) --------
    x_flat = jnp.transpose(x_nchw, (1, 0, 2, 3)).reshape(cin, r0)
    x0 = jnp.pad(x_flat, ((0, 0), (pad, pad)))

    inputs = (x0,
              kp["w_e1"], kp["b_e1"], kp["w_e2"], kp["b_e2"],
              kp["w_bt"], kp["b_bt"],
              kp["w_d2a"], kp["w_d2b"], kp["b_d2"],
              kp["w_d1a"], kp["w_d1b"], kp["b_d1"],
              kp["w_hd"], kp["b_hd"],
              kp["m0"], kp["m1"], kp["m2"],
              kp["pool0"], kp["pool1"], kp["up1"], kp["up0"])

    conv_flops = 2 * 9 * (r0 * cin * c1 + r1 * c1 * c2 + r2 * c2 * c3
                          + r1 * (c3 + c2) * c2 + r0 * (c2 + c1) * c1)
    gather_flops = 2 * (c1 * r0 * r1 + c2 * r1 * r2 + c3 * r2 * r1 + c2 * r1 * r0)
    head_flops = 2 * r0 * c1 * num_classes
    cost = pl.CostEstimate(
        flops=conv_flops + gather_flops + head_flops,
        transcendentals=(num_classes + 1) * r0,
        bytes_accessed=4 * (sum(int(a.size) for a in inputs) + num_classes * r0))

    out = pl.pallas_call(
        kernel,
        out_shape=jax.ShapeDtypeStruct((num_classes, r0), f32),
        in_specs=[_VMEM] * len(inputs),
        out_specs=_VMEM,
        scratch_shapes=[
            pltpu.VMEM((c1, r0 + 2 * pad), f32),    # e1 slab   (16x16)
            pltpu.VMEM((c1, r1 + 2 * pad), f32),    # pool(e1)  ( 8x 8)
            pltpu.VMEM((c2, r1 + 2 * pad), f32),    # e2 slab   ( 8x 8)
            pltpu.VMEM((c2, r2 + 2 * pad), f32),    # pool(e2)  ( 4x 4)
            pltpu.VMEM((c3, r1 + 2 * pad), f32),    # up(bott)  ( 8x 8)
            pltpu.VMEM((c2, r0 + 2 * pad), f32),    # up(d2)    (16x16)
        ],
        cost_estimate=cost,
    )(*inputs)

    # (num_classes, N*H*W) -> NCHW; tiny metadata-level work in XLA.
    return jnp.transpose(out.reshape(num_classes, n, h, w), (1, 0, 2, 3))


# ------------------------- pure-JAX (XLA) reference ------------------------ #

def _im2col3x3(x_nhwc):
    n, h, w, c = x_nhwc.shape
    xp = jnp.pad(x_nhwc, ((0, 0), (1, 1), (1, 1), (0, 0)))
    cols = [xp[:, kh:kh + h, kw:kw + w, :] for kh in range(3) for kw in range(3)]
    return jnp.concatenate(cols, axis=-1).reshape(n * h * w, 9 * c)


def _conv3x3_relu_ref(x, w, b):
    n, h, wd, cin = x.shape
    cout = w.shape[-1]
    out = jnp.dot(_im2col3x3(x), w.reshape(9 * cin, cout), precision=_HI) + b
    return jnp.maximum(out, 0.0).reshape(n, h, wd, cout)


def _maxpool2_ref(x):
    n, h, w, c = x.shape
    return x.reshape(n, h // 2, 2, w // 2, 2, c).max(axis=(2, 4))


def _upsample2_ref(x):
    return jnp.repeat(jnp.repeat(x, 2, axis=1), 2, axis=2)


def unet_forward_ref(params, x_nchw):
    """Pure-JAX reference used to validate the fused Pallas kernel."""
    x = jnp.transpose(x_nchw, (0, 2, 3, 1))
    e1 = _conv3x3_relu_ref(x, *params["enc1"])
    e2 = _conv3x3_relu_ref(_maxpool2_ref(e1), *params["enc2"])
    bt = _conv3x3_relu_ref(_maxpool2_ref(e2), *params["bott"])
    d2 = _conv3x3_relu_ref(jnp.concatenate([_upsample2_ref(bt), e2], -1),
                           *params["dec2"])
    d1 = _conv3x3_relu_ref(jnp.concatenate([_upsample2_ref(d2), e1], -1),
                           *params["dec1"])
    wh, bh = params["head"]
    n, h, w, _ = d1.shape
    logits = jnp.dot(d1.reshape(n * h * w, -1), wh, precision=_HI) + bh
    probs = jax.nn.softmax(logits, axis=-1) if wh.shape[-1] > 1 else jax.nn.sigmoid(logits)
    return jnp.transpose(probs.reshape(n, h, w, -1), (0, 3, 1, 2))


# ----------------------------------- main ----------------------------------- #

if __name__ == "__main__":
    cfg = dict(backbone="synthetic-mini", in_channels=4, num_classes=3,
               layers_to_freeze=0)   # freezing affects training only, not forward
    n, h, w = 2, 16, 16

    params = init_unet_params(cfg, seed=0)
    kparams = prepare_kernel_params(params, n=n, h=h, w=w)

    x = jax.random.normal(jax.random.PRNGKey(0),
                          (n, cfg["in_channels"], h, w), jnp.float32)

    fwd = jax.jit(functools.partial(unet_pallas_forward, kparams,
                                    num_classes=cfg["num_classes"]))
    out = jax.block_until_ready(fwd(x))

    assert out.shape == (n, cfg["num_classes"], h, w), out.shape

    # softmax over the class axis must sum to ~1 (Newton-refined reciprocal)
    sums = jnp.sum(out, axis=1)
    assert bool(jnp.allclose(sums, 1.0, atol=1e-3)), float(jnp.max(jnp.abs(sums - 1.0)))

    # numerical check against the pure-JAX reference of the same network
    ref = jax.jit(functools.partial(unet_forward_ref, params))(x)
    max_err = float(jnp.max(jnp.abs(out - ref)))
    assert max_err < 5e-3, max_err

    print("KERNEL_OK")
</pallas_src>

<mosaic_0001>
module attributes {stable_mosaic.version = 11 : i64} {
  func.func @kernel(%arg0: memref<4x768xf32, #tpu.memory_space<vmem>>, %arg1: memref<72x4xf32, #tpu.memory_space<vmem>>, %arg2: memref<8x1xf32, #tpu.memory_space<vmem>>, %arg3: memref<144x8xf32, #tpu.memory_space<vmem>>, %arg4: memref<16x1xf32, #tpu.memory_space<vmem>>, %arg5: memref<288x16xf32, #tpu.memory_space<vmem>>, %arg6: memref<32x1xf32, #tpu.memory_space<vmem>>, %arg7: memref<144x32xf32, #tpu.memory_space<vmem>>, %arg8: memref<144x16xf32, #tpu.memory_space<vmem>>, %arg9: memref<16x1xf32, #tpu.memory_space<vmem>>, %arg10: memref<72x16xf32, #tpu.memory_space<vmem>>, %arg11: memref<72x8xf32, #tpu.memory_space<vmem>>, %arg12: memref<8x1xf32, #tpu.memory_space<vmem>>, %arg13: memref<3x8xf32, #tpu.memory_space<vmem>>, %arg14: memref<3x1xf32, #tpu.memory_space<vmem>>, %arg15: memref<9x512xf32, #tpu.memory_space<vmem>>, %arg16: memref<9x128xf32, #tpu.memory_space<vmem>>, %arg17: memref<9x32xf32, #tpu.memory_space<vmem>>, %arg18: memref<512x128xf32, #tpu.memory_space<vmem>>, %arg19: memref<128x32xf32, #tpu.memory_space<vmem>>, %arg20: memref<32x128xf32, #tpu.memory_space<vmem>>, %arg21: memref<128x512xf32, #tpu.memory_space<vmem>>, %arg22: memref<3x512xf32, #tpu.memory_space<vmem>>, %arg23: memref<8x768xf32, #tpu.memory_space<vmem>>, %arg24: memref<8x384xf32, #tpu.memory_space<vmem>>, %arg25: memref<16x384xf32, #tpu.memory_space<vmem>>, %arg26: memref<16x288xf32, #tpu.memory_space<vmem>>, %arg27: memref<32x384xf32, #tpu.memory_space<vmem>>, %arg28: memref<16x768xf32, #tpu.memory_space<vmem>>) attributes {dimension_semantics = [], scalar_prefetch = 0 : i64, scratch_operands = 6 : i64, tpu.core_type = #tpu.core_type<tc>} {
    %c0 = arith.constant 0 : index
    %c111 = arith.constant 111 : index
    %0 = vector.load %arg0[%c0, %c111] : memref<4x768xf32, #tpu.memory_space<vmem>>, vector<4x512xf32>
    %c0_0 = arith.constant 0 : index
    %c0_1 = arith.constant 0 : index
    %1 = vector.load %arg1[%c0_0, %c0_1] : memref<72x4xf32, #tpu.memory_space<vmem>>, vector<8x4xf32>
    %cst = arith.constant dense<0.000000e+00> : vector<8x512xf32>
    %2 = tpu.matmul %1, %0, %cst {dimension_numbers = #tpu.dot_dimension_numbers<[1], [0], [0], [1], [0, 0, 1, 1], [], []>} : vector<8x4xf32>, vector<4x512xf32>, vector<8x512xf32> -> vector<8x512xf32>
    %c0_2 = arith.constant 0 : index
    %c0_3 = arith.constant 0 : index
    %3 = vector.load %arg15[%c0_2, %c0_3] : memref<9x512xf32, #tpu.memory_space<vmem>>, vector<1x512xf32>
    %4 = vector.broadcast %3 : vector<1x512xf32> to vector<8x512xf32>
    %5 = arith.mulf %2, %4 : vector<8x512xf32>
    %c0_4 = arith.constant 0 : index
    %c112 = arith.constant 112 : index
    %6 = vector.load %arg0[%c0_4, %c112] : memref<4x768xf32, #tpu.memory_space<vmem>>, vector<4x512xf32>
    %c8 = arith.constant 8 : index
    %c0_5 = arith.constant 0 : index
    %7 = vector.load %arg1[%c8, %c0_5] : memref<72x4xf32, #tpu.memory_space<vmem>>, vector<8x4xf32>
    %cst_6 = arith.constant dense<0.000000e+00> : vector<8x512xf32>
    %8 = tpu.matmul %7, %6, %cst_6 {dimension_numbers = #tpu.dot_dimension_numbers<[1], [0], [0], [1], [0, 0, 1, 1], [], []>} : vector<8x4xf32>, vector<4x512xf32>, vector<8x512xf32> -> vector<8x512xf32>
    %c1 = arith.constant 1 : index
    %c0_7 = arith.constant 0 : index
    %9 = vector.load %arg15[%c1, %c0_7] : memref<9x512xf32, #tpu.memory_space<vmem>>, vector<1x512xf32>
    %10 = vector.broadcast %9 : vector<1x512xf32> to vector<8x512xf32>
    %11 = arith.mulf %8, %10 : vector<8x512xf32>
    %12 = arith.addf %5, %11 : vector<8x512xf32>
    %c0_8 = arith.constant 0 : index
    %c113 = arith.constant 113 : index
    %13 = vector.load %arg0[%c0_8, %c113] : memref<4x768xf32, #tpu.memory_space<vmem>>, vector<4x512xf32>
    %c16 = arith.constant 16 : index
    %c0_9 = arith.constant 0 : index
    %14 = vector.load %arg1[%c16, %c0_9] : memref<72x4xf32, #tpu.memory_space<vmem>>, vector<8x4xf32>
    %cst_10 = arith.constant dense<0.000000e+00> : vector<8x512xf32>
    %15 = tpu.matmul %14, %13, %cst_10 {dimension_numbers = #tpu.dot_dimension_numbers<[1], [0], [0], [1], [0, 0, 1, 1], [], []>} : vector<8x4xf32>, vector<4x512xf32>, vector<8x512xf32> -> vector<8x512xf32>
    %c2 = arith.constant 2 : index
    %c0_11 = arith.constant 0 : index
    %16 = vector.load %arg15[%c2, %c0_11] : memref<9x512xf32, #tpu.memory_space<vmem>>, vector<1x512xf32>
    %17 = vector.broadcast %16 : vector<1x512xf32> to vector<8x512xf32>
    %18 = arith.mulf %15, %17 : vector<8x512xf32>
    %19 = arith.addf %12, %18 : vector<8x512xf32>
    %c0_12 = arith.constant 0 : index
    %c127 = arith.constant 127 : index
    %20 = vector.load %arg0[%c0_12, %c127] : memref<4x768xf32, #tpu.memory_space<vmem>>, vector<4x512xf32>
    %c24 = arith.constant 24 : index
    %c0_13 = arith.constant 0 : index
    %21 = vector.load %arg1[%c24, %c0_13] : memref<72x4xf32, #tpu.memory_space<vmem>>, vector<8x4xf32>
    %cst_14 = arith.constant dense<0.000000e+00> : vector<8x512xf32>
    %22 = tpu.matmul %21, %20, %cst_14 {dimension_numbers = #tpu.dot_dimension_numbers<[1], [0], [0], [1], [0, 0, 1, 1], [], []>} : vector<8x4xf32>, vector<4x512xf32>, vector<8x512xf32> -> vector<8x512xf32>
    %c3 = arith.constant 3 : index
    %c0_15 = arith.constant 0 : index
    %23 = vector.load %arg15[%c3, %c0_15] : memref<9x512xf32, #tpu.memory_space<vmem>>, vector<1x512xf32>
    %24 = vector.broadcast %23 : vector<1x512xf32> to vector<8x512xf32>
    %25 = arith.mulf %22, %24 : vector<8x512xf32>
    %26 = arith.addf %19, %25 : vector<8x512xf32>
    %c0_16 = arith.constant 0 : index
    %c128 = arith.constant 128 : index
    %27 = vector.load %arg0[%c0_16, %c128] : memref<4x768xf32, #tpu.memory_space<vmem>>, vector<4x512xf32>
    %c32 = arith.constant 32 : index
    %c0_17 = arith.constant 0 : index
    %28 = vector.load %arg1[%c32, %c0_17] : memref<72x4xf32, #tpu.memory_space<vmem>>, vector<8x4xf32>
    %cst_18 = arith.constant dense<0.000000e+00> : vector<8x512xf32>
    %29 = tpu.matmul %28, %27, %cst_18 {dimension_numbers = #tpu.dot_dimension_numbers<[1], [0], [0], [1], [0, 0, 1, 1], [], []>} : vector<8x4xf32>, vector<4x512xf32>, vector<8x512xf32> -> vector<8x512xf32>
    %30 = arith.addf %26, %29 : vector<8x512xf32>
    %c0_19 = arith.constant 0 : index
    %c129 = arith.constant 129 : index
    %31 = vector.load %arg0[%c0_19, %c129] : memref<4x768xf32, #tpu.memory_space<vmem>>, vector<4x512xf32>
    %c40 = arith.constant 40 : index
    %c0_20 = arith.constant 0 : index
    %32 = vector.load %arg1[%c40, %c0_20] : memref<72x4xf32, #tpu.memory_space<vmem>>, vector<8x4xf32>
    %cst_21 = arith.constant dense<0.000000e+00> : vector<8x512xf32>
    %33 = tpu.matmul %32, %31, %cst_21 {dimension_numbers = #tpu.dot_dimension_numbers<[1], [0], [0], [1], [0, 0, 1, 1], [], []>} : vector<8x4xf32>, vector<4x512xf32>, vector<8x512xf32> -> vector<8x512xf32>
    %c5 = arith.constant 5 : index
    %c0_22 = arith.constant 0 : index
    %34 = vector.load %arg15[%c5, %c0_22] : memref<9x512xf32, #tpu.memory_space<vmem>>, vector<1x512xf32>
    %35 = vector.broadcast %34 : vector<1x512xf32> to vector<8x512xf32>
    %36 = arith.mulf %33, %35 : vector<8x512xf32>
    %37 = arith.addf %30, %36 : vector<8x512xf32>
    %c0_23 = arith.constant 0 : index
    %c143 = arith.constant 143 : index
    %38 = vector.load %arg0[%c0_23, %c143] : memref<4x768xf32, #tpu.memory_space<vmem>>, vector<4x512xf32>
    %c48 = arith.constant 48 : index
    %c0_24 = arith.constant 0 : index
    %39 = vector.load %arg1[%c48, %c0_24] : memref<72x4xf32, #tpu.memory_space<vmem>>, vector<8x4xf32>
    %cst_25 = arith.constant dense<0.000000e+00> : vector<8x512xf32>
    %40 = tpu.matmul %39, %38, %cst_25 {dimension_numbers = #tpu.dot_dimension_numbers<[1], [0], [0], [1], [0, 0, 1, 1], [], []>} : vector<8x4xf32>, vector<4x512xf32>, vector<8x512xf32> -> vector<8x512xf32>
    %c6 = arith.constant 6 : index
    %c0_26 = arith.constant 0 : index
    %41 = vector.load %arg15[%c6, %c0_26] : memref<9x512xf32, #tpu.memory_space<vmem>>, vector<1x512xf32>
    %42 = vector.broadcast %41 : vector<1x512xf32> to vector<8x512xf32>
    %43 = arith.mulf %40, %42 : vector<8x512xf32>
    %44 = arith.addf %37, %43 : vector<8x512xf32>
    %c0_27 = arith.constant 0 : index
    %c144 = arith.constant 144 : index
    %45 = vector.load %arg0[%c0_27, %c144] : memref<4x768xf32, #tpu.memory_space<vmem>>, vector<4x512xf32>
    %c56 = arith.constant 56 : index
    %c0_28 = arith.constant 0 : index
    %46 = vector.load %arg1[%c56, %c0_28] : memref<72x4xf32, #tpu.memory_space<vmem>>, vector<8x4xf32>
    %cst_29 = arith.constant dense<0.000000e+00> : vector<8x512xf32>
    %47 = tpu.matmul %46, %45, %cst_29 {dimension_numbers = #tpu.dot_dimension_numbers<[1], [0], [0], [1], [0, 0, 1, 1], [], []>} : vector<8x4xf32>, vector<4x512xf32>, vector<8x512xf32> -> vector<8x512xf32>
    %c7 = arith.constant 7 : index
    %c0_30 = arith.constant 0 : index
    %48 = vector.load %arg15[%c7, %c0_30] : memref<9x512xf32, #tpu.memory_space<vmem>>, vector<1x512xf32>
    %49 = vector.broadcast %48 : vector<1x512xf32> to vector<8x512xf32>
    %50 = arith.mulf %47, %49 : vector<8x512xf32>
    %51 = arith.addf %44, %50 : vector<8x512xf32>
    %c0_31 = arith.constant 0 : index
    %c145 = arith.constant 145 : index
    %52 = vector.load %arg0[%c0_31, %c145] : memref<4x768xf32, #tpu.memory_space<vmem>>, vector<4x512xf32>
    %c64 = arith.constant 64 : index
    %c0_32 = arith.constant 0 : index
    %53 = vector.load %arg1[%c64, %c0_32] : memref<72x4xf32, #tpu.memory_space<vmem>>, vector<8x4xf32>
    %cst_33 = arith.constant dense<0.000000e+00> : vector<8x512xf32>
    %54 = tpu.matmul %53, %52, %cst_33 {dimension_numbers = #tpu.dot_dimension_numbers<[1], [0], [0], [1], [0, 0, 1, 1], [], []>} : vector<8x4xf32>, vector<4x512xf32>, vector<8x512xf32> -> vector<8x512xf32>
    %c8_34 = arith.constant 8 : index
    %c0_35 = arith.constant 0 : index
    %55 = vector.load %arg15[%c8_34, %c0_35] : memref<9x512xf32, #tpu.memory_space<vmem>>, vector<1x512xf32>
    %56 = vector.broadcast %55 : vector<1x512xf32> to vector<8x512xf32>
    %57 = arith.mulf %54, %56 : vector<8x512xf32>
    %58 = arith.addf %51, %57 : vector<8x512xf32>
    %c0_36 = arith.constant 0 : index
    %c0_37 = arith.constant 0 : index
    %59 = vector.load %arg2[%c0_36, %c0_37] : memref<8x1xf32, #tpu.memory_space<vmem>>, vector<8x1xf32>
    %60 = vector.broadcast %59 : vector<8x1xf32> to vector<8x512xf32>
    %61 = arith.addf %58, %60 : vector<8x512xf32>
    %cst_38 = arith.constant 0.000000e+00 : f32
    %62 = vector.broadcast %cst_38 : f32 to vector<8x512xf32>
    %63 = arith.maximumf %61, %62 : vector<8x512xf32>
    %cst_39 = arith.constant 0.000000e+00 : f32
    %64 = vector.broadcast %cst_39 : f32 to vector<8x768xf32>
    %c0_40 = arith.constant 0 : index
    %c0_41 = arith.constant 0 : index
    %65 = vector.load %arg23[%c0_40, %c0_41] : memref<8x768xf32, #tpu.memory_space<vmem>>, vector<8x768xf32>
    tpu.vector_store %arg23[%c0_40, %c0_41], %64 {strides = array<i32>} : memref<8x768xf32, #tpu.memory_space<vmem>>, vector<8x768xf32>,
    %c0_42 = arith.constant 0 : index
    %c128_43 = arith.constant 128 : index
    %66 = vector.load %arg23[%c0_42, %c128_43] : memref<8x768xf32, #tpu.memory_space<vmem>>, vector<8x512xf32>
    tpu.vector_store %arg23[%c0_42, %c128_43], %63 {strides = array<i32>} : memref<8x768xf32, #tpu.memory_space<vmem>>, vector<8x512xf32>,
    %c0_44 = arith.constant 0 : index
    %c128_45 = arith.constant 128 : index
    %67 = vector.load %arg23[%c0_44, %c128_45] : memref<8x768xf32, #tpu.memory_space<vmem>>, vector<8x512xf32>
    %c0_46 = arith.constant 0 : index
    %c129_47 = arith.constant 129 : index
    %68 = vector.load %arg23[%c0_46, %c129_47] : memref<8x768xf32, #tpu.memory_space<vmem>>, vector<8x512xf32>
    %69 = arith.maximumf %67, %68 : vector<8x512xf32>
    %c0_48 = arith.constant 0 : index
    %c144_49 = arith.constant 144 : index
    %70 = vector.load %arg23[%c0_48, %c144_49] : memref<8x768xf32, #tpu.memory_space<vmem>>, vector<8x512xf32>
    %c0_50 = arith.constant 0 : index
    %c145_51 = arith.constant 145 : index
    %71 = vector.load %arg23[%c0_50, %c145_51] : memref<8x768xf32, #tpu.memory_space<vmem>>, vector<8x512xf32>
    %72 = arith.maximumf %70, %71 : vector<8x512xf32>
    %73 = arith.maximumf %69, %72 : vector<8x512xf32>
    %c0_52 = arith.constant 0 : index
    %c0_53 = arith.constant 0 : index
    %74 = vector.load %arg18[%c0_52, %c0_53] : memref<512x128xf32, #tpu.memory_space<vmem>>, vector<512x128xf32>
    %cst_54 = arith.constant dense<0.000000e+00> : vector<8x128xf32>
    %75 = tpu.matmul %73, %74, %cst_54 {dimension_numbers = #tpu.dot_dimension_numbers<[1], [0], [0], [1], [0, 0, 1, 1], [], []>} : vector<8x512xf32>, vector<512x128xf32>, vector<8x128xf32> -> vector<8x128xf32>
    %cst_55 = arith.constant 0.000000e+00 : f32
    %76 = vector.broadcast %cst_55 : f32 to vector<8x384xf32>
    %c0_56 = arith.constant 0 : index
    %c0_57 = arith.constant 0 : index
    %77 = vector.load %arg24[%c0_56, %c0_57] : memref<8x384xf32, #tpu.memory_space<vmem>>, vector<8x384xf32>
    tpu.vector_store %arg24[%c0_56, %c0_57], %76 {strides = array<i32>} : memref<8x384xf32, #tpu.memory_space<vmem>>, vector<8x384xf32>,
    %c0_58 = arith.constant 0 : index
    %c128_59 = arith.constant 128 : index
    %78 = vector.load %arg24[%c0_58, %c128_59] : memref<8x384xf32, #tpu.memory_space<vmem>>, vector<8x128xf32>
    tpu.vector_store %arg24[%c0_58, %c128_59], %75 {strides = array<i32>} : memref<8x384xf32, #tpu.memory_space<vmem>>, vector<8x128xf32>,
    %c0_60 = arith.constant 0 : index
    %c119 = arith.constant 119 : index
    %79 = vector.load %arg24[%c0_60, %c119] : memref<8x384xf32, #tpu.memory_space<vmem>>, vector<8x128xf32>
    %c0_61 = arith.constant 0 : index
    %c0_62 = arith.constant 0 : index
    %80 = vector.load %arg3[%c0_61, %c0_62] : memref<144x8xf32, #tpu.memory_space<vmem>>, vector<16x8xf32>
    %cst_63 = arith.constant dense<0.000000e+00> : vector<16x128xf32>
    %81 = tpu.matmul %80, %79, %cst_63 {dimension_numbers = #tpu.dot_dimension_numbers<[1], [0], [0], [1], [0, 0, 1, 1], [], []>} : vector<16x8xf32>, vector<8x128xf32>, vector<16x128xf32> -> vector<16x128xf32>
    %c0_64 = arith.constant 0 : index
    %c0_65 = arith.constant 0 : index
    %82 = vector.load %arg16[%c0_64, %c0_65] : memref<9x128xf32, #tpu.memory_space<vmem>>, vector<1x128xf32>
    %83 = vector.broadcast %82 : vector<1x128xf32> to vector<16x128xf32>
    %84 = arith.mulf %81, %83 : vector<16x128xf32>
    %c0_66 = arith.constant 0 : index
    %c120 = arith.constant 120 : index
    %85 = vector.load %arg24[%c0_66, %c120] : memref<8x384xf32, #tpu.memory_space<vmem>>, vector<8x128xf32>
    %c16_67 = arith.constant 16 : index
    %c0_68 = arith.constant 0 : index
    %86 = vector.load %arg3[%c16_67, %c0_68] : memref<144x8xf32, #tpu.memory_space<vmem>>, vector<16x8xf32>
    %cst_69 = arith.constant dense<0.000000e+00> : vector<16x128xf32>
    %87 = tpu.matmul %86, %85, %cst_69 {dimension_numbers = #tpu.dot_dimension_numbers<[1], [0], [0], [1], [0, 0, 1, 1], [], []>} : vector<16x8xf32>, vector<8x128xf32>, vector<16x128xf32> -> vector<16x128xf32>
    %c1_70 = arith.constant 1 : index
    %c0_71 = arith.constant 0 : index
    %88 = vector.load %arg16[%c1_70, %c0_71] : memref<9x128xf32, #tpu.memory_space<vmem>>, vector<1x128xf32>
    %89 = vector.broadcast %88 : vector<1x128xf32> to vector<16x128xf32>
    %90 = arith.mulf %87, %89 : vector<16x128xf32>
    %91 = arith.addf %84, %90 : vector<16x128xf32>
    %c0_72 = arith.constant 0 : index
    %c121 = arith.constant 121 : index
    %92 = vector.load %arg24[%c0_72, %c121] : memref<8x384xf32, #tpu.memory_space<vmem>>, vector<8x128xf32>
    %c32_73 = arith.constant 32 : index
    %c0_74 = arith.constant 0 : index
    %93 = vector.load %arg3[%c32_73, %c0_74] : memref<144x8xf32, #tpu.memory_space<vmem>>, vector<16x8xf32>
    %cst_75 = arith.constant dense<0.000000e+00> : vector<16x128xf32>
    %94 = tpu.matmul %93, %92, %cst_75 {dimension_numbers = #tpu.dot_dimension_numbers<[1], [0], [0], [1], [0, 0, 1, 1], [], []>} : vector<16x8xf32>, vector<8x128xf32>, vector<16x128xf32> -> vector<16x128xf32>
    %c2_76 = arith.constant 2 : index
    %c0_77 = arith.constant 0 : index
    %95 = vector.load %arg16[%c2_76, %c0_77] : memref<9x128xf32, #tpu.memory_space<vmem>>, vector<1x128xf32>
    %96 = vector.broadcast %95 : vector<1x128xf32> to vector<16x128xf32>
    %97 = arith.mulf %94, %96 : vector<16x128xf32>
    %98 = arith.addf %91, %97 : vector<16x128xf32>
    %c0_78 = arith.constant 0 : index
    %c127_79 = arith.constant 127 : index
    %99 = vector.load %arg24[%c0_78, %c127_79] : memref<8x384xf32, #tpu.memory_space<vmem>>, vector<8x128xf32>
    %c48_80 = arith.constant 48 : index
    %c0_81 = arith.constant 0 : index
    %100 = vector.load %arg3[%c48_80, %c0_81] : memref<144x8xf32, #tpu.memory_space<vmem>>, vector<16x8xf32>
    %cst_82 = arith.constant dense<0.000000e+00> : vector<16x128xf32>
    %101 = tpu.matmul %100, %99, %cst_82 {dimension_numbers = #tpu.dot_dimension_numbers<[1], [0], [0], [1], [0, 0, 1, 1], [], []>} : vector<16x8xf32>, vector<8x128xf32>, vector<16x128xf32> -> vector<16x128xf32>
    %c3_83 = arith.constant 3 : index
    %c0_84 = arith.constant 0 : index
    %102 = vector.load %arg16[%c3_83, %c0_84] : memref<9x128xf32, #tpu.memory_space<vmem>>, vector<1x128xf32>
    %103 = vector.broadcast %102 : vector<1x128xf32> to vector<16x128xf32>
    %104 = arith.mulf %101, %103 : vector<16x128xf32>
    %105 = arith.addf %98, %104 : vector<16x128xf32>
    %c0_85 = arith.constant 0 : index
    %c128_86 = arith.constant 128 : index
    %106 = vector.load %arg24[%c0_85, %c128_86] : memref<8x384xf32, #tpu.memory_space<vmem>>, vector<8x128xf32>
    %c64_87 = arith.constant 64 : index
    %c0_88 = arith.constant 0 : index
    %107 = vector.load %arg3[%c64_87, %c0_88] : memref<144x8xf32, #tpu.memory_space<vmem>>, vector<16x8xf32>
    %cst_89 = arith.constant dense<0.000000e+00> : vector<16x128xf32>
    %108 = tpu.matmul %107, %106, %cst_89 {dimension_numbers = #tpu.dot_dimension_numbers<[1], [0], [0], [1], [0, 0, 1, 1], [], []>} : vector<16x8xf32>, vector<8x128xf32>, vector<16x128xf32> -> vector<16x128xf32>
    %109 = arith.addf %105, %108 : vector<16x128xf32>
    %c0_90 = arith.constant 0 : index
    %c129_91 = arith.constant 129 : index
    %110 = vector.load %arg24[%c0_90, %c129_91] : memref<8x384xf32, #tpu.memory_space<vmem>>, vector<8x128xf32>
    %c80 = arith.constant 80 : index
    %c0_92 = arith.constant 0 : index
    %111 = vector.load %arg3[%c80, %c0_92] : memref<144x8xf32, #tpu.memory_space<vmem>>, vector<16x8xf32>
    %cst_93 = arith.constant dense<0.000000e+00> : vector<16x128xf32>
    %112 = tpu.matmul %111, %110, %cst_93 {dimension_numbers = #tpu.dot_dimension_numbers<[1], [0], [0], [1], [0, 0, 1, 1], [], []>} : vector<16x8xf32>, vector<8x128xf32>, vector<16x128xf32> -> vector<16x128xf32>
    %c5_94 = arith.constant 5 : index
    %c0_95 = arith.constant 0 : index
    %113 = vector.load %arg16[%c5_94, %c0_95] : memref<9x128xf32, #tpu.memory_space<vmem>>, vector<1x128xf32>
    %114 = vector.broadcast %113 : vector<1x128xf32> to vector<16x128xf32>
    %115 = arith.mulf %112, %114 : vector<16x128xf32>
    %116 = arith.addf %109, %115 : vector<16x128xf32>
    %c0_96 = arith.constant 0 : index
    %c135 = arith.constant 135 : index
    %117 = vector.load %arg24[%c0_96, %c135] : memref<8x384xf32, #tpu.memory_space<vmem>>, vector<8x128xf32>
    %c96 = arith.constant 96 : index
    %c0_97 = arith.constant 0 : index
    %118 = vector.load %arg3[%c96, %c0_97] : memref<144x8xf32, #tpu.memory_space<vmem>>, vector<16x8xf32>
    %cst_98 = arith.constant dense<0.000000e+00> : vector<16x128xf32>
    %119 = tpu.matmul %118, %117, %cst_98 {dimension_numbers = #tpu.dot_dimension_numbers<[1], [0], [0], [1], [0, 0, 1, 1], [], []>} : vector<16x8xf32>, vector<8x128xf32>, vector<16x128xf32> -> vector<16x128xf32>
    %c6_99 = arith.constant 6 : index
    %c0_100 = arith.constant 0 : index
    %120 = vector.load %arg16[%c6_99, %c0_100] : memref<9x128xf32, #tpu.memory_space<vmem>>, vector<1x128xf32>
    %121 = vector.broadcast %120 : vector<1x128xf32> to vector<16x128xf32>
    %122 = arith.mulf %119, %121 : vector<16x128xf32>
    %123 = arith.addf %116, %122 : vector<16x128xf32>
    %c0_101 = arith.constant 0 : index
    %c136 = arith.constant 136 : index
    %124 = vector.load %arg24[%c0_101, %c136] : memref<8x384xf32, #tpu.memory_space<vmem>>, vector<8x128xf32>
    %c112_102 = arith.constant 112 : index
    %c0_103 = arith.constant 0 : index
    %125 = vector.load %arg3[%c112_102, %c0_103] : memref<144x8xf32, #tpu.memory_space<vmem>>, vector<16x8xf32>
    %cst_104 = arith.constant dense<0.000000e+00> : vector<16x128xf32>
    %126 = tpu.matmul %125, %124, %cst_104 {dimension_numbers = #tpu.dot_dimension_numbers<[1], [0], [0], [1], [0, 0, 1, 1], [], []>} : vector<16x8xf32>, vector<8x128xf32>, vector<16x128xf32> -> vector<16x128xf32>
    %c7_105 = arith.constant 7 : index
    %c0_106 = arith.constant 0 : index
    %127 = vector.load %arg16[%c7_105, %c0_106] : memref<9x128xf32, #tpu.memory_space<vmem>>, vector<1x128xf32>
    %128 = vector.broadcast %127 : vector<1x128xf32> to vector<16x128xf32>
    %129 = arith.mulf %126, %128 : vector<16x128xf32>
    %130 = arith.addf %123, %129 : vector<16x128xf32>
    %c0_107 = arith.constant 0 : index
    %c137 = arith.constant 137 : index
    %131 = vector.load %arg24[%c0_107, %c137] : memref<8x384xf32, #tpu.memory_space<vmem>>, vector<8x128xf32>
    %c128_108 = arith.constant 128 : index
    %c0_109 = arith.constant 0 : index
    %132 = vector.load %arg3[%c128_108, %c0_109] : memref<144x8xf32, #tpu.memory_space<vmem>>, vector<16x8xf32>
    %cst_110 = arith.constant dense<0.000000e+00> : vector<16x128xf32>
    %133 = tpu.matmul %132, %131, %cst_110 {dimension_numbers = #tpu.dot_dimension_numbers<[1], [0], [0], [1], [0, 0, 1, 1], [], []>} : vector<16x8xf32>, vector<8x128xf32>, vector<16x128xf32> -> vector<16x128xf32>
    %c8_111 = arith.constant 8 : index
    %c0_112 = arith.constant 0 : index
    %134 = vector.load %arg16[%c8_111, %c0_112] : memref<9x128xf32, #tpu.memory_space<vmem>>, vector<1x128xf32>
    %135 = vector.broadcast %134 : vector<1x128xf32> to vector<16x128xf32>
    %136 = arith.mulf %133, %135 : vector<16x128xf32>
    %137 = arith.addf %130, %136 : vector<16x128xf32>
    %c0_113 = arith.constant 0 : index
    %c0_114 = arith.constant 0 : index
    %138 = vector.load %arg4[%c0_113, %c0_114] : memref<16x1xf32, #tpu.memory_space<vmem>>, vector<16x1xf32>
    %139 = vector.broadcast %138 : vector<16x1xf32> to vector<16x128xf32>
    %140 = arith.addf %137, %139 : vector<16x128xf32>
    %cst_115 = arith.constant 0.000000e+00 : f32
    %141 = vector.broadcast %cst_115 : f32 to vector<16x128xf32>
    %142 = arith.maximumf %140, %141 : vector<16x128xf32>
    %cst_116 = arith.constant 0.000000e+00 : f32
    %143 = vector.broadcast %cst_116 : f32 to vector<16x384xf32>
    %c0_117 = arith.constant 0 : index
    %c0_118 = arith.constant 0 : index
    %144 = vector.load %arg25[%c0_117, %c0_118] : memref<16x384xf32, #tpu.memory_space<vmem>>, vector<16x384xf32>
    tpu.vector_store %arg25[%c0_117, %c0_118], %143 {strides = array<i32>} : memref<16x384xf32, #tpu.memory_space<vmem>>, vector<16x384xf32>,
    %c0_119 = arith.constant 0 : index
    %c128_120 = arith.constant 128 : index
    %145 = vector.load %arg25[%c0_119, %c128_120] : memref<16x384xf32, #tpu.memory_space<vmem>>, vector<16x128xf32>
    tpu.vector_store %arg25[%c0_119, %c128_120], %142 {strides = array<i32>} : memref<16x384xf32, #tpu.memory_space<vmem>>, vector<16x128xf32>,
    %c0_121 = arith.constant 0 : index
    %c128_122 = arith.constant 128 : index
    %146 = vector.load %arg25[%c0_121, %c128_122] : memref<16x384xf32, #tpu.memory_space<vmem>>, vector<16x128xf32>
    %c0_123 = arith.constant 0 : index
    %c129_124 = arith.constant 129 : index
    %147 = vector.load %arg25[%c0_123, %c129_124] : memref<16x384xf32, #tpu.memory_space<vmem>>, vector<16x128xf32>
    %148 = arith.maximumf %146, %147 : vector<16x128xf32>
    %c0_125 = arith.constant 0 : index
    %c136_126 = arith.constant 136 : index
    %149 = vector.load %arg25[%c0_125, %c136_126] : memref<16x384xf32, #tpu.memory_space<vmem>>, vector<16x128xf32>
    %c0_127 = arith.constant 0 : index
    %c137_128 = arith.constant 137 : index
    %150 = vector.load %arg25[%c0_127, %c137_128] : memref<16x384xf32, #tpu.memory_space<vmem>>, vector<16x128xf32>
    %151 = arith.maximumf %149, %150 : vector<16x128xf32>
    %152 = arith.maximumf %148, %151 : vector<16x128xf32>
    %c0_129 = arith.constant 0 : index
    %c0_130 = arith.constant 0 : index
    %153 = vector.load %arg19[%c0_129, %c0_130] : memref<128x32xf32, #tpu.memory_space<vmem>>, vector<128x32xf32>
    %cst_131 = arith.constant dense<0.000000e+00> : vector<16x32xf32>
    %154 = tpu.matmul %152, %153, %cst_131 {dimension_numbers = #tpu.dot_dimension_numbers<[1], [0], [0], [1], [0, 0, 1, 1], [], []>} : vector<16x128xf32>, vector<128x32xf32>, vector<16x32xf32> -> vector<16x32xf32>
    %cst_132 = arith.constant 0.000000e+00 : f32
    %155 = vector.broadcast %cst_132 : f32 to vector<16x288xf32>
    %c0_133 = arith.constant 0 : index
    %c0_134 = arith.constant 0 : index
    %156 = vector.load %arg26[%c0_133, %c0_134] : memref<16x288xf32, #tpu.memory_space<vmem>>, vector<16x288xf32>
    tpu.vector_store %arg26[%c0_133, %c0_134], %155 {strides = array<i32>} : memref<16x288xf32, #tpu.memory_space<vmem>>, vector<16x288xf32>,
    %c0_135 = arith.constant 0 : index
    %c128_136 = arith.constant 128 : index
    %157 = vector.load %arg26[%c0_135, %c128_136] : memref<16x288xf32, #tpu.memory_space<vmem>>, vector<16x32xf32>
    tpu.vector_store %arg26[%c0_135, %c128_136], %154 {strides = array<i32>} : memref<16x288xf32, #tpu.memory_space<vmem>>, vector<16x32xf32>,
    %c0_137 = arith.constant 0 : index
    %c123 = arith.constant 123 : index
    %158 = vector.load %arg26[%c0_137, %c123] : memref<16x288xf32, #tpu.memory_space<vmem>>, vector<16x32xf32>
    %c0_138 = arith.constant 0 : index
    %c0_139 = arith.constant 0 : index
    %159 = vector.load %arg5[%c0_138, %c0_139] : memref<288x16xf32, #tpu.memory_space<vmem>>, vector<32x16xf32>
    %cst_140 = arith.constant dense<0.000000e+00> : vector<32x32xf32>
    %160 = tpu.matmul %159, %158, %cst_140 {dimension_numbers = #tpu.dot_dimension_numbers<[1], [0], [0], [1], [0, 0, 1, 1], [], []>} : vector<32x16xf32>, vector<16x32xf32>, vector<32x32xf32> -> vector<32x32xf32>
    %c0_141 = arith.constant 0 : index
    %c0_142 = arith.constant 0 : index
    %161 = vector.load %arg17[%c0_141, %c0_142] : memref<9x32xf32, #tpu.memory_space<vmem>>, vector<1x32xf32>
    %162 = vector.broadcast %161 : vector<1x32xf32> to vector<32x32xf32>
    %163 = arith.mulf %160, %162 : vector<32x32xf32>
    %c0_143 = arith.constant 0 : index
    %c124 = arith.constant 124 : index
    %164 = vector.load %arg26[%c0_143, %c124] : memref<16x288xf32, #tpu.memory_space<vmem>>, vector<16x32xf32>
    %c32_144 = arith.constant 32 : index
    %c0_145 = arith.constant 0 : index
    %165 = vector.load %arg5[%c32_144, %c0_145] : memref<288x16xf32, #tpu.memory_space<vmem>>, vector<32x16xf32>
    %cst_146 = arith.constant dense<0.000000e+00> : vector<32x32xf32>
    %166 = tpu.matmul %165, %164, %cst_146 {dimension_numbers = #tpu.dot_dimension_numbers<[1], [0], [0], [1], [0, 0, 1, 1], [], []>} : vector<32x16xf32>, vector<16x32xf32>, vector<32x32xf32> -> vector<32x32xf32>
    %c1_147 = arith.constant 1 : index
    %c0_148 = arith.constant 0 : index
    %167 = vector.load %arg17[%c1_147, %c0_148] : memref<9x32xf32, #tpu.memory_space<vmem>>, vector<1x32xf32>
    %168 = vector.broadcast %167 : vector<1x32xf32> to vector<32x32xf32>
    %169 = arith.mulf %166, %168 : vector<32x32xf32>
    %170 = arith.addf %163, %169 : vector<32x32xf32>
    %c0_149 = arith.constant 0 : index
    %c125 = arith.constant 125 : index
    %171 = vector.load %arg26[%c0_149, %c125] : memref<16x288xf32, #tpu.memory_space<vmem>>, vector<16x32xf32>
    %c64_150 = arith.constant 64 : index
    %c0_151 = arith.constant 0 : index
    %172 = vector.load %arg5[%c64_150, %c0_151] : memref<288x16xf32, #tpu.memory_space<vmem>>, vector<32x16xf32>
    %cst_152 = arith.constant dense<0.000000e+00> : vector<32x32xf32>
    %173 = tpu.matmul %172, %171, %cst_152 {dimension_numbers = #tpu.dot_dimension_numbers<[1], [0], [0], [1], [0, 0, 1, 1], [], []>} : vector<32x16xf32>, vector<16x32xf32>, vector<32x32xf32> -> vector<32x32xf32>
    %c2_153 = arith.constant 2 : index
    %c0_154 = arith.constant 0 : index
    %174 = vector.load %arg17[%c2_153, %c0_154] : memref<9x32xf32, #tpu.memory_space<vmem>>, vector<1x32xf32>
    %175 = vector.broadcast %174 : vector<1x32xf32> to vector<32x32xf32>
    %176 = arith.mulf %173, %175 : vector<32x32xf32>
    %177 = arith.addf %170, %176 : vector<32x32xf32>
    %c0_155 = arith.constant 0 : index
    %c127_156 = arith.constant 127 : index
    %178 = vector.load %arg26[%c0_155, %c127_156] : memref<16x288xf32, #tpu.memory_space<vmem>>, vector<16x32xf32>
    %c96_157 = arith.constant 96 : index
    %c0_158 = arith.constant 0 : index
    %179 = vector.load %arg5[%c96_157, %c0_158] : memref<288x16xf32, #tpu.memory_space<vmem>>, vector<32x16xf32>
    %cst_159 = arith.constant dense<0.000000e+00> : vector<32x32xf32>
    %180 = tpu.matmul %179, %178, %cst_159 {dimension_numbers = #tpu.dot_dimension_numbers<[1], [0], [0], [1], [0, 0, 1, 1], [], []>} : vector<32x16xf32>, vector<16x32xf32>, vector<32x32xf32> -> vector<32x32xf32>
    %c3_160 = arith.constant 3 : index
    %c0_161 = arith.constant 0 : index
    %181 = vector.load %arg17[%c3_160, %c0_161] : memref<9x32xf32, #tpu.memory_space<vmem>>, vector<1x32xf32>
    %182 = vector.broadcast %181 : vector<1x32xf32> to vector<32x32xf32>
    %183 = arith.mulf %180, %182 : vector<32x32xf32>
    %184 = arith.addf %177, %183 : vector<32x32xf32>
    %c0_162 = arith.constant 0 : index
    %c128_163 = arith.constant 128 : index
    %185 = vector.load %arg26[%c0_162, %c128_163] : memref<16x288xf32, #tpu.memory_space<vmem>>, vector<16x32xf32>
    %c128_164 = arith.constant 128 : index
    %c0_165 = arith.constant 0 : index
    %186 = vector.load %arg5[%c128_164, %c0_165] : memref<288x16xf32, #tpu.memory_space<vmem>>, vector<32x16xf32>
    %cst_166 = arith.constant dense<0.000000e+00> : vector<32x32xf32>
    %187 = tpu.matmul %186, %185, %cst_166 {dimension_numbers = #tpu.dot_dimension_numbers<[1], [0], [0], [1], [0, 0, 1, 1], [], []>} : vector<32x16xf32>, vector<16x32xf32>, vector<32x32xf32> -> vector<32x32xf32>
    %188 = arith.addf %184, %187 : vector<32x32xf32>
    %c0_167 = arith.constant 0 : index
    %c129_168 = arith.constant 129 : index
    %189 = vector.load %arg26[%c0_167, %c129_168] : memref<16x288xf32, #tpu.memory_space<vmem>>, vector<16x32xf32>
    %c160 = arith.constant 160 : index
    %c0_169 = arith.constant 0 : index
    %190 = vector.load %arg5[%c160, %c0_169] : memref<288x16xf32, #tpu.memory_space<vmem>>, vector<32x16xf32>
    %cst_170 = arith.constant dense<0.000000e+00> : vector<32x32xf32>
    %191 = tpu.matmul %190, %189, %cst_170 {dimension_numbers = #tpu.dot_dimension_numbers<[1], [0], [0], [1], [0, 0, 1, 1], [], []>} : vector<32x16xf32>, vector<16x32xf32>, vector<32x32xf32> -> vector<32x32xf32>
    %c5_171 = arith.constant 5 : index
    %c0_172 = arith.constant 0 : index
    %192 = vector.load %arg17[%c5_171, %c0_172] : memref<9x32xf32, #tpu.memory_space<vmem>>, vector<1x32xf32>
    %193 = vector.broadcast %192 : vector<1x32xf32> to vector<32x32xf32>
    %194 = arith.mulf %191, %193 : vector<32x32xf32>
    %195 = arith.addf %188, %194 : vector<32x32xf32>
    %c0_173 = arith.constant 0 : index
    %c131 = arith.constant 131 : index
    %196 = vector.load %arg26[%c0_173, %c131] : memref<16x288xf32, #tpu.memory_space<vmem>>, vector<16x32xf32>
    %c192 = arith.constant 192 : index
    %c0_174 = arith.constant 0 : index
    %197 = vector.load %arg5[%c192, %c0_174] : memref<288x16xf32, #tpu.memory_space<vmem>>, vector<32x16xf32>
    %cst_175 = arith.constant dense<0.000000e+00> : vector<32x32xf32>
    %198 = tpu.matmul %197, %196, %cst_175 {dimension_numbers = #tpu.dot_dimension_numbers<[1], [0], [0], [1], [0, 0, 1, 1], [], []>} : vector<32x16xf32>, vector<16x32xf32>, vector<32x32xf32> -> vector<32x32xf32>
    %c6_176 = arith.constant 6 : index
    %c0_177 = arith.constant 0 : index
    %199 = vector.load %arg17[%c6_176, %c0_177] : memref<9x32xf32, #tpu.memory_space<vmem>>, vector<1x32xf32>
    %200 = vector.broadcast %199 : vector<1x32xf32> to vector<32x32xf32>
    %201 = arith.mulf %198, %200 : vector<32x32xf32>
    %202 = arith.addf %195, %201 : vector<32x32xf32>
    %c0_178 = arith.constant 0 : index
    %c132 = arith.constant 132 : index
    %203 = vector.load %arg26[%c0_178, %c132] : memref<16x288xf32, #tpu.memory_space<vmem>>, vector<16x32xf32>
    %c224 = arith.constant 224 : index
    %c0_179 = arith.constant 0 : index
    %204 = vector.load %arg5[%c224, %c0_179] : memref<288x16xf32, #tpu.memory_space<vmem>>, vector<32x16xf32>
    %cst_180 = arith.constant dense<0.000000e+00> : vector<32x32xf32>
    %205 = tpu.matmul %204, %203, %cst_180 {dimension_numbers = #tpu.dot_dimension_numbers<[1], [0], [0], [1], [0, 0, 1, 1], [], []>} : vector<32x16xf32>, vector<16x32xf32>, vector<32x32xf32> -> vector<32x32xf32>
    %c7_181 = arith.constant 7 : index
    %c0_182 = arith.constant 0 : index
    %206 = vector.load %arg17[%c7_181, %c0_182] : memref<9x32xf32, #tpu.memory_space<vmem>>, vector<1x32xf32>
    %207 = vector.broadcast %206 : vector<1x32xf32> to vector<32x32xf32>
    %208 = arith.mulf %205, %207 : vector<32x32xf32>
    %209 = arith.addf %202, %208 : vector<32x32xf32>
    %c0_183 = arith.constant 0 : index
    %c133 = arith.constant 133 : index
    %210 = vector.load %arg26[%c0_183, %c133] : memref<16x288xf32, #tpu.memory_space<vmem>>, vector<16x32xf32>
    %c256 = arith.constant 256 : index
    %c0_184 = arith.constant 0 : index
    %211 = vector.load %arg5[%c256, %c0_184] : memref<288x16xf32, #tpu.memory_space<vmem>>, vector<32x16xf32>
    %cst_185 = arith.constant dense<0.000000e+00> : vector<32x32xf32>
    %212 = tpu.matmul %211, %210, %cst_185 {dimension_numbers = #tpu.dot_dimension_numbers<[1], [0], [0], [1], [0, 0, 1, 1], [], []>} : vector<32x16xf32>, vector<16x32xf32>, vector<32x32xf32> -> vector<32x32xf32>
    %c8_186 = arith.constant 8 : index
    %c0_187 = arith.constant 0 : index
    %213 = vector.load %arg17[%c8_186, %c0_187] : memref<9x32xf32, #tpu.memory_space<vmem>>, vector<1x32xf32>
    %214 = vector.broadcast %213 : vector<1x32xf32> to vector<32x32xf32>
    %215 = arith.mulf %212, %214 : vector<32x32xf32>
    %216 = arith.addf %209, %215 : vector<32x32xf32>
    %c0_188 = arith.constant 0 : index
    %c0_189 = arith.constant 0 : index
    %217 = vector.load %arg6[%c0_188, %c0_189] : memref<32x1xf32, #tpu.memory_space<vmem>>, vector<32x1xf32>
    %218 = vector.broadcast %217 : vector<32x1xf32> to vector<32x32xf32>
    %219 = arith.addf %216, %218 : vector<32x32xf32>
    %cst_190 = arith.constant 0.000000e+00 : f32
    %220 = vector.broadcast %cst_190 : f32 to vector<32x32xf32>
    %221 = arith.maximumf %219, %220 : vector<32x32xf32>
    %c0_191 = arith.constant 0 : index
    %c0_192 = arith.constant 0 : index
    %222 = vector.load %arg20[%c0_191, %c0_192] : memref<32x128xf32, #tpu.memory_space<vmem>>, vector<32x128xf32>
    %cst_193 = arith.constant dense<0.000000e+00> : vector<32x128xf32>
    %223 = tpu.matmul %221, %222, %cst_193 {dimension_numbers = #tpu.dot_dimension_numbers<[1], [0], [0], [1], [0, 0, 1, 1], [], []>} : vector<32x32xf32>, vector<32x128xf32>, vector<32x128xf32> -> vector<32x128xf32>
    %cst_194 = arith.constant 0.000000e+00 : f32
    %224 = vector.broadcast %cst_194 : f32 to vector<32x384xf32>
    %c0_195 = arith.constant 0 : index
    %c0_196 = arith.constant 0 : index
    %225 = vector.load %arg27[%c0_195, %c0_196] : memref<32x384xf32, #tpu.memory_space<vmem>>, vector<32x384xf32>
    tpu.vector_store %arg27[%c0_195, %c0_196], %224 {strides = array<i32>} : memref<32x384xf32, #tpu.memory_space<vmem>>, vector<32x384xf32>,
    %c0_197 = arith.constant 0 : index
    %c128_198 = arith.constant 128 : index
    %226 = vector.load %arg27[%c0_197, %c128_198] : memref<32x384xf32, #tpu.memory_space<vmem>>, vector<32x128xf32>
    tpu.vector_store %arg27[%c0_197, %c128_198], %223 {strides = array<i32>} : memref<32x384xf32, #tpu.memory_space<vmem>>, vector<32x128xf32>,
    %c0_199 = arith.constant 0 : index
    %c119_200 = arith.constant 119 : index
    %227 = vector.load %arg27[%c0_199, %c119_200] : memref<32x384xf32, #tpu.memory_space<vmem>>, vector<32x128xf32>
    %c0_201 = arith.constant 0 : index
    %c0_202 = arith.constant 0 : index
    %228 = vector.load %arg7[%c0_201, %c0_202] : memref<144x32xf32, #tpu.memory_space<vmem>>, vector<16x32xf32>
    %cst_203 = arith.constant dense<0.000000e+00> : vector<16x128xf32>
    %229 = tpu.matmul %228, %227, %cst_203 {dimension_numbers = #tpu.dot_dimension_numbers<[1], [0], [0], [1], [0, 0, 1, 1], [], []>} : vector<16x32xf32>, vector<32x128xf32>, vector<16x128xf32> -> vector<16x128xf32>
    %c0_204 = arith.constant 0 : index
    %c0_205 = arith.constant 0 : index
    %230 = vector.load %arg16[%c0_204, %c0_205] : memref<9x128xf32, #tpu.memory_space<vmem>>, vector<1x128xf32>
    %231 = vector.broadcast %230 : vector<1x128xf32> to vector<16x128xf32>
    %232 = arith.mulf %229, %231 : vector<16x128xf32>
    %c0_206 = arith.constant 0 : index
    %c120_207 = arith.constant 120 : index
    %233 = vector.load %arg27[%c0_206, %c120_207] : memref<32x384xf32, #tpu.memory_space<vmem>>, vector<32x128xf32>
    %c16_208 = arith.constant 16 : index
    %c0_209 = arith.constant 0 : index
    %234 = vector.load %arg7[%c16_208, %c0_209] : memref<144x32xf32, #tpu.memory_space<vmem>>, vector<16x32xf32>
    %cst_210 = arith.constant dense<0.000000e+00> : vector<16x128xf32>
    %235 = tpu.matmul %234, %233, %cst_210 {dimension_numbers = #tpu.dot_dimension_numbers<[1], [0], [0], [1], [0, 0, 1, 1], [], []>} : vector<16x32xf32>, vector<32x128xf32>, vector<16x128xf32> -> vector<16x128xf32>
    %c1_211 = arith.constant 1 : index
    %c0_212 = arith.constant 0 : index
    %236 = vector.load %arg16[%c1_211, %c0_212] : memref<9x128xf32, #tpu.memory_space<vmem>>, vector<1x128xf32>
    %237 = vector.broadcast %236 : vector<1x128xf32> to vector<16x128xf32>
    %238 = arith.mulf %235, %237 : vector<16x128xf32>
    %239 = arith.addf %232, %238 : vector<16x128xf32>
    %c0_213 = arith.constant 0 : index
    %c121_214 = arith.constant 121 : index
    %240 = vector.load %arg27[%c0_213, %c121_214] : memref<32x384xf32, #tpu.memory_space<vmem>>, vector<32x128xf32>
    %c32_215 = arith.constant 32 : index
    %c0_216 = arith.constant 0 : index
    %241 = vector.load %arg7[%c32_215, %c0_216] : memref<144x32xf32, #tpu.memory_space<vmem>>, vector<16x32xf32>
    %cst_217 = arith.constant dense<0.000000e+00> : vector<16x128xf32>
    %242 = tpu.matmul %241, %240, %cst_217 {dimension_numbers = #tpu.dot_dimension_numbers<[1], [0], [0], [1], [0, 0, 1, 1], [], []>} : vector<16x32xf32>, vector<32x128xf32>, vector<16x128xf32> -> vector<16x128xf32>
    %c2_218 = arith.constant 2 : index
    %c0_219 = arith.constant 0 : index
    %243 = vector.load %arg16[%c2_218, %c0_219] : memref<9x128xf32, #tpu.memory_space<vmem>>, vector<1x128xf32>
    %244 = vector.broadcast %243 : vector<1x128xf32> to vector<16x128xf32>
    %245 = arith.mulf %242, %244 : vector<16x128xf32>
    %246 = arith.addf %239, %245 : vector<16x128xf32>
    %c0_220 = arith.constant 0 : index
    %c127_221 = arith.constant 127 : index
    %247 = vector.load %arg27[%c0_220, %c127_221] : memref<32x384xf32, #tpu.memory_space<vmem>>, vector<32x128xf32>
    %c48_222 = arith.constant 48 : index
    %c0_223 = arith.constant 0 : index
    %248 = vector.load %arg7[%c48_222, %c0_223] : memref<144x32xf32, #tpu.memory_space<vmem>>, vector<16x32xf32>
    %cst_224 = arith.constant dense<0.000000e+00> : vector<16x128xf32>
    %249 = tpu.matmul %248, %247, %cst_224 {dimension_numbers = #tpu.dot_dimension_numbers<[1], [0], [0], [1], [0, 0, 1, 1], [], []>} : vector<16x32xf32>, vector<32x128xf32>, vector<16x128xf32> -> vector<16x128xf32>
    %c3_225 = arith.constant 3 : index
    %c0_226 = arith.constant 0 : index
    %250 = vector.load %arg16[%c3_225, %c0_226] : memref<9x128xf32, #tpu.memory_space<vmem>>, vector<1x128xf32>
    %251 = vector.broadcast %250 : vector<1x128xf32> to vector<16x128xf32>
    %252 = arith.mulf %249, %251 : vector<16x128xf32>
    %253 = arith.addf %246, %252 : vector<16x128xf32>
    %c0_227 = arith.constant 0 : index
    %c128_228 = arith.constant 128 : index
    %254 = vector.load %arg27[%c0_227, %c128_228] : memref<32x384xf32, #tpu.memory_space<vmem>>, vector<32x128xf32>
    %c64_229 = arith.constant 64 : index
    %c0_230 = arith.constant 0 : index
    %255 = vector.load %arg7[%c64_229, %c0_230] : memref<144x32xf32, #tpu.memory_space<vmem>>, vector<16x32xf32>
    %cst_231 = arith.constant dense<0.000000e+00> : vector<16x128xf32>
    %256 = tpu.matmul %255, %254, %cst_231 {dimension_numbers = #tpu.dot_dimension_numbers<[1], [0], [0], [1], [0, 0, 1, 1], [], []>} : vector<16x32xf32>, vector<32x128xf32>, vector<16x128xf32> -> vector<16x128xf32>
    %257 = arith.addf %253, %256 : vector<16x128xf32>
    %c0_232 = arith.constant 0 : index
    %c129_233 = arith.constant 129 : index
    %258 = vector.load %arg27[%c0_232, %c129_233] : memref<32x384xf32, #tpu.memory_space<vmem>>, vector<32x128xf32>
    %c80_234 = arith.constant 80 : index
    %c0_235 = arith.constant 0 : index
    %259 = vector.load %arg7[%c80_234, %c0_235] : memref<144x32xf32, #tpu.memory_space<vmem>>, vector<16x32xf32>
    %cst_236 = arith.constant dense<0.000000e+00> : vector<16x128xf32>
    %260 = tpu.matmul %259, %258, %cst_236 {dimension_numbers = #tpu.dot_dimension_numbers<[1], [0], [0], [1], [0, 0, 1, 1], [], []>} : vector<16x32xf32>, vector<32x128xf32>, vector<16x128xf32> -> vector<16x128xf32>
    %c5_237 = arith.constant 5 : index
    %c0_238 = arith.constant 0 : index
    %261 = vector.load %arg16[%c5_237, %c0_238] : memref<9x128xf32, #tpu.memory_space<vmem>>, vector<1x128xf32>
    %262 = vector.broadcast %261 : vector<1x128xf32> to vector<16x128xf32>
    %263 = arith.mulf %260, %262 : vector<16x128xf32>
    %264 = arith.addf %257, %263 : vector<16x128xf32>
    %c0_239 = arith.constant 0 : index
    %c135_240 = arith.constant 135 : index
    %265 = vector.load %arg27[%c0_239, %c135_240] : memref<32x384xf32, #tpu.memory_space<vmem>>, vector<32x128xf32>
    %c96_241 = arith.constant 96 : index
    %c0_242 = arith.constant 0 : index
    %266 = vector.load %arg7[%c96_241, %c0_242] : memref<144x32xf32, #tpu.memory_space<vmem>>, vector<16x32xf32>
    %cst_243 = arith.constant dense<0.000000e+00> : vector<16x128xf32>
    %267 = tpu.matmul %266, %265, %cst_243 {dimension_numbers = #tpu.dot_dimension_numbers<[1], [0], [0], [1], [0, 0, 1, 1], [], []>} : vector<16x32xf32>, vector<32x128xf32>, vector<16x128xf32> -> vector<16x128xf32>
    %c6_244 = arith.constant 6 : index
    %c0_245 = arith.constant 0 : index
    %268 = vector.load %arg16[%c6_244, %c0_245] : memref<9x128xf32, #tpu.memory_space<vmem>>, vector<1x128xf32>
    %269 = vector.broadcast %268 : vector<1x128xf32> to vector<16x128xf32>
    %270 = arith.mulf %267, %269 : vector<16x128xf32>
    %271 = arith.addf %264, %270 : vector<16x128xf32>
    %c0_246 = arith.constant 0 : index
    %c136_247 = arith.constant 136 : index
    %272 = vector.load %arg27[%c0_246, %c136_247] : memref<32x384xf32, #tpu.memory_space<vmem>>, vector<32x128xf32>
    %c112_248 = arith.constant 112 : index
    %c0_249 = arith.constant 0 : index
    %273 = vector.load %arg7[%c112_248, %c0_249] : memref<144x32xf32, #tpu.memory_space<vmem>>, vector<16x32xf32>
    %cst_250 = arith.constant dense<0.000000e+00> : vector<16x128xf32>
    %274 = tpu.matmul %273, %272, %cst_250 {dimension_numbers = #tpu.dot_dimension_numbers<[1], [0], [0], [1], [0, 0, 1, 1], [], []>} : vector<16x32xf32>, vector<32x128xf32>, vector<16x128xf32> -> vector<16x128xf32>
    %c7_251 = arith.constant 7 : index
    %c0_252 = arith.constant 0 : index
    %275 = vector.load %arg16[%c7_251, %c0_252] : memref<9x128xf32, #tpu.memory_space<vmem>>, vector<1x128xf32>
    %276 = vector.broadcast %275 : vector<1x128xf32> to vector<16x128xf32>
    %277 = arith.mulf %274, %276 : vector<16x128xf32>
    %278 = arith.addf %271, %277 : vector<16x128xf32>
    %c0_253 = arith.constant 0 : index
    %c137_254 = arith.constant 137 : index
    %279 = vector.load %arg27[%c0_253, %c137_254] : memref<32x384xf32, #tpu.memory_space<vmem>>, vector<32x128xf32>
    %c128_255 = arith.constant 128 : index
    %c0_256 = arith.constant 0 : index
    %280 = vector.load %arg7[%c128_255, %c0_256] : memref<144x32xf32, #tpu.memory_space<vmem>>, vector<16x32xf32>
    %cst_257 = arith.constant dense<0.000000e+00> : vector<16x128xf32>
    %281 = tpu.matmul %280, %279, %cst_257 {dimension_numbers = #tpu.dot_dimension_numbers<[1], [0], [0], [1], [0, 0, 1, 1], [], []>} : vector<16x32xf32>, vector<32x128xf32>, vector<16x128xf32> -> vector<16x128xf32>
    %c8_258 = arith.constant 8 : index
    %c0_259 = arith.constant 0 : index
    %282 = vector.load %arg16[%c8_258, %c0_259] : memref<9x128xf32, #tpu.memory_space<vmem>>, vector<1x128xf32>
    %283 = vector.broadcast %282 : vector<1x128xf32> to vector<16x128xf32>
    %284 = arith.mulf %281, %283 : vector<16x128xf32>
    %285 = arith.addf %278, %284 : vector<16x128xf32>
    %c0_260 = arith.constant 0 : index
    %c119_261 = arith.constant 119 : index
    %286 = vector.load %arg25[%c0_260, %c119_261] : memref<16x384xf32, #tpu.memory_space<vmem>>, vector<16x128xf32>
    %c0_262 = arith.constant 0 : index
    %c0_263 = arith.constant 0 : index
    %287 = vector.load %arg8[%c0_262, %c0_263] : memref<144x16xf32, #tpu.memory_space<vmem>>, vector<16x16xf32>
    %cst_264 = arith.constant dense<0.000000e+00> : vector<16x128xf32>
    %288 = tpu.matmul %287, %286, %cst_264 {dimension_numbers = #tpu.dot_dimension_numbers<[1], [0], [0], [1], [0, 0, 1, 1], [], []>} : vector<16x16xf32>, vector<16x128xf32>, vector<16x128xf32> -> vector<16x128xf32>
    %c0_265 = arith.constant 0 : index
    %c0_266 = arith.constant 0 : index
    %289 = vector.load %arg16[%c0_265, %c0_266] : memref<9x128xf32, #tpu.memory_space<vmem>>, vector<1x128xf32>
    %290 = vector.broadcast %289 : vector<1x128xf32> to vector<16x128xf32>
    %291 = arith.mulf %288, %290 : vector<16x128xf32>
    %c0_267 = arith.constant 0 : index
    %c120_268 = arith.constant 120 : index
    %292 = vector.load %arg25[%c0_267, %c120_268] : memref<16x384xf32, #tpu.memory_space<vmem>>, vector<16x128xf32>
    %c16_269 = arith.constant 16 : index
    %c0_270 = arith.constant 0 : index
    %293 = vector.load %arg8[%c16_269, %c0_270] : memref<144x16xf32, #tpu.memory_space<vmem>>, vector<16x16xf32>
    %cst_271 = arith.constant dense<0.000000e+00> : vector<16x128xf32>
    %294 = tpu.matmul %293, %292, %cst_271 {dimension_numbers = #tpu.dot_dimension_numbers<[1], [0], [0], [1], [0, 0, 1, 1], [], []>} : vector<16x16xf32>, vector<16x128xf32>, vector<16x128xf32> -> vector<16x128xf32>
    %c1_272 = arith.constant 1 : index
    %c0_273 = arith.constant 0 : index
    %295 = vector.load %arg16[%c1_272, %c0_273] : memref<9x128xf32, #tpu.memory_space<vmem>>, vector<1x128xf32>
    %296 = vector.broadcast %295 : vector<1x128xf32> to vector<16x128xf32>
    %297 = arith.mulf %294, %296 : vector<16x128xf32>
    %298 = arith.addf %291, %297 : vector<16x128xf32>
    %c0_274 = arith.constant 0 : index
    %c121_275 = arith.constant 121 : index
    %299 = vector.load %arg25[%c0_274, %c121_275] : memref<16x384xf32, #tpu.memory_space<vmem>>, vector<16x128xf32>
    %c32_276 = arith.constant 32 : index
    %c0_277 = arith.constant 0 : index
    %300 = vector.load %arg8[%c32_276, %c0_277] : memref<144x16xf32, #tpu.memory_space<vmem>>, vector<16x16xf32>
    %cst_278 = arith.constant dense<0.000000e+00> : vector<16x128xf32>
    %301 = tpu.matmul %300, %299, %cst_278 {dimension_numbers = #tpu.dot_dimension_numbers<[1], [0], [0], [1], [0, 0, 1, 1], [], []>} : vector<16x16xf32>, vector<16x128xf32>, vector<16x128xf32> -> vector<16x128xf32>
    %c2_279 = arith.constant 2 : index
    %c0_280 = arith.constant 0 : index
    %302 = vector.load %arg16[%c2_279, %c0_280] : memref<9x128xf32, #tpu.memory_space<vmem>>, vector<1x128xf32>
    %303 = vector.broadcast %302 : vector<1x128xf32> to vector<16x128xf32>
    %304 = arith.mulf %301, %303 : vector<16x128xf32>
    %305 = arith.addf %298, %304 : vector<16x128xf32>
    %c0_281 = arith.constant 0 : index
    %c127_282 = arith.constant 127 : index
    %306 = vector.load %arg25[%c0_281, %c127_282] : memref<16x384xf32, #tpu.memory_space<vmem>>, vector<16x128xf32>
    %c48_283 = arith.constant 48 : index
    %c0_284 = arith.constant 0 : index
    %307 = vector.load %arg8[%c48_283, %c0_284] : memref<144x16xf32, #tpu.memory_space<vmem>>, vector<16x16xf32>
    %cst_285 = arith.constant dense<0.000000e+00> : vector<16x128xf32>
    %308 = tpu.matmul %307, %306, %cst_285 {dimension_numbers = #tpu.dot_dimension_numbers<[1], [0], [0], [1], [0, 0, 1, 1], [], []>} : vector<16x16xf32>, vector<16x128xf32>, vector<16x128xf32> -> vector<16x128xf32>
    %c3_286 = arith.constant 3 : index
    %c0_287 = arith.constant 0 : index
    %309 = vector.load %arg16[%c3_286, %c0_287] : memref<9x128xf32, #tpu.memory_space<vmem>>, vector<1x128xf32>
    %310 = vector.broadcast %309 : vector<1x128xf32> to vector<16x128xf32>
    %311 = arith.mulf %308, %310 : vector<16x128xf32>
    %312 = arith.addf %305, %311 : vector<16x128xf32>
    %c0_288 = arith.constant 0 : index
    %c128_289 = arith.constant 128 : index
    %313 = vector.load %arg25[%c0_288, %c128_289] : memref<16x384xf32, #tpu.memory_space<vmem>>, vector<16x128xf32>
    %c64_290 = arith.constant 64 : index
    %c0_291 = arith.constant 0 : index
    %314 = vector.load %arg8[%c64_290, %c0_291] : memref<144x16xf32, #tpu.memory_space<vmem>>, vector<16x16xf32>
    %cst_292 = arith.constant dense<0.000000e+00> : vector<16x128xf32>
    %315 = tpu.matmul %314, %313, %cst_292 {dimension_numbers = #tpu.dot_dimension_numbers<[1], [0], [0], [1], [0, 0, 1, 1], [], []>} : vector<16x16xf32>, vector<16x128xf32>, vector<16x128xf32> -> vector<16x128xf32>
    %316 = arith.addf %312, %315 : vector<16x128xf32>
    %c0_293 = arith.constant 0 : index
    %c129_294 = arith.constant 129 : index
    %317 = vector.load %arg25[%c0_293, %c129_294] : memref<16x384xf32, #tpu.memory_space<vmem>>, vector<16x128xf32>
    %c80_295 = arith.constant 80 : index
    %c0_296 = arith.constant 0 : index
    %318 = vector.load %arg8[%c80_295, %c0_296] : memref<144x16xf32, #tpu.memory_space<vmem>>, vector<16x16xf32>
    %cst_297 = arith.constant dense<0.000000e+00> : vector<16x128xf32>
    %319 = tpu.matmul %318, %317, %cst_297 {dimension_numbers = #tpu.dot_dimension_numbers<[1], [0], [0], [1], [0, 0, 1, 1], [], []>} : vector<16x16xf32>, vector<16x128xf32>, vector<16x128xf32> -> vector<16x128xf32>
    %c5_298 = arith.constant 5 : index
    %c0_299 = arith.constant 0 : index
    %320 = vector.load %arg16[%c5_298, %c0_299] : memref<9x128xf32, #tpu.memory_space<vmem>>, vector<1x128xf32>
    %321 = vector.broadcast %320 : vector<1x128xf32> to vector<16x128xf32>
    %322 = arith.mulf %319, %321 : vector<16x128xf32>
    %323 = arith.addf %316, %322 : vector<16x128xf32>
    %c0_300 = arith.constant 0 : index
    %c135_301 = arith.constant 135 : index
    %324 = vector.load %arg25[%c0_300, %c135_301] : memref<16x384xf32, #tpu.memory_space<vmem>>, vector<16x128xf32>
    %c96_302 = arith.constant 96 : index
    %c0_303 = arith.constant 0 : index
    %325 = vector.load %arg8[%c96_302, %c0_303] : memref<144x16xf32, #tpu.memory_space<vmem>>, vector<16x16xf32>
    %cst_304 = arith.constant dense<0.000000e+00> : vector<16x128xf32>
    %326 = tpu.matmul %325, %324, %cst_304 {dimension_numbers = #tpu.dot_dimension_numbers<[1], [0], [0], [1], [0, 0, 1, 1], [], []>} : vector<16x16xf32>, vector<16x128xf32>, vector<16x128xf32> -> vector<16x128xf32>
    %c6_305 = arith.constant 6 : index
    %c0_306 = arith.constant 0 : index
    %327 = vector.load %arg16[%c6_305, %c0_306] : memref<9x128xf32, #tpu.memory_space<vmem>>, vector<1x128xf32>
    %328 = vector.broadcast %327 : vector<1x128xf32> to vector<16x128xf32>
    %329 = arith.mulf %326, %328 : vector<16x128xf32>
    %330 = arith.addf %323, %329 : vector<16x128xf32>
    %c0_307 = arith.constant 0 : index
    %c136_308 = arith.constant 136 : index
    %331 = vector.load %arg25[%c0_307, %c136_308] : memref<16x384xf32, #tpu.memory_space<vmem>>, vector<16x128xf32>
    %c112_309 = arith.constant 112 : index
    %c0_310 = arith.constant 0 : index
    %332 = vector.load %arg8[%c112_309, %c0_310] : memref<144x16xf32, #tpu.memory_space<vmem>>, vector<16x16xf32>
    %cst_311 = arith.constant dense<0.000000e+00> : vector<16x128xf32>
    %333 = tpu.matmul %332, %331, %cst_311 {dimension_numbers = #tpu.dot_dimension_numbers<[1], [0], [0], [1], [0, 0, 1, 1], [], []>} : vector<16x16xf32>, vector<16x128xf32>, vector<16x128xf32> -> vector<16x128xf32>
    %c7_312 = arith.constant 7 : index
    %c0_313 = arith.constant 0 : index
    %334 = vector.load %arg16[%c7_312, %c0_313] : memref<9x128xf32, #tpu.memory_space<vmem>>, vector<1x128xf32>
    %335 = vector.broadcast %334 : vector<1x128xf32> to vector<16x128xf32>
    %336 = arith.mulf %333, %335 : vector<16x128xf32>
    %337 = arith.addf %330, %336 : vector<16x128xf32>
    %c0_314 = arith.constant 0 : index
    %c137_315 = arith.constant 137 : index
    %338 = vector.load %arg25[%c0_314, %c137_315] : memref<16x384xf32, #tpu.memory_space<vmem>>, vector<16x128xf32>
    %c128_316 = arith.constant 128 : index
    %c0_317 = arith.constant 0 : index
    %339 = vector.load %arg8[%c128_316, %c0_317] : memref<144x16xf32, #tpu.memory_space<vmem>>, vector<16x16xf32>
    %cst_318 = arith.constant dense<0.000000e+00> : vector<16x128xf32>
    %340 = tpu.matmul %339, %338, %cst_318 {dimension_numbers = #tpu.dot_dimension_numbers<[1], [0], [0], [1], [0, 0, 1, 1], [], []>} : vector<16x16xf32>, vector<16x128xf32>, vector<16x128xf32> -> vector<16x128xf32>
    %c8_319 = arith.constant 8 : index
    %c0_320 = arith.constant 0 : index
    %341 = vector.load %arg16[%c8_319, %c0_320] : memref<9x128xf32, #tpu.memory_space<vmem>>, vector<1x128xf32>
    %342 = vector.broadcast %341 : vector<1x128xf32> to vector<16x128xf32>
    %343 = arith.mulf %340, %342 : vector<16x128xf32>
    %344 = arith.addf %337, %343 : vector<16x128xf32>
    %345 = arith.addf %285, %344 : vector<16x128xf32>
    %c0_321 = arith.constant 0 : index
    %c0_322 = arith.constant 0 : index
    %346 = vector.load %arg9[%c0_321, %c0_322] : memref<16x1xf32, #tpu.memory_space<vmem>>, vector<16x1xf32>
    %347 = vector.broadcast %346 : vector<16x1xf32> to vector<16x128xf32>
    %348 = arith.addf %345, %347 : vector<16x128xf32>
    %cst_323 = arith.constant 0.000000e+00 : f32
    %349 = vector.broadcast %cst_323 : f32 to vector<16x128xf32>
    %350 = arith.maximumf %348, %349 : vector<16x128xf32>
    %c0_324 = arith.constant 0 : index
    %c0_325 = arith.constant 0 : index
    %351 = vector.load %arg21[%c0_324, %c0_325] : memref<128x512xf32, #tpu.memory_space<vmem>>, vector<128x512xf32>
    %cst_326 = arith.constant dense<0.000000e+00> : vector<16x512xf32>
    %352 = tpu.matmul %350, %351, %cst_326 {dimension_numbers = #tpu.dot_dimension_numbers<[1], [0], [0], [1], [0, 0, 1, 1], [], []>} : vector<16x128xf32>, vector<128x512xf32>, vector<16x512xf32> -> vector<16x512xf32>
    %cst_327 = arith.constant 0.000000e+00 : f32
    %353 = vector.broadcast %cst_327 : f32 to vector<16x768xf32>
    %c0_328 = arith.constant 0 : index
    %c0_329 = arith.constant 0 : index
    %354 = vector.load %arg28[%c0_328, %c0_329] : memref<16x768xf32, #tpu.memory_space<vmem>>, vector<16x768xf32>
    tpu.vector_store %arg28[%c0_328, %c0_329], %353 {strides = array<i32>} : memref<16x768xf32, #tpu.memory_space<vmem>>, vector<16x768xf32>,
    %c0_330 = arith.constant 0 : index
    %c128_331 = arith.constant 128 : index
    %355 = vector.load %arg28[%c0_330, %c128_331] : memref<16x768xf32, #tpu.memory_space<vmem>>, vector<16x512xf32>
    tpu.vector_store %arg28[%c0_330, %c128_331], %352 {strides = array<i32>} : memref<16x768xf32, #tpu.memory_space<vmem>>, vector<16x512xf32>,
    %c0_332 = arith.constant 0 : index
    %c111_333 = arith.constant 111 : index
    %356 = vector.load %arg28[%c0_332, %c111_333] : memref<16x768xf32, #tpu.memory_space<vmem>>, vector<16x512xf32>
    %c0_334 = arith.constant 0 : index
    %c0_335 = arith.constant 0 : index
    %357 = vector.load %arg10[%c0_334, %c0_335] : memref<72x16xf32, #tpu.memory_space<vmem>>, vector<8x16xf32>
    %cst_336 = arith.constant dense<0.000000e+00> : vector<8x512xf32>
    %358 = tpu.matmul %357, %356, %cst_336 {dimension_numbers = #tpu.dot_dimension_numbers<[1], [0], [0], [1], [0, 0, 1, 1], [], []>} : vector<8x16xf32>, vector<16x512xf32>, vector<8x512xf32> -> vector<8x512xf32>
    %c0_337 = arith.constant 0 : index
    %c0_338 = arith.constant 0 : index
    %359 = vector.load %arg15[%c0_337, %c0_338] : memref<9x512xf32, #tpu.memory_space<vmem>>, vector<1x512xf32>
    %360 = vector.broadcast %359 : vector<1x512xf32> to vector<8x512xf32>
    %361 = arith.mulf %358, %360 : vector<8x512xf32>
    %c0_339 = arith.constant 0 : index
    %c112_340 = arith.constant 112 : index
    %362 = vector.load %arg28[%c0_339, %c112_340] : memref<16x768xf32, #tpu.memory_space<vmem>>, vector<16x512xf32>
    %c8_341 = arith.constant 8 : index
    %c0_342 = arith.constant 0 : index
    %363 = vector.load %arg10[%c8_341, %c0_342] : memref<72x16xf32, #tpu.memory_space<vmem>>, vector<8x16xf32>
    %cst_343 = arith.constant dense<0.000000e+00> : vector<8x512xf32>
    %364 = tpu.matmul %363, %362, %cst_343 {dimension_numbers = #tpu.dot_dimension_numbers<[1], [0], [0], [1], [0, 0, 1, 1], [], []>} : vector<8x16xf32>, vector<16x512xf32>, vector<8x512xf32> -> vector<8x512xf32>
    %c1_344 = arith.constant 1 : index
    %c0_345 = arith.constant 0 : index
    %365 = vector.load %arg15[%c1_344, %c0_345] : memref<9x512xf32, #tpu.memory_space<vmem>>, vector<1x512xf32>
    %366 = vector.broadcast %365 : vector<1x512xf32> to vector<8x512xf32>
    %367 = arith.mulf %364, %366 : vector<8x512xf32>
    %368 = arith.addf %361, %367 : vector<8x512xf32>
    %c0_346 = arith.constant 0 : index
    %c113_347 = arith.constant 113 : index
    %369 = vector.load %arg28[%c0_346, %c113_347] : memref<16x768xf32, #tpu.memory_space<vmem>>, vector<16x512xf32>
    %c16_348 = arith.constant 16 : index
    %c0_349 = arith.constant 0 : index
    %370 = vector.load %arg10[%c16_348, %c0_349] : memref<72x16xf32, #tpu.memory_space<vmem>>, vector<8x16xf32>
    %cst_350 = arith.constant dense<0.000000e+00> : vector<8x512xf32>
    %371 = tpu.matmul %370, %369, %cst_350 {dimension_numbers = #tpu.dot_dimension_numbers<[1], [0], [0], [1], [0, 0, 1, 1], [], []>} : vector<8x16xf32>, vector<16x512xf32>, vector<8x512xf32> -> vector<8x512xf32>
    %c2_351 = arith.constant 2 : index
    %c0_352 = arith.constant 0 : index
    %372 = vector.load %arg15[%c2_351, %c0_352] : memref<9x512xf32, #tpu.memory_space<vmem>>, vector<1x512xf32>
    %373 = vector.broadcast %372 : vector<1x512xf32> to vector<8x512xf32>
    %374 = arith.mulf %371, %373 : vector<8x512xf32>
    %375 = arith.addf %368, %374 : vector<8x512xf32>
    %c0_353 = arith.constant 0 : index
    %c127_354 = arith.constant 127 : index
    %376 = vector.load %arg28[%c0_353, %c127_354] : memref<16x768xf32, #tpu.memory_space<vmem>>, vector<16x512xf32>
    %c24_355 = arith.constant 24 : index
    %c0_356 = arith.constant 0 : index
    %377 = vector.load %arg10[%c24_355, %c0_356] : memref<72x16xf32, #tpu.memory_space<vmem>>, vector<8x16xf32>
    %cst_357 = arith.constant dense<0.000000e+00> : vector<8x512xf32>
    %378 = tpu.matmul %377, %376, %cst_357 {dimension_numbers = #tpu.dot_dimension_numbers<[1], [0], [0], [1], [0, 0, 1, 1], [], []>} : vector<8x16xf32>, vector<16x512xf32>, vector<8x512xf32> -> vector<8x512xf32>
    %c3_358 = arith.constant 3 : index
    %c0_359 = arith.constant 0 : index
    %379 = vector.load %arg15[%c3_358, %c0_359] : memref<9x512xf32, #tpu.memory_space<vmem>>, vector<1x512xf32>
    %380 = vector.broadcast %379 : vector<1x512xf32> to vector<8x512xf32>
    %381 = arith.mulf %378, %380 : vector<8x512xf32>
    %382 = arith.addf %375, %381 : vector<8x512xf32>
    %c0_360 = arith.constant 0 : index
    %c128_361 = arith.constant 128 : index
    %383 = vector.load %arg28[%c0_360, %c128_361] : memref<16x768xf32, #tpu.memory_space<vmem>>, vector<16x512xf32>
    %c32_362 = arith.constant 32 : index
    %c0_363 = arith.constant 0 : index
    %384 = vector.load %arg10[%c32_362, %c0_363] : memref<72x16xf32, #tpu.memory_space<vmem>>, vector<8x16xf32>
    %cst_364 = arith.constant dense<0.000000e+00> : vector<8x512xf32>
    %385 = tpu.matmul %384, %383, %cst_364 {dimension_numbers = #tpu.dot_dimension_numbers<[1], [0], [0], [1], [0, 0, 1, 1], [], []>} : vector<8x16xf32>, vector<16x512xf32>, vector<8x512xf32> -> vector<8x512xf32>
    %386 = arith.addf %382, %385 : vector<8x512xf32>
    %c0_365 = arith.constant 0 : index
    %c129_366 = arith.constant 129 : index
    %387 = vector.load %arg28[%c0_365, %c129_366] : memref<16x768xf32, #tpu.memory_space<vmem>>, vector<16x512xf32>
    %c40_367 = arith.constant 40 : index
    %c0_368 = arith.constant 0 : index
    %388 = vector.load %arg10[%c40_367, %c0_368] : memref<72x16xf32, #tpu.memory_space<vmem>>, vector<8x16xf32>
    %cst_369 = arith.constant dense<0.000000e+00> : vector<8x512xf32>
    %389 = tpu.matmul %388, %387, %cst_369 {dimension_numbers = #tpu.dot_dimension_numbers<[1], [0], [0], [1], [0, 0, 1, 1], [], []>} : vector<8x16xf32>, vector<16x512xf32>, vector<8x512xf32> -> vector<8x512xf32>
    %c5_370 = arith.constant 5 : index
    %c0_371 = arith.constant 0 : index
    %390 = vector.load %arg15[%c5_370, %c0_371] : memref<9x512xf32, #tpu.memory_space<vmem>>, vector<1x512xf32>
    %391 = vector.broadcast %390 : vector<1x512xf32> to vector<8x512xf32>
    %392 = arith.mulf %389, %391 : vector<8x512xf32>
    %393 = arith.addf %386, %392 : vector<8x512xf32>
    %c0_372 = arith.constant 0 : index
    %c143_373 = arith.constant 143 : index
    %394 = vector.load %arg28[%c0_372, %c143_373] : memref<16x768xf32, #tpu.memory_space<vmem>>, vector<16x512xf32>
    %c48_374 = arith.constant 48 : index
    %c0_375 = arith.constant 0 : index
    %395 = vector.load %arg10[%c48_374, %c0_375] : memref<72x16xf32, #tpu.memory_space<vmem>>, vector<8x16xf32>
    %cst_376 = arith.constant dense<0.000000e+00> : vector<8x512xf32>
    %396 = tpu.matmul %395, %394, %cst_376 {dimension_numbers = #tpu.dot_dimension_numbers<[1], [0], [0], [1], [0, 0, 1, 1], [], []>} : vector<8x16xf32>, vector<16x512xf32>, vector<8x512xf32> -> vector<8x512xf32>
    %c6_377 = arith.constant 6 : index
    %c0_378 = arith.constant 0 : index
    %397 = vector.load %arg15[%c6_377, %c0_378] : memref<9x512xf32, #tpu.memory_space<vmem>>, vector<1x512xf32>
    %398 = vector.broadcast %397 : vector<1x512xf32> to vector<8x512xf32>
    %399 = arith.mulf %396, %398 : vector<8x512xf32>
    %400 = arith.addf %393, %399 : vector<8x512xf32>
    %c0_379 = arith.constant 0 : index
    %c144_380 = arith.constant 144 : index
    %401 = vector.load %arg28[%c0_379, %c144_380] : memref<16x768xf32, #tpu.memory_space<vmem>>, vector<16x512xf32>
    %c56_381 = arith.constant 56 : index
    %c0_382 = arith.constant 0 : index
    %402 = vector.load %arg10[%c56_381, %c0_382] : memref<72x16xf32, #tpu.memory_space<vmem>>, vector<8x16xf32>
    %cst_383 = arith.constant dense<0.000000e+00> : vector<8x512xf32>
    %403 = tpu.matmul %402, %401, %cst_383 {dimension_numbers = #tpu.dot_dimension_numbers<[1], [0], [0], [1], [0, 0, 1, 1], [], []>} : vector<8x16xf32>, vector<16x512xf32>, vector<8x512xf32> -> vector<8x512xf32>
    %c7_384 = arith.constant 7 : index
    %c0_385 = arith.constant 0 : index
    %404 = vector.load %arg15[%c7_384, %c0_385] : memref<9x512xf32, #tpu.memory_space<vmem>>, vector<1x512xf32>
    %405 = vector.broadcast %404 : vector<1x512xf32> to vector<8x512xf32>
    %406 = arith.mulf %403, %405 : vector<8x512xf32>
    %407 = arith.addf %400, %406 : vector<8x512xf32>
    %c0_386 = arith.constant 0 : index
    %c145_387 = arith.constant 145 : index
    %408 = vector.load %arg28[%c0_386, %c145_387] : memref<16x768xf32, #tpu.memory_space<vmem>>, vector<16x512xf32>
    %c64_388 = arith.constant 64 : index
    %c0_389 = arith.constant 0 : index
    %409 = vector.load %arg10[%c64_388, %c0_389] : memref<72x16xf32, #tpu.memory_space<vmem>>, vector<8x16xf32>
    %cst_390 = arith.constant dense<0.000000e+00> : vector<8x512xf32>
    %410 = tpu.matmul %409, %408, %cst_390 {dimension_numbers = #tpu.dot_dimension_numbers<[1], [0], [0], [1], [0, 0, 1, 1], [], []>} : vector<8x16xf32>, vector<16x512xf32>, vector<8x512xf32> -> vector<8x512xf32>
    %c8_391 = arith.constant 8 : index
    %c0_392 = arith.constant 0 : index
    %411 = vector.load %arg15[%c8_391, %c0_392] : memref<9x512xf32, #tpu.memory_space<vmem>>, vector<1x512xf32>
    %412 = vector.broadcast %411 : vector<1x512xf32> to vector<8x512xf32>
    %413 = arith.mulf %410, %412 : vector<8x512xf32>
    %414 = arith.addf %407, %413 : vector<8x512xf32>
    %c0_393 = arith.constant 0 : index
    %c111_394 = arith.constant 111 : index
    %415 = vector.load %arg23[%c0_393, %c111_394] : memref<8x768xf32, #tpu.memory_space<vmem>>, vector<8x512xf32>
    %c0_395 = arith.constant 0 : index
    %c0_396 = arith.constant 0 : index
    %416 = vector.load %arg11[%c0_395, %c0_396] : memref<72x8xf32, #tpu.memory_space<vmem>>, vector<8x8xf32>
    %cst_397 = arith.constant dense<0.000000e+00> : vector<8x512xf32>
    %417 = tpu.matmul %416, %415, %cst_397 {dimension_numbers = #tpu.dot_dimension_numbers<[1], [0], [0], [1], [0, 0, 1, 1], [], []>} : vector<8x8xf32>, vector<8x512xf32>, vector<8x512xf32> -> vector<8x512xf32>
    %c0_398 = arith.constant 0 : index
    %c0_399 = arith.constant 0 : index
    %418 = vector.load %arg15[%c0_398, %c0_399] : memref<9x512xf32, #tpu.memory_space<vmem>>, vector<1x512xf32>
    %419 = vector.broadcast %418 : vector<1x512xf32> to vector<8x512xf32>
    %420 = arith.mulf %417, %419 : vector<8x512xf32>
    %c0_400 = arith.constant 0 : index
    %c112_401 = arith.constant 112 : index
    %421 = vector.load %arg23[%c0_400, %c112_401] : memref<8x768xf32, #tpu.memory_space<vmem>>, vector<8x512xf32>
    %c8_402 = arith.constant 8 : index
    %c0_403 = arith.constant 0 : index
    %422 = vector.load %arg11[%c8_402, %c0_403] : memref<72x8xf32, #tpu.memory_space<vmem>>, vector<8x8xf32>
    %cst_404 = arith.constant dense<0.000000e+00> : vector<8x512xf32>
    %423 = tpu.matmul %422, %421, %cst_404 {dimension_numbers = #tpu.dot_dimension_numbers<[1], [0], [0], [1], [0, 0, 1, 1], [], []>} : vector<8x8xf32>, vector<8x512xf32>, vector<8x512xf32> -> vector<8x512xf32>
    %c1_405 = arith.constant 1 : index
    %c0_406 = arith.constant 0 : index
    %424 = vector.load %arg15[%c1_405, %c0_406] : memref<9x512xf32, #tpu.memory_space<vmem>>, vector<1x512xf32>
    %425 = vector.broadcast %424 : vector<1x512xf32> to vector<8x512xf32>
    %426 = arith.mulf %423, %425 : vector<8x512xf32>
    %427 = arith.addf %420, %426 : vector<8x512xf32>
    %c0_407 = arith.constant 0 : index
    %c113_408 = arith.constant 113 : index
    %428 = vector.load %arg23[%c0_407, %c113_408] : memref<8x768xf32, #tpu.memory_space<vmem>>, vector<8x512xf32>
    %c16_409 = arith.constant 16 : index
    %c0_410 = arith.constant 0 : index
    %429 = vector.load %arg11[%c16_409, %c0_410] : memref<72x8xf32, #tpu.memory_space<vmem>>, vector<8x8xf32>
    %cst_411 = arith.constant dense<0.000000e+00> : vector<8x512xf32>
    %430 = tpu.matmul %429, %428, %cst_411 {dimension_numbers = #tpu.dot_dimension_numbers<[1], [0], [0], [1], [0, 0, 1, 1], [], []>} : vector<8x8xf32>, vector<8x512xf32>, vector<8x512xf32> -> vector<8x512xf32>
    %c2_412 = arith.constant 2 : index
    %c0_413 = arith.constant 0 : index
    %431 = vector.load %arg15[%c2_412, %c0_413] : memref<9x512xf32, #tpu.memory_space<vmem>>, vector<1x512xf32>
    %432 = vector.broadcast %431 : vector<1x512xf32> to vector<8x512xf32>
    %433 = arith.mulf %430, %432 : vector<8x512xf32>
    %434 = arith.addf %427, %433 : vector<8x512xf32>
    %c0_414 = arith.constant 0 : index
    %c127_415 = arith.constant 127 : index
    %435 = vector.load %arg23[%c0_414, %c127_415] : memref<8x768xf32, #tpu.memory_space<vmem>>, vector<8x512xf32>
    %c24_416 = arith.constant 24 : index
    %c0_417 = arith.constant 0 : index
    %436 = vector.load %arg11[%c24_416, %c0_417] : memref<72x8xf32, #tpu.memory_space<vmem>>, vector<8x8xf32>
    %cst_418 = arith.constant dense<0.000000e+00> : vector<8x512xf32>
    %437 = tpu.matmul %436, %435, %cst_418 {dimension_numbers = #tpu.dot_dimension_numbers<[1], [0], [0], [1], [0, 0, 1, 1], [], []>} : vector<8x8xf32>, vector<8x512xf32>, vector<8x512xf32> -> vector<8x512xf32>
    %c3_419 = arith.constant 3 : index
    %c0_420 = arith.constant 0 : index
    %438 = vector.load %arg15[%c3_419, %c0_420] : memref<9x512xf32, #tpu.memory_space<vmem>>, vector<1x512xf32>
    %439 = vector.broadcast %438 : vector<1x512xf32> to vector<8x512xf32>
    %440 = arith.mulf %437, %439 : vector<8x512xf32>
    %441 = arith.addf %434, %440 : vector<8x512xf32>
    %c0_421 = arith.constant 0 : index
    %c128_422 = arith.constant 128 : index
    %442 = vector.load %arg23[%c0_421, %c128_422] : memref<8x768xf32, #tpu.memory_space<vmem>>, vector<8x512xf32>
    %c32_423 = arith.constant 32 : index
    %c0_424 = arith.constant 0 : index
    %443 = vector.load %arg11[%c32_423, %c0_424] : memref<72x8xf32, #tpu.memory_space<vmem>>, vector<8x8xf32>
    %cst_425 = arith.constant dense<0.000000e+00> : vector<8x512xf32>
    %444 = tpu.matmul %443, %442, %cst_425 {dimension_numbers = #tpu.dot_dimension_numbers<[1], [0], [0], [1], [0, 0, 1, 1], [], []>} : vector<8x8xf32>, vector<8x512xf32>, vector<8x512xf32> -> vector<8x512xf32>
    %445 = arith.addf %441, %444 : vector<8x512xf32>
    %c0_426 = arith.constant 0 : index
    %c129_427 = arith.constant 129 : index
    %446 = vector.load %arg23[%c0_426, %c129_427] : memref<8x768xf32, #tpu.memory_space<vmem>>, vector<8x512xf32>
    %c40_428 = arith.constant 40 : index
    %c0_429 = arith.constant 0 : index
    %447 = vector.load %arg11[%c40_428, %c0_429] : memref<72x8xf32, #tpu.memory_space<vmem>>, vector<8x8xf32>
    %cst_430 = arith.constant dense<0.000000e+00> : vector<8x512xf32>
    %448 = tpu.matmul %447, %446, %cst_430 {dimension_numbers = #tpu.dot_dimension_numbers<[1], [0], [0], [1], [0, 0, 1, 1], [], []>} : vector<8x8xf32>, vector<8x512xf32>, vector<8x512xf32> -> vector<8x512xf32>
    %c5_431 = arith.constant 5 : index
    %c0_432 = arith.constant 0 : index
    %449 = vector.load %arg15[%c5_431, %c0_432] : memref<9x512xf32, #tpu.memory_space<vmem>>, vector<1x512xf32>
    %450 = vector.broadcast %449 : vector<1x512xf32> to vector<8x512xf32>
    %451 = arith.mulf %448, %450 : vector<8x512xf32>
    %452 = arith.addf %445, %451 : vector<8x512xf32>
    %c0_433 = arith.constant 0 : index
    %c143_434 = arith.constant 143 : index
    %453 = vector.load %arg23[%c0_433, %c143_434] : memref<8x768xf32, #tpu.memory_space<vmem>>, vector<8x512xf32>
    %c48_435 = arith.constant 48 : index
    %c0_436 = arith.constant 0 : index
    %454 = vector.load %arg11[%c48_435, %c0_436] : memref<72x8xf32, #tpu.memory_space<vmem>>, vector<8x8xf32>
    %cst_437 = arith.constant dense<0.000000e+00> : vector<8x512xf32>
    %455 = tpu.matmul %454, %453, %cst_437 {dimension_numbers = #tpu.dot_dimension_numbers<[1], [0], [0], [1], [0, 0, 1, 1], [], []>} : vector<8x8xf32>, vector<8x512xf32>, vector<8x512xf32> -> vector<8x512xf32>
    %c6_438 = arith.constant 6 : index
    %c0_439 = arith.constant 0 : index
    %456 = vector.load %arg15[%c6_438, %c0_439] : memref<9x512xf32, #tpu.memory_space<vmem>>, vector<1x512xf32>
    %457 = vector.broadcast %456 : vector<1x512xf32> to vector<8x512xf32>
    %458 = arith.mulf %455, %457 : vector<8x512xf32>
    %459 = arith.addf %452, %458 : vector<8x512xf32>
    %c0_440 = arith.constant 0 : index
    %c144_441 = arith.constant 144 : index
    %460 = vector.load %arg23[%c0_440, %c144_441] : memref<8x768xf32, #tpu.memory_space<vmem>>, vector<8x512xf32>
    %c56_442 = arith.constant 56 : index
    %c0_443 = arith.constant 0 : index
    %461 = vector.load %arg11[%c56_442, %c0_443] : memref<72x8xf32, #tpu.memory_space<vmem>>, vector<8x8xf32>
    %cst_444 = arith.constant dense<0.000000e+00> : vector<8x512xf32>
    %462 = tpu.matmul %461, %460, %cst_444 {dimension_numbers = #tpu.dot_dimension_numbers<[1], [0], [0], [1], [0, 0, 1, 1], [], []>} : vector<8x8xf32>, vector<8x512xf32>, vector<8x512xf32> -> vector<8x512xf32>
    %c7_445 = arith.constant 7 : index
    %c0_446 = arith.constant 0 : index
    %463 = vector.load %arg15[%c7_445, %c0_446] : memref<9x512xf32, #tpu.memory_space<vmem>>, vector<1x512xf32>
    %464 = vector.broadcast %463 : vector<1x512xf32> to vector<8x512xf32>
    %465 = arith.mulf %462, %464 : vector<8x512xf32>
    %466 = arith.addf %459, %465 : vector<8x512xf32>
    %c0_447 = arith.constant 0 : index
    %c145_448 = arith.constant 145 : index
    %467 = vector.load %arg23[%c0_447, %c145_448] : memref<8x768xf32, #tpu.memory_space<vmem>>, vector<8x512xf32>
    %c64_449 = arith.constant 64 : index
    %c0_450 = arith.constant 0 : index
    %468 = vector.load %arg11[%c64_449, %c0_450] : memref<72x8xf32, #tpu.memory_space<vmem>>, vector<8x8xf32>
    %cst_451 = arith.constant dense<0.000000e+00> : vector<8x512xf32>
    %469 = tpu.matmul %468, %467, %cst_451 {dimension_numbers = #tpu.dot_dimension_numbers<[1], [0], [0], [1], [0, 0, 1, 1], [], []>} : vector<8x8xf32>, vector<8x512xf32>, vector<8x512xf32> -> vector<8x512xf32>
    %c8_452 = arith.constant 8 : index
    %c0_453 = arith.constant 0 : index
    %470 = vector.load %arg15[%c8_452, %c0_453] : memref<9x512xf32, #tpu.memory_space<vmem>>, vector<1x512xf32>
    %471 = vector.broadcast %470 : vector<1x512xf32> to vector<8x512xf32>
    %472 = arith.mulf %469, %471 : vector<8x512xf32>
    %473 = arith.addf %466, %472 : vector<8x512xf32>
    %474 = arith.addf %414, %473 : vector<8x512xf32>
    %c0_454 = arith.constant 0 : index
    %c0_455 = arith.constant 0 : index
    %475 = vector.load %arg12[%c0_454, %c0_455] : memref<8x1xf32, #tpu.memory_space<vmem>>, vector<8x1xf32>
    %476 = vector.broadcast %475 : vector<8x1xf32> to vector<8x512xf32>
    %477 = arith.addf %474, %476 : vector<8x512xf32>
    %cst_456 = arith.constant 0.000000e+00 : f32
    %478 = vector.broadcast %cst_456 : f32 to vector<8x512xf32>
    %479 = arith.maximumf %477, %478 : vector<8x512xf32>
    %c0_457 = arith.constant 0 : index
    %c0_458 = arith.constant 0 : index
    %480 = vector.load %arg13[%c0_457, %c0_458] : memref<3x8xf32, #tpu.memory_space<vmem>>, vector<1x8xf32>
    %cst_459 = arith.constant dense<0.000000e+00> : vector<1x512xf32>
    %481 = tpu.matmul %480, %479, %cst_459 {dimension_numbers = #tpu.dot_dimension_numbers<[1], [0], [0], [1], [0, 0, 1, 1], [], []>} : vector<1x8xf32>, vector<8x512xf32>, vector<1x512xf32> -> vector<1x512xf32>
    %c0_460 = arith.constant 0 : index
    %c0_461 = arith.constant 0 : index
    %482 = vector.load %arg14[%c0_460, %c0_461] : memref<3x1xf32, #tpu.memory_space<vmem>>, vector<1x1xf32>
    %483 = vector.broadcast %482 : vector<1x1xf32> to vector<1x512xf32>
    %484 = arith.addf %481, %483 : vector<1x512xf32>
    %c1_462 = arith.constant 1 : index
    %c0_463 = arith.constant 0 : index
    %485 = vector.load %arg13[%c1_462, %c0_463] : memref<3x8xf32, #tpu.memory_space<vmem>>, vector<1x8xf32>
    %cst_464 = arith.constant dense<0.000000e+00> : vector<1x512xf32>
    %486 = tpu.matmul %485, %479, %cst_464 {dimension_numbers = #tpu.dot_dimension_numbers<[1], [0], [0], [1], [0, 0, 1, 1], [], []>} : vector<1x8xf32>, vector<8x512xf32>, vector<1x512xf32> -> vector<1x512xf32>
    %c1_465 = arith.constant 1 : index
    %c0_466 = arith.constant 0 : index
    %487 = vector.load %arg14[%c1_465, %c0_466] : memref<3x1xf32, #tpu.memory_space<vmem>>, vector<1x1xf32>
    %488 = vector.broadcast %487 : vector<1x1xf32> to vector<1x512xf32>
    %489 = arith.addf %486, %488 : vector<1x512xf32>
    %c2_467 = arith.constant 2 : index
    %c0_468 = arith.constant 0 : index
    %490 = vector.load %arg13[%c2_467, %c0_468] : memref<3x8xf32, #tpu.memory_space<vmem>>, vector<1x8xf32>
    %cst_469 = arith.constant dense<0.000000e+00> : vector<1x512xf32>
    %491 = tpu.matmul %490, %479, %cst_469 {dimension_numbers = #tpu.dot_dimension_numbers<[1], [0], [0], [1], [0, 0, 1, 1], [], []>} : vector<1x8xf32>, vector<8x512xf32>, vector<1x512xf32> -> vector<1x512xf32>
    %c2_470 = arith.constant 2 : index
    %c0_471 = arith.constant 0 : index
    %492 = vector.load %arg14[%c2_470, %c0_471] : memref<3x1xf32, #tpu.memory_space<vmem>>, vector<1x1xf32>
    %493 = vector.broadcast %492 : vector<1x1xf32> to vector<1x512xf32>
    %494 = arith.addf %491, %493 : vector<1x512xf32>
    %495 = arith.maximumf %484, %489 : vector<1x512xf32>
    %496 = arith.maximumf %495, %494 : vector<1x512xf32>
    %497 = arith.subf %484, %496 : vector<1x512xf32>
    %498 = math.exp %497 : vector<1x512xf32>
    %499 = arith.subf %489, %496 : vector<1x512xf32>
    %500 = math.exp %499 : vector<1x512xf32>
    %501 = arith.subf %494, %496 : vector<1x512xf32>
    %502 = math.exp %501 : vector<1x512xf32>
    %503 = arith.addf %498, %500 : vector<1x512xf32>
    %504 = arith.addf %503, %502 : vector<1x512xf32>
    %505 = tpu.reciprocal %504 {approx = true} : vector<1x512xf32> -> vector<1x512xf32>
    %506 = arith.mulf %504, %505 : vector<1x512xf32>
    %cst_472 = arith.constant 2.000000e+00 : f32
    %507 = vector.broadcast %cst_472 : f32 to vector<1x512xf32>
    %508 = arith.subf %507, %506 : vector<1x512xf32>
    %509 = arith.mulf %505, %508 : vector<1x512xf32>
    %510 = arith.mulf %498, %509 : vector<1x512xf32>
    %c0_473 = arith.constant 0 : index
    %c0_474 = arith.constant 0 : index
    %511 = vector.load %arg22[%c0_473, %c0_474] : memref<3x512xf32, #tpu.memory_space<vmem>>, vector<1x512xf32>
    tpu.vector_store %arg22[%c0_473, %c0_474], %510 {strides = array<i32>} : memref<3x512xf32, #tpu.memory_space<vmem>>, vector<1x512xf32>,
    %512 = arith.mulf %500, %509 : vector<1x512xf32>
    %c1_475 = arith.constant 1 : index
    %c0_476 = arith.constant 0 : index
    %513 = vector.load %arg22[%c1_475, %c0_476] : memref<3x512xf32, #tpu.memory_space<vmem>>, vector<1x512xf32>
    tpu.vector_store %arg22[%c1_475, %c0_476], %512 {strides = array<i32>} : memref<3x512xf32, #tpu.memory_space<vmem>>, vector<1x512xf32>,
    %514 = arith.mulf %502, %509 : vector<1x512xf32>
    %c2_477 = arith.constant 2 : index
    %c0_478 = arith.constant 0 : index
    %515 = vector.load %arg22[%c2_477, %c0_478] : memref<3x512xf32, #tpu.memory_space<vmem>>, vector<1x512xf32>
    tpu.vector_store %arg22[%c2_477, %c0_478], %514 {strides = array<i32>} : memref<3x512xf32, #tpu.memory_space<vmem>>, vector<1x512xf32>,
    return
  }
}

</mosaic_0001>

<llo_original>
// kernel: unet_pallas_forward.1
$region0: #{unet_pallas_forward.1}
  #allocation0 [shape = 'u32[]', space=smem, size = 0x4, offset = 0x4, fixed_abs, tag = 'smem constant byte address 0x4 - core index']
  #allocation1 [shape = 'u32[144,128]{1,0:T(1,128)}', space=vmem, size = 0x12000, scoped, tag = 'internal scratch']
  #allocation2 [shape = 'f32[8,768]{1,0:T(8,128)}', space=vmem, size = 0x6000, scoped, tag = 'scratch operand']
  #allocation3 [shape = 'f32[8,384]{1,0:T(8,128)}', space=vmem, size = 0x3000, scoped, tag = 'scratch operand']
  #allocation4 [shape = 'f32[16,384]{1,0:T(8,128)}', space=vmem, size = 0x6000, scoped, tag = 'scratch operand']
  #allocation5 [shape = 'f32[16,288]{1,0:T(8,128)}', space=vmem, size = 0x6000, scoped, tag = 'scratch operand']
  #allocation6 [shape = 'f32[32,384]{1,0:T(8,128)}', space=vmem, size = 0xc000, scoped, tag = 'scratch operand']
  #allocation7 [shape = 'f32[16,768]{1,0:T(8,128)}', space=vmem, size = 0xc000, scoped, tag = 'scratch operand']
  %s0 = inlined_call_operand.vmem [shape: f32[4,768], index: 0, kind: input, shape index: {}]
  %s1 = inlined_call_operand.hbm [shape: f32[72,4], index: 1, kind: input, shape index: {}]
  %s2 = inlined_call_operand.hbm [shape: f32[8,1], index: 2, kind: input, shape index: {}]
  %s3 = inlined_call_operand.hbm [shape: f32[144,8], index: 3, kind: input, shape index: {}]
  %s4 = inlined_call_operand.hbm [shape: f32[16,1], index: 4, kind: input, shape index: {}]
  %s5 = inlined_call_operand.hbm [shape: f32[288,16], index: 5, kind: input, shape index: {}]
  %s6 = inlined_call_operand.hbm [shape: f32[32,1], index: 6, kind: input, shape index: {}]
  %s7 = inlined_call_operand.hbm [shape: f32[144,32], index: 7, kind: input, shape index: {}]
  %s8 = inlined_call_operand.hbm [shape: f32[144,16], index: 8, kind: input, shape index: {}]
  %s9 = inlined_call_operand.hbm [shape: f32[16,1], index: 9, kind: input, shape index: {}]
  %s10 = inlined_call_operand.hbm [shape: f32[72,16], index: 10, kind: input, shape index: {}]
  %s11 = inlined_call_operand.hbm [shape: f32[72,8], index: 11, kind: input, shape index: {}]
  %s12 = inlined_call_operand.vmem [shape: f32[8,1], index: 12, kind: input, shape index: {}]
  %s13 = inlined_call_operand.hbm [shape: f32[3,8], index: 13, kind: input, shape index: {}]
  %s14 = inlined_call_operand.vmem [shape: f32[3,1], index: 14, kind: input, shape index: {}]
  %s15 = inlined_call_operand.hbm [shape: f32[9,512], index: 15, kind: input, shape index: {}]
  %s16 = inlined_call_operand.hbm [shape: f32[9,128], index: 16, kind: input, shape index: {}]
  %s17 = inlined_call_operand.hbm [shape: f32[9,32], index: 17, kind: input, shape index: {}]
  %s18 = inlined_call_operand.hbm [shape: f32[512,128], index: 18, kind: input, shape index: {}]
  %s19 = inlined_call_operand.hbm [shape: f32[128,32], index: 19, kind: input, shape index: {}]
  %s20 = inlined_call_operand.hbm [shape: f32[32,128], index: 20, kind: input, shape index: {}]
  %s21 = inlined_call_operand.vmem [shape: f32[128,512], index: 21, kind: input, shape index: {}]
  %s22 = inlined_call_operand.vmem [shape: f32[3,512], index: 22, kind: output, shape index: {}]
  %s23 = sld [smem:[#allocation0]]
  $region170: #{unet_pallas_forward.1} parent=0
    _
  %s25 = ssub.s32 1, %s23
  %s26 = scalar_select 0, %s25, %s23
  $region1: #{unet_pallas_forward.1} parent=0
    #allocation8 [shape = 'u8[36864]{0}', space=vmem, size = 0x9000, scoped, tag = 'input window, operand 1, single buffered']
    #allocation9 [shape = 's32[1]{0}', space=sflag, size = 0x4, scoped, tag = 'scoped memory for unet_pallas_forward.1']
    #allocation10 [shape = 'u8[4096]{0}', space=vmem, size = 0x1000, scoped, tag = 'input window, operand 2, single buffered']
    #allocation11 [shape = 's32[1]{0}', space=sflag, size = 0x4, scoped, tag = 'scoped memory for unet_pallas_forward.1']
    #allocation12 [shape = 'u8[73728]{0}', space=vmem, size = 0x12000, scoped, tag = 'input window, operand 3, single buffered']
    #allocation13 [shape = 'u8[8192]{0}', space=vmem, size = 0x2000, scoped, tag = 'input window, operand 4, single buffered']
    #allocation14 [shape = 's32[1]{0}', space=sflag, size = 0x4, scoped, tag = 'scoped memory for unet_pallas_forward.1']
    #allocation15 [shape = 'u8[147456]{0}', space=vmem, size = 0x24000, scoped, tag = 'input window, operand 5, single buffered']
    #allocation16 [shape = 'u8[16384]{0}', space=vmem, size = 0x4000, scoped, tag = 'input window, operand 6, single buffered']
    #allocation17 [shape = 's32[1]{0}', space=sflag, size = 0x4, scoped, tag = 'scoped memory for unet_pallas_forward.1']
    #allocation18 [shape = 'u8[73728]{0}', space=vmem, size = 0x12000, scoped, tag = 'input window, operand 7, single buffered']
    #allocation19 [shape = 'u8[73728]{0}', space=vmem, size = 0x12000, scoped, tag = 'input window, operand 8, single buffered']
    #allocation20 [shape = 's32[1]{0}', space=sflag, size = 0x4, scoped, tag = 'scoped memory for unet_pallas_forward.1']
    #allocation21 [shape = 'u8[8192]{0}', space=vmem, size = 0x2000, scoped, tag = 'input window, operand 9, single buffered']
    #allocation22 [shape = 'u8[36864]{0}', space=vmem, size = 0x9000, scoped, tag = 'input window, operand 10, single buffered']
    #allocation23 [shape = 's32[1]{0}', space=sflag, size = 0x4, scoped, tag = 'scoped memory for unet_pallas_forward.1']
    #allocation24 [shape = 'u8[36864]{0}', space=vmem, size = 0x9000, scoped, tag = 'input window, operand 11, single buffered']
    #allocation25 [shape = 'u8[2048]{0}', space=vmem, size = 0x800, scoped, tag = 'input window, operand 13, single buffered']
    #allocation26 [shape = 's32[1]{0}', space=sflag, size = 0x4, scoped, tag = 'scoped memory for unet_pallas_forward.1']
    #allocation27 [shape = 'u8[32768]{0}', space=vmem, size = 0x8000, scoped, tag = 'input window, operand 15, single buffered']
    #allocation28 [shape = 'u8[8192]{0}', space=vmem, size = 0x2000, scoped, tag = 'input window, operand 16, single buffered']
    #allocation29 [shape = 's32[1]{0}', space=sflag, size = 0x4, scoped, tag = 'scoped memory for unet_pallas_forward.1']
    #allocation30 [shape = 'u8[8192]{0}', space=vmem, size = 0x2000, scoped, tag = 'input window, operand 17, single buffered']
    #allocation31 [shape = 'u8[262144]{0}', space=vmem, size = 0x40000, scoped, tag = 'input window, operand 18, single buffered']
    #allocation32 [shape = 's32[1]{0}', space=sflag, size = 0x4, scoped, tag = 'scoped memory for unet_pallas_forward.1']
    #allocation33 [shape = 'u8[65536]{0}', space=vmem, size = 0x10000, scoped, tag = 'input window, operand 19, single buffered']
    #allocation34 [shape = 'u8[16384]{0}', space=vmem, size = 0x4000, scoped, tag = 'input window, operand 20, single buffered']
    #allocation35 [shape = 's32[1]{0}', space=sflag, size = 0x4, scoped, tag = 'scoped memory for unet_pallas_forward.1']
    %27 = vsyncpa [#allocation9], 0
    %28 = vsyncpa [#allocation11], 0
    %29 = vsyncpa [#allocation14], 0
    %30 = vsyncpa [#allocation17], 0
    %31 = vsyncpa [#allocation20], 0
    %32 = vsyncpa [#allocation23], 0
    %33 = vsyncpa [#allocation26], 0
    %34 = vsyncpa [#allocation29], 0
    %35 = vsyncpa [#allocation32], 0
    %36 = vsyncpa [#allocation35], 0
    // Predicated region
    $region2: #{unet_pallas_forward.1} parent=1 // pred_check
      _
    $region3: #{unet_pallas_forward.1} parent=1 // pred_check_branch
      %38 = sbr.rel (0) target = $region5
    $region4: #{unet_pallas_forward.1} parent=1 // pred_region
      _
    $region5: #{unet_pallas_forward.1} parent=1 // pred_fallthru
      _
    // Predicated region
    $region6: #{unet_pallas_forward.1} parent=1 // pred_check
      _
    $region7: #{unet_pallas_forward.1} parent=1 // pred_check_branch
      %40 = sbr.rel (0) target = $region9
    $region8: #{unet_pallas_forward.1} parent=1 // pred_region
      %s42 = ssub.s32 1152, 1152
      %43 = vsyncadd [#allocation9], %s42
      %s44 = sshll.u32 [#allocation8], 4
      %s45 = int_to_ptr.vmem [resolvable:$true] %s44
      %50 = dma.hbm_to_vmem [thread:$0]  %s1, 1152, %s45, [#allocation9], 128, 128, 8
    $region9: #{unet_pallas_forward.1} parent=1 // pred_fallthru
      _
    // Predicated region
    $region10: #{unet_pallas_forward.1} parent=1 // pred_check
      _
    $region11: #{unet_pallas_forward.1} parent=1 // pred_check_branch
      %52 = sbr.rel (0) target = $region13
    $region12: #{unet_pallas_forward.1} parent=1 // pred_region
      %s54 = ssub.s32 128, 128
      %55 = vsyncadd [#allocation11], %s54
      %s57 = sshll.u32 [#allocation10], 4
      %s58 = int_to_ptr.vmem [resolvable:$true] %s57
      %60 = dma.hbm_to_vmem [thread:$0]  %s2, 128, %s58, [#allocation11]
    $region13: #{unet_pallas_forward.1} parent=1 // pred_fallthru
      _
    // Predicated region
    $region14: #{unet_pallas_forward.1} parent=1 // pred_check
      _
    $region15: #{unet_pallas_forward.1} parent=1 // pred_check_branch
      %62 = sbr.rel (0) target = $region17
    $region16: #{unet_pallas_forward.1} parent=1 // pred_region
      %s64 = ssub.s32 2304, 2304
      %65 = vsyncadd [#allocation11], %s64
      %s66 = sshll.u32 [#allocation12], 4
      %s67 = int_to_ptr.vmem [resolvable:$true] %s66
      %72 = dma.hbm_to_vmem [thread:$0]  %s3, 2304, %s67, [#allocation11], 128, 128, 8
    $region17: #{unet_pallas_forward.1} parent=1 // pred_fallthru
      _
    // Predicated region
    $region18: #{unet_pallas_forward.1} parent=1 // pred_check
      _
    $region19: #{unet_pallas_forward.1} parent=1 // pred_check_branch
      %74 = sbr.rel (0) target = $region21
    $region20: #{unet_pallas_forward.1} parent=1 // pred_region
      %s76 = ssub.s32 256, 256
      %77 = vsyncadd [#allocation14], %s76
      %s78 = sshll.u32 [#allocation13], 4
      %s79 = int_to_ptr.vmem [resolvable:$true] %s78
      %84 = dma.hbm_to_vmem [thread:$0]  %s4, 256, %s79, [#allocation14], 128, 128, 8
    $region21: #{unet_pallas_forward.1} parent=1 // pred_fallthru
      _
    // Predicated region
    $region22: #{unet_pallas_forward.1} parent=1 // pred_check
      _
    $region23: #{unet_pallas_forward.1} parent=1 // pred_check_branch
      %86 = sbr.rel (0) target = $region25
    $region24: #{unet_pallas_forward.1} parent=1 // pred_region
      %s88 = ssub.s32 4608, 4608
      %89 = vsyncadd [#allocation14], %s88
      %s90 = sshll.u32 [#allocation15], 4
      %s91 = int_to_ptr.vmem [resolvable:$true] %s90
      %96 = dma.hbm_to_vmem [thread:$0]  %s5, 4608, %s91, [#allocation14], 128, 128, 8
    $region25: #{unet_pallas_forward.1} parent=1 // pred_fallthru
      _
    // Predicated region
    $region26: #{unet_pallas_forward.1} parent=1 // pred_check
      _
    $region27: #{unet_pallas_forward.1} parent=1 // pred_check_branch
      %98 = sbr.rel (0) target = $region29
    $region28: #{unet_pallas_forward.1} parent=1 // pred_region
      %s100 = ssub.s32 512, 512
      %101 = vsyncadd [#allocation17], %s100
      %s102 = sshll.u32 [#allocation16], 4
      %s103 = int_to_ptr.vmem [resolvable:$true] %s102
      %108 = dma.hbm_to_vmem [thread:$0]  %s6, 512, %s103, [#allocation17], 128, 128, 8
    $region29: #{unet_pallas_forward.1} parent=1 // pred_fallthru
      _
    // Predicated region
    $region30: #{unet_pallas_forward.1} parent=1 // pred_check
      _
    $region31: #{unet_pallas_forward.1} parent=1 // pred_check_branch
      %110 = sbr.rel (0) target = $region33
    $region32: #{unet_pallas_forward.1} parent=1 // pred_region
      %s112 = ssub.s32 2304, 2304
      %113 = vsyncadd [#allocation17], %s112
      %s114 = sshll.u32 [#allocation18], 4
      %s115 = int_to_ptr.vmem [resolvable:$true] %s114
      %120 = dma.hbm_to_vmem [thread:$0]  %s7, 2304, %s115, [#allocation17], 128, 128, 8
    $region33: #{unet_pallas_forward.1} parent=1 // pred_fallthru
      _
    // Predicated region
    $region34: #{unet_pallas_forward.1} parent=1 // pred_check
      _
    $region35: #{unet_pallas_forward.1} parent=1 // pred_check_branch
      %122 = sbr.rel (0) target = $region37
    $region36: #{unet_pallas_forward.1} parent=1 // pred_region
      %s124 = ssub.s32 2304, 2304
      %125 = vsyncadd [#allocation20], %s124
      %s126 = sshll.u32 [#allocation19], 4
      %s127 = int_to_ptr.vmem [resolvable:$true] %s126
      %132 = dma.hbm_to_vmem [thread:$0]  %s8, 2304, %s127, [#allocation20], 128, 128, 8
    $region37: #{unet_pallas_forward.1} parent=1 // pred_fallthru
      _
    // Predicated region
    $region38: #{unet_pallas_forward.1} parent=1 // pred_check
      _
    $region39: #{unet_pallas_forward.1} parent=1 // pred_check_branch
      %134 = sbr.rel (0) target = $region41
    $region40: #{unet_pallas_forward.1} parent=1 // pred_region
      %s136 = ssub.s32 256, 256
      %137 = vsyncadd [#allocation20], %s136
      %s138 = sshll.u32 [#allocation21], 4
      %s139 = int_to_ptr.vmem [resolvable:$true] %s138
      %144 = dma.hbm_to_vmem [thread:$0]  %s9, 256, %s139, [#allocation20], 128, 128, 8
    $region41: #{unet_pallas_forward.1} parent=1 // pred_fallthru
      _
    // Predicated region
    $region42: #{unet_pallas_forward.1} parent=1 // pred_check
      _
    $region43: #{unet_pallas_forward.1} parent=1 // pred_check_branch
      %146 = sbr.rel (0) target = $region45
    $region44: #{unet_pallas_forward.1} parent=1 // pred_region
      %s148 = ssub.s32 1152, 1152
      %149 = vsyncadd [#allocation23], %s148
      %s150 = sshll.u32 [#allocation22], 4
      %s151 = int_to_ptr.vmem [resolvable:$true] %s150
      %156 = dma.hbm_to_vmem [thread:$0]  %s10, 1152, %s151, [#allocation23], 128, 128, 8
    $region45: #{unet_pallas_forward.1} parent=1 // pred_fallthru
      _
    // Predicated region
    $region46: #{unet_pallas_forward.1} parent=1 // pred_check
      _
    $region47: #{unet_pallas_forward.1} parent=1 // pred_check_branch
      %158 = sbr.rel (0) target = $region49
    $region48: #{unet_pallas_forward.1} parent=1 // pred_region
      %s160 = ssub.s32 1152, 1152
      %161 = vsyncadd [#allocation23], %s160
      %s162 = sshll.u32 [#allocation24], 4
      %s163 = int_to_ptr.vmem [resolvable:$true] %s162
      %168 = dma.hbm_to_vmem [thread:$0]  %s11, 1152, %s163, [#allocation23], 128, 128, 8
    $region49: #{unet_pallas_forward.1} parent=1 // pred_fallthru
      _
    // Predicated region
    $region50: #{unet_pallas_forward.1} parent=1 // pred_check
      _
    $region51: #{unet_pallas_forward.1} parent=1 // pred_check_branch
      %170 = sbr.rel (0) target = $region53
    $region52: #{unet_pallas_forward.1} parent=1 // pred_region
      _
    $region53: #{unet_pallas_forward.1} parent=1 // pred_fallthru
      _
    // Predicated region
    $region54: #{unet_pallas_forward.1} parent=1 // pred_check
      _
    $region55: #{unet_pallas_forward.1} parent=1 // pred_check_branch
      %172 = sbr.rel (0) target = $region57
    $region56: #{unet_pallas_forward.1} parent=1 // pred_region
      %s174 = ssub.s32 64, 64
      %175 = vsyncadd [#allocation26], %s174
      %s177 = sshll.u32 [#allocation25], 4
      %s178 = int_to_ptr.vmem [resolvable:$true] %s177
      %180 = dma.hbm_to_vmem [thread:$0]  %s13, 64, %s178, [#allocation26]
    $region57: #{unet_pallas_forward.1} parent=1 // pred_fallthru
      _
    // Predicated region
    $region58: #{unet_pallas_forward.1} parent=1 // pred_check
      _
    $region59: #{unet_pallas_forward.1} parent=1 // pred_check_branch
      %182 = sbr.rel (0) target = $region61
    $region60: #{unet_pallas_forward.1} parent=1 // pred_region
      _
    $region61: #{unet_pallas_forward.1} parent=1 // pred_fallthru
      _
    // Predicated region
    $region62: #{unet_pallas_forward.1} parent=1 // pred_check
      _
    $region63: #{unet_pallas_forward.1} parent=1 // pred_check_branch
      %184 = sbr.rel (0) target = $region65
    $region64: #{unet_pallas_forward.1} parent=1 // pred_region
      %s186 = ssub.s32 1024, 1024
      %187 = vsyncadd [#allocation26], %s186
      %s188 = sshll.u32 [#allocation27], 4
      %s189 = int_to_ptr.vmem [resolvable:$true] %s188
      %194 = dma.hbm_to_vmem [thread:$0]  %s15, 1024, %s189, [#allocation26], 512, 512, 32
    $region65: #{unet_pallas_forward.1} parent=1 // pred_fallthru
      _
    // Predicated region
    $region66: #{unet_pallas_forward.1} parent=1 // pred_check
      _
    $region67: #{unet_pallas_forward.1} parent=1 // pred_check_branch
      %196 = sbr.rel (0) target = $region69
    $region68: #{unet_pallas_forward.1} parent=1 // pred_region
      %s198 = ssub.s32 256, 256
      %199 = vsyncadd [#allocation29], %s198
      %s200 = sshll.u32 [#allocation28], 4
      %s201 = int_to_ptr.vmem [resolvable:$true] %s200
      %206 = dma.hbm_to_vmem [thread:$0]  %s16, 256, %s201, [#allocation29], 128, 128, 8
    $region69: #{unet_pallas_forward.1} parent=1 // pred_fallthru
      _
    // Predicated region
    $region70: #{unet_pallas_forward.1} parent=1 // pred_check
      _
    $region71: #{unet_pallas_forward.1} parent=1 // pred_check_branch
      %208 = sbr.rel (0) target = $region73
    $region72: #{unet_pallas_forward.1} parent=1 // pred_region
      %s210 = ssub.s32 256, 256
      %211 = vsyncadd [#allocation29], %s210
      %s212 = sshll.u32 [#allocation30], 4
      %s213 = int_to_ptr.vmem [resolvable:$true] %s212
      %218 = dma.hbm_to_vmem [thread:$0]  %s17, 256, %s213, [#allocation29], 128, 128, 8
    $region73: #{unet_pallas_forward.1} parent=1 // pred_fallthru
      _
    // Predicated region
    $region74: #{unet_pallas_forward.1} parent=1 // pred_check
      _
    $region75: #{unet_pallas_forward.1} parent=1 // pred_check_branch
      %220 = sbr.rel (0) target = $region77
    $region76: #{unet_pallas_forward.1} parent=1 // pred_region
      %s222 = ssub.s32 8192, 8192
      %223 = vsyncadd [#allocation32], %s222
      %s224 = sshll.u32 [#allocation31], 4
      %s225 = int_to_ptr.vmem [resolvable:$true] %s224
      %230 = dma.hbm_to_vmem [thread:$0]  %s18, 8192, %s225, [#allocation32], 128, 128, 8
    $region77: #{unet_pallas_forward.1} parent=1 // pred_fallthru
      _
    // Predicated region
    $region78: #{unet_pallas_forward.1} parent=1 // pred_check
      _
    $region79: #{unet_pallas_forward.1} parent=1 // pred_check_branch
      %232 = sbr.rel (0) target = $region81
    $region80: #{unet_pallas_forward.1} parent=1 // pred_region
      %s234 = ssub.s32 2048, 2048
      %235 = vsyncadd [#allocation32], %s234
      %s236 = sshll.u32 [#allocation33], 4
      %s237 = int_to_ptr.vmem [resolvable:$true] %s236
      %242 = dma.hbm_to_vmem [thread:$0]  %s19, 2048, %s237, [#allocation32], 128, 128, 8
    $region81: #{unet_pallas_forward.1} parent=1 // pred_fallthru
      _
    // Predicated region
    $region82: #{unet_pallas_forward.1} parent=1 // pred_check
      _
    $region83: #{unet_pallas_forward.1} parent=1 // pred_check_branch
      %244 = sbr.rel (0) target = $region85
    $region84: #{unet_pallas_forward.1} parent=1 // pred_region
      %s246 = ssub.s32 512, 512
      %247 = vsyncadd [#allocation35], %s246
      %s248 = sshll.u32 [#allocation34], 4
      %s249 = int_to_ptr.vmem [resolvable:$true] %s248
      %254 = dma.hbm_to_vmem [thread:$0]  %s20, 512, %s249, [#allocation35], 128, 128, 8
    $region85: #{unet_pallas_forward.1} parent=1 // pred_fallthru
      _
    // Predicated region
    $region86: #{unet_pallas_forward.1} parent=1 // pred_check
      _
    $region87: #{unet_pallas_forward.1} parent=1 // pred_check_branch
      %256 = sbr.rel (0) target = $region89
    $region88: #{unet_pallas_forward.1} parent=1 // pred_region
      _
    $region89: #{unet_pallas_forward.1} parent=1 // pred_fallthru
      _
    // Predicated region
    $region90: #{unet_pallas_forward.1} parent=1 // pred_check
      _
    $region91: #{unet_pallas_forward.1} parent=1 // pred_check_branch
      %258 = sbr.rel (0) target = $region93
    $region92: #{unet_pallas_forward.1} parent=1 // pred_region
      %259 = dma.done [#allocation9], 1152
    $region93: #{unet_pallas_forward.1} parent=1 // pred_fallthru
      _
    // Predicated region
    $region94: #{unet_pallas_forward.1} parent=1 // pred_check
      _
    $region95: #{unet_pallas_forward.1} parent=1 // pred_check_branch
      %261 = sbr.rel (0) target = $region97
    $region96: #{unet_pallas_forward.1} parent=1 // pred_region
      %262 = dma.done [#allocation11], 128
    $region97: #{unet_pallas_forward.1} parent=1 // pred_fallthru
      _
    // Predicated region
    $region98: #{unet_pallas_forward.1} parent=1 // pred_check
      _
    $region99: #{unet_pallas_forward.1} parent=1 // pred_check_branch
      %264 = sbr.rel (0) target = $region101
    $region100: #{unet_pallas_forward.1} parent=1 // pred_region
      %265 = dma.done [#allocation11], 2304
    $region101: #{unet_pallas_forward.1} parent=1 // pred_fallthru
      _
    // Predicated region
    $region102: #{unet_pallas_forward.1} parent=1 // pred_check
      _
    $region103: #{unet_pallas_forward.1} parent=1 // pred_check_branch
      %267 = sbr.rel (0) target = $region105
    $region104: #{unet_pallas_forward.1} parent=1 // pred_region
      %268 = dma.done [#allocation14], 256
    $region105: #{unet_pallas_forward.1} parent=1 // pred_fallthru
      _
    // Predicated region
    $region106: #{unet_pallas_forward.1} parent=1 // pred_check
      _
    $region107: #{unet_pallas_forward.1} parent=1 // pred_check_branch
      %270 = sbr.rel (0) target = $region109
    $region108: #{unet_pallas_forward.1} parent=1 // pred_region
      %271 = dma.done [#allocation14], 4608
    $region109: #{unet_pallas_forward.1} parent=1 // pred_fallthru
      _
    // Predicated region
    $region110: #{unet_pallas_forward.1} parent=1 // pred_check
      _
    $region111: #{unet_pallas_forward.1} parent=1 // pred_check_branch
      %273 = sbr.rel (0) target = $region113
    $region112: #{unet_pallas_forward.1} parent=1 // pred_region
      %274 = dma.done [#allocation17], 512
    $region113: #{unet_pallas_forward.1} parent=1 // pred_fallthru
      _
    // Predicated region
    $region114: #{unet_pallas_forward.1} parent=1 // pred_check
      _
    $region115: #{unet_pallas_forward.1} parent=1 // pred_check_branch
      %276 = sbr.rel (0) target = $region117
    $region116: #{unet_pallas_forward.1} parent=1 // pred_region
      %277 = dma.done [#allocation17], 2304
    $region117: #{unet_pallas_forward.1} parent=1 // pred_fallthru
      _
    // Predicated region
    $region118: #{unet_pallas_forward.1} parent=1 // pred_check
      _
    $region119: #{unet_pallas_forward.1} parent=1 // pred_check_branch
      %279 = sbr.rel (0) target = $region121
    $region120: #{unet_pallas_forward.1} parent=1 // pred_region
      %280 = dma.done [#allocation20], 2304
    $region121: #{unet_pallas_forward.1} parent=1 // pred_fallthru
      _
    // Predicated region
    $region122: #{unet_pallas_forward.1} parent=1 // pred_check
      _
    $region123: #{unet_pallas_forward.1} parent=1 // pred_check_branch
      %282 = sbr.rel (0) target = $region125
    $region124: #{unet_pallas_forward.1} parent=1 // pred_region
      %283 = dma.done [#allocation20], 256
    $region125: #{unet_pallas_forward.1} parent=1 // pred_fallthru
      _
    // Predicated region
    $region126: #{unet_pallas_forward.1} parent=1 // pred_check
      _
    $region127: #{unet_pallas_forward.1} parent=1 // pred_check_branch
      %285 = sbr.rel (0) target = $region129
    $region128: #{unet_pallas_forward.1} parent=1 // pred_region
      %286 = dma.done [#allocation23], 1152
    $region129: #{unet_pallas_forward.1} parent=1 // pred_fallthru
      _
    // Predicated region
    $region130: #{unet_pallas_forward.1} parent=1 // pred_check
      _
    $region131: #{unet_pallas_forward.1} parent=1 // pred_check_branch
      %288 = sbr.rel (0) target = $region133
    $region132: #{unet_pallas_forward.1} parent=1 // pred_region
      %289 = dma.done [#allocation23], 1152
    $region133: #{unet_pallas_forward.1} parent=1 // pred_fallthru
      _
    // Predicated region
    $region134: #{unet_pallas_forward.1} parent=1 // pred_check
      _
    $region135: #{unet_pallas_forward.1} parent=1 // pred_check_branch
      %291 = sbr.rel (0) target = $region137
    $region136: #{unet_pallas_forward.1} parent=1 // pred_region
      %292 = dma.done [#allocation26], 64
    $region137: #{unet_pallas_forward.1} parent=1 // pred_fallthru
      _
    // Predicated region
    $region138: #{unet_pallas_forward.1} parent=1 // pred_check
      _
    $region139: #{unet_pallas_forward.1} parent=1 // pred_check_branch
      %294 = sbr.rel (0) target = $region141
    $region140: #{unet_pallas_forward.1} parent=1 // pred_region
      %295 = dma.done [#allocation26], 1024
    $region141: #{unet_pallas_forward.1} parent=1 // pred_fallthru
      _
    // Predicated region
    $region142: #{unet_pallas_forward.1} parent=1 // pred_check
      _
    $region143: #{unet_pallas_forward.1} parent=1 // pred_check_branch
      %297 = sbr.rel (0) target = $region145
    $region144: #{unet_pallas_forward.1} parent=1 // pred_region
      %298 = dma.done [#allocation29], 256
    $region145: #{unet_pallas_forward.1} parent=1 // pred_fallthru
      _
    // Predicated region
    $region146: #{unet_pallas_forward.1} parent=1 // pred_check
      _
    $region147: #{unet_pallas_forward.1} parent=1 // pred_check_branch
      %300 = sbr.rel (0) target = $region149
    $region148: #{unet_pallas_forward.1} parent=1 // pred_region
      %301 = dma.done [#allocation29], 256
    $region149: #{unet_pallas_forward.1} parent=1 // pred_fallthru
      _
    // Predicated region
    $region150: #{unet_pallas_forward.1} parent=1 // pred_check
      _
    $region151: #{unet_pallas_forward.1} parent=1 // pred_check_branch
      %303 = sbr.rel (0) target = $region153
    $region152: #{unet_pallas_forward.1} parent=1 // pred_region
      %304 = dma.done [#allocation32], 8192
    $region153: #{unet_pallas_forward.1} parent=1 // pred_fallthru
      _
    // Predicated region
    $region154: #{unet_pallas_forward.1} parent=1 // pred_check
      _
    $region155: #{unet_pallas_forward.1} parent=1 // pred_check_branch
      %306 = sbr.rel (0) target = $region157
    $region156: #{unet_pallas_forward.1} parent=1 // pred_region
      %307 = dma.done [#allocation32], 2048
    $region157: #{unet_pallas_forward.1} parent=1 // pred_fallthru
      _
    // Predicated region
    $region158: #{unet_pallas_forward.1} parent=1 // pred_check
      _
    $region159: #{unet_pallas_forward.1} parent=1 // pred_check_branch
      %309 = sbr.rel (0) target = $region161
    $region160: #{unet_pallas_forward.1} parent=1 // pred_region
      %310 = dma.done [#allocation35], 512
    $region161: #{unet_pallas_forward.1} parent=1 // pred_fallthru
      _
    %v311 = vld [vmem:[%s0] sm:$0xff]
    %v312 = vld [vmem:[%s0 + $0x8] sm:$0xff]
    %v313 = vld [vmem:[%s0 + $0x10] sm:$0xf]
    %v314 = vld [vmem:[#allocation8] sm:$0xff]
    %v318 = vcombine.high %v311, %v311
    %v319 = vcombine.high %v312, %v312
    %320 = vrot.lane.b32.xlu0 %v311, 17
    %v321 = vpop.permute.xlu0 %320
    %322 = vrot.lane.b32.xlu0 %v318, 17
    %v323 = vpop.permute.xlu0 %322
    %324 = vrot.lane.b32.xlu0 %v312, 17
    %v325 = vpop.permute.xlu0 %324
    %326 = vrot.lane.b32.xlu0 %v319, 17
    %v327 = vpop.permute.xlu0 %326
    %328 = vrot.lane.b32.xlu0 %v313, 17
    %v329 = vpop.permute.xlu0 %328
    %vm330 = vcmask 138240
    %v331 = vsel %vm330, %v321, %v323
    %v332 = vsel %vm330, %v323, %v325
    %v333 = vsel %vm330, %v325, %v327
    %v334 = vsel %vm330, %v327, %v329
    %vm335 = vcmask 31744
    %v337 = vsel %vm335, %v314, 0
    %vm339 = vcmask 1043456
    %v340 = vsel %vm339, %v331, 0
    %v342 = vsel %vm339, %v332, 0
    %v344 = vsel %vm339, %v333, 0
    %v346 = vsel %vm339, %v334, 0
    %348 = vmatprep.subr.mxu0 %v342
    %349 = vmatpush1.msra.mxu0 %v340
    %350 = vmatprep.subr.mxu0 0.0
    %351 = vmatpush1.msra.mxu0 0.0
    %352 = vmatprep.subr.mxu0 0.0
    %353 = vmatpush1.msra.mxu0 0.0
    %354 = vmatprep.subr.mxu0 0.0
    %355 = vmatpush1.msra.mxu0 0.0
    %356 = vmatprep.subr.mxu0 0.0
    %357 = vmatpush1.msra.mxu0 0.0
    %358 = vmatprep.subr.mxu0 0.0
    %359 = vmatpush1.msra.mxu0 0.0
    %360 = vmatprep.subr.mxu0 0.0
    %361 = vmatpush1.msra.mxu0 0.0
    %362 = vmatprep.subr.mxu0 0.0
    %363 = vmatpush1.msra.mxu0 0.0
    %364 = vmatprep.subr.mxu0 0.0
    %365 = vmatpush1.msra.mxu0 0.0
    %366 = vmatprep.subr.mxu0 0.0
    %367 = vmatpush1.msra.mxu0 0.0
    %368 = vmatprep.subr.mxu0 0.0
    %369 = vmatpush1.msra.mxu0 0.0
    %370 = vmatprep.subr.mxu0 0.0
    %371 = vmatpush1.msra.mxu0 0.0
    %372 = vmatprep.subr.mxu0 0.0
    %373 = vmatpush1.msra.mxu0 0.0
    %374 = vmatprep.subr.mxu0 0.0
    %375 = vmatpush1.msra.mxu0 0.0
    %376 = vmatprep.subr.mxu0 0.0
    %377 = vmatpush1.msra.mxu0 0.0
    %378 = vmatprep.subr.mxu0 0.0
    %379 = vmatpush1.msra.mxu0 0.0
    %380 = vmatprep.subr.mxu0 0.0
    %381 = vmatpush1.msra.mxu0 0.0
    %382 = vmatprep.subr.mxu0 0.0
    %383 = vmatpush1.msra.mxu0 0.0
    %384 = vmatprep.subr.mxu0 0.0
    %385 = vmatpush1.msra.mxu0 0.0
    %386 = vmatprep.subr.mxu0 0.0
    %387 = vmatpush1.msra.mxu0 0.0
    %388 = vmatprep.subr.mxu0 0.0
    %389 = vmatpush1.msra.mxu0 0.0
    %390 = vmatprep.subr.mxu0 0.0
    %391 = vmatpush1.msra.mxu0 0.0
    %392 = vmatprep.subr.mxu0 0.0
    %393 = vmatpush1.msra.mxu0 0.0
    %394 = vmatprep.subr.mxu0 0.0
    %395 = vmatpush1.msra.mxu0 0.0
    %396 = vmatprep.subr.mxu0 0.0
    %397 = vmatpush1.msra.mxu0 0.0
    %398 = vmatprep.subr.mxu0 0.0
    %399 = vmatpush1.msra.mxu0 0.0
    %400 = vmatprep.subr.mxu0 0.0
    %401 = vmatpush1.msra.mxu0 0.0
    %402 = vmatprep.subr.mxu0 0.0
    %403 = vmatpush1.msra.mxu0 0.0
    %404 = vmatprep.subr.mxu0 0.0
    %405 = vmatpush1.msra.mxu0 0.0
    %406 = vmatprep.subr.mxu0 0.0
    %407 = vmatpush1.msra.mxu0 0.0
    %408 = vmatprep.subr.mxu0 0.0
    %409 = vmatpush1.msra.mxu0 0.0
    %410 = vmatprep.subr.mxu0 0.0
    %411 = vmatpush1.msra.mxu0 0.0
    %412 = vmatprep.mubr.f32.mxu0 0.0
    %413 = vmatmul.mubr.f32.gmra.mrb[0].mxu0 %v337
    %v414 = vpop.f32.mrb[0].mxu0
    %v415 = vadd.f32 0.0, %v414
    %v416 = vpop.f32.mrb[0].mxu0
    %v417 = vadd.f32 0.0, %v416
    %418 = vdwg.mxu0
    %419 = vmatprep.subr.mxu0 %v346
    %420 = vmatpush1.msra.mxu0 %v344
    %421 = vmatprep.subr.mxu0 0.0
    %422 = vmatpush1.msra.mxu0 0.0
    %423 = vmatprep.subr.mxu0 0.0
    %424 = vmatpush1.msra.mxu0 0.0
    %425 = vmatprep.subr.mxu0 0.0
    %426 = vmatpush1.msra.mxu0 0.0
    %427 = vmatprep.subr.mxu0 0.0
    %428 = vmatpush1.msra.mxu0 0.0
    %429 = vmatprep.subr.mxu0 0.0
    %430 = vmatpush1.msra.mxu0 0.0
    %431 = vmatprep.subr.mxu0 0.0
    %432 = vmatpush1.msra.mxu0 0.0
    %433 = vmatprep.subr.mxu0 0.0
    %434 = vmatpush1.msra.mxu0 0.0
    %435 = vmatprep.subr.mxu0 0.0
    %436 = vmatpush1.msra.mxu0 0.0
    %437 = vmatprep.subr.mxu0 0.0
    %438 = vmatpush1.msra.mxu0 0.0
    %439 = vmatprep.subr.mxu0 0.0
    %440 = vmatpush1.msra.mxu0 0.0
    %441 = vmatprep.subr.mxu0 0.0
    %442 = vmatpush1.msra.mxu0 0.0
    %443 = vmatprep.subr.mxu0 0.0
    %444 = vmatpush1.msra.mxu0 0.0
    %445 = vmatprep.subr.mxu0 0.0
    %446 = vmatpush1.msra.mxu0 0.0
    %447 = vmatprep.subr.mxu0 0.0
    %448 = vmatpush1.msra.mxu0 0.0
    %449 = vmatprep.subr.mxu0 0.0
    %450 = vmatpush1.msra.mxu0 0.0
    %451 = vmatprep.subr.mxu0 0.0
    %452 = vmatpush1.msra.mxu0 0.0
    %453 = vmatprep.subr.mxu0 0.0
    %454 = vmatpush1.msra.mxu0 0.0
    %455 = vmatprep.subr.mxu0 0.0
    %456 = vmatpush1.msra.mxu0 0.0
    %457 = vmatprep.subr.mxu0 0.0
    %458 = vmatpush1.msra.mxu0 0.0
    %459 = vmatprep.subr.mxu0 0.0
    %460 = vmatpush1.msra.mxu0 0.0
    %461 = vmatprep.subr.mxu0 0.0
    %462 = vmatpush1.msra.mxu0 0.0
    %463 = vmatprep.subr.mxu0 0.0
    %464 = vmatpush1.msra.mxu0 0.0
    %465 = vmatprep.subr.mxu0 0.0
    %466 = vmatpush1.msra.mxu0 0.0
    %467 = vmatprep.subr.mxu0 0.0
    %468 = vmatpush1.msra.mxu0 0.0
    %469 = vmatprep.subr.mxu0 0.0
    %470 = vmatpush1.msra.mxu0 0.0
    %471 = vmatprep.subr.mxu0 0.0
    %472 = vmatpush1.msra.mxu0 0.0
    %473 = vmatprep.subr.mxu0 0.0
    %474 = vmatpush1.msra.mxu0 0.0
    %475 = vmatprep.subr.mxu0 0.0
    %476 = vmatpush1.msra.mxu0 0.0
    %477 = vmatprep.subr.mxu0 0.0
    %478 = vmatpush1.msra.mxu0 0.0
    %479 = vmatprep.subr.mxu0 0.0
    %480 = vmatpush1.msra.mxu0 0.0
    %481 = vmatprep.subr.mxu0 0.0
    %482 = vmatpush1.msra.mxu0 0.0
    %483 = vmatprep.mubr.f32.mxu0 0.0
    %484 = vmatmul.mubr.f32.gmra.mrb[0].mxu0 %v337
    %v485 = vpop.f32.mrb[0].mxu0
    %v486 = vadd.f32 0.0, %v485
    %v487 = vpop.f32.mrb[0].mxu0
    %v488 = vadd.f32 0.0, %v487
    %489 = vdwg.mxu0
    %v490 = vld [vmem:[#allocation27] ss:$8 sm:$0xf]
    %v492 = vlaneseq
    %v493 = vshrl.u32 %v492, 7
    %v494 = vsub.s32 0, %v493
    %v495 = vrot.slane %v490, %v494
    %v496 = vlaneseq
    %v497 = vshrl.u32 %v496, 7
    %v498 = vsub.s32 1, %v497
    %v499 = vrot.slane %v490, %v498
    %v500 = vlaneseq
    %v501 = vshrl.u32 %v500, 7
    %v502 = vsub.s32 2, %v501
    %v503 = vrot.slane %v490, %v502
    %v504 = vlaneseq
    %v505 = vshrl.u32 %v504, 7
    %v506 = vsub.s32 3, %v505
    %v507 = vrot.slane %v490, %v506
    %v512 = vmul.f32 %v415, %v495
    %v513 = vmul.f32 %v417, %v499
    %v514 = vmul.f32 %v486, %v503
    %v515 = vmul.f32 %v488, %v507
    %v516 = vld [vmem:[%s0] sm:$0xff]
    %v517 = vld [vmem:[%s0 + $0x8] sm:$0xff]
    %v518 = vld [vmem:[%s0 + $0x10] sm:$0xf]
    %v519 = vld [vmem:[#allocation8 + $0x8] sm:$0xff]
    %v523 = vcombine.high %v516, %v516
    %v524 = vcombine.high %v517, %v517
    %525 = vrot.lane.b32.xlu0 %v516, 16
    %v526 = vpop.permute.xlu0 %525
    %527 = vrot.lane.b32.xlu0 %v523, 16
    %v528 = vpop.permute.xlu0 %527
    %529 = vrot.lane.b32.xlu0 %v517, 16
    %v530 = vpop.permute.xlu0 %529
    %531 = vrot.lane.b32.xlu0 %v524, 16
    %v532 = vpop.permute.xlu0 %531
    %533 = vrot.lane.b32.xlu0 %v518, 16
    %v534 = vpop.permute.xlu0 %533
    %vm535 = vcmask 130048
    %v536 = vsel %vm535, %v526, %v528
    %v537 = vsel %vm535, %v528, %v530
    %v538 = vsel %vm535, %v530, %v532
    %v539 = vsel %vm535, %v532, %v534
    %v541 = vsel %vm335, %v519, 0
    %v543 = vsel %vm339, %v536, 0
    %v545 = vsel %vm339, %v537, 0
    %v547 = vsel %vm339, %v538, 0
    %v549 = vsel %vm339, %v539, 0
    %551 = vmatprep.subr.mxu0 %v545
    %552 = vmatpush1.msra.mxu0 %v543
    %553 = vmatprep.subr.mxu0 0.0
    %554 = vmatpush1.msra.mxu0 0.0
    %555 = vmatprep.subr.mxu0 0.0
    %556 = vmatpush1.msra.mxu0 0.0
    %557 = vmatprep.subr.mxu0 0.0
    %558 = vmatpush1.msra.mxu0 0.0
    %559 = vmatprep.subr.mxu0 0.0
    %560 = vmatpush1.msra.mxu0 0.0
    %561 = vmatprep.subr.mxu0 0.0
    %562 = vmatpush1.msra.mxu0 0.0
    %563 = vmatprep.subr.mxu0 0.0
    %564 = vmatpush1.msra.mxu0 0.0
    %565 = vmatprep.subr.mxu0 0.0
    %566 = vmatpush1.msra.mxu0 0.0
    %567 = vmatprep.subr.mxu0 0.0
    %568 = vmatpush1.msra.mxu0 0.0
    %569 = vmatprep.subr.mxu0 0.0
    %570 = vmatpush1.msra.mxu0 0.0
    %571 = vmatprep.subr.mxu0 0.0
    %572 = vmatpush1.msra.mxu0 0.0
    %573 = vmatprep.subr.mxu0 0.0
    %574 = vmatpush1.msra.mxu0 0.0
    %575 = vmatprep.subr.mxu0 0.0
    %576 = vmatpush1.msra.mxu0 0.0
    %577 = vmatprep.subr.mxu0 0.0
    %578 = vmatpush1.msra.mxu0 0.0
    %579 = vmatprep.subr.mxu0 0.0
    %580 = vmatpush1.msra.mxu0 0.0
    %581 = vmatprep.subr.mxu0 0.0
    %582 = vmatpush1.msra.mxu0 0.0
    %583 = vmatprep.subr.mxu0 0.0
    %584 = vmatpush1.msra.mxu0 0.0
    %585 = vmatprep.subr.mxu0 0.0
    %586 = vmatpush1.msra.mxu0 0.0
    %587 = vmatprep.subr.mxu0 0.0
    %588 = vmatpush1.msra.mxu0 0.0
    %589 = vmatprep.subr.mxu0 0.0
    %590 = vmatpush1.msra.mxu0 0.0
    %591 = vmatprep.subr.mxu0 0.0
    %592 = vmatpush1.msra.mxu0 0.0
    %593 = vmatprep.subr.mxu0 0.0
    %594 = vmatpush1.msra.mxu0 0.0
    %595 = vmatprep.subr.mxu0 0.0
    %596 = vmatpush1.msra.mxu0 0.0
    %597 = vmatprep.subr.mxu0 0.0
    %598 = vmatpush1.msra.mxu0 0.0
    %599 = vmatprep.subr.mxu0 0.0
    %600 = vmatpush1.msra.mxu0 0.0
    %601 = vmatprep.subr.mxu0 0.0
    %602 = vmatpush1.msra.mxu0 0.0
    %603 = vmatprep.subr.mxu0 0.0
    %604 = vmatpush1.msra.mxu0 0.0
    %605 = vmatprep.subr.mxu0 0.0
    %606 = vmatpush1.msra.mxu0 0.0
    %607 = vmatprep.subr.mxu0 0.0
    %608 = vmatpush1.msra.mxu0 0.0
    %609 = vmatprep.subr.mxu0 0.0
    %610 = vmatpush1.msra.mxu0 0.0
    %611 = vmatprep.subr.mxu0 0.0
    %612 = vmatpush1.msra.mxu0 0.0
    %613 = vmatprep.subr.mxu0 0.0
    %614 = vmatpush1.msra.mxu0 0.0
    %615 = vmatprep.mubr.f32.mxu0 0.0
    %616 = vmatmul.mubr.f32.gmra.mrb[0].mxu0 %v541
    %v617 = vpop.f32.mrb[0].mxu0
    %v618 = vadd.f32 0.0, %v617
    %v619 = vpop.f32.mrb[0].mxu0
    %v620 = vadd.f32 0.0, %v619
    %621 = vdwg.mxu0
    %622 = vmatprep.subr.mxu0 %v549
    %623 = vmatpush1.msra.mxu0 %v547
    %624 = vmatprep.subr.mxu0 0.0
    %625 = vmatpush1.msra.mxu0 0.0
    %626 = vmatprep.subr.mxu0 0.0
    %627 = vmatpush1.msra.mxu0 0.0
    %628 = vmatprep.subr.mxu0 0.0
    %629 = vmatpush1.msra.mxu0 0.0
    %630 = vmatprep.subr.mxu0 0.0
    %631 = vmatpush1.msra.mxu0 0.0
    %632 = vmatprep.subr.mxu0 0.0
    %633 = vmatpush1.msra.mxu0 0.0
    %634 = vmatprep.subr.mxu0 0.0
    %635 = vmatpush1.msra.mxu0 0.0
    %636 = vmatprep.subr.mxu0 0.0
    %637 = vmatpush1.msra.mxu0 0.0
    %638 = vmatprep.subr.mxu0 0.0
    %639 = vmatpush1.msra.mxu0 0.0
    %640 = vmatprep.subr.mxu0 0.0
    %641 = vmatpush1.msra.mxu0 0.0
    %642 = vmatprep.subr.mxu0 0.0
    %643 = vmatpush1.msra.mxu0 0.0
    %644 = vmatprep.subr.mxu0 0.0
    %645 = vmatpush1.msra.mxu0 0.0
    %646 = vmatprep.subr.mxu0 0.0
    %647 = vmatpush1.msra.mxu0 0.0
    %648 = vmatprep.subr.mxu0 0.0
    %649 = vmatpush1.msra.mxu0 0.0
    %650 = vmatprep.subr.mxu0 0.0
    %651 = vmatpush1.msra.mxu0 0.0
    %652 = vmatprep.subr.mxu0 0.0
    %653 = vmatpush1.msra.mxu0 0.0
    %654 = vmatprep.subr.mxu0 0.0
    %655 = vmatpush1.msra.mxu0 0.0
    %656 = vmatprep.subr.mxu0 0.0
    %657 = vmatpush1.msra.mxu0 0.0
    %658 = vmatprep.subr.mxu0 0.0
    %659 = vmatpush1.msra.mxu0 0.0
    %660 = vmatprep.subr.mxu0 0.0
    %661 = vmatpush1.msra.mxu0 0.0
    %662 = vmatprep.subr.mxu0 0.0
    %663 = vmatpush1.msra.mxu0 0.0
    %664 = vmatprep.subr.mxu0 0.0
    %665 = vmatpush1.msra.mxu0 0.0
    %666 = vmatprep.subr.mxu0 0.0
    %667 = vmatpush1.msra.mxu0 0.0
    %668 = vmatprep.subr.mxu0 0.0
    %669 = vmatpush1.msra.mxu0 0.0
    %670 = vmatprep.subr.mxu0 0.0
    %671 = vmatpush1.msra.mxu0 0.0
    %672 = vmatprep.subr.mxu0 0.0
    %673 = vmatpush1.msra.mxu0 0.0
    %674 = vmatprep.subr.mxu0 0.0
    %675 = vmatpush1.msra.mxu0 0.0
    %676 = vmatprep.subr.mxu0 0.0
    %677 = vmatpush1.msra.mxu0 0.0
    %678 = vmatprep.subr.mxu0 0.0
    %679 = vmatpush1.msra.mxu0 0.0
    %680 = vmatprep.subr.mxu0 0.0
    %681 = vmatpush1.msra.mxu0 0.0
    %682 = vmatprep.subr.mxu0 0.0
    %683 = vmatpush1.msra.mxu0 0.0
    %684 = vmatprep.subr.mxu0 0.0
    %685 = vmatpush1.msra.mxu0 0.0
    %686 = vmatprep.mubr.f32.mxu0 0.0
    %687 = vmatmul.mubr.f32.gmra.mrb[0].mxu0 %v541
    %v688 = vpop.f32.mrb[0].mxu0
    %v689 = vadd.f32 0.0, %v688
    %v690 = vpop.f32.mrb[0].mxu0
    %v691 = vadd.f32 0.0, %v690
    %692 = vdwg.mxu0
    %s693 = scalar_lea.vmem [#allocation27], 1
    %v694 = vld [vmem:[%s693] ss:$8 sm:$0xf]
    %v696 = vlaneseq
    %v697 = vshrl.u32 %v696, 7
    %v698 = vsub.s32 0, %v697
    %v699 = vrot.slane %v694, %v698
    %v700 = vlaneseq
    %v701 = vshrl.u32 %v700, 7
    %v702 = vsub.s32 1, %v701
    %v703 = vrot.slane %v694, %v702
    %v704 = vlaneseq
    %v705 = vshrl.u32 %v704, 7
    %v706 = vsub.s32 2, %v705
    %v707 = vrot.slane %v694, %v706
    %v708 = vlaneseq
    %v709 = vshrl.u32 %v708, 7
    %v710 = vsub.s32 3, %v709
    %v711 = vrot.slane %v694, %v710
    %v716 = vmul.f32 %v618, %v699
    %v717 = vmul.f32 %v620, %v703
    %v718 = vmul.f32 %v689, %v707
    %v719 = vmul.f32 %v691, %v711
    %v720 = vadd.f32 %v512, %v716
    %v721 = vadd.f32 %v513, %v717
    %v722 = vadd.f32 %v514, %v718
    %v723 = vadd.f32 %v515, %v719
    %v724 = vld [vmem:[%s0] sm:$0xff]
    %v725 = vld [vmem:[%s0 + $0x8] sm:$0xff]
    %v726 = vld [vmem:[%s0 + $0x10] sm:$0xf]
    %v727 = vld [vmem:[#allocation8 + $0x10] sm:$0xff]
    %v731 = vcombine.high %v724, %v724
    %v732 = vcombine.high %v725, %v725
    %733 = vrot.lane.b32.xlu0 %v724, 15
    %v734 = vpop.permute.xlu0 %733
    %735 = vrot.lane.b32.xlu0 %v731, 15
    %v736 = vpop.permute.xlu0 %735
    %737 = vrot.lane.b32.xlu0 %v725, 15
    %v738 = vpop.permute.xlu0 %737
    %739 = vrot.lane.b32.xlu0 %v732, 15
    %v740 = vpop.permute.xlu0 %739
    %741 = vrot.lane.b32.xlu0 %v726, 15
    %v742 = vpop.permute.xlu0 %741
    %vm743 = vcmask 121856
    %v744 = vsel %vm743, %v734, %v736
    %v745 = vsel %vm743, %v736, %v738
    %v746 = vsel %vm743, %v738, %v740
    %v747 = vsel %vm743, %v740, %v742
    %v749 = vsel %vm335, %v727, 0
    %v751 = vsel %vm339, %v744, 0
    %v753 = vsel %vm339, %v745, 0
    %v755 = vsel %vm339, %v746, 0
    %v757 = vsel %vm339, %v747, 0
    %759 = vmatprep.subr.mxu0 %v753
    %760 = vmatpush1.msra.mxu0 %v751
    %761 = vmatprep.subr.mxu0 0.0
    %762 = vmatpush1.msra.mxu0 0.0
    %763 = vmatprep.subr.mxu0 0.0
    %764 = vmatpush1.msra.mxu0 0.0
    %765 = vmatprep.subr.mxu0 0.0
    %766 = vmatpush1.msra.mxu0 0.0
    %767 = vmatprep.subr.mxu0 0.0
    %768 = vmatpush1.msra.mxu0 0.0
    %769 = vmatprep.subr.mxu0 0.0
    %770 = vmatpush1.msra.mxu0 0.0
    %771 = vmatprep.subr.mxu0 0.0
    %772 = vmatpush1.msra.mxu0 0.0
    %773 = vmatprep.subr.mxu0 0.0
    %774 = vmatpush1.msra.mxu0 0.0
    %775 = vmatprep.subr.mxu0 0.0
    %776 = vmatpush1.msra.mxu0 0.0
    %777 = vmatprep.subr.mxu0 0.0
    %778 = vmatpush1.msra.mxu0 0.0
    %779 = vmatprep.subr.mxu0 0.0
    %780 = vmatpush1.msra.mxu0 0.0
    %781 = vmatprep.subr.mxu0 0.0
    %782 = vmatpush1.msra.mxu0 0.0
    %783 = vmatprep.subr.mxu0 0.0
    %784 = vmatpush1.msra.mxu0 0.0
    %785 = vmatprep.subr.mxu0 0.0
    %786 = vmatpush1.msra.mxu0 0.0
    %787 = vmatprep.subr.mxu0 0.0
    %788 = vmatpush1.msra.mxu0 0.0
    %789 = vmatprep.subr.mxu0 0.0
    %790 = vmatpush1.msra.mxu0 0.0
    %791 = vmatprep.subr.mxu0 0.0
    %792 = vmatpush1.msra.mxu0 0.0
    %793 = vmatprep.subr.mxu0 0.0
    %794 = vmatpush1.msra.mxu0 0.0
    %795 = vmatprep.subr.mxu0 0.0
    %796 = vmatpush1.msra.mxu0 0.0
    %797 = vmatprep.subr.mxu0 0.0
    %798 = vmatpush1.msra.mxu0 0.0
    %799 = vmatprep.subr.mxu0 0.0
    %800 = vmatpush1.msra.mxu0 0.0
    %801 = vmatprep.subr.mxu0 0.0
    %802 = vmatpush1.msra.mxu0 0.0
    %803 = vmatprep.subr.mxu0 0.0
    %804 = vmatpush1.msra.mxu0 0.0
    %805 = vmatprep.subr.mxu0 0.0
    %806 = vmatpush1.msra.mxu0 0.0
    %807 = vmatprep.subr.mxu0 0.0
    %808 = vmatpush1.msra.mxu0 0.0
    %809 = vmatprep.subr.mxu0 0.0
    %810 = vmatpush1.msra.mxu0 0.0
    %811 = vmatprep.subr.mxu0 0.0
    %812 = vmatpush1.msra.mxu0 0.0
    %813 = vmatprep.subr.mxu0 0.0
    %814 = vmatpush1.msra.mxu0 0.0
    %815 = vmatprep.subr.mxu0 0.0
    %816 = vmatpush1.msra.mxu0 0.0
    %817 = vmatprep.subr.mxu0 0.0
    %818 = vmatpush1.msra.mxu0 0.0
    %819 = vmatprep.subr.mxu0 0.0
    %820 = vmatpush1.msra.mxu0 0.0
    %821 = vmatprep.subr.mxu0 0.0
    %822 = vmatpush1.msra.mxu0 0.0
    %823 = vmatprep.mubr.f32.mxu0 0.0
    %824 = vmatmul.mubr.f32.gmra.mrb[0].mxu0 %v749
    %v825 = vpop.f32.mrb[0].mxu0
    %v826 = vadd.f32 0.0, %v825
    %v827 = vpop.f32.mrb[0].mxu0
    %v828 = vadd.f32 0.0, %v827
    %829 = vdwg.mxu0
    %830 = vmatprep.subr.mxu0 %v757
    %831 = vmatpush1.msra.mxu0 %v755
    %832 = vmatprep.subr.mxu0 0.0
    %833 = vmatpush1.msra.mxu0 0.0
    %834 = vmatprep.subr.mxu0 0.0
    %835 = vmatpush1.msra.mxu0 0.0
    %836 = vmatprep.subr.mxu0 0.0
    %837 = vmatpush1.msra.mxu0 0.0
    %838 = vmatprep.subr.mxu0 0.0
    %839 = vmatpush1.msra.mxu0 0.0
    %840 = vmatprep.subr.mxu0 0.0
    %841 = vmatpush1.msra.mxu0 0.0
    %842 = vmatprep.subr.mxu0 0.0
    %843 = vmatpush1.msra.mxu0 0.0
    %844 = vmatprep.subr.mxu0 0.0
    %845 = vmatpush1.msra.mxu0 0.0
    %846 = vmatprep.subr.mxu0 0.0
    %847 = vmatpush1.msra.mxu0 0.0
    %848 = vmatprep.subr.mxu0 0.0
    %849 = vmatpush1.msra.mxu0 0.0
    %850 = vmatprep.subr.mxu0 0.0
    %851 = vmatpush1.msra.mxu0 0.0
    %852 = vmatprep.subr.mxu0 0.0
    %853 = vmatpush1.msra.mxu0 0.0
    %854 = vmatprep.subr.mxu0 0.0
    %855 = vmatpush1.msra.mxu0 0.0
    %856 = vmatprep.subr.mxu0 0.0
    %857 = vmatpush1.msra.mxu0 0.0
    %858 = vmatprep.subr.mxu0 0.0
    %859 = vmatpush1.msra.mxu0 0.0
    %860 = vmatprep.subr.mxu0 0.0
    %861 = vmatpush1.msra.mxu0 0.0
    %862 = vmatprep.subr.mxu0 0.0
    %863 = vmatpush1.msra.mxu0 0.0
    %864 = vmatprep.subr.mxu0 0.0
    %865 = vmatpush1.msra.mxu0 0.0
    %866 = vmatprep.subr.mxu0 0.0
    %867 = vmatpush1.msra.mxu0 0.0
    %868 = vmatprep.subr.mxu0 0.0
    %869 = vmatpush1.msra.mxu0 0.0
    %870 = vmatprep.subr.mxu0 0.0
    %871 = vmatpush1.msra.mxu0 0.0
    %872 = vmatprep.subr.mxu0 0.0
    %873 = vmatpush1.msra.mxu0 0.0
    %874 = vmatprep.subr.mxu0 0.0
    %875 = vmatpush1.msra.mxu0 0.0
    %876 = vmatprep.subr.mxu0 0.0
    %877 = vmatpush1.msra.mxu0 0.0
    %878 = vmatprep.subr.mxu0 0.0
    %879 = vmatpush1.msra.mxu0 0.0
    %880 = vmatprep.subr.mxu0 0.0
    %881 = vmatpush1.msra.mxu0 0.0
    %882 = vmatprep.subr.mxu0 0.0
    %883 = vmatpush1.msra.mxu0 0.0
    %884 = vmatprep.subr.mxu0 0.0
    %885 = vmatpush1.msra.mxu0 0.0
    %886 = vmatprep.subr.mxu0 0.0
    %887 = vmatpush1.msra.mxu0 0.0
    %888 = vmatprep.subr.mxu0 0.0
    %889 = vmatpush1.msra.mxu0 0.0
    %890 = vmatprep.subr.mxu0 0.0
    %891 = vmatpush1.msra.mxu0 0.0
    %892 = vmatprep.subr.mxu0 0.0
    %893 = vmatpush1.msra.mxu0 0.0
    %894 = vmatprep.mubr.f32.mxu0 0.0
    %895 = vmatmul.mubr.f32.gmra.mrb[0].mxu0 %v749
    %v896 = vpop.f32.mrb[0].mxu0
    %v897 = vadd.f32 0.0, %v896
    %v898 = vpop.f32.mrb[0].mxu0
    %v899 = vadd.f32 0.0, %v898
    %900 = vdwg.mxu0
    %s901 = scalar_lea.vmem [#allocation27], 2
    %v902 = vld [vmem:[%s901] ss:$8 sm:$0xf]
    %v904 = vlaneseq
    %v905 = vshrl.u32 %v904, 7
    %v906 = vsub.s32 0, %v905
    %v907 = vrot.slane %v902, %v906
    %v908 = vlaneseq
    %v909 = vshrl.u32 %v908, 7
    %v910 = vsub.s32 1, %v909
    %v911 = vrot.slane %v902, %v910
    %v912 = vlaneseq
    %v913 = vshrl.u32 %v912, 7
    %v914 = vsub.s32 2, %v913
    %v915 = vrot.slane %v902, %v914
    %v916 = vlaneseq
    %v917 = vshrl.u32 %v916, 7
    %v918 = vsub.s32 3, %v917
    %v919 = vrot.slane %v902, %v918
    %v924 = vmul.f32 %v826, %v907
    %v925 = vmul.f32 %v828, %v911
    %v926 = vmul.f32 %v897, %v915
    %v927 = vmul.f32 %v899, %v919
    %v928 = vadd.f32 %v720, %v924
    %v929 = vadd.f32 %v721, %v925
    %v930 = vadd.f32 %v722, %v926
    %v931 = vadd.f32 %v723, %v927
    %v932 = vld [vmem:[%s0] sm:$0xff]
    %v933 = vld [vmem:[%s0 + $0x8] sm:$0xff]
    %v934 = vld [vmem:[%s0 + $0x10] sm:$0xf]
    %v935 = vld [vmem:[#allocation8 + $0x18] sm:$0xff]
    %v939 = vcombine.high %v932, %v932
    %v940 = vcombine.high %v933, %v933
    %941 = vrot.lane.b32.xlu0 %v932, 1
    %v942 = vpop.permute.xlu0 %941
    %943 = vrot.lane.b32.xlu0 %v939, 1
    %v944 = vpop.permute.xlu0 %943
    %945 = vrot.lane.b32.xlu0 %v933, 1
    %v946 = vpop.permute.xlu0 %945
    %947 = vrot.lane.b32.xlu0 %v940, 1
    %v948 = vpop.permute.xlu0 %947
    %949 = vrot.lane.b32.xlu0 %v934, 1
    %v950 = vpop.permute.xlu0 %949
    %vm951 = vcmask 7168
    %v952 = vsel %vm951, %v942, %v944
    %v953 = vsel %vm951, %v944, %v946
    %v954 = vsel %vm951, %v946, %v948
    %v955 = vsel %vm951, %v948, %v950
    %v957 = vsel %vm335, %v935, 0
    %v959 = vsel %vm339, %v952, 0
    %v961 = vsel %vm339, %v953, 0
    %v963 = vsel %vm339, %v954, 0
    %v965 = vsel %vm339, %v955, 0
    %967 = vmatprep.subr.mxu0 %v961
    %968 = vmatpush1.msra.mxu0 %v959
    %969 = vmatprep.subr.mxu0 0.0
    %970 = vmatpush1.msra.mxu0 0.0
    %971 = vmatprep.subr.mxu0 0.0
    %972 = vmatpush1.msra.mxu0 0.0
    %973 = vmatprep.subr.mxu0 0.0
    %974 = vmatpush1.msra.mxu0 0.0
    %975 = vmatprep.subr.mxu0 0.0
    %976 = vmatpush1.msra.mxu0 0.0
    %977 = vmatprep.subr.mxu0 0.0
    %978 = vmatpush1.msra.mxu0 0.0
    %979 = vmatprep.subr.mxu0 0.0
    %980 = vmatpush1.msra.mxu0 0.0
    %981 = vmatprep.subr.mxu0 0.0
    %982 = vmatpush1.msra.mxu0 0.0
    %983 = vmatprep.subr.mxu0 0.0
    %984 = vmatpush1.msra.mxu0 0.0
    %985 = vmatprep.subr.mxu0 0.0
    %986 = vmatpush1.msra.mxu0 0.0
    %987 = vmatprep.subr.mxu0 0.0
    %988 = vmatpush1.msra.mxu0 0.0
    %989 = vmatprep.subr.mxu0 0.0
    %990 = vmatpush1.msra.mxu0 0.0
    %991 = vmatprep.subr.mxu0 0.0
    %992 = vmatpush1.msra.mxu0 0.0
    %993 = vmatprep.subr.mxu0 0.0
    %994 = vmatpush1.msra.mxu0 0.0
    %995 = vmatprep.subr.mxu0 0.0
    %996 = vmatpush1.msra.mxu0 0.0
    %997 = vmatprep.subr.mxu0 0.0
    %998 = vmatpush1.msra.mxu0 0.0
    %999 = vmatprep.subr.mxu0 0.0
    %1000 = vmatpush1.msra.mxu0 0.0
    %1001 = vmatprep.subr.mxu0 0.0
    %1002 = vmatpush1.msra.mxu0 0.0
    %1003 = vmatprep.subr.mxu0 0.0
    %1004 = vmatpush1.msra.mxu0 0.0
    %1005 = vmatprep.subr.mxu0 0.0
    %1006 = vmatpush1.msra.mxu0 0.0
    %1007 = vmatprep.subr.mxu0 0.0
    %1008 = vmatpush1.msra.mxu0 0.0
    %1009 = vmatprep.subr.mxu0 0.0
    %1010 = vmatpush1.msra.mxu0 0.0
    %1011 = vmatprep.subr.mxu0 0.0
    %1012 = vmatpush1.msra.mxu0 0.0
    %1013 = vmatprep.subr.mxu0 0.0
    %1014 = vmatpush1.msra.mxu0 0.0
    %1015 = vmatprep.subr.mxu0 0.0
    %1016 = vmatpush1.msra.mxu0 0.0
    %1017 = vmatprep.subr.mxu0 0.0
    %1018 = vmatpush1.msra.mxu0 0.0
    %1019 = vmatprep.subr.mxu0 0.0
    %1020 = vmatpush1.msra.mxu0 0.0
    %1021 = vmatprep.subr.mxu0 0.0
    %1022 = vmatpush1.msra.mxu0 0.0
    %1023 = vmatprep.subr.mxu0 0.0
    %1024 = vmatpush1.msra.mxu0 0.0
    %1025 = vmatprep.subr.mxu0 0.0
    %1026 = vmatpush1.msra.mxu0 0.0
    %1027 = vmatprep.subr.mxu0 0.0
    %1028 = vmatpush1.msra.mxu0 0.0
    %1029 = vmatprep.subr.mxu0 0.0
    %1030 = vmatpush1.msra.mxu0 0.0
    %1031 = vmatprep.mubr.f32.mxu0 0.0
    %1032 = vmatmul.mubr.f32.gmra.mrb[0].mxu0 %v957
    %v1033 = vpop.f32.mrb[0].mxu0
    %v1034 = vadd.f32 0.0, %v1033
    %v1035 = vpop.f32.mrb[0].mxu0
    %v1036 = vadd.f32 0.0, %v1035
    %1037 = vdwg.mxu0
    %1038 = vmatprep.subr.mxu0 %v965
    %1039 = vmatpush1.msra.mxu0 %v963
    %1040 = vmatprep.subr.mxu0 0.0
    %1041 = vmatpush1.msra.mxu0 0.0
    %1042 = vmatprep.subr.mxu0 0.0
    %1043 = vmatpush1.msra.mxu0 0.0
    %1044 = vmatprep.subr.mxu0 0.0
    %1045 = vmatpush1.msra.mxu0 0.0
    %1046 = vmatprep.subr.mxu0 0.0
    %1047 = vmatpush1.msra.mxu0 0.0
    %1048 = vmatprep.subr.mxu0 0.0
    %1049 = vmatpush1.msra.mxu0 0.0
    %1050 = vmatprep.subr.mxu0 0.0
    %1051 = vmatpush1.msra.mxu0 0.0
    %1052 = vmatprep.subr.mxu0 0.0
    %1053 = vmatpush1.msra.mxu0 0.0
    %1054 = vmatprep.subr.mxu0 0.0
    %1055 = vmatpush1.msra.mxu0 0.0
    %1056 = vmatprep.subr.mxu0 0.0
    %1057 = vmatpush1.msra.mxu0 0.0
    %1058 = vmatprep.subr.mxu0 0.0
    %1059 = vmatpush1.msra.mxu0 0.0
    %1060 = vmatprep.subr.mxu0 0.0
    %1061 = vmatpush1.msra.mxu0 0.0
    %1062 = vmatprep.subr.mxu0 0.0
    %1063 = vmatpush1.msra.mxu0 0.0
    %1064 = vmatprep.subr.mxu0 0.0
    %1065 = vmatpush1.msra.mxu0 0.0
    %1066 = vmatprep.subr.mxu0 0.0
    %1067 = vmatpush1.msra.mxu0 0.0
    %1068 = vmatprep.subr.mxu0 0.0
    %1069 = vmatpush1.msra.mxu0 0.0
    %1070 = vmatprep.subr.mxu0 0.0
    %1071 = vmatpush1.msra.mxu0 0.0
    %1072 = vmatprep.subr.mxu0 0.0
    %1073 = vmatpush1.msra.mxu0 0.0
    %1074 = vmatprep.subr.mxu0 0.0
    %1075 = vmatpush1.msra.mxu0 0.0
    %1076 = vmatprep.subr.mxu0 0.0
    %1077 = vmatpush1.msra.mxu0 0.0
    %1078 = vmatprep.subr.mxu0 0.0
    %1079 = vmatpush1.msra.mxu0 0.0
    %1080 = vmatprep.subr.mxu0 0.0
    %1081 = vmatpush1.msra.mxu0 0.0
    %1082 = vmatprep.subr.mxu0 0.0
    %1083 = vmatpush1.msra.mxu0 0.0
    %1084 = vmatprep.subr.mxu0 0.0
    %1085 = vmatpush1.msra.mxu0 0.0
    %1086 = vmatprep.subr.mxu0 0.0
    %1087 = vmatpush1.msra.mxu0 0.0
    %1088 = vmatprep.subr.mxu0 0.0
    %1089 = vmatpush1.msra.mxu0 0.0
    %1090 = vmatprep.subr.mxu0 0.0
    %1091 = vmatpush1.msra.mxu0 0.0
    %1092 = vmatprep.subr.mxu0 0.0
    %1093 = vmatpush1.msra.mxu0 0.0
    %1094 = vmatprep.subr.mxu0 0.0
    %1095 = vmatpush1.msra.mxu0 0.0
    %1096 = vmatprep.subr.mxu0 0.0
    %1097 = vmatpush1.msra.mxu0 0.0
    %1098 = vmatprep.subr.mxu0 0.0
    %1099 = vmatpush1.msra.mxu0 0.0
    %1100 = vmatprep.subr.mxu0 0.0
    %1101 = vmatpush1.msra.mxu0 0.0
    %1102 = vmatprep.mubr.f32.mxu0 0.0
    %1103 = vmatmul.mubr.f32.gmra.mrb[0].mxu0 %v957
    %v1104 = vpop.f32.mrb[0].mxu0
    %v1105 = vadd.f32 0.0, %v1104
    %v1106 = vpop.f32.mrb[0].mxu0
    %v1107 = vadd.f32 0.0, %v1106
    %1108 = vdwg.mxu0
    %s1109 = scalar_lea.vmem [#allocation27], 3
    %v1110 = vld [vmem:[%s1109] ss:$8 sm:$0xf]
    %v1112 = vlaneseq
    %v1113 = vshrl.u32 %v1112, 7
    %v1114 = vsub.s32 0, %v1113
    %v1115 = vrot.slane %v1110, %v1114
    %v1116 = vlaneseq
    %v1117 = vshrl.u32 %v1116, 7
    %v1118 = vsub.s32 1, %v1117
    %v1119 = vrot.slane %v1110, %v1118
    %v1120 = vlaneseq
    %v1121 = vshrl.u32 %v1120, 7
    %v1122 = vsub.s32 2, %v1121
    %v1123 = vrot.slane %v1110, %v1122
    %v1124 = vlaneseq
    %v1125 = vshrl.u32 %v1124, 7
    %v1126 = vsub.s32 3, %v1125
    %v1127 = vrot.slane %v1110, %v1126
    %v1132 = vmul.f32 %v1034, %v1115
    %v1133 = vmul.f32 %v1036, %v1119
    %v1134 = vmul.f32 %v1105, %v1123
    %v1135 = vmul.f32 %v1107, %v1127
    %v1136 = vadd.f32 %v928, %v1132
    %v1137 = vadd.f32 %v929, %v1133
    %v1138 = vadd.f32 %v930, %v1134
    %v1139 = vadd.f32 %v931, %v1135
    %v1140 = vld [vmem:[%s0 + $0x4] sm:$0xff]
    %v1141 = vld [vmem:[%s0 + $0xc] sm:$0xff]
    %v1142 = vld [vmem:[#allocation8 + $0x20] sm:$0xff]
    %v1145 = vcombine.high %v1140, %v1140
    %v1146 = vcombine.high %v1141, %v1141
    %v1148 = vsel %vm335, %v1142, 0
    %v1150 = vsel %vm339, %v1140, 0
    %v1152 = vsel %vm339, %v1145, 0
    %v1154 = vsel %vm339, %v1141, 0
    %v1156 = vsel %vm339, %v1146, 0
    %1158 = vmatprep.subr.mxu0 %v1152
    %1159 = vmatpush1.msra.mxu0 %v1150
    %1160 = vmatprep.subr.mxu0 0.0
    %1161 = vmatpush1.msra.mxu0 0.0
    %1162 = vmatprep.subr.mxu0 0.0
    %1163 = vmatpush1.msra.mxu0 0.0
    %1164 = vmatprep.subr.mxu0 0.0
    %1165 = vmatpush1.msra.mxu0 0.0
    %1166 = vmatprep.subr.mxu0 0.0
    %1167 = vmatpush1.msra.mxu0 0.0
    %1168 = vmatprep.subr.mxu0 0.0
    %1169 = vmatpush1.msra.mxu0 0.0
    %1170 = vmatprep.subr.mxu0 0.0
    %1171 = vmatpush1.msra.mxu0 0.0
    %1172 = vmatprep.subr.mxu0 0.0
    %1173 = vmatpush1.msra.mxu0 0.0
    %1174 = vmatprep.subr.mxu0 0.0
    %1175 = vmatpush1.msra.mxu0 0.0
    %1176 = vmatprep.subr.mxu0 0.0
    %1177 = vmatpush1.msra.mxu0 0.0
    %1178 = vmatprep.subr.mxu0 0.0
    %1179 = vmatpush1.msra.mxu0 0.0
    %1180 = vmatprep.subr.mxu0 0.0
    %1181 = vmatpush1.msra.mxu0 0.0
    %1182 = vmatprep.subr.mxu0 0.0
    %1183 = vmatpush1.msra.mxu0 0.0
    %1184 = vmatprep.subr.mxu0 0.0
    %1185 = vmatpush1.msra.mxu0 0.0
    %1186 = vmatprep.subr.mxu0 0.0
    %1187 = vmatpush1.msra.mxu0 0.0
    %1188 = vmatprep.subr.mxu0 0.0
    %1189 = vmatpush1.msra.mxu0 0.0
    %1190 = vmatprep.subr.mxu0 0.0
    %1191 = vmatpush1.msra.mxu0 0.0
    %1192 = vmatprep.subr.mxu0 0.0
    %1193 = vmatpush1.msra.mxu0 0.0
    %1194 = vmatprep.subr.mxu0 0.0
    %1195 = vmatpush1.msra.mxu0 0.0
    %1196 = vmatprep.subr.mxu0 0.0
    %1197 = vmatpush1.msra.mxu0 0.0
    %1198 = vmatprep.subr.mxu0 0.0
    %1199 = vmatpush1.msra.mxu0 0.0
    %1200 = vmatprep.subr.mxu0 0.0
    %1201 = vmatpush1.msra.mxu0 0.0
    %1202 = vmatprep.subr.mxu0 0.0
    %1203 = vmatpush1.msra.mxu0 0.0
    %1204 = vmatprep.subr.mxu0 0.0
    %1205 = vmatpush1.msra.mxu0 0.0
    %1206 = vmatprep.subr.mxu0 0.0
    %1207 = vmatpush1.msra.mxu0 0.0
    %1208 = vmatprep.subr.mxu0 0.0
    %1209 = vmatpush1.msra.mxu0 0.0
    %1210 = vmatprep.subr.mxu0 0.0
    %1211 = vmatpush1.msra.mxu0 0.0
    %1212 = vmatprep.subr.mxu0 0.0
    %1213 = vmatpush1.msra.mxu0 0.0
    %1214 = vmatprep.subr.mxu0 0.0
    %1215 = vmatpush1.msra.mxu0 0.0
    %1216 = vmatprep.subr.mxu0 0.0
    %1217 = vmatpush1.msra.mxu0 0.0
    %1218 = vmatprep.subr.mxu0 0.0
    %1219 = vmatpush1.msra.mxu0 0.0
    %1220 = vmatprep.subr.mxu0 0.0
    %1221 = vmatpush1.msra.mxu0 0.0
    %1222 = vmatprep.mubr.f32.mxu0 0.0
    %1223 = vmatmul.mubr.f32.gmra.mrb[0].mxu0 %v1148
    %v1224 = vpop.f32.mrb[0].mxu0
    %v1225 = vadd.f32 0.0, %v1224
    %v1226 = vpop.f32.mrb[0].mxu0
    %v1227 = vadd.f32 0.0, %v1226
    %1228 = vdwg.mxu0
    %1229 = vmatprep.subr.mxu0 %v1156
    %1230 = vmatpush1.msra.mxu0 %v1154
    %1231 = vmatprep.subr.mxu0 0.0
    %1232 = vmatpush1.msra.mxu0 0.0
    %1233 = vmatprep.subr.mxu0 0.0
    %1234 = vmatpush1.msra.mxu0 0.0
    %1235 = vmatprep.subr.mxu0 0.0
    %1236 = vmatpush1.msra.mxu0 0.0
    %1237 = vmatprep.subr.mxu0 0.0
    %1238 = vmatpush1.msra.mxu0 0.0
    %1239 = vmatprep.subr.mxu0 0.0
    %1240 = vmatpush1.msra.mxu0 0.0
    %1241 = vmatprep.subr.mxu0 0.0
    %1242 = vmatpush1.msra.mxu0 0.0
    %1243 = vmatprep.subr.mxu0 0.0
    %1244 = vmatpush1.msra.mxu0 0.0
    %1245 = vmatprep.subr.mxu0 0.0
    %1246 = vmatpush1.msra.mxu0 0.0
    %1247 = vmatprep.subr.mxu0 0.0
    %1248 = vmatpush1.msra.mxu0 0.0
    %1249 = vmatprep.subr.mxu0 0.0
    %1250 = vmatpush1.msra.mxu0 0.0
    %1251 = vmatprep.subr.mxu0 0.0
    %1252 = vmatpush1.msra.mxu0 0.0
    %1253 = vmatprep.subr.mxu0 0.0
    %1254 = vmatpush1.msra.mxu0 0.0
    %1255 = vmatprep.subr.mxu0 0.0
    %1256 = vmatpush1.msra.mxu0 0.0
    %1257 = vmatprep.subr.mxu0 0.0
    %1258 = vmatpush1.msra.mxu0 0.0
    %1259 = vmatprep.subr.mxu0 0.0
    %1260 = vmatpush1.msra.mxu0 0.0
    %1261 = vmatprep.subr.mxu0 0.0
    %1262 = vmatpush1.msra.mxu0 0.0
    %1263 = vmatprep.subr.mxu0 0.0
    %1264 = vmatpush1.msra.mxu0 0.0
    %1265 = vmatprep.subr.mxu0 0.0
    %1266 = vmatpush1.msra.mxu0 0.0
    %1267 = vmatprep.subr.mxu0 0.0
    %1268 = vmatpush1.msra.mxu0 0.0
    %1269 = vmatprep.subr.mxu0 0.0
    %1270 = vmatpush1.msra.mxu0 0.0
    %1271 = vmatprep.subr.mxu0 0.0
    %1272 = vmatpush1.msra.mxu0 0.0
    %1273 = vmatprep.subr.mxu0 0.0
    %1274 = vmatpush1.msra.mxu0 0.0
    %1275 = vmatprep.subr.mxu0 0.0
    %1276 = vmatpush1.msra.mxu0 0.0
    %1277 = vmatprep.subr.mxu0 0.0
    %1278 = vmatpush1.msra.mxu0 0.0
    %1279 = vmatprep.subr.mxu0 0.0
    %1280 = vmatpush1.msra.mxu0 0.0
    %1281 = vmatprep.subr.mxu0 0.0
    %1282 = vmatpush1.msra.mxu0 0.0
    %1283 = vmatprep.subr.mxu0 0.0
    %1284 = vmatpush1.msra.mxu0 0.0
    %1285 = vmatprep.subr.mxu0 0.0
    %1286 = vmatpush1.msra.mxu0 0.0
    %1287 = vmatprep.subr.mxu0 0.0
    %1288 = vmatpush1.msra.mxu0 0.0
    %1289 = vmatprep.subr.mxu0 0.0
    %1290 = vmatpush1.msra.mxu0 0.0
    %1291 = vmatprep.subr.mxu0 0.0
    %1292 = vmatpush1.msra.mxu0 0.0
    %1293 = vmatprep.mubr.f32.mxu0 0.0
    %1294 = vmatmul.mubr.f32.gmra.mrb[0].mxu0 %v1148
    %v1295 = vpop.f32.mrb[0].mxu0
    %v1296 = vadd.f32 0.0, %v1295
    %v1297 = vpop.f32.mrb[0].mxu0
    %v1298 = vadd.f32 0.0, %v1297
    %1299 = vdwg.mxu0
    %v1300 = vadd.f32 %v1136, %v1225
    %v1301 = vadd.f32 %v1137, %v1227
    %v1302 = vadd.f32 %v1138, %v1296
    %v1303 = vadd.f32 %v1139, %v1298
    %v1304 = vld [vmem:[%s0 + $0x4] sm:$0xff]
    %v1305 = vld [vmem:[%s0 + $0xc] sm:$0xff]
    %v1306 = vld [vmem:[%s0 + $0x14] sm:$0xf]
    %v1307 = vld [vmem:[#allocation8 + $0x28] sm:$0xff]
    %v1311 = vcombine.high %v1304, %v1304
    %v1312 = vcombine.high %v1305, %v1305
    %1313 = vrot.lane.b32.xlu0 %v1304, 127
    %v1314 = vpop.permute.xlu0 %1313
    %1315 = vrot.lane.b32.xlu0 %v1311, 127
    %v1316 = vpop.permute.xlu0 %1315
    %1317 = vrot.lane.b32.xlu0 %v1305, 127
    %v1318 = vpop.permute.xlu0 %1317
    %1319 = vrot.lane.b32.xlu0 %v1312, 127
    %v1320 = vpop.permute.xlu0 %1319
    %1321 = vrot.lane.b32.xlu0 %v1306, 127
    %v1322 = vpop.permute.xlu0 %1321
    %vm1323 = vcmask 1039360
    %v1324 = vsel %vm1323, %v1314, %v1316
    %v1325 = vsel %vm1323, %v1316, %v1318
    %v1326 = vsel %vm1323, %v1318, %v1320
    %v1327 = vsel %vm1323, %v1320, %v1322
    %v1329 = vsel %vm335, %v1307, 0
    %v1331 = vsel %vm339, %v1324, 0
    %v1333 = vsel %vm339, %v1325, 0
    %v1335 = vsel %vm339, %v1326, 0
    %v1337 = vsel %vm339, %v1327, 0
    %1339 = vmatprep.subr.mxu0 %v1333
    %1340 = vmatpush1.msra.mxu0 %v1331
    %1341 = vmatprep.subr.mxu0 0.0
    %1342 = vmatpush1.msra.mxu0 0.0
    %1343 = vmatprep.subr.mxu0 0.0
    %1344 = vmatpush1.msra.mxu0 0.0
    %1345 = vmatprep.subr.mxu0 0.0
    %1346 = vmatpush1.msra.mxu0 0.0
    %1347 = vmatprep.subr.mxu0 0.0
    %1348 = vmatpush1.msra.mxu0 0.0
    %1349 = vmatprep.subr.mxu0 0.0
    %1350 = vmatpush1.msra.mxu0 0.0
    %1351 = vmatprep.subr.mxu0 0.0
    %1352 = vmatpush1.msra.mxu0 0.0
    %1353 = vmatprep.subr.mxu0 0.0
    %1354 = vmatpush1.msra.mxu0 0.0
    %1355 = vmatprep.subr.mxu0 0.0
    %1356 = vmatpush1.msra.mxu0 0.0
    %1357 = vmatprep.subr.mxu0 0.0
    %1358 = vmatpush1.msra.mxu0 0.0
    %1359 = vmatprep.subr.mxu0 0.0
    %1360 = vmatpush1.msra.mxu0 0.0
    %1361 = vmatprep.subr.mxu0 0.0
    %1362 = vmatpush1.msra.mxu0 0.0
    %1363 = vmatprep.subr.mxu0 0.0
    %1364 = vmatpush1.msra.mxu0 0.0
    %1365 = vmatprep.subr.mxu0 0.0
    %1366 = vmatpush1.msra.mxu0 0.0
    %1367 = vmatprep.subr.mxu0 0.0
    %1368 = vmatpush1.msra.mxu0 0.0
    %1369 = vmatprep.subr.mxu0 0.0
    %1370 = vmatpush1.msra.mxu0 0.0
    %1371 = vmatprep.subr.mxu0 0.0
    %1372 = vmatpush1.msra.mxu0 0.0
    %1373 = vmatprep.subr.mxu0 0.0
    %1374 = vmatpush1.msra.mxu0 0.0
    %1375 = vmatprep.subr.mxu0 0.0
    %1376 = vmatpush1.msra.mxu0 0.0
    %1377 = vmatprep.subr.mxu0 0.0
    %1378 = vmatpush1.msra.mxu0 0.0
    %1379 = vmatprep.subr.mxu0 0.0
    %1380 = vmatpush1.msra.mxu0 0.0
    %1381 = vmatprep.subr.mxu0 0.0
    %1382 = vmatpush1.msra.mxu0 0.0
    %1383 = vmatprep.subr.mxu0 0.0
    %1384 = vmatpush1.msra.mxu0 0.0
    %1385 = vmatprep.subr.mxu0 0.0
    %1386 = vmatpush1.msra.mxu0 0.0
    %1387 = vmatprep.subr.mxu0 0.0
    %1388 = vmatpush1.msra.mxu0 0.0
    %1389 = vmatprep.subr.mxu0 0.0
    %1390 = vmatpush1.msra.mxu0 0.0
    %1391 = vmatprep.subr.mxu0 0.0
    %1392 = vmatpush1.msra.mxu0 0.0
    %1393 = vmatprep.subr.mxu0 0.0
    %1394 = vmatpush1.msra.mxu0 0.0
    %1395 = vmatprep.subr.mxu0 0.0
    %1396 = vmatpush1.msra.mxu0 0.0
    %1397 = vmatprep.subr.mxu0 0.0
    %1398 = vmatpush1.msra.mxu0 0.0
    %1399 = vmatprep.subr.mxu0 0.0
    %1400 = vmatpush1.msra.mxu0 0.0
    %1401 = vmatprep.subr.mxu0 0.0
    %1402 = vmatpush1.msra.mxu0 0.0
    %1403 = vmatprep.mubr.f32.mxu0 0.0
    %1404 = vmatmul.mubr.f32.gmra.mrb[0].mxu0 %v1329
    %v1405 = vpop.f32.mrb[0].mxu0
    %v1406 = vadd.f32 0.0, %v1405
    %v1407 = vpop.f32.mrb[0].mxu0
    %v1408 = vadd.f32 0.0, %v1407
    %1409 = vdwg.mxu0
    %1410 = vmatprep.subr.mxu0 %v1337
    %1411 = vmatpush1.msra.mxu0 %v1335
    %1412 = vmatprep.subr.mxu0 0.0
    %1413 = vmatpush1.msra.mxu0 0.0
    %1414 = vmatprep.subr.mxu0 0.0
    %1415 = vmatpush1.msra.mxu0 0.0
    %1416 = vmatprep.subr.mxu0 0.0
    %1417 = vmatpush1.msra.mxu0 0.0
    %1418 = vmatprep.subr.mxu0 0.0
    %1419 = vmatpush1.msra.mxu0 0.0
    %1420 = vmatprep.subr.mxu0 0.0
    %1421 = vmatpush1.msra.mxu0 0.0
    %1422 = vmatprep.subr.mxu0 0.0
    %1423 = vmatpush1.msra.mxu0 0.0
    %1424 = vmatprep.subr.mxu0 0.0
    %1425 = vmatpush1.msra.mxu0 0.0
    %1426 = vmatprep.subr.mxu0 0.0
    %1427 = vmatpush1.msra.mxu0 0.0
    %1428 = vmatprep.subr.mxu0 0.0
    %1429 = vmatpush1.msra.mxu0 0.0
    %1430 = vmatprep.subr.mxu0 0.0
    %1431 = vmatpush1.msra.mxu0 0.0
    %1432 = vmatprep.subr.mxu0 0.0
    %1433 = vmatpush1.msra.mxu0 0.0
    %1434 = vmatprep.subr.mxu0 0.0
    %1435 = vmatpush1.msra.mxu0 0.0
    %1436 = vmatprep.subr.mxu0 0.0
    %1437 = vmatpush1.msra.mxu0 0.0
    %1438 = vmatprep.subr.mxu0 0.0
    %1439 = vmatpush1.msra.mxu0 0.0
    %1440 = vmatprep.subr.mxu0 0.0
    %1441 = vmatpush1.msra.mxu0 0.0
    %1442 = vmatprep.subr.mxu0 0.0
    %1443 = vmatpush1.msra.mxu0 0.0
    %1444 = vmatprep.subr.mxu0 0.0
    %1445 = vmatpush1.msra.mxu0 0.0
    %1446 = vmatprep.subr.mxu0 0.0
    %1447 = vmatpush1.msra.mxu0 0.0
    %1448 = vmatprep.subr.mxu0 0.0
    %1449 = vmatpush1.msra.mxu0 0.0
    %1450 = vmatprep.subr.mxu0 0.0
    %1451 = vmatpush1.msra.mxu0 0.0
    %1452 = vmatprep.subr.mxu0 0.0
    %1453 = vmatpush1.msra.mxu0 0.0
    %1454 = vmatprep.subr.mxu0 0.0
    %1455 = vmatpush1.msra.mxu0 0.0
    %1456 = vmatprep.subr.mxu0 0.0
    %1457 = vmatpush1.msra.mxu0 0.0
    %1458 = vmatprep.subr.mxu0 0.0
    %1459 = vmatpush1.msra.mxu0 0.0
    %1460 = vmatprep.subr.mxu0 0.0
    %1461 = vmatpush1.msra.mxu0 0.0
    %1462 = vmatprep.subr.mxu0 0.0
    %1463 = vmatpush1.msra.mxu0 0.0
    %1464 = vmatprep.subr.mxu0 0.0
    %1465 = vmatpush1.msra.mxu0 0.0
    %1466 = vmatprep.subr.mxu0 0.0
    %1467 = vmatpush1.msra.mxu0 0.0
    %1468 = vmatprep.subr.mxu0 0.0
    %1469 = vmatpush1.msra.mxu0 0.0
    %1470 = vmatprep.subr.mxu0 0.0
    %1471 = vmatpush1.msra.mxu0 0.0
    %1472 = vmatprep.subr.mxu0 0.0
    %1473 = vmatpush1.msra.mxu0 0.0
    %1474 = vmatprep.mubr.f32.mxu0 0.0
    %1475 = vmatmul.mubr.f32.gmra.mrb[0].mxu0 %v1329
    %v1476 = vpop.f32.mrb[0].mxu0
    %v1477 = vadd.f32 0.0, %v1476
    %v1478 = vpop.f32.mrb[0].mxu0
    %v1479 = vadd.f32 0.0, %v1478
    %1480 = vdwg.mxu0
    %s1481 = scalar_lea.vmem [#allocation27], 5
    %v1482 = vld [vmem:[%s1481] ss:$8 sm:$0xf]
    %v1484 = vlaneseq
    %v1485 = vshrl.u32 %v1484, 7
    %v1486 = vsub.s32 0, %v1485
    %v1487 = vrot.slane %v1482, %v1486
    %v1488 = vlaneseq
    %v1489 = vshrl.u32 %v1488, 7
    %v1490 = vsub.s32 1, %v1489
    %v1491 = vrot.slane %v1482, %v1490
    %v1492 = vlaneseq
    %v1493 = vshrl.u32 %v1492, 7
    %v1494 = vsub.s32 2, %v1493
    %v1495 = vrot.slane %v1482, %v1494
    %v1496 = vlaneseq
    %v1497 = vshrl.u32 %v1496, 7
    %v1498 = vsub.s32 3, %v1497
    %v1499 = vrot.slane %v1482, %v1498
    %v1504 = vmul.f32 %v1406, %v1487
    %v1505 = vmul.f32 %v1408, %v1491
    %v1506 = vmul.f32 %v1477, %v1495
    %v1507 = vmul.f32 %v1479, %v1499
    %v1508 = vadd.f32 %v1300, %v1504
    %v1509 = vadd.f32 %v1301, %v1505
    %v1510 = vadd.f32 %v1302, %v1506
    %v1511 = vadd.f32 %v1303, %v1507
    %v1512 = vld [vmem:[%s0 + $0x4] sm:$0xff]
    %v1513 = vld [vmem:[%s0 + $0xc] sm:$0xff]
    %v1514 = vld [vmem:[%s0 + $0x14] sm:$0xf]
    %v1515 = vld [vmem:[#allocation8 + $0x30] sm:$0xff]
    %v1519 = vcombine.high %v1512, %v1512
    %v1520 = vcombine.high %v1513, %v1513
    %1521 = vrot.lane.b32.xlu0 %v1512, 113
    %v1522 = vpop.permute.xlu0 %1521
    %1523 = vrot.lane.b32.xlu0 %v1519, 113
    %v1524 = vpop.permute.xlu0 %1523
    %1525 = vrot.lane.b32.xlu0 %v1513, 113
    %v1526 = vpop.permute.xlu0 %1525
    %1527 = vrot.lane.b32.xlu0 %v1520, 113
    %v1528 = vpop.permute.xlu0 %1527
    %1529 = vrot.lane.b32.xlu0 %v1514, 113
    %v1530 = vpop.permute.xlu0 %1529
    %vm1531 = vcmask 924672
    %v1532 = vsel %vm1531, %v1522, %v1524
    %v1533 = vsel %vm1531, %v1524, %v1526
    %v1534 = vsel %vm1531, %v1526, %v1528
    %v1535 = vsel %vm1531, %v1528, %v1530
    %v1537 = vsel %vm335, %v1515, 0
    %v1539 = vsel %vm339, %v1532, 0
    %v1541 = vsel %vm339, %v1533, 0
    %v1543 = vsel %vm339, %v1534, 0
    %v1545 = vsel %vm339, %v1535, 0
    %1547 = vmatprep.subr.mxu0 %v1541
    %1548 = vmatpush1.msra.mxu0 %v1539
    %1549 = vmatprep.subr.mxu0 0.0
    %1550 = vmatpush1.msra.mxu0 0.0
    %1551 = vmatprep.subr.mxu0 0.0
    %1552 = vmatpush1.msra.mxu0 0.0
    %1553 = vmatprep.subr.mxu0 0.0
    %1554 = vmatpush1.msra.mxu0 0.0
    %1555 = vmatprep.subr.mxu0 0.0
    %1556 = vmatpush1.msra.mxu0 0.0
    %1557 = vmatprep.subr.mxu0 0.0
    %1558 = vmatpush1.msra.mxu0 0.0
    %1559 = vmatprep.subr.mxu0 0.0
    %1560 = vmatpush1.msra.mxu0 0.0
    %1561 = vmatprep.subr.mxu0 0.0
    %1562 = vmatpush1.msra.mxu0 0.0
    %1563 = vmatprep.subr.mxu0 0.0
    %1564 = vmatpush1.msra.mxu0 0.0
    %1565 = vmatprep.subr.mxu0 0.0
    %1566 = vmatpush1.msra.mxu0 0.0
    %1567 = vmatprep.subr.mxu0 0.0
    %1568 = vmatpush1.msra.mxu0 0.0
    %1569 = vmatprep.subr.mxu0 0.0
    %1570 = vmatpush1.msra.mxu0 0.0
    %1571 = vmatprep.subr.mxu0 0.0
    %1572 = vmatpush1.msra.mxu0 0.0
    %1573 = vmatprep.subr.mxu0 0.0
    %1574 = vmatpush1.msra.mxu0 0.0
    %1575 = vmatprep.subr.mxu0 0.0
    %1576 = vmatpush1.msra.mxu0 0.0
    %1577 = vmatprep.subr.mxu0 0.0
    %1578 = vmatpush1.msra.mxu0 0.0
    %1579 = vmatprep.subr.mxu0 0.0
    %1580 = vmatpush1.msra.mxu0 0.0
    %1581 = vmatprep.subr.mxu0 0.0
    %1582 = vmatpush1.msra.mxu0 0.0
    %1583 = vmatprep.subr.mxu0 0.0
    %1584 = vmatpush1.msra.mxu0 0.0
    %1585 = vmatprep.subr.mxu0 0.0
    %1586 = vmatpush1.msra.mxu0 0.0
    %1587 = vmatprep.subr.mxu0 0.0
    %1588 = vmatpush1.msra.mxu0 0.0
    %1589 = vmatprep.subr.mxu0 0.0
    %1590 = vmatpush1.msra.mxu0 0.0
    %1591 = vmatprep.subr.mxu0 0.0
    %1592 = vmatpush1.msra.mxu0 0.0
    %1593 = vmatprep.subr.mxu0 0.0
    %1594 = vmatpush1.msra.mxu0 0.0
    %1595 = vmatprep.subr.mxu0 0.0
    %1596 = vmatpush1.msra.mxu0 0.0
    %1597 = vmatprep.subr.mxu0 0.0
    %1598 = vmatpush1.msra.mxu0 0.0
    %1599 = vmatprep.subr.mxu0 0.0
    %1600 = vmatpush1.msra.mxu0 0.0
    %1601 = vmatprep.subr.mxu0 0.0
    %1602 = vmatpush1.msra.mxu0 0.0
    %1603 = vmatprep.subr.mxu0 0.0
    %1604 = vmatpush1.msra.mxu0 0.0
    %1605 = vmatprep.subr.mxu0 0.0
    %1606 = vmatpush1.msra.mxu0 0.0
    %1607 = vmatprep.subr.mxu0 0.0
    %1608 = vmatpush1.msra.mxu0 0.0
    %1609 = vmatprep.subr.mxu0 0.0
    %1610 = vmatpush1.msra.mxu0 0.0
    %1611 = vmatprep.mubr.f32.mxu0 0.0
    %1612 = vmatmul.mubr.f32.gmra.mrb[0].mxu0 %v1537
    %v1613 = vpop.f32.mrb[0].mxu0
    %v1614 = vadd.f32 0.0, %v1613
    %v1615 = vpop.f32.mrb[0].mxu0
    %v1616 = vadd.f32 0.0, %v1615
    %1617 = vdwg.mxu0
    %1618 = vmatprep.subr.mxu0 %v1545
    %1619 = vmatpush1.msra.mxu0 %v1543
    %1620 = vmatprep.subr.mxu0 0.0
    %1621 = vmatpush1.msra.mxu0 0.0
    %1622 = vmatprep.subr.mxu0 0.0
    %1623 = vmatpush1.msra.mxu0 0.0
    %1624 = vmatprep.subr.mxu0 0.0
    %1625 = vmatpush1.msra.mxu0 0.0
    %1626 = vmatprep.subr.mxu0 0.0
    %1627 = vmatpush1.msra.mxu0 0.0
    %1628 = vmatprep.subr.mxu0 0.0
    %1629 = vmatpush1.msra.mxu0 0.0
    %1630 = vmatprep.subr.mxu0 0.0
    %1631 = vmatpush1.msra.mxu0 0.0
    %1632 = vmatprep.subr.mxu0 0.0
    %1633 = vmatpush1.msra.mxu0 0.0
    %1634 = vmatprep.subr.mxu0 0.0
    %1635 = vmatpush1.msra.mxu0 0.0
    %1636 = vmatprep.subr.mxu0 0.0
    %1637 = vmatpush1.msra.mxu0 0.0
    %1638 = vmatprep.subr.mxu0 0.0
    %1639 = vmatpush1.msra.mxu0 0.0
    %1640 = vmatprep.subr.mxu0 0.0
    %1641 = vmatpush1.msra.mxu0 0.0
    %1642 = vmatprep.subr.mxu0 0.0
    %1643 = vmatpush1.msra.mxu0 0.0
    %1644 = vmatprep.subr.mxu0 0.0
    %1645 = vmatpush1.msra.mxu0 0.0
    %1646 = vmatprep.subr.mxu0 0.0
    %1647 = vmatpush1.msra.mxu0 0.0
    %1648 = vmatprep.subr.mxu0 0.0
    %1649 = vmatpush1.msra.mxu0 0.0
    %1650 = vmatprep.subr.mxu0 0.0
    %1651 = vmatpush1.msra.mxu0 0.0
    %1652 = vmatprep.subr.mxu0 0.0
    %1653 = vmatpush1.msra.mxu0 0.0
    %1654 = vmatprep.subr.mxu0 0.0
    %1655 = vmatpush1.msra.mxu0 0.0
    %1656 = vmatprep.subr.mxu0 0.0
    %1657 = vmatpush1.msra.mxu0 0.0
    %1658 = vmatprep.subr.mxu0 0.0
    %1659 = vmatpush1.msra.mxu0 0.0
    %1660 = vmatprep.subr.mxu0 0.0
    %1661 = vmatpush1.msra.mxu0 0.0
    %1662 = vmatprep.subr.mxu0 0.0
    %1663 = vmatpush1.msra.mxu0 0.0
    %1664 = vmatprep.subr.mxu0 0.0
    %1665 = vmatpush1.msra.mxu0 0.0
    %1666 = vmatprep.subr.mxu0 0.0
    %1667 = vmatpush1.msra.mxu0 0.0
    %1668 = vmatprep.subr.mxu0 0.0
    %1669 = vmatpush1.msra.mxu0 0.0
    %1670 = vmatprep.subr.mxu0 0.0
    %1671 = vmatpush1.msra.mxu0 0.0
    %1672 = vmatprep.subr.mxu0 0.0
    %1673 = vmatpush1.msra.mxu0 0.0
    %1674 = vmatprep.subr.mxu0 0.0
    %1675 = vmatpush1.msra.mxu0 0.0
    %1676 = vmatprep.subr.mxu0 0.0
    %1677 = vmatpush1.msra.mxu0 0.0
    %1678 = vmatprep.subr.mxu0 0.0
    %1679 = vmatpush1.msra.mxu0 0.0
    %1680 = vmatprep.subr.mxu0 0.0
    %1681 = vmatpush1.msra.mxu0 0.0
    %1682 = vmatprep.mubr.f32.mxu0 0.0
    %1683 = vmatmul.mubr.f32.gmra.mrb[0].mxu0 %v1537
    %v1684 = vpop.f32.mrb[0].mxu0
    %v1685 = vadd.f32 0.0, %v1684
    %v1686 = vpop.f32.mrb[0].mxu0
    %v1687 = vadd.f32 0.0, %v1686
    %1688 = vdwg.mxu0
    %s1689 = scalar_lea.vmem [#allocation27], 6
    %v1690 = vld [vmem:[%s1689] ss:$8 sm:$0xf]
    %v1692 = vlaneseq
    %v1693 = vshrl.u32 %v1692, 7
    %v1694 = vsub.s32 0, %v1693
    %v1695 = vrot.slane %v1690, %v1694
    %v1696 = vlaneseq
    %v1697 = vshrl.u32 %v1696, 7
    %v1698 = vsub.s32 1, %v1697
    %v1699 = vrot.slane %v1690, %v1698
    %v1700 = vlaneseq
    %v1701 = vshrl.u32 %v1700, 7
    %v1702 = vsub.s32 2, %v1701
    %v1703 = vrot.slane %v1690, %v1702
    %v1704 = vlaneseq
    %v1705 = vshrl.u32 %v1704, 7
    %v1706 = vsub.s32 3, %v1705
    %v1707 = vrot.slane %v1690, %v1706
    %v1712 = vmul.f32 %v1614, %v1695
    %v1713 = vmul.f32 %v1616, %v1699
    %v1714 = vmul.f32 %v1685, %v1703
    %v1715 = vmul.f32 %v1687, %v1707
    %v1716 = vadd.f32 %v1508, %v1712
    %v1717 = vadd.f32 %v1509, %v1713
    %v1718 = vadd.f32 %v1510, %v1714
    %v1719 = vadd.f32 %v1511, %v1715
    %v1720 = vld [vmem:[%s0 + $0x4] sm:$0xff]
    %v1721 = vld [vmem:[%s0 + $0xc] sm:$0xff]
    %v1722 = vld [vmem:[%s0 + $0x14] sm:$0xf]
    %v1723 = vld [vmem:[#allocation8 + $0x38] sm:$0xff]
    %v1727 = vcombine.high %v1720, %v1720
    %v1728 = vcombine.high %v1721, %v1721
    %1729 = vrot.lane.b32.xlu0 %v1720, 112
    %v1730 = vpop.permute.xlu0 %1729
    %1731 = vrot.lane.b32.xlu0 %v1727, 112
    %v1732 = vpop.permute.xlu0 %1731
    %1733 = vrot.lane.b32.xlu0 %v1721, 112
    %v1734 = vpop.permute.xlu0 %1733
    %1735 = vrot.lane.b32.xlu0 %v1728, 112
    %v1736 = vpop.permute.xlu0 %1735
    %1737 = vrot.lane.b32.xlu0 %v1722, 112
    %v1738 = vpop.permute.xlu0 %1737
    %vm1739 = vcmask 916480
    %v1740 = vsel %vm1739, %v1730, %v1732
    %v1741 = vsel %vm1739, %v1732, %v1734
    %v1742 = vsel %vm1739, %v1734, %v1736
    %v1743 = vsel %vm1739, %v1736, %v1738
    %v1745 = vsel %vm335, %v1723, 0
    %v1747 = vsel %vm339, %v1740, 0
    %v1749 = vsel %vm339, %v1741, 0
    %v1751 = vsel %vm339, %v1742, 0
    %v1753 = vsel %vm339, %v1743, 0
    %1755 = vmatprep.subr.mxu0 %v1749
    %1756 = vmatpush1.msra.mxu0 %v1747
    %1757 = vmatprep.subr.mxu0 0.0
    %1758 = vmatpush1.msra.mxu0 0.0
    %1759 = vmatprep.subr.mxu0 0.0
    %1760 = vmatpush1.msra.mxu0 0.0
    %1761 = vmatprep.subr.mxu0 0.0
    %1762 = vmatpush1.msra.mxu0 0.0
    %1763 = vmatprep.subr.mxu0 0.0
    %1764 = vmatpush1.msra.mxu0 0.0
    %1765 = vmatprep.subr.mxu0 0.0
    %1766 = vmatpush1.msra.mxu0 0.0
    %1767 = vmatprep.subr.mxu0 0.0
    %1768 = vmatpush1.msra.mxu0 0.0
    %1769 = vmatprep.subr.mxu0 0.0
    %1770 = vmatpush1.msra.mxu0 0.0
    %1771 = vmatprep.subr.mxu0 0.0
    %1772 = vmatpush1.msra.mxu0 0.0
    %1773 = vmatprep.subr.mxu0 0.0
    %1774 = vmatpush1.msra.mxu0 0.0
    %1775 = vmatprep.subr.mxu0 0.0
    %1776 = vmatpush1.msra.mxu0 0.0
    %1777 = vmatprep.subr.mxu0 0.0
    %1778 = vmatpush1.msra.mxu0 0.0
    %1779 = vmatprep.subr.mxu0 0.0
    %1780 = vmatpush1.msra.mxu0 0.0
    %1781 = vmatprep.subr.mxu0 0.0
    %1782 = vmatpush1.msra.mxu0 0.0
    %1783 = vmatprep.subr.mxu0 0.0
    %1784 = vmatpush1.msra.mxu0 0.0
    %1785 = vmatprep.subr.mxu0 0.0
    %1786 = vmatpush1.msra.mxu0 0.0
    %1787 = vmatprep.subr.mxu0 0.0
    %1788 = vmatpush1.msra.mxu0 0.0
    %1789 = vmatprep.subr.mxu0 0.0
    %1790 = vmatpush1.msra.mxu0 0.0
    %1791 = vmatprep.subr.mxu0 0.0
    %1792 = vmatpush1.msra.mxu0 0.0
    %1793 = vmatprep.subr.mxu0 0.0
    %1794 = vmatpush1.msra.mxu0 0.0
    %1795 = vmatprep.subr.mxu0 0.0
    %1796 = vmatpush1.msra.mxu0 0.0
    %1797 = vmatprep.subr.mxu0 0.0
    %1798 = vmatpush1.msra.mxu0 0.0
    %1799 = vmatprep.subr.mxu0 0.0
    %1800 = vmatpush1.msra.mxu0 0.0
    %1801 = vmatprep.subr.mxu0 0.0
    %1802 = vmatpush1.msra.mxu0 0.0
    %1803 = vmatprep.subr.mxu0 0.0
    %1804 = vmatpush1.msra.mxu0 0.0
    %1805 = vmatprep.subr.mxu0 0.0
    %1806 = vmatpush1.msra.mxu0 0.0
    %1807 = vmatprep.subr.mxu0 0.0
    %1808 = vmatpush1.msra.mxu0 0.0
    %1809 = vmatprep.subr.mxu0 0.0
    %1810 = vmatpush1.msra.mxu0 0.0
    %1811 = vmatprep.subr.mxu0 0.0
    %1812 = vmatpush1.msra.mxu0 0.0
    %1813 = vmatprep.subr.mxu0 0.0
    %1814 = vmatpush1.msra.mxu0 0.0
    %1815 = vmatprep.subr.mxu0 0.0
    %1816 = vmatpush1.msra.mxu0 0.0
    %1817 = vmatprep.subr.mxu0 0.0
    %1818 = vmatpush1.msra.mxu0 0.0
    %1819 = vmatprep.mubr.f32.mxu0 0.0
    %1820 = vmatmul.mubr.f32.gmra.mrb[0].mxu0 %v1745
    %v1821 = vpop.f32.mrb[0].mxu0
    %v1822 = vadd.f32 0.0, %v1821
    %v1823 = vpop.f32.mrb[0].mxu0
    %v1824 = vadd.f32 0.0, %v1823
    %1825 = vdwg.mxu0
    %1826 = vmatprep.subr.mxu0 %v1753
    %1827 = vmatpush1.msra.mxu0 %v1751
    %1828 = vmatprep.subr.mxu0 0.0
    %1829 = vmatpush1.msra.mxu0 0.0
    %1830 = vmatprep.subr.mxu0 0.0
    %1831 = vmatpush1.msra.mxu0 0.0
    %1832 = vmatprep.subr.mxu0 0.0
    %1833 = vmatpush1.msra.mxu0 0.0
    %1834 = vmatprep.subr.mxu0 0.0
    %1835 = vmatpush1.msra.mxu0 0.0
    %1836 = vmatprep.subr.mxu0 0.0
    %1837 = vmatpush1.msra.mxu0 0.0
    %1838 = vmatprep.subr.mxu0 0.0
    %1839 = vmatpush1.msra.mxu0 0.0
    %1840 = vmatprep.subr.mxu0 0.0
    %1841 = vmatpush1.msra.mxu0 0.0
    %1842 = vmatprep.subr.mxu0 0.0
    %1843 = vmatpush1.msra.mxu0 0.0
    %1844 = vmatprep.subr.mxu0 0.0
    %1845 = vmatpush1.msra.mxu0 0.0
    %1846 = vmatprep.subr.mxu0 0.0
    %1847 = vmatpush1.msra.mxu0 0.0
    %1848 = vmatprep.subr.mxu0 0.0
    %1849 = vmatpush1.msra.mxu0 0.0
    %1850 = vmatprep.subr.mxu0 0.0
    %1851 = vmatpush1.msra.mxu0 0.0
    %1852 = vmatprep.subr.mxu0 0.0
    %1853 = vmatpush1.msra.mxu0 0.0
    %1854 = vmatprep.subr.mxu0 0.0
    %1855 = vmatpush1.msra.mxu0 0.0
    %1856 = vmatprep.subr.mxu0 0.0
    %1857 = vmatpush1.msra.mxu0 0.0
    %1858 = vmatprep.subr.mxu0 0.0
    %1859 = vmatpush1.msra.mxu0 0.0
    %1860 = vmatprep.subr.mxu0 0.0
    %1861 = vmatpush1.msra.mxu0 0.0
    %1862 = vmatprep.subr.mxu0 0.0
    %1863 = vmatpush1.msra.mxu0 0.0
    %1864 = vmatprep.subr.mxu0 0.0
    %1865 = vmatpush1.msra.mxu0 0.0
    %1866 = vmatprep.subr.mxu0 0.0
    %1867 = vmatpush1.msra.mxu0 0.0
    %1868 = vmatprep.subr.mxu0 0.0
    %1869 = vmatpush1.msra.mxu0 0.0
    %1870 = vmatprep.subr.mxu0 0.0
    %1871 = vmatpush1.msra.mxu0 0.0
    %1872 = vmatprep.subr.mxu0 0.0
    %1873 = vmatpush1.msra.mxu0 0.0
    %1874 = vmatprep.subr.mxu0 0.0
    %1875 = vmatpush1.msra.mxu0 0.0
    %1876 = vmatprep.subr.mxu0 0.0
    %1877 = vmatpush1.msra.mxu0 0.0
    %1878 = vmatprep.subr.mxu0 0.0
    %1879 = vmatpush1.msra.mxu0 0.0
    %1880 = vmatprep.subr.mxu0 0.0
    %1881 = vmatpush1.msra.mxu0 0.0
    %1882 = vmatprep.subr.mxu0 0.0
    %1883 = vmatpush1.msra.mxu0 0.0
    %1884 = vmatprep.subr.mxu0 0.0
    %1885 = vmatpush1.msra.mxu0 0.0
    %1886 = vmatprep.subr.mxu0 0.0
    %1887 = vmatpush1.msra.mxu0 0.0
    %1888 = vmatprep.subr.mxu0 0.0
    %1889 = vmatpush1.msra.mxu0 0.0
    %1890 = vmatprep.mubr.f32.mxu0 0.0
    %1891 = vmatmul.mubr.f32.gmra.mrb[0].mxu0 %v1745
    %v1892 = vpop.f32.mrb[0].mxu0
    %v1893 = vadd.f32 0.0, %v1892
    %v1894 = vpop.f32.mrb[0].mxu0
    %v1895 = vadd.f32 0.0, %v1894
    %1896 = vdwg.mxu0
    %s1897 = scalar_lea.vmem [#allocation27], 7
    %v1898 = vld [vmem:[%s1897] ss:$8 sm:$0xf]
    %v1900 = vlaneseq
    %v1901 = vshrl.u32 %v1900, 7
    %v1902 = vsub.s32 0, %v1901
    %v1903 = vrot.slane %v1898, %v1902
    %v1904 = vlaneseq
    %v1905 = vshrl.u32 %v1904, 7
    %v1906 = vsub.s32 1, %v1905
    %v1907 = vrot.slane %v1898, %v1906
    %v1908 = vlaneseq
    %v1909 = vshrl.u32 %v1908, 7
    %v1910 = vsub.s32 2, %v1909
    %v1911 = vrot.slane %v1898, %v1910
    %v1912 = vlaneseq
    %v1913 = vshrl.u32 %v1912, 7
    %v1914 = vsub.s32 3, %v1913
    %v1915 = vrot.slane %v1898, %v1914
    %v1920 = vmul.f32 %v1822, %v1903
    %v1921 = vmul.f32 %v1824, %v1907
    %v1922 = vmul.f32 %v1893, %v1911
    %v1923 = vmul.f32 %v1895, %v1915
    %v1924 = vadd.f32 %v1716, %v1920
    %v1925 = vadd.f32 %v1717, %v1921
    %v1926 = vadd.f32 %v1718, %v1922
    %v1927 = vadd.f32 %v1719, %v1923
    %v1928 = vld [vmem:[%s0 + $0x4] sm:$0xff]
    %v1929 = vld [vmem:[%s0 + $0xc] sm:$0xff]
    %v1930 = vld [vmem:[%s0 + $0x14] sm:$0xf]
    %v1931 = vld [vmem:[#allocation8 + $0x40] sm:$0xff]
    %v1935 = vcombine.high %v1928, %v1928
    %v1936 = vcombine.high %v1929, %v1929
    %1937 = vrot.lane.b32.xlu0 %v1928, 111
    %v1938 = vpop.permute.xlu0 %1937
    %1939 = vrot.lane.b32.xlu0 %v1935, 111
    %v1940 = vpop.permute.xlu0 %1939
    %1941 = vrot.lane.b32.xlu0 %v1929, 111
    %v1942 = vpop.permute.xlu0 %1941
    %1943 = vrot.lane.b32.xlu0 %v1936, 111
    %v1944 = vpop.permute.xlu0 %1943
    %1945 = vrot.lane.b32.xlu0 %v1930, 111
    %v1946 = vpop.permute.xlu0 %1945
    %vm1947 = vcmask 908288
    %v1948 = vsel %vm1947, %v1938, %v1940
    %v1949 = vsel %vm1947, %v1940, %v1942
    %v1950 = vsel %vm1947, %v1942, %v1944
    %v1951 = vsel %vm1947, %v1944, %v1946
    %v1953 = vsel %vm335, %v1931, 0
    %v1955 = vsel %vm339, %v1948, 0
    %v1957 = vsel %vm339, %v1949, 0
    %v1959 = vsel %vm339, %v1950, 0
    %v1961 = vsel %vm339, %v1951, 0
    %1963 = vmatprep.subr.mxu0 %v1957
    %1964 = vmatpush1.msra.mxu0 %v1955
    %1965 = vmatprep.subr.mxu0 0.0
    %1966 = vmatpush1.msra.mxu0 0.0
    %1967 = vmatprep.subr.mxu0 0.0
    %1968 = vmatpush1.msra.mxu0 0.0
    %1969 = vmatprep.subr.mxu0 0.0
    %1970 = vmatpush1.msra.mxu0 0.0
    %1971 = vmatprep.subr.mxu0 0.0
    %1972 = vmatpush1.msra.mxu0 0.0
    %1973 = vmatprep.subr.mxu0 0.0
    %1974 = vmatpush1.msra.mxu0 0.0
    %1975 = vmatprep.subr.mxu0 0.0
    %1976 = vmatpush1.msra.mxu0 0.0
    %1977 = vmatprep.subr.mxu0 0.0
    %1978 = vmatpush1.msra.mxu0 0.0
    %1979 = vmatprep.subr.mxu0 0.0
    %1980 = vmatpush1.msra.mxu0 0.0
    %1981 = vmatprep.subr.mxu0 0.0
    %1982 = vmatpush1.msra.mxu0 0.0
    %1983 = vmatprep.subr.mxu0 0.0
    %1984 = vmatpush1.msra.mxu0 0.0
    %1985 = vmatprep.subr.mxu0 0.0
    %1986 = vmatpush1.msra.mxu0 0.0
    %1987 = vmatprep.subr.mxu0 0.0
    %1988 = vmatpush1.msra.mxu0 0.0
    %1989 = vmatprep.subr.mxu0 0.0
    %1990 = vmatpush1.msra.mxu0 0.0
    %1991 = vmatprep.subr.mxu0 0.0
    %1992 = vmatpush1.msra.mxu0 0.0
    %1993 = vmatprep.subr.mxu0 0.0
    %1994 = vmatpush1.msra.mxu0 0.0
    %1995 = vmatprep.subr.mxu0 0.0
    %1996 = vmatpush1.msra.mxu0 0.0
    %1997 = vmatprep.subr.mxu0 0.0
    %1998 = vmatpush1.msra.mxu0 0.0
    %1999 = vmatprep.subr.mxu0 0.0
    %2000 = vmatpush1.msra.mxu0 0.0
    %2001 = vmatprep.subr.mxu0 0.0
    %2002 = vmatpush1.msra.mxu0 0.0
    %2003 = vmatprep.subr.mxu0 0.0
    %2004 = vmatpush1.msra.mxu0 0.0
    %2005 = vmatprep.subr.mxu0 0.0
    %2006 = vmatpush1.msra.mxu0 0.0
    %2007 = vmatprep.subr.mxu0 0.0
    %2008 = vmatpush1.msra.mxu0 0.0
    %2009 = vmatprep.subr.mxu0 0.0
    %2010 = vmatpush1.msra.mxu0 0.0
    %2011 = vmatprep.subr.mxu0 0.0
    %2012 = vmatpush1.msra.mxu0 0.0
    %2013 = vmatprep.subr.mxu0 0.0
    %2014 = vmatpush1.msra.mxu0 0.0
    %2015 = vmatprep.subr.mxu0 0.0
    %2016 = vmatpush1.msra.mxu0 0.0
    %2017 = vmatprep.subr.mxu0 0.0
    %2018 = vmatpush1.msra.mxu0 0.0
    %2019 = vmatprep.subr.mxu0 0.0
    %2020 = vmatpush1.msra.mxu0 0.0
    %2021 = vmatprep.subr.mxu0 0.0
    %2022 = vmatpush1.msra.mxu0 0.0
    %2023 = vmatprep.subr.mxu0 0.0
    %2024 = vmatpush1.msra.mxu0 0.0
    %2025 = vmatprep.subr.mxu0 0.0
    %2026 = vmatpush1.msra.mxu0 0.0
    %2027 = vmatprep.mubr.f32.mxu0 0.0
    %2028 = vmatmul.mubr.f32.gmra.mrb[0].mxu0 %v1953
    %v2029 = vpop.f32.mrb[0].mxu0
    %v2030 = vadd.f32 0.0, %v2029
    %v2031 = vpop.f32.mrb[0].mxu0
    %v2032 = vadd.f32 0.0, %v2031
    %2033 = vdwg.mxu0
    %2034 = vmatprep.subr.mxu0 %v1961
    %2035 = vmatpush1.msra.mxu0 %v1959
    %2036 = vmatprep.subr.mxu0 0.0
    %2037 = vmatpush1.msra.mxu0 0.0
    %2038 = vmatprep.subr.mxu0 0.0
    %2039 = vmatpush1.msra.mxu0 0.0
    %2040 = vmatprep.subr.mxu0 0.0
    %2041 = vmatpush1.msra.mxu0 0.0
    %2042 = vmatprep.subr.mxu0 0.0
    %2043 = vmatpush1.msra.mxu0 0.0
    %2044 = vmatprep.subr.mxu0 0.0
    %2045 = vmatpush1.msra.mxu0 0.0
    %2046 = vmatprep.subr.mxu0 0.0
    %2047 = vmatpush1.msra.mxu0 0.0
    %2048 = vmatprep.subr.mxu0 0.0
    %2049 = vmatpush1.msra.mxu0 0.0
    %2050 = vmatprep.subr.mxu0 0.0
    %2051 = vmatpush1.msra.mxu0 0.0
    %2052 = vmatprep.subr.mxu0 0.0
    %2053 = vmatpush1.msra.mxu0 0.0
    %2054 = vmatprep.subr.mxu0 0.0
    %2055 = vmatpush1.msra.mxu0 0.0
    %2056 = vmatprep.subr.mxu0 0.0
    %2057 = vmatpush1.msra.mxu0 0.0
    %2058 = vmatprep.subr.mxu0 0.0
    %2059 = vmatpush1.msra.mxu0 0.0
    %2060 = vmatprep.subr.mxu0 0.0
    %2061 = vmatpush1.msra.mxu0 0.0
    %2062 = vmatprep.subr.mxu0 0.0
    %2063 = vmatpush1.msra.mxu0 0.0
    %2064 = vmatprep.subr.mxu0 0.0
    %2065 = vmatpush1.msra.mxu0 0.0
    %2066 = vmatprep.subr.mxu0 0.0
    %2067 = vmatpush1.msra.mxu0 0.0
    %2068 = vmatprep.subr.mxu0 0.0
    %2069 = vmatpush1.msra.mxu0 0.0
    %2070 = vmatprep.subr.mxu0 0.0
    %2071 = vmatpush1.msra.mxu0 0.0
    %2072 = vmatprep.subr.mxu0 0.0
    %2073 = vmatpush1.msra.mxu0 0.0
    %2074 = vmatprep.subr.mxu0 0.0
    %2075 = vmatpush1.msra.mxu0 0.0
    %2076 = vmatprep.subr.mxu0 0.0
    %2077 = vmatpush1.msra.mxu0 0.0
    %2078 = vmatprep.subr.mxu0 0.0
    %2079 = vmatpush1.msra.mxu0 0.0
    %2080 = vmatprep.subr.mxu0 0.0
    %2081 = vmatpush1.msra.mxu0 0.0
    %2082 = vmatprep.subr.mxu0 0.0
    %2083 = vmatpush1.msra.mxu0 0.0
    %2084 = vmatprep.subr.mxu0 0.0
    %2085 = vmatpush1.msra.mxu0 0.0
    %2086 = vmatprep.subr.mxu0 0.0
    %2087 = vmatpush1.msra.mxu0 0.0
    %2088 = vmatprep.subr.mxu0 0.0
    %2089 = vmatpush1.msra.mxu0 0.0
    %2090 = vmatprep.subr.mxu0 0.0
    %2091 = vmatpush1.msra.mxu0 0.0
    %2092 = vmatprep.subr.mxu0 0.0
    %2093 = vmatpush1.msra.mxu0 0.0
    %2094 = vmatprep.subr.mxu0 0.0
    %2095 = vmatpush1.msra.mxu0 0.0
    %2096 = vmatprep.subr.mxu0 0.0
    %2097 = vmatpush1.msra.mxu0 0.0
    %2098 = vmatprep.mubr.f32.mxu0 0.0
    %2099 = vmatmul.mubr.f32.gmra.mrb[0].mxu0 %v1953
    %v2100 = vpop.f32.mrb[0].mxu0
    %v2101 = vadd.f32 0.0, %v2100
    %v2102 = vpop.f32.mrb[0].mxu0
    %v2103 = vadd.f32 0.0, %v2102
    %2104 = vdwg.mxu0
    %s2105 = scalar_lea.vmem [#allocation27], 32
    %v2106 = vld [vmem:[%s2105] ss:$8 sm:$0xf]
    %v2108 = vlaneseq
    %v2109 = vshrl.u32 %v2108, 7
    %v2110 = vsub.s32 0, %v2109
    %v2111 = vrot.slane %v2106, %v2110
    %v2112 = vlaneseq
    %v2113 = vshrl.u32 %v2112, 7
    %v2114 = vsub.s32 1, %v2113
    %v2115 = vrot.slane %v2106, %v2114
    %v2116 = vlaneseq
    %v2117 = vshrl.u32 %v2116, 7
    %v2118 = vsub.s32 2, %v2117
    %v2119 = vrot.slane %v2106, %v2118
    %v2120 = vlaneseq
    %v2121 = vshrl.u32 %v2120, 7
    %v2122 = vsub.s32 3, %v2121
    %v2123 = vrot.slane %v2106, %v2122
    %v2128 = vmul.f32 %v2030, %v2111
    %v2129 = vmul.f32 %v2032, %v2115
    %v2130 = vmul.f32 %v2101, %v2119
    %v2131 = vmul.f32 %v2103, %v2123
    %v2132 = vadd.f32 %v1924, %v2128
    %v2133 = vadd.f32 %v1925, %v2129
    %v2134 = vadd.f32 %v1926, %v2130
    %v2135 = vadd.f32 %v1927, %v2131
    %v2136 = vld [vmem:[#allocation10] sm:$0xff]
    %2138 = vset.pattern.permute.xlu0 0
    %2139 = vperm.xlu0 %2138, %v2136
    %v2140 = vpop.permute.xlu0 %2139
    %v2142 = vadd.f32 %v2132, %v2140
    %v2143 = vadd.f32 %v2133, %v2140
    %v2144 = vadd.f32 %v2134, %v2140
    %v2145 = vadd.f32 %v2135, %v2140
    %v2146 = vmax.f32 %v2142, 0.0
    %v2147 = vmax.f32 %v2143, 0.0
    %v2148 = vmax.f32 %v2144, 0.0
    %v2149 = vmax.f32 %v2145, 0.0
    %2150 = vst [vmem:[#allocation2] sm:$0xff] 0.0
    %2151 = vst [vmem:[#allocation2 + $0x8] sm:$0xff] 0.0
    %2152 = vst [vmem:[#allocation2 + $0x10] sm:$0xff] 0.0
    %2153 = vst [vmem:[#allocation2 + $0x18] sm:$0xff] 0.0
    %2154 = vst [vmem:[#allocation2 + $0x20] sm:$0xff] 0.0
    %2155 = vst [vmem:[#allocation2 + $0x28] sm:$0xff] 0.0
    %2156 = vst [vmem:[#allocation2 + $0x8] sm:$0xff] %v2146
    %2157 = vst [vmem:[#allocation2 + $0x10] sm:$0xff] %v2147
    %2158 = vst [vmem:[#allocation2 + $0x18] sm:$0xff] %v2148
    %2159 = vst [vmem:[#allocation2 + $0x20] sm:$0xff] %v2149
    %v2160 = vld [vmem:[#allocation2 + $0x8] sm:$0xff]
    %v2161 = vld [vmem:[#allocation2 + $0x10] sm:$0xff]
    %v2162 = vld [vmem:[#allocation2 + $0x18] sm:$0xff]
    %v2163 = vld [vmem:[#allocation2 + $0x20] sm:$0xff]
    %v2164 = vld [vmem:[#allocation2 + $0x8] sm:$0xff]
    %v2165 = vld [vmem:[#allocation2 + $0x10] sm:$0xff]
    %v2166 = vld [vmem:[#allocation2 + $0x18] sm:$0xff]
    %v2167 = vld [vmem:[#allocation2 + $0x20] sm:$0xff]
    %v2168 = vld [vmem:[#allocation2 + $0x28] sm:$0xff]
    %2174 = vrot.lane.b32.xlu0 %v2164, 127
    %v2175 = vpop.permute.xlu0 %2174
    %2176 = vrot.lane.b32.xlu0 %v2165, 127
    %v2177 = vpop.permute.xlu0 %2176
    %2178 = vrot.lane.b32.xlu0 %v2166, 127
    %v2179 = vpop.permute.xlu0 %2178
    %2180 = vrot.lane.b32.xlu0 %v2167, 127
    %v2181 = vpop.permute.xlu0 %2180
    %2182 = vrot.lane.b32.xlu0 %v2168, 127
    %v2183 = vpop.permute.xlu0 %2182
    %v2184 = vsel %vm1323, %v2175, %v2177
    %v2185 = vsel %vm1323, %v2177, %v2179
    %v2186 = vsel %vm1323, %v2179, %v2181
    %v2187 = vsel %vm1323, %v2181, %v2183
    %v2192 = vmax.f32 %v2160, %v2184
    %v2193 = vmax.f32 %v2161, %v2185
    %v2194 = vmax.f32 %v2162, %v2186
    %v2195 = vmax.f32 %v2163, %v2187
    %v2197 = vmax.f32 %v2164, %v2184
    %v2198 = vmax.f32 %v2165, %v2185
    %v2199 = vmax.f32 %v2166, %v2186
    %v2200 = vmax.f32 %v2167, %v2187
    %v2201 = vmax.f32 %v2168, %v2183
    %2207 = vrot.lane.b32.xlu0 %v2197, 112
    %v2208 = vpop.permute.xlu0 %2207
    %2209 = vrot.lane.b32.xlu0 %v2198, 112
    %v2210 = vpop.permute.xlu0 %2209
    %2211 = vrot.lane.b32.xlu0 %v2199, 112
    %v2212 = vpop.permute.xlu0 %2211
    %2213 = vrot.lane.b32.xlu0 %v2200, 112
    %v2214 = vpop.permute.xlu0 %2213
    %2215 = vrot.lane.b32.xlu0 %v2201, 112
    %v2216 = vpop.permute.xlu0 %2215
    %v2217 = vsel %vm1739, %v2208, %v2210
    %v2218 = vsel %vm1739, %v2210, %v2212
    %v2219 = vsel %vm1739, %v2212, %v2214
    %v2220 = vsel %vm1739, %v2214, %v2216
    %v2225 = vmax.f32 %v2192, %v2217
    %v2226 = vmax.f32 %v2193, %v2218
    %v2227 = vmax.f32 %v2194, %v2219
    %v2228 = vmax.f32 %v2195, %v2220
    %v2229 = vld [vmem:[#allocation31] sm:$0xff]
    %v2230 = vld [vmem:[#allocation31 + $0x8] sm:$0xff]
    %v2231 = vld [vmem:[#allocation31 + $0x10] sm:$0xff]
    %v2232 = vld [vmem:[#allocation31 + $0x18] sm:$0xff]
    %v2233 = vld [vmem:[#allocation31 + $0x20] sm:$0xff]
    %v2234 = vld [vmem:[#allocation31 + $0x28] sm:$0xff]
    %v2235 = vld [vmem:[#allocation31 + $0x30] sm:$0xff]
    %v2236 = vld [vmem:[#allocation31 + $0x38] sm:$0xff]
    %v2237 = vld [vmem:[#allocation31 + $0x40] sm:$0xff]
    %v2238 = vld [vmem:[#allocation31 + $0x48] sm:$0xff]
    %v2239 = vld [vmem:[#allocation31 + $0x50] sm:$0xff]
    %v2240 = vld [vmem:[#allocation31 + $0x58] sm:$0xff]
    %v2241 = vld [vmem:[#allocation31 + $0x60] sm:$0xff]
    %v2242 = vld [vmem:[#allocation31 + $0x68] sm:$0xff]
    %v2243 = vld [vmem:[#allocation31 + $0x70] sm:$0xff]
    %v2244 = vld [vmem:[#allocation31 + $0x78] sm:$0xff]
    %v2245 = vld [vmem:[#allocation31 + $0x80] sm:$0xff]
    %v2246 = vld [vmem:[#allocation31 + $0x88] sm:$0xff]
    %v2247 = vld [vmem:[#allocation31 + $0x90] sm:$0xff]
    %v2248 = vld [vmem:[#allocation31 + $0x98] sm:$0xff]
    %v2249 = vld [vmem:[#allocation31 + $0xa0] sm:$0xff]
    %v2250 = vld [vmem:[#allocation31 + $0xa8] sm:$0xff]
    %v2251 = vld [vmem:[#allocation31 + $0xb0] sm:$0xff]
    %v2252 = vld [vmem:[#allocation31 + $0xb8] sm:$0xff]
    %v2253 = vld [vmem:[#allocation31 + $0xc0] sm:$0xff]
    %v2254 = vld [vmem:[#allocation31 + $0xc8] sm:$0xff]
    %v2255 = vld [vmem:[#allocation31 + $0xd0] sm:$0xff]
    %v2256 = vld [vmem:[#allocation31 + $0xd8] sm:$0xff]
    %v2257 = vld [vmem:[#allocation31 + $0xe0] sm:$0xff]
    %v2258 = vld [vmem:[#allocation31 + $0xe8] sm:$0xff]
    %v2259 = vld [vmem:[#allocation31 + $0xf0] sm:$0xff]
    %v2260 = vld [vmem:[#allocation31 + $0xf8] sm:$0xff]
    %v2261 = vld [vmem:[#allocation31 + $0x100] sm:$0xff]
    %v2262 = vld [vmem:[#allocation31 + $0x108] sm:$0xff]
    %v2263 = vld [vmem:[#allocation31 + $0x110] sm:$0xff]
    %v2264 = vld [vmem:[#allocation31 + $0x118] sm:$0xff]
    %v2265 = vld [vmem:[#allocation31 + $0x120] sm:$0xff]
    %v2266 = vld [vmem:[#allocation31 + $0x128] sm:$0xff]
    %v2267 = vld [vmem:[#allocation31 + $0x130] sm:$0xff]
    %v2268 = vld [vmem:[#allocation31 + $0x138] sm:$0xff]
    %v2269 = vld [vmem:[#allocation31 + $0x140] sm:$0xff]
    %v2270 = vld [vmem:[#allocation31 + $0x148] sm:$0xff]
    %v2271 = vld [vmem:[#allocation31 + $0x150] sm:$0xff]
    %v2272 = vld [vmem:[#allocation31 + $0x158] sm:$0xff]
    %v2273 = vld [vmem:[#allocation31 + $0x160] sm:$0xff]
    %v2274 = vld [vmem:[#allocation31 + $0x168] sm:$0xff]
    %v2275 = vld [vmem:[#allocation31 + $0x170] sm:$0xff]
    %v2276 = vld [vmem:[#allocation31 + $0x178] sm:$0xff]
    %v2277 = vld [vmem:[#allocation31 + $0x180] sm:$0xff]
    %v2278 = vld [vmem:[#allocation31 + $0x188] sm:$0xff]
    %v2279 = vld [vmem:[#allocation31 + $0x190] sm:$0xff]
    %v2280 = vld [vmem:[#allocation31 + $0x198] sm:$0xff]
    %v2281 = vld [vmem:[#allocation31 + $0x1a0] sm:$0xff]
    %v2282 = vld [vmem:[#allocation31 + $0x1a8] sm:$0xff]
    %v2283 = vld [vmem:[#allocation31 + $0x1b0] sm:$0xff]
    %v2284 = vld [vmem:[#allocation31 + $0x1b8] sm:$0xff]
    %v2285 = vld [vmem:[#allocation31 + $0x1c0] sm:$0xff]
    %v2286 = vld [vmem:[#allocation31 + $0x1c8] sm:$0xff]
    %v2287 = vld [vmem:[#allocation31 + $0x1d0] sm:$0xff]
    %v2288 = vld [vmem:[#allocation31 + $0x1d8] sm:$0xff]
    %v2289 = vld [vmem:[#allocation31 + $0x1e0] sm:$0xff]
    %v2290 = vld [vmem:[#allocation31 + $0x1e8] sm:$0xff]
    %v2291 = vld [vmem:[#allocation31 + $0x1f0] sm:$0xff]
    %v2292 = vld [vmem:[#allocation31 + $0x1f8] sm:$0xff]
    %2293 = vmatprep.subr.mxu0 0.0
    %2294 = vmatpush1.msra.mxu0 %v2229
    %2295 = vmatprep.subr.mxu0 0.0
    %2296 = vmatpush1.msra.mxu0 %v2230
    %2297 = vmatprep.subr.mxu0 0.0
    %2298 = vmatpush1.msra.mxu0 %v2231
    %2299 = vmatprep.subr.mxu0 0.0
    %2300 = vmatpush1.msra.mxu0 %v2232
    %2301 = vmatprep.subr.mxu0 0.0
    %2302 = vmatpush1.msra.mxu0 %v2233
    %2303 = vmatprep.subr.mxu0 0.0
    %2304 = vmatpush1.msra.mxu0 %v2234
    %2305 = vmatprep.subr.mxu0 0.0
    %2306 = vmatpush1.msra.mxu0 %v2235
    %2307 = vmatprep.subr.mxu0 0.0
    %2308 = vmatpush1.msra.mxu0 %v2236
    %2309 = vmatprep.subr.mxu0 0.0
    %2310 = vmatpush1.msra.mxu0 %v2237
    %2311 = vmatprep.subr.mxu0 0.0
    %2312 = vmatpush1.msra.mxu0 %v2238
    %2313 = vmatprep.subr.mxu0 0.0
    %2314 = vmatpush1.msra.mxu0 %v2239
    %2315 = vmatprep.subr.mxu0 0.0
    %2316 = vmatpush1.msra.mxu0 %v2240
    %2317 = vmatprep.subr.mxu0 0.0
    %2318 = vmatpush1.msra.mxu0 %v2241
    %2319 = vmatprep.subr.mxu0 0.0
    %2320 = vmatpush1.msra.mxu0 %v2242
    %2321 = vmatprep.subr.mxu0 0.0
    %2322 = vmatpush1.msra.mxu0 %v2243
    %2323 = vmatprep.subr.mxu0 0.0
    %2324 = vmatpush1.msra.mxu0 %v2244
    %2325 = vmatprep.subr.mxu0 0.0
    %2326 = vmatpush1.msra.mxu0 %v2245
    %2327 = vmatprep.subr.mxu0 0.0
    %2328 = vmatpush1.msra.mxu0 %v2246
    %2329 = vmatprep.subr.mxu0 0.0
    %2330 = vmatpush1.msra.mxu0 %v2247
    %2331 = vmatprep.subr.mxu0 0.0
    %2332 = vmatpush1.msra.mxu0 %v2248
    %2333 = vmatprep.subr.mxu0 0.0
    %2334 = vmatpush1.msra.mxu0 %v2249
    %2335 = vmatprep.subr.mxu0 0.0
    %2336 = vmatpush1.msra.mxu0 %v2250
    %2337 = vmatprep.subr.mxu0 0.0
    %2338 = vmatpush1.msra.mxu0 %v2251
    %2339 = vmatprep.subr.mxu0 0.0
    %2340 = vmatpush1.msra.mxu0 %v2252
    %2341 = vmatprep.subr.mxu0 0.0
    %2342 = vmatpush1.msra.mxu0 %v2253
    %2343 = vmatprep.subr.mxu0 0.0
    %2344 = vmatpush1.msra.mxu0 %v2254
    %2345 = vmatprep.subr.mxu0 0.0
    %2346 = vmatpush1.msra.mxu0 %v2255
    %2347 = vmatprep.subr.mxu0 0.0
    %2348 = vmatpush1.msra.mxu0 %v2256
    %2349 = vmatprep.subr.mxu0 0.0
    %2350 = vmatpush1.msra.mxu0 %v2257
    %2351 = vmatprep.subr.mxu0 0.0
    %2352 = vmatpush1.msra.mxu0 %v2258
    %2353 = vmatprep.subr.mxu0 0.0
    %2354 = vmatpush1.msra.mxu0 %v2259
    %2355 = vmatprep.subr.mxu0 0.0
    %2356 = vmatpush1.msra.mxu0 %v2260
    %2357 = vmatprep.mubr.f32.mxu0 %v2226
    %2358 = vmatmul.mubr.f32.gmra.mrb[0].mxu0 %v2225
    %v2359 = vpop.f32.mrb[0].mxu0
    %v2360 = vadd.f32 0.0, %v2359
    %v2361 = vpop.f32.mrb[0].mxu0
    %2362 = vdwg.mxu0
    %2363 = vmatprep.subr.mxu0 0.0
    %2364 = vmatpush1.msra.mxu0 %v2261
    %2365 = vmatprep.subr.mxu0 0.0
    %2366 = vmatpush1.msra.mxu0 %v2262
    %2367 = vmatprep.subr.mxu0 0.0
    %2368 = vmatpush1.msra.mxu0 %v2263
    %2369 = vmatprep.subr.mxu0 0.0
    %2370 = vmatpush1.msra.mxu0 %v2264
    %2371 = vmatprep.subr.mxu0 0.0
    %2372 = vmatpush1.msra.mxu0 %v2265
    %2373 = vmatprep.subr.mxu0 0.0
    %2374 = vmatpush1.msra.mxu0 %v2266
    %2375 = vmatprep.subr.mxu0 0.0
    %2376 = vmatpush1.msra.mxu0 %v2267
    %2377 = vmatprep.subr.mxu0 0.0
    %2378 = vmatpush1.msra.mxu0 %v2268
    %2379 = vmatprep.subr.mxu0 0.0
    %2380 = vmatpush1.msra.mxu0 %v2269
    %2381 = vmatprep.subr.mxu0 0.0
    %2382 = vmatpush1.msra.mxu0 %v2270
    %2383 = vmatprep.subr.mxu0 0.0
    %2384 = vmatpush1.msra.mxu0 %v2271
    %2385 = vmatprep.subr.mxu0 0.0
    %2386 = vmatpush1.msra.mxu0 %v2272
    %2387 = vmatprep.subr.mxu0 0.0
    %2388 = vmatpush1.msra.mxu0 %v2273
    %2389 = vmatprep.subr.mxu0 0.0
    %2390 = vmatpush1.msra.mxu0 %v2274
    %2391 = vmatprep.subr.mxu0 0.0
    %2392 = vmatpush1.msra.mxu0 %v2275
    %2393 = vmatprep.subr.mxu0 0.0
    %2394 = vmatpush1.msra.mxu0 %v2276
    %2395 = vmatprep.subr.mxu0 0.0
    %2396 = vmatpush1.msra.mxu0 %v2277
    %2397 = vmatprep.subr.mxu0 0.0
    %2398 = vmatpush1.msra.mxu0 %v2278
    %2399 = vmatprep.subr.mxu0 0.0
    %2400 = vmatpush1.msra.mxu0 %v2279
    %2401 = vmatprep.subr.mxu0 0.0
    %2402 = vmatpush1.msra.mxu0 %v2280
    %2403 = vmatprep.subr.mxu0 0.0
    %2404 = vmatpush1.msra.mxu0 %v2281
    %2405 = vmatprep.subr.mxu0 0.0
    %2406 = vmatpush1.msra.mxu0 %v2282
    %2407 = vmatprep.subr.mxu0 0.0
    %2408 = vmatpush1.msra.mxu0 %v2283
    %2409 = vmatprep.subr.mxu0 0.0
    %2410 = vmatpush1.msra.mxu0 %v2284
    %2411 = vmatprep.subr.mxu0 0.0
    %2412 = vmatpush1.msra.mxu0 %v2285
    %2413 = vmatprep.subr.mxu0 0.0
    %2414 = vmatpush1.msra.mxu0 %v2286
    %2415 = vmatprep.subr.mxu0 0.0
    %2416 = vmatpush1.msra.mxu0 %v2287
    %2417 = vmatprep.subr.mxu0 0.0
    %2418 = vmatpush1.msra.mxu0 %v2288
    %2419 = vmatprep.subr.mxu0 0.0
    %2420 = vmatpush1.msra.mxu0 %v2289
    %2421 = vmatprep.subr.mxu0 0.0
    %2422 = vmatpush1.msra.mxu0 %v2290
    %2423 = vmatprep.subr.mxu0 0.0
    %2424 = vmatpush1.msra.mxu0 %v2291
    %2425 = vmatprep.subr.mxu0 0.0
    %2426 = vmatpush1.msra.mxu0 %v2292
    %2427 = vmatprep.mubr.f32.mxu0 %v2228
    %2428 = vmatmul.mubr.f32.gmra.mrb[0].mxu0 %v2227
    %v2429 = vpop.f32.mrb[0].mxu0
    %v2430 = vadd.f32 %v2360, %v2429
    %v2431 = vpop.f32.mrb[0].mxu0
    %2432 = vdwg.mxu0
    %2433 = vst [vmem:[#allocation3] sm:$0xff] 0.0
    %2434 = vst [vmem:[#allocation3 + $0x8] sm:$0xff] 0.0
    %2435 = vst [vmem:[#allocation3 + $0x10] sm:$0xff] 0.0
    %2436 = vst [vmem:[#allocation3 + $0x8] sm:$0xff] %v2430
    %v2437 = vld [vmem:[#allocation3] sm:$0xff]
    %v2438 = vld [vmem:[#allocation3 + $0x8] sm:$0xff]
    %v2439 = vld [vmem:[#allocation12] sm:$0xff]
    %v2440 = vld [vmem:[#allocation12 + $0x8] sm:$0xff]
    %2443 = vrot.lane.b32.xlu0 %v2437, 9
    %v2444 = vpop.permute.xlu0 %2443
    %2445 = vrot.lane.b32.xlu0 %v2438, 9
    %v2446 = vpop.permute.xlu0 %2445
    %vm2447 = vcmask 72704
    %v2448 = vsel %vm2447, %v2444, %v2446
    %vm2450 = vcmask 64512
    %v2452 = vsel %vm2450, %v2439, 0
    %v2455 = vsel %vm2450, %v2440, 0
    %2457 = vmatprep.subr.mxu0 0.0
    %2458 = vmatpush1.msra.mxu0 %v2448
    %2459 = vmatprep.subr.mxu0 0.0
    %2460 = vmatpush1.msra.mxu0 0.0
    %2461 = vmatprep.subr.mxu0 0.0
    %2462 = vmatpush1.msra.mxu0 0.0
    %2463 = vmatprep.subr.mxu0 0.0
    %2464 = vmatpush1.msra.mxu0 0.0
    %2465 = vmatprep.subr.mxu0 0.0
    %2466 = vmatpush1.msra.mxu0 0.0
    %2467 = vmatprep.subr.mxu0 0.0
    %2468 = vmatpush1.msra.mxu0 0.0
    %2469 = vmatprep.subr.mxu0 0.0
    %2470 = vmatpush1.msra.mxu0 0.0
    %2471 = vmatprep.subr.mxu0 0.0
    %2472 = vmatpush1.msra.mxu0 0.0
    %2473 = vmatprep.subr.mxu0 0.0
    %2474 = vmatpush1.msra.mxu0 0.0
    %2475 = vmatprep.subr.mxu0 0.0
    %2476 = vmatpush1.msra.mxu0 0.0
    %2477 = vmatprep.subr.mxu0 0.0
    %2478 = vmatpush1.msra.mxu0 0.0
    %2479 = vmatprep.subr.mxu0 0.0
    %2480 = vmatpush1.msra.mxu0 0.0
    %2481 = vmatprep.subr.mxu0 0.0
    %2482 = vmatpush1.msra.mxu0 0.0
    %2483 = vmatprep.subr.mxu0 0.0
    %2484 = vmatpush1.msra.mxu0 0.0
    %2485 = vmatprep.subr.mxu0 0.0
    %2486 = vmatpush1.msra.mxu0 0.0
    %2487 = vmatprep.subr.mxu0 0.0
    %2488 = vmatpush1.msra.mxu0 0.0
    %2489 = vmatprep.subr.mxu0 0.0
    %2490 = vmatpush1.msra.mxu0 0.0
    %2491 = vmatprep.subr.mxu0 0.0
    %2492 = vmatpush1.msra.mxu0 0.0
    %2493 = vmatprep.subr.mxu0 0.0
    %2494 = vmatpush1.msra.mxu0 0.0
    %2495 = vmatprep.subr.mxu0 0.0
    %2496 = vmatpush1.msra.mxu0 0.0
    %2497 = vmatprep.subr.mxu0 0.0
    %2498 = vmatpush1.msra.mxu0 0.0
    %2499 = vmatprep.subr.mxu0 0.0
    %2500 = vmatpush1.msra.mxu0 0.0
    %2501 = vmatprep.subr.mxu0 0.0
    %2502 = vmatpush1.msra.mxu0 0.0
    %2503 = vmatprep.subr.mxu0 0.0
    %2504 = vmatpush1.msra.mxu0 0.0
    %2505 = vmatprep.subr.mxu0 0.0
    %2506 = vmatpush1.msra.mxu0 0.0
    %2507 = vmatprep.subr.mxu0 0.0
    %2508 = vmatpush1.msra.mxu0 0.0
    %2509 = vmatprep.subr.mxu0 0.0
    %2510 = vmatpush1.msra.mxu0 0.0
    %2511 = vmatprep.subr.mxu0 0.0
    %2512 = vmatpush1.msra.mxu0 0.0
    %2513 = vmatprep.subr.mxu0 0.0
    %2514 = vmatpush1.msra.mxu0 0.0
    %2515 = vmatprep.subr.mxu0 0.0
    %2516 = vmatpush1.msra.mxu0 0.0
    %2517 = vmatprep.subr.mxu0 0.0
    %2518 = vmatpush1.msra.mxu0 0.0
    %2519 = vmatprep.subr.mxu0 0.0
    %2520 = vmatpush1.msra.mxu0 0.0
    %2521 = vmatprep.mubr.f32.mxu0 0.0
    %2522 = vmatmul.mubr.f32.gmra.mrb[0].mxu0 %v2452
    %v2523 = vpop.f32.mrb[0].mxu0
    %v2524 = vadd.f32 0.0, %v2523
    %v2525 = vpop.f32.mrb[0].mxu0
    %2526 = vmatprep.mubr.f32.mxu0 0.0
    %2527 = vmatmul.mubr.f32.gmra.mrb[0].mxu0 %v2455
    %v2528 = vpop.f32.mrb[0].mxu0
    %v2529 = vadd.f32 0.0, %v2528
    %v2530 = vpop.f32.mrb[0].mxu0
    %2531 = vdwg.mxu0
    %v2532 = vld [vmem:[#allocation28] sm:$0x1]
    %v2533 = vlaneseq
    %v2534 = vshrl.u32 %v2533, 7
    %v2535 = vsub.s32 0, %v2534
    %v2536 = vrot.slane %v2532, %v2535
    %v2537 = vmul.f32 %v2524, %v2536
    %v2538 = vmul.f32 %v2529, %v2536
    %v2539 = vld [vmem:[#allocation12 + $0x10] sm:$0xff]
    %v2540 = vld [vmem:[#allocation12 + $0x18] sm:$0xff]
    %2541 = vrot.lane.b32.xlu0 %v2437, 8
    %v2542 = vpop.permute.xlu0 %2541
    %2543 = vrot.lane.b32.xlu0 %v2438, 8
    %v2544 = vpop.permute.xlu0 %2543
    %v2545 = vsel %vm2450, %v2542, %v2544
    %v2548 = vsel %vm2450, %v2539, 0
    %v2551 = vsel %vm2450, %v2540, 0
    %2553 = vmatprep.subr.mxu0 0.0
    %2554 = vmatpush1.msra.mxu0 %v2545
    %2555 = vmatprep.subr.mxu0 0.0
    %2556 = vmatpush1.msra.mxu0 0.0
    %2557 = vmatprep.subr.mxu0 0.0
    %2558 = vmatpush1.msra.mxu0 0.0
    %2559 = vmatprep.subr.mxu0 0.0
    %2560 = vmatpush1.msra.mxu0 0.0
    %2561 = vmatprep.subr.mxu0 0.0
    %2562 = vmatpush1.msra.mxu0 0.0
    %2563 = vmatprep.subr.mxu0 0.0
    %2564 = vmatpush1.msra.mxu0 0.0
    %2565 = vmatprep.subr.mxu0 0.0
    %2566 = vmatpush1.msra.mxu0 0.0
    %2567 = vmatprep.subr.mxu0 0.0
    %2568 = vmatpush1.msra.mxu0 0.0
    %2569 = vmatprep.subr.mxu0 0.0
    %2570 = vmatpush1.msra.mxu0 0.0
    %2571 = vmatprep.subr.mxu0 0.0
    %2572 = vmatpush1.msra.mxu0 0.0
    %2573 = vmatprep.subr.mxu0 0.0
    %2574 = vmatpush1.msra.mxu0 0.0
    %2575 = vmatprep.subr.mxu0 0.0
    %2576 = vmatpush1.msra.mxu0 0.0
    %2577 = vmatprep.subr.mxu0 0.0
    %2578 = vmatpush1.msra.mxu0 0.0
    %2579 = vmatprep.subr.mxu0 0.0
    %2580 = vmatpush1.msra.mxu0 0.0
    %2581 = vmatprep.subr.mxu0 0.0
    %2582 = vmatpush1.msra.mxu0 0.0
    %2583 = vmatprep.subr.mxu0 0.0
    %2584 = vmatpush1.msra.mxu0 0.0
    %2585 = vmatprep.subr.mxu0 0.0
    %2586 = vmatpush1.msra.mxu0 0.0
    %2587 = vmatprep.subr.mxu0 0.0
    %2588 = vmatpush1.msra.mxu0 0.0
    %2589 = vmatprep.subr.mxu0 0.0
    %2590 = vmatpush1.msra.mxu0 0.0
    %2591 = vmatprep.subr.mxu0 0.0
    %2592 = vmatpush1.msra.mxu0 0.0
    %2593 = vmatprep.subr.mxu0 0.0
    %2594 = vmatpush1.msra.mxu0 0.0
    %2595 = vmatprep.subr.mxu0 0.0
    %2596 = vmatpush1.msra.mxu0 0.0
    %2597 = vmatprep.subr.mxu0 0.0
    %2598 = vmatpush1.msra.mxu0 0.0
    %2599 = vmatprep.subr.mxu0 0.0
    %2600 = vmatpush1.msra.mxu0 0.0
    %2601 = vmatprep.subr.mxu0 0.0
    %2602 = vmatpush1.msra.mxu0 0.0
    %2603 = vmatprep.subr.mxu0 0.0
    %2604 = vmatpush1.msra.mxu0 0.0
    %2605 = vmatprep.subr.mxu0 0.0
    %2606 = vmatpush1.msra.mxu0 0.0
    %2607 = vmatprep.subr.mxu0 0.0
    %2608 = vmatpush1.msra.mxu0 0.0
    %2609 = vmatprep.subr.mxu0 0.0
    %2610 = vmatpush1.msra.mxu0 0.0
    %2611 = vmatprep.subr.mxu0 0.0
    %2612 = vmatpush1.msra.mxu0 0.0
    %2613 = vmatprep.subr.mxu0 0.0
    %2614 = vmatpush1.msra.mxu0 0.0
    %2615 = vmatprep.subr.mxu0 0.0
    %2616 = vmatpush1.msra.mxu0 0.0
    %2617 = vmatprep.mubr.f32.mxu0 0.0
    %2618 = vmatmul.mubr.f32.gmra.mrb[0].mxu0 %v2548
    %v2619 = vpop.f32.mrb[0].mxu0
    %v2620 = vadd.f32 0.0, %v2619
    %v2621 = vpop.f32.mrb[0].mxu0
    %2622 = vmatprep.mubr.f32.mxu0 0.0
    %2623 = vmatmul.mubr.f32.gmra.mrb[0].mxu0 %v2551
    %v2624 = vpop.f32.mrb[0].mxu0
    %v2625 = vadd.f32 0.0, %v2624
    %v2626 = vpop.f32.mrb[0].mxu0
    %2627 = vdwg.mxu0
    %v2628 = vld [vmem:[#allocation28 + $0x1] sm:$0x1]
    %v2629 = vlaneseq
    %v2630 = vshrl.u32 %v2629, 7
    %v2631 = vsub.s32 0, %v2630
    %v2632 = vrot.slane %v2628, %v2631
    %v2633 = vmul.f32 %v2620, %v2632
    %v2634 = vmul.f32 %v2625, %v2632
    %v2635 = vadd.f32 %v2537, %v2633
    %v2636 = vadd.f32 %v2538, %v2634
    %v2637 = vld [vmem:[#allocation12 + $0x20] sm:$0xff]
    %v2638 = vld [vmem:[#allocation12 + $0x28] sm:$0xff]
    %2639 = vrot.lane.b32.xlu0 %v2437, 7
    %v2640 = vpop.permute.xlu0 %2639
    %2641 = vrot.lane.b32.xlu0 %v2438, 7
    %v2642 = vpop.permute.xlu0 %2641
    %vm2643 = vcmask 56320
    %v2644 = vsel %vm2643, %v2640, %v2642
    %v2647 = vsel %vm2450, %v2637, 0
    %v2650 = vsel %vm2450, %v2638, 0
    %2652 = vmatprep.subr.mxu0 0.0
    %2653 = vmatpush1.msra.mxu0 %v2644
    %2654 = vmatprep.subr.mxu0 0.0
    %2655 = vmatpush1.msra.mxu0 0.0
    %2656 = vmatprep.subr.mxu0 0.0
    %2657 = vmatpush1.msra.mxu0 0.0
    %2658 = vmatprep.subr.mxu0 0.0
    %2659 = vmatpush1.msra.mxu0 0.0
    %2660 = vmatprep.subr.mxu0 0.0
    %2661 = vmatpush1.msra.mxu0 0.0
    %2662 = vmatprep.subr.mxu0 0.0
    %2663 = vmatpush1.msra.mxu0 0.0
    %2664 = vmatprep.subr.mxu0 0.0
    %2665 = vmatpush1.msra.mxu0 0.0
    %2666 = vmatprep.subr.mxu0 0.0
    %2667 = vmatpush1.msra.mxu0 0.0
    %2668 = vmatprep.subr.mxu0 0.0
    %2669 = vmatpush1.msra.mxu0 0.0
    %2670 = vmatprep.subr.mxu0 0.0
    %2671 = vmatpush1.msra.mxu0 0.0
    %2672 = vmatprep.subr.mxu0 0.0
    %2673 = vmatpush1.msra.mxu0 0.0
    %2674 = vmatprep.subr.mxu0 0.0
    %2675 = vmatpush1.msra.mxu0 0.0
    %2676 = vmatprep.subr.mxu0 0.0
    %2677 = vmatpush1.msra.mxu0 0.0
    %2678 = vmatprep.subr.mxu0 0.0
    %2679 = vmatpush1.msra.mxu0 0.0
    %2680 = vmatprep.subr.mxu0 0.0
    %2681 = vmatpush1.msra.mxu0 0.0
    %2682 = vmatprep.subr.mxu0 0.0
    %2683 = vmatpush1.msra.mxu0 0.0
    %2684 = vmatprep.subr.mxu0 0.0
    %2685 = vmatpush1.msra.mxu0 0.0
    %2686 = vmatprep.subr.mxu0 0.0
    %2687 = vmatpush1.msra.mxu0 0.0
    %2688 = vmatprep.subr.mxu0 0.0
    %2689 = vmatpush1.msra.mxu0 0.0
    %2690 = vmatprep.subr.mxu0 0.0
    %2691 = vmatpush1.msra.mxu0 0.0
    %2692 = vmatprep.subr.mxu0 0.0
    %2693 = vmatpush1.msra.mxu0 0.0
    %2694 = vmatprep.subr.mxu0 0.0
    %2695 = vmatpush1.msra.mxu0 0.0
    %2696 = vmatprep.subr.mxu0 0.0
    %2697 = vmatpush1.msra.mxu0 0.0
    %2698 = vmatprep.subr.mxu0 0.0
    %2699 = vmatpush1.msra.mxu0 0.0
    %2700 = vmatprep.subr.mxu0 0.0
    %2701 = vmatpush1.msra.mxu0 0.0
    %2702 = vmatprep.subr.mxu0 0.0
    %2703 = vmatpush1.msra.mxu0 0.0
    %2704 = vmatprep.subr.mxu0 0.0
    %2705 = vmatpush1.msra.mxu0 0.0
    %2706 = vmatprep.subr.mxu0 0.0
    %2707 = vmatpush1.msra.mxu0 0.0
    %2708 = vmatprep.subr.mxu0 0.0
    %2709 = vmatpush1.msra.mxu0 0.0
    %2710 = vmatprep.subr.mxu0 0.0
    %2711 = vmatpush1.msra.mxu0 0.0
    %2712 = vmatprep.subr.mxu0 0.0
    %2713 = vmatpush1.msra.mxu0 0.0
    %2714 = vmatprep.subr.mxu0 0.0
    %2715 = vmatpush1.msra.mxu0 0.0
    %2716 = vmatprep.mubr.f32.mxu0 0.0
    %2717 = vmatmul.mubr.f32.gmra.mrb[0].mxu0 %v2647
    %v2718 = vpop.f32.mrb[0].mxu0
    %v2719 = vadd.f32 0.0, %v2718
    %v2720 = vpop.f32.mrb[0].mxu0
    %2721 = vmatprep.mubr.f32.mxu0 0.0
    %2722 = vmatmul.mubr.f32.gmra.mrb[0].mxu0 %v2650
    %v2723 = vpop.f32.mrb[0].mxu0
    %v2724 = vadd.f32 0.0, %v2723
    %v2725 = vpop.f32.mrb[0].mxu0
    %2726 = vdwg.mxu0
    %v2727 = vld [vmem:[#allocation28 + $0x2] sm:$0x1]
    %v2728 = vlaneseq
    %v2729 = vshrl.u32 %v2728, 7
    %v2730 = vsub.s32 0, %v2729
    %v2731 = vrot.slane %v2727, %v2730
    %v2732 = vmul.f32 %v2719, %v2731
    %v2733 = vmul.f32 %v2724, %v2731
    %v2734 = vadd.f32 %v2635, %v2732
    %v2735 = vadd.f32 %v2636, %v2733
    %v2736 = vld [vmem:[#allocation12 + $0x30] sm:$0xff]
    %v2737 = vld [vmem:[#allocation12 + $0x38] sm:$0xff]
    %2738 = vrot.lane.b32.xlu0 %v2437, 1
    %v2739 = vpop.permute.xlu0 %2738
    %2740 = vrot.lane.b32.xlu0 %v2438, 1
    %v2741 = vpop.permute.xlu0 %2740
    %v2742 = vsel %vm951, %v2739, %v2741
    %v2745 = vsel %vm2450, %v2736, 0
    %v2748 = vsel %vm2450, %v2737, 0
    %2750 = vmatprep.subr.mxu0 0.0
    %2751 = vmatpush1.msra.mxu0 %v2742
    %2752 = vmatprep.subr.mxu0 0.0
    %2753 = vmatpush1.msra.mxu0 0.0
    %2754 = vmatprep.subr.mxu0 0.0
    %2755 = vmatpush1.msra.mxu0 0.0
    %2756 = vmatprep.subr.mxu0 0.0
    %2757 = vmatpush1.msra.mxu0 0.0
    %2758 = vmatprep.subr.mxu0 0.0
    %2759 = vmatpush1.msra.mxu0 0.0
    %2760 = vmatprep.subr.mxu0 0.0
    %2761 = vmatpush1.msra.mxu0 0.0
    %2762 = vmatprep.subr.mxu0 0.0
    %2763 = vmatpush1.msra.mxu0 0.0
    %2764 = vmatprep.subr.mxu0 0.0
    %2765 = vmatpush1.msra.mxu0 0.0
    %2766 = vmatprep.subr.mxu0 0.0
    %2767 = vmatpush1.msra.mxu0 0.0
    %2768 = vmatprep.subr.mxu0 0.0
    %2769 = vmatpush1.msra.mxu0 0.0
    %2770 = vmatprep.subr.mxu0 0.0
    %2771 = vmatpush1.msra.mxu0 0.0
    %2772 = vmatprep.subr.mxu0 0.0
    %2773 = vmatpush1.msra.mxu0 0.0
    %2774 = vmatprep.subr.mxu0 0.0
    %2775 = vmatpush1.msra.mxu0 0.0
    %2776 = vmatprep.subr.mxu0 0.0
    %2777 = vmatpush1.msra.mxu0 0.0
    %2778 = vmatprep.subr.mxu0 0.0
    %2779 = vmatpush1.msra.mxu0 0.0
    %2780 = vmatprep.subr.mxu0 0.0
    %2781 = vmatpush1.msra.mxu0 0.0
    %2782 = vmatprep.subr.mxu0 0.0
    %2783 = vmatpush1.msra.mxu0 0.0
    %2784 = vmatprep.subr.mxu0 0.0
    %2785 = vmatpush1.msra.mxu0 0.0
    %2786 = vmatprep.subr.mxu0 0.0
    %2787 = vmatpush1.msra.mxu0 0.0
    %2788 = vmatprep.subr.mxu0 0.0
    %2789 = vmatpush1.msra.mxu0 0.0
    %2790 = vmatprep.subr.mxu0 0.0
    %2791 = vmatpush1.msra.mxu0 0.0
    %2792 = vmatprep.subr.mxu0 0.0
    %2793 = vmatpush1.msra.mxu0 0.0
    %2794 = vmatprep.subr.mxu0 0.0
    %2795 = vmatpush1.msra.mxu0 0.0
    %2796 = vmatprep.subr.mxu0 0.0
    %2797 = vmatpush1.msra.mxu0 0.0
    %2798 = vmatprep.subr.mxu0 0.0
    %2799 = vmatpush1.msra.mxu0 0.0
    %2800 = vmatprep.subr.mxu0 0.0
    %2801 = vmatpush1.msra.mxu0 0.0
    %2802 = vmatprep.subr.mxu0 0.0
    %2803 = vmatpush1.msra.mxu0 0.0
    %2804 = vmatprep.subr.mxu0 0.0
    %2805 = vmatpush1.msra.mxu0 0.0
    %2806 = vmatprep.subr.mxu0 0.0
    %2807 = vmatpush1.msra.mxu0 0.0
    %2808 = vmatprep.subr.mxu0 0.0
    %2809 = vmatpush1.msra.mxu0 0.0
    %2810 = vmatprep.subr.mxu0 0.0
    %2811 = vmatpush1.msra.mxu0 0.0
    %2812 = vmatprep.subr.mxu0 0.0
    %2813 = vmatpush1.msra.mxu0 0.0
    %2814 = vmatprep.mubr.f32.mxu0 0.0
    %2815 = vmatmul.mubr.f32.gmra.mrb[0].mxu0 %v2745
    %v2816 = vpop.f32.mrb[0].mxu0
    %v2817 = vadd.f32 0.0, %v2816
    %v2818 = vpop.f32.mrb[0].mxu0
    %2819 = vmatprep.mubr.f32.mxu0 0.0
    %2820 = vmatmul.mubr.f32.gmra.mrb[0].mxu0 %v2748
    %v2821 = vpop.f32.mrb[0].mxu0
    %v2822 = vadd.f32 0.0, %v2821
    %v2823 = vpop.f32.mrb[0].mxu0
    %2824 = vdwg.mxu0
    %v2825 = vld [vmem:[#allocation28 + $0x3] sm:$0x1]
    %v2826 = vlaneseq
    %v2827 = vshrl.u32 %v2826, 7
    %v2828 = vsub.s32 0, %v2827
    %v2829 = vrot.slane %v2825, %v2828
    %v2830 = vmul.f32 %v2817, %v2829
    %v2831 = vmul.f32 %v2822, %v2829
    %v2832 = vadd.f32 %v2734, %v2830
    %v2833 = vadd.f32 %v2735, %v2831
    %v2834 = vld [vmem:[#allocation12 + $0x40] sm:$0xff]
    %v2835 = vld [vmem:[#allocation12 + $0x48] sm:$0xff]
    %v2837 = vsel %vm2450, %v2834, 0
    %v2840 = vsel %vm2450, %v2835, 0
    %2842 = vmatprep.subr.mxu0 0.0
    %2843 = vmatpush1.msra.mxu0 %v2438
    %2844 = vmatprep.subr.mxu0 0.0
    %2845 = vmatpush1.msra.mxu0 0.0
    %2846 = vmatprep.subr.mxu0 0.0
    %2847 = vmatpush1.msra.mxu0 0.0
    %2848 = vmatprep.subr.mxu0 0.0
    %2849 = vmatpush1.msra.mxu0 0.0
    %2850 = vmatprep.subr.mxu0 0.0
    %2851 = vmatpush1.msra.mxu0 0.0
    %2852 = vmatprep.subr.mxu0 0.0
    %2853 = vmatpush1.msra.mxu0 0.0
    %2854 = vmatprep.subr.mxu0 0.0
    %2855 = vmatpush1.msra.mxu0 0.0
    %2856 = vmatprep.subr.mxu0 0.0
    %2857 = vmatpush1.msra.mxu0 0.0
    %2858 = vmatprep.subr.mxu0 0.0
    %2859 = vmatpush1.msra.mxu0 0.0
    %2860 = vmatprep.subr.mxu0 0.0
    %2861 = vmatpush1.msra.mxu0 0.0
    %2862 = vmatprep.subr.mxu0 0.0
    %2863 = vmatpush1.msra.mxu0 0.0
    %2864 = vmatprep.subr.mxu0 0.0
    %2865 = vmatpush1.msra.mxu0 0.0
    %2866 = vmatprep.subr.mxu0 0.0
    %2867 = vmatpush1.msra.mxu0 0.0
    %2868 = vmatprep.subr.mxu0 0.0
    %2869 = vmatpush1.msra.mxu0 0.0
    %2870 = vmatprep.subr.mxu0 0.0
    %2871 = vmatpush1.msra.mxu0 0.0
    %2872 = vmatprep.subr.mxu0 0.0
    %2873 = vmatpush1.msra.mxu0 0.0
    %2874 = vmatprep.subr.mxu0 0.0
    %2875 = vmatpush1.msra.mxu0 0.0
    %2876 = vmatprep.subr.mxu0 0.0
    %2877 = vmatpush1.msra.mxu0 0.0
    %2878 = vmatprep.subr.mxu0 0.0
    %2879 = vmatpush1.msra.mxu0 0.0
    %2880 = vmatprep.subr.mxu0 0.0
    %2881 = vmatpush1.msra.mxu0 0.0
    %2882 = vmatprep.subr.mxu0 0.0
    %2883 = vmatpush1.msra.mxu0 0.0
    %2884 = vmatprep.subr.mxu0 0.0
    %2885 = vmatpush1.msra.mxu0 0.0
    %2886 = vmatprep.subr.mxu0 0.0
    %2887 = vmatpush1.msra.mxu0 0.0
    %2888 = vmatprep.subr.mxu0 0.0
    %2889 = vmatpush1.msra.mxu0 0.0
    %2890 = vmatprep.subr.mxu0 0.0
    %2891 = vmatpush1.msra.mxu0 0.0
    %2892 = vmatprep.subr.mxu0 0.0
    %2893 = vmatpush1.msra.mxu0 0.0
    %2894 = vmatprep.subr.mxu0 0.0
    %2895 = vmatpush1.msra.mxu0 0.0
    %2896 = vmatprep.subr.mxu0 0.0
    %2897 = vmatpush1.msra.mxu0 0.0
    %2898 = vmatprep.subr.mxu0 0.0
    %2899 = vmatpush1.msra.mxu0 0.0
    %2900 = vmatprep.subr.mxu0 0.0
    %2901 = vmatpush1.msra.mxu0 0.0
    %2902 = vmatprep.subr.mxu0 0.0
    %2903 = vmatpush1.msra.mxu0 0.0
    %2904 = vmatprep.subr.mxu0 0.0
    %2905 = vmatpush1.msra.mxu0 0.0
    %2906 = vmatprep.mubr.f32.mxu0 0.0
    %2907 = vmatmul.mubr.f32.gmra.mrb[0].mxu0 %v2837
    %v2908 = vpop.f32.mrb[0].mxu0
    %v2909 = vadd.f32 0.0, %v2908
    %v2910 = vpop.f32.mrb[0].mxu0
    %2911 = vmatprep.mubr.f32.mxu0 0.0
    %2912 = vmatmul.mubr.f32.gmra.mrb[0].mxu0 %v2840
    %v2913 = vpop.f32.mrb[0].mxu0
    %v2914 = vadd.f32 0.0, %v2913
    %v2915 = vpop.f32.mrb[0].mxu0
    %2916 = vdwg.mxu0
    %v2917 = vadd.f32 %v2832, %v2909
    %v2918 = vadd.f32 %v2833, %v2914
    %v2919 = vld [vmem:[#allocation3 + $0x8] sm:$0xff]
    %v2920 = vld [vmem:[#allocation3 + $0x10] sm:$0xff]
    %v2921 = vld [vmem:[#allocation12 + $0x50] sm:$0xff]
    %v2922 = vld [vmem:[#allocation12 + $0x58] sm:$0xff]
    %2925 = vrot.lane.b32.xlu0 %v2919, 127
    %v2926 = vpop.permute.xlu0 %2925
    %2927 = vrot.lane.b32.xlu0 %v2920, 127
    %v2928 = vpop.permute.xlu0 %2927
    %v2929 = vsel %vm1323, %v2926, %v2928
    %v2932 = vsel %vm2450, %v2921, 0
    %v2935 = vsel %vm2450, %v2922, 0
    %2937 = vmatprep.subr.mxu0 0.0
    %2938 = vmatpush1.msra.mxu0 %v2929
    %2939 = vmatprep.subr.mxu0 0.0
    %2940 = vmatpush1.msra.mxu0 0.0
    %2941 = vmatprep.subr.mxu0 0.0
    %2942 = vmatpush1.msra.mxu0 0.0
    %2943 = vmatprep.subr.mxu0 0.0
    %2944 = vmatpush1.msra.mxu0 0.0
    %2945 = vmatprep.subr.mxu0 0.0
    %2946 = vmatpush1.msra.mxu0 0.0
    %2947 = vmatprep.subr.mxu0 0.0
    %2948 = vmatpush1.msra.mxu0 0.0
    %2949 = vmatprep.subr.mxu0 0.0
    %2950 = vmatpush1.msra.mxu0 0.0
    %2951 = vmatprep.subr.mxu0 0.0
    %2952 = vmatpush1.msra.mxu0 0.0
    %2953 = vmatprep.subr.mxu0 0.0
    %2954 = vmatpush1.msra.mxu0 0.0
    %2955 = vmatprep.subr.mxu0 0.0
    %2956 = vmatpush1.msra.mxu0 0.0
    %2957 = vmatprep.subr.mxu0 0.0
    %2958 = vmatpush1.msra.mxu0 0.0
    %2959 = vmatprep.subr.mxu0 0.0
    %2960 = vmatpush1.msra.mxu0 0.0
    %2961 = vmatprep.subr.mxu0 0.0
    %2962 = vmatpush1.msra.mxu0 0.0
    %2963 = vmatprep.subr.mxu0 0.0
    %2964 = vmatpush1.msra.mxu0 0.0
    %2965 = vmatprep.subr.mxu0 0.0
    %2966 = vmatpush1.msra.mxu0 0.0
    %2967 = vmatprep.subr.mxu0 0.0
    %2968 = vmatpush1.msra.mxu0 0.0
    %2969 = vmatprep.subr.mxu0 0.0
    %2970 = vmatpush1.msra.mxu0 0.0
    %2971 = vmatprep.subr.mxu0 0.0
    %2972 = vmatpush1.msra.mxu0 0.0
    %2973 = vmatprep.subr.mxu0 0.0
    %2974 = vmatpush1.msra.mxu0 0.0
    %2975 = vmatprep.subr.mxu0 0.0
    %2976 = vmatpush1.msra.mxu0 0.0
    %2977 = vmatprep.subr.mxu0 0.0
    %2978 = vmatpush1.msra.mxu0 0.0
    %2979 = vmatprep.subr.mxu0 0.0
    %2980 = vmatpush1.msra.mxu0 0.0
    %2981 = vmatprep.subr.mxu0 0.0
    %2982 = vmatpush1.msra.mxu0 0.0
    %2983 = vmatprep.subr.mxu0 0.0
    %2984 = vmatpush1.msra.mxu0 0.0
    %2985 = vmatprep.subr.mxu0 0.0
    %2986 = vmatpush1.msra.mxu0 0.0
    %2987 = vmatprep.subr.mxu0 0.0
    %2988 = vmatpush1.msra.mxu0 0.0
    %2989 = vmatprep.subr.mxu0 0.0
    %2990 = vmatpush1.msra.mxu0 0.0
    %2991 = vmatprep.subr.mxu0 0.0
    %2992 = vmatpush1.msra.mxu0 0.0
    %2993 = vmatprep.subr.mxu0 0.0
    %2994 = vmatpush1.msra.mxu0 0.0
    %2995 = vmatprep.subr.mxu0 0.0
    %2996 = vmatpush1.msra.mxu0 0.0
    %2997 = vmatprep.subr.mxu0 0.0
    %2998 = vmatpush1.msra.mxu0 0.0
    %2999 = vmatprep.subr.mxu0 0.0
    %3000 = vmatpush1.msra.mxu0 0.0
    %3001 = vmatprep.mubr.f32.mxu0 0.0
    %3002 = vmatmul.mubr.f32.gmra.mrb[0].mxu0 %v2932
    %v3003 = vpop.f32.mrb[0].mxu0
    %v3004 = vadd.f32 0.0, %v3003
    %v3005 = vpop.f32.mrb[0].mxu0
    %3006 = vmatprep.mubr.f32.mxu0 0.0
    %3007 = vmatmul.mubr.f32.gmra.mrb[0].mxu0 %v2935
    %v3008 = vpop.f32.mrb[0].mxu0
    %v3009 = vadd.f32 0.0, %v3008
    %v3010 = vpop.f32.mrb[0].mxu0
    %3011 = vdwg.mxu0
    %v3012 = vld [vmem:[#allocation28 + $0x5] sm:$0x1]
    %v3013 = vlaneseq
    %v3014 = vshrl.u32 %v3013, 7
    %v3015 = vsub.s32 0, %v3014
    %v3016 = vrot.slane %v3012, %v3015
    %v3017 = vmul.f32 %v3004, %v3016
    %v3018 = vmul.f32 %v3009, %v3016
    %v3019 = vadd.f32 %v2917, %v3017
    %v3020 = vadd.f32 %v2918, %v3018
    %v3021 = vld [vmem:[#allocation12 + $0x60] sm:$0xff]
    %v3022 = vld [vmem:[#allocation12 + $0x68] sm:$0xff]
    %3023 = vrot.lane.b32.xlu0 %v2919, 121
    %v3024 = vpop.permute.xlu0 %3023
    %3025 = vrot.lane.b32.xlu0 %v2920, 121
    %v3026 = vpop.permute.xlu0 %3025
    %vm3027 = vcmask 990208
    %v3028 = vsel %vm3027, %v3024, %v3026
    %v3031 = vsel %vm2450, %v3021, 0
    %v3034 = vsel %vm2450, %v3022, 0
    %3036 = vmatprep.subr.mxu0 0.0
    %3037 = vmatpush1.msra.mxu0 %v3028
    %3038 = vmatprep.subr.mxu0 0.0
    %3039 = vmatpush1.msra.mxu0 0.0
    %3040 = vmatprep.subr.mxu0 0.0
    %3041 = vmatpush1.msra.mxu0 0.0
    %3042 = vmatprep.subr.mxu0 0.0
    %3043 = vmatpush1.msra.mxu0 0.0
    %3044 = vmatprep.subr.mxu0 0.0
    %3045 = vmatpush1.msra.mxu0 0.0
    %3046 = vmatprep.subr.mxu0 0.0
    %3047 = vmatpush1.msra.mxu0 0.0
    %3048 = vmatprep.subr.mxu0 0.0
    %3049 = vmatpush1.msra.mxu0 0.0
    %3050 = vmatprep.subr.mxu0 0.0
    %3051 = vmatpush1.msra.mxu0 0.0
    %3052 = vmatprep.subr.mxu0 0.0
    %3053 = vmatpush1.msra.mxu0 0.0
    %3054 = vmatprep.subr.mxu0 0.0
    %3055 = vmatpush1.msra.mxu0 0.0
    %3056 = vmatprep.subr.mxu0 0.0
    %3057 = vmatpush1.msra.mxu0 0.0
    %3058 = vmatprep.subr.mxu0 0.0
    %3059 = vmatpush1.msra.mxu0 0.0
    %3060 = vmatprep.subr.mxu0 0.0
    %3061 = vmatpush1.msra.mxu0 0.0
    %3062 = vmatprep.subr.mxu0 0.0
    %3063 = vmatpush1.msra.mxu0 0.0
    %3064 = vmatprep.subr.mxu0 0.0
    %3065 = vmatpush1.msra.mxu0 0.0
    %3066 = vmatprep.subr.mxu0 0.0
    %3067 = vmatpush1.msra.mxu0 0.0
    %3068 = vmatprep.subr.mxu0 0.0
    %3069 = vmatpush1.msra.mxu0 0.0
    %3070 = vmatprep.subr.mxu0 0.0
    %3071 = vmatpush1.msra.mxu0 0.0
    %3072 = vmatprep.subr.mxu0 0.0
    %3073 = vmatpush1.msra.mxu0 0.0
    %3074 = vmatprep.subr.mxu0 0.0
    %3075 = vmatpush1.msra.mxu0 0.0
    %3076 = vmatprep.subr.mxu0 0.0
    %3077 = vmatpush1.msra.mxu0 0.0
    %3078 = vmatprep.subr.mxu0 0.0
    %3079 = vmatpush1.msra.mxu0 0.0
    %3080 = vmatprep.subr.mxu0 0.0
    %3081 = vmatpush1.msra.mxu0 0.0
    %3082 = vmatprep.subr.mxu0 0.0
    %3083 = vmatpush1.msra.mxu0 0.0
    %3084 = vmatprep.subr.mxu0 0.0
    %3085 = vmatpush1.msra.mxu0 0.0
    %3086 = vmatprep.subr.mxu0 0.0
    %3087 = vmatpush1.msra.mxu0 0.0
    %3088 = vmatprep.subr.mxu0 0.0
    %3089 = vmatpush1.msra.mxu0 0.0
    %3090 = vmatprep.subr.mxu0 0.0
    %3091 = vmatpush1.msra.mxu0 0.0
    %3092 = vmatprep.subr.mxu0 0.0
    %3093 = vmatpush1.msra.mxu0 0.0
    %3094 = vmatprep.subr.mxu0 0.0
    %3095 = vmatpush1.msra.mxu0 0.0
    %3096 = vmatprep.subr.mxu0 0.0
    %3097 = vmatpush1.msra.mxu0 0.0
    %3098 = vmatprep.subr.mxu0 0.0
    %3099 = vmatpush1.msra.mxu0 0.0
    %3100 = vmatprep.mubr.f32.mxu0 0.0
    %3101 = vmatmul.mubr.f32.gmra.mrb[0].mxu0 %v3031
    %v3102 = vpop.f32.mrb[0].mxu0
    %v3103 = vadd.f32 0.0, %v3102
    %v3104 = vpop.f32.mrb[0].mxu0
    %3105 = vmatprep.mubr.f32.mxu0 0.0
    %3106 = vmatmul.mubr.f32.gmra.mrb[0].mxu0 %v3034
    %v3107 = vpop.f32.mrb[0].mxu0
    %v3108 = vadd.f32 0.0, %v3107
    %v3109 = vpop.f32.mrb[0].mxu0
    %3110 = vdwg.mxu0
    %v3111 = vld [vmem:[#allocation28 + $0x6] sm:$0x1]
    %v3112 = vlaneseq
    %v3113 = vshrl.u32 %v3112, 7
    %v3114 = vsub.s32 0, %v3113
    %v3115 = vrot.slane %v3111, %v3114
    %v3116 = vmul.f32 %v3103, %v3115
    %v3117 = vmul.f32 %v3108, %v3115
    %v3118 = vadd.f32 %v3019, %v3116
    %v3119 = vadd.f32 %v3020, %v3117
    %v3120 = vld [vmem:[#allocation12 + $0x70] sm:$0xff]
    %v3121 = vld [vmem:[#allocation12 + $0x78] sm:$0xff]
    %3122 = vrot.lane.b32.xlu0 %v2919, 120
    %v3123 = vpop.permute.xlu0 %3122
    %3124 = vrot.lane.b32.xlu0 %v2920, 120
    %v3125 = vpop.permute.xlu0 %3124
    %vm3126 = vcmask 982016
    %v3127 = vsel %vm3126, %v3123, %v3125
    %v3130 = vsel %vm2450, %v3120, 0
    %v3133 = vsel %vm2450, %v3121, 0
    %3135 = vmatprep.subr.mxu0 0.0
    %3136 = vmatpush1.msra.mxu0 %v3127
    %3137 = vmatprep.subr.mxu0 0.0
    %3138 = vmatpush1.msra.mxu0 0.0
    %3139 = vmatprep.subr.mxu0 0.0
    %3140 = vmatpush1.msra.mxu0 0.0
    %3141 = vmatprep.subr.mxu0 0.0
    %3142 = vmatpush1.msra.mxu0 0.0
    %3143 = vmatprep.subr.mxu0 0.0
    %3144 = vmatpush1.msra.mxu0 0.0
    %3145 = vmatprep.subr.mxu0 0.0
    %3146 = vmatpush1.msra.mxu0 0.0
    %3147 = vmatprep.subr.mxu0 0.0
    %3148 = vmatpush1.msra.mxu0 0.0
    %3149 = vmatprep.subr.mxu0 0.0
    %3150 = vmatpush1.msra.mxu0 0.0
    %3151 = vmatprep.subr.mxu0 0.0
    %3152 = vmatpush1.msra.mxu0 0.0
    %3153 = vmatprep.subr.mxu0 0.0
    %3154 = vmatpush1.msra.mxu0 0.0
    %3155 = vmatprep.subr.mxu0 0.0
    %3156 = vmatpush1.msra.mxu0 0.0
    %3157 = vmatprep.subr.mxu0 0.0
    %3158 = vmatpush1.msra.mxu0 0.0
    %3159 = vmatprep.subr.mxu0 0.0
    %3160 = vmatpush1.msra.mxu0 0.0
    %3161 = vmatprep.subr.mxu0 0.0
    %3162 = vmatpush1.msra.mxu0 0.0
    %3163 = vmatprep.subr.mxu0 0.0
    %3164 = vmatpush1.msra.mxu0 0.0
    %3165 = vmatprep.subr.mxu0 0.0
    %3166 = vmatpush1.msra.mxu0 0.0
    %3167 = vmatprep.subr.mxu0 0.0
    %3168 = vmatpush1.msra.mxu0 0.0
    %3169 = vmatprep.subr.mxu0 0.0
    %3170 = vmatpush1.msra.mxu0 0.0
    %3171 = vmatprep.subr.mxu0 0.0
    %3172 = vmatpush1.msra.mxu0 0.0
    %3173 = vmatprep.subr.mxu0 0.0
    %3174 = vmatpush1.msra.mxu0 0.0
    %3175 = vmatprep.subr.mxu0 0.0
    %3176 = vmatpush1.msra.mxu0 0.0
    %3177 = vmatprep.subr.mxu0 0.0
    %3178 = vmatpush1.msra.mxu0 0.0
    %3179 = vmatprep.subr.mxu0 0.0
    %3180 = vmatpush1.msra.mxu0 0.0
    %3181 = vmatprep.subr.mxu0 0.0
    %3182 = vmatpush1.msra.mxu0 0.0
    %3183 = vmatprep.subr.mxu0 0.0
    %3184 = vmatpush1.msra.mxu0 0.0
    %3185 = vmatprep.subr.mxu0 0.0
    %3186 = vmatpush1.msra.mxu0 0.0
    %3187 = vmatprep.subr.mxu0 0.0
    %3188 = vmatpush1.msra.mxu0 0.0
    %3189 = vmatprep.subr.mxu0 0.0
    %3190 = vmatpush1.msra.mxu0 0.0
    %3191 = vmatprep.subr.mxu0 0.0
    %3192 = vmatpush1.msra.mxu0 0.0
    %3193 = vmatprep.subr.mxu0 0.0
    %3194 = vmatpush1.msra.mxu0 0.0
    %3195 = vmatprep.subr.mxu0 0.0
    %3196 = vmatpush1.msra.mxu0 0.0
    %3197 = vmatprep.subr.mxu0 0.0
    %3198 = vmatpush1.msra.mxu0 0.0
    %3199 = vmatprep.mubr.f32.mxu0 0.0
    %3200 = vmatmul.mubr.f32.gmra.mrb[0].mxu0 %v3130
    %v3201 = vpop.f32.mrb[0].mxu0
    %v3202 = vadd.f32 0.0, %v3201
    %v3203 = vpop.f32.mrb[0].mxu0
    %3204 = vmatprep.mubr.f32.mxu0 0.0
    %3205 = vmatmul.mubr.f32.gmra.mrb[0].mxu0 %v3133
    %v3206 = vpop.f32.mrb[0].mxu0
    %v3207 = vadd.f32 0.0, %v3206
    %v3208 = vpop.f32.mrb[0].mxu0
    %3209 = vdwg.mxu0
    %v3210 = vld [vmem:[#allocation28 + $0x7] sm:$0x1]
    %v3211 = vlaneseq
    %v3212 = vshrl.u32 %v3211, 7
    %v3213 = vsub.s32 0, %v3212
    %v3214 = vrot.slane %v3210, %v3213
    %v3215 = vmul.f32 %v3202, %v3214
    %v3216 = vmul.f32 %v3207, %v3214
    %v3217 = vadd.f32 %v3118, %v3215
    %v3218 = vadd.f32 %v3119, %v3216
    %v3219 = vld [vmem:[#allocation12 + $0x80] sm:$0xff]
    %v3220 = vld [vmem:[#allocation12 + $0x88] sm:$0xff]
    %3221 = vrot.lane.b32.xlu0 %v2919, 119
    %v3222 = vpop.permute.xlu0 %3221
    %3223 = vrot.lane.b32.xlu0 %v2920, 119
    %v3224 = vpop.permute.xlu0 %3223
    %vm3225 = vcmask 973824
    %v3226 = vsel %vm3225, %v3222, %v3224
    %v3229 = vsel %vm2450, %v3219, 0
    %v3232 = vsel %vm2450, %v3220, 0
    %3234 = vmatprep.subr.mxu0 0.0
    %3235 = vmatpush1.msra.mxu0 %v3226
    %3236 = vmatprep.subr.mxu0 0.0
    %3237 = vmatpush1.msra.mxu0 0.0
    %3238 = vmatprep.subr.mxu0 0.0
    %3239 = vmatpush1.msra.mxu0 0.0
    %3240 = vmatprep.subr.mxu0 0.0
    %3241 = vmatpush1.msra.mxu0 0.0
    %3242 = vmatprep.subr.mxu0 0.0
    %3243 = vmatpush1.msra.mxu0 0.0
    %3244 = vmatprep.subr.mxu0 0.0
    %3245 = vmatpush1.msra.mxu0 0.0
    %3246 = vmatprep.subr.mxu0 0.0
    %3247 = vmatpush1.msra.mxu0 0.0
    %3248 = vmatprep.subr.mxu0 0.0
    %3249 = vmatpush1.msra.mxu0 0.0
    %3250 = vmatprep.subr.mxu0 0.0
    %3251 = vmatpush1.msra.mxu0 0.0
    %3252 = vmatprep.subr.mxu0 0.0
    %3253 = vmatpush1.msra.mxu0 0.0
    %3254 = vmatprep.subr.mxu0 0.0
    %3255 = vmatpush1.msra.mxu0 0.0
    %3256 = vmatprep.subr.mxu0 0.0
    %3257 = vmatpush1.msra.mxu0 0.0
    %3258 = vmatprep.subr.mxu0 0.0
    %3259 = vmatpush1.msra.mxu0 0.0
    %3260 = vmatprep.subr.mxu0 0.0
    %3261 = vmatpush1.msra.mxu0 0.0
    %3262 = vmatprep.subr.mxu0 0.0
    %3263 = vmatpush1.msra.mxu0 0.0
    %3264 = vmatprep.subr.mxu0 0.0
    %3265 = vmatpush1.msra.mxu0 0.0
    %3266 = vmatprep.subr.mxu0 0.0
    %3267 = vmatpush1.msra.mxu0 0.0
    %3268 = vmatprep.subr.mxu0 0.0
    %3269 = vmatpush1.msra.mxu0 0.0
    %3270 = vmatprep.subr.mxu0 0.0
    %3271 = vmatpush1.msra.mxu0 0.0
    %3272 = vmatprep.subr.mxu0 0.0
    %3273 = vmatpush1.msra.mxu0 0.0
    %3274 = vmatprep.subr.mxu0 0.0
    %3275 = vmatpush1.msra.mxu0 0.0
    %3276 = vmatprep.subr.mxu0 0.0
    %3277 = vmatpush1.msra.mxu0 0.0
    %3278 = vmatprep.subr.mxu0 0.0
    %3279 = vmatpush1.msra.mxu0 0.0
    %3280 = vmatprep.subr.mxu0 0.0
    %3281 = vmatpush1.msra.mxu0 0.0
    %3282 = vmatprep.subr.mxu0 0.0
    %3283 = vmatpush1.msra.mxu0 0.0
    %3284 = vmatprep.subr.mxu0 0.0
    %3285 = vmatpush1.msra.mxu0 0.0
    %3286 = vmatprep.subr.mxu0 0.0
    %3287 = vmatpush1.msra.mxu0 0.0
    %3288 = vmatprep.subr.mxu0 0.0
    %3289 = vmatpush1.msra.mxu0 0.0
    %3290 = vmatprep.subr.mxu0 0.0
    %3291 = vmatpush1.msra.mxu0 0.0
    %3292 = vmatprep.subr.mxu0 0.0
    %3293 = vmatpush1.msra.mxu0 0.0
    %3294 = vmatprep.subr.mxu0 0.0
    %3295 = vmatpush1.msra.mxu0 0.0
    %3296 = vmatprep.subr.mxu0 0.0
    %3297 = vmatpush1.msra.mxu0 0.0
    %3298 = vmatprep.mubr.f32.mxu0 0.0
    %3299 = vmatmul.mubr.f32.gmra.mrb[0].mxu0 %v3229
    %v3300 = vpop.f32.mrb[0].mxu0
    %v3301 = vadd.f32 0.0, %v3300
    %v3302 = vpop.f32.mrb[0].mxu0
    %3303 = vmatprep.mubr.f32.mxu0 0.0
    %3304 = vmatmul.mubr.f32.gmra.mrb[0].mxu0 %v3232
    %v3305 = vpop.f32.mrb[0].mxu0
    %v3306 = vadd.f32 0.0, %v3305
    %v3307 = vpop.f32.mrb[0].mxu0
    %3308 = vdwg.mxu0
    %v3309 = vld [vmem:[#allocation28 + $0x8] sm:$0x1]
    %v3310 = vlaneseq
    %v3311 = vshrl.u32 %v3310, 7
    %v3312 = vsub.s32 0, %v3311
    %v3313 = vrot.slane %v3309, %v3312
    %v3314 = vmul.f32 %v3301, %v3313
    %v3315 = vmul.f32 %v3306, %v3313
    %v3316 = vadd.f32 %v3217, %v3314
    %v3317 = vadd.f32 %v3218, %v3315
    %v3318 = vld [vmem:[#allocation13] sm:$0xff]
    %v3319 = vld [vmem:[#allocation13 + $0x8] sm:$0xff]
    %3321 = vset.pattern.permute.xlu0 0
    %3322 = vperm.xlu0 %3321, %v3318
    %v3323 = vpop.permute.xlu0 %3322
    %3326 = vset.pattern.permute.xlu0 0
    %3327 = vperm.xlu0 %3326, %v3319
    %v3328 = vpop.permute.xlu0 %3327
    %v3330 = vadd.f32 %v3316, %v3323
    %v3331 = vadd.f32 %v3317, %v3328
    %v3332 = vmax.f32 %v3330, 0.0
    %v3333 = vmax.f32 %v3331, 0.0
    %3334 = vst [vmem:[#allocation4] sm:$0xff] 0.0
    %3335 = vst [vmem:[#allocation4 + $0x8] sm:$0xff] 0.0
    %3336 = vst [vmem:[#allocation4 + $0x10] sm:$0xff] 0.0
    %3337 = vst [vmem:[#allocation4 + $0x18] sm:$0xff] 0.0
    %3338 = vst [vmem:[#allocation4 + $0x20] sm:$0xff] 0.0
    %3339 = vst [vmem:[#allocation4 + $0x28] sm:$0xff] 0.0
    %3340 = vst [vmem:[#allocation4 + $0x8] sm:$0xff] %v3332
    %3341 = vst [vmem:[#allocation4 + $0x20] sm:$0xff] %v3333
    %v3342 = vld [vmem:[#allocation4 + $0x8] sm:$0xff]
    %v3343 = vld [vmem:[#allocation4 + $0x20] sm:$0xff]
    %v3344 = vld [vmem:[#allocation4 + $0x8] sm:$0xff]
    %v3345 = vld [vmem:[#allocation4 + $0x10] sm:$0xff]
    %v3346 = vld [vmem:[#allocation4 + $0x20] sm:$0xff]
    %v3347 = vld [vmem:[#allocation4 + $0x28] sm:$0xff]
    %3352 = vrot.lane.b32.xlu0 %v3344, 127
    %v3353 = vpop.permute.xlu0 %3352
    %3354 = vrot.lane.b32.xlu0 %v3345, 127
    %v3355 = vpop.permute.xlu0 %3354
    %3356 = vrot.lane.b32.xlu0 %v3346, 127
    %v3357 = vpop.permute.xlu0 %3356
    %3358 = vrot.lane.b32.xlu0 %v3347, 127
    %v3359 = vpop.permute.xlu0 %3358
    %v3360 = vsel %vm1323, %v3353, %v3355
    %v3361 = vsel %vm1323, %v3357, %v3359
    %v3364 = vmax.f32 %v3342, %v3360
    %v3365 = vmax.f32 %v3343, %v3361
    %v3368 = vmax.f32 %v3344, %v3360
    %v3369 = vmax.f32 %v3345, %v3355
    %v3370 = vmax.f32 %v3346, %v3361
    %v3371 = vmax.f32 %v3347, %v3359
    %3376 = vrot.lane.b32.xlu0 %v3368, 120
    %v3377 = vpop.permute.xlu0 %3376
    %3378 = vrot.lane.b32.xlu0 %v3369, 120
    %v3379 = vpop.permute.xlu0 %3378
    %3380 = vrot.lane.b32.xlu0 %v3370, 120
    %v3381 = vpop.permute.xlu0 %3380
    %3382 = vrot.lane.b32.xlu0 %v3371, 120
    %v3383 = vpop.permute.xlu0 %3382
    %v3384 = vsel %vm3126, %v3377, %v3379
    %v3385 = vsel %vm3126, %v3381, %v3383
    %v3388 = vmax.f32 %v3364, %v3384
    %v3389 = vmax.f32 %v3365, %v3385
    %v3390 = vld [vmem:[#allocation33] sm:$0xff]
    %v3391 = vld [vmem:[#allocation33 + $0x8] sm:$0xff]
    %v3392 = vld [vmem:[#allocation33 + $0x10] sm:$0xff]
    %v3393 = vld [vmem:[#allocation33 + $0x18] sm:$0xff]
    %v3394 = vld [vmem:[#allocation33 + $0x20] sm:$0xff]
    %v3395 = vld [vmem:[#allocation33 + $0x28] sm:$0xff]
    %v3396 = vld [vmem:[#allocation33 + $0x30] sm:$0xff]
    %v3397 = vld [vmem:[#allocation33 + $0x38] sm:$0xff]
    %v3398 = vld [vmem:[#allocation33 + $0x40] sm:$0xff]
    %v3399 = vld [vmem:[#allocation33 + $0x48] sm:$0xff]
    %v3400 = vld [vmem:[#allocation33 + $0x50] sm:$0xff]
    %v3401 = vld [vmem:[#allocation33 + $0x58] sm:$0xff]
    %v3402 = vld [vmem:[#allocation33 + $0x60] sm:$0xff]
    %v3403 = vld [vmem:[#allocation33 + $0x68] sm:$0xff]
    %v3404 = vld [vmem:[#allocation33 + $0x70] sm:$0xff]
    %v3405 = vld [vmem:[#allocation33 + $0x78] sm:$0xff]
    %3406 = vmatprep.subr.mxu0 0.0
    %3407 = vmatpush1.msra.mxu0 %v3390
    %3408 = vmatprep.subr.mxu0 0.0
    %3409 = vmatpush1.msra.mxu0 %v3391
    %3410 = vmatprep.subr.mxu0 0.0
    %3411 = vmatpush1.msra.mxu0 %v3392
    %3412 = vmatprep.subr.mxu0 0.0
    %3413 = vmatpush1.msra.mxu0 %v3393
    %3414 = vmatprep.subr.mxu0 0.0
    %3415 = vmatpush1.msra.mxu0 %v3394
    %3416 = vmatprep.subr.mxu0 0.0
    %3417 = vmatpush1.msra.mxu0 %v3395
    %3418 = vmatprep.subr.mxu0 0.0
    %3419 = vmatpush1.msra.mxu0 %v3396
    %3420 = vmatprep.subr.mxu0 0.0
    %3421 = vmatpush1.msra.mxu0 %v3397
    %3422 = vmatprep.subr.mxu0 0.0
    %3423 = vmatpush1.msra.mxu0 %v3398
    %3424 = vmatprep.subr.mxu0 0.0
    %3425 = vmatpush1.msra.mxu0 %v3399
    %3426 = vmatprep.subr.mxu0 0.0
    %3427 = vmatpush1.msra.mxu0 %v3400
    %3428 = vmatprep.subr.mxu0 0.0
    %3429 = vmatpush1.msra.mxu0 %v3401
    %3430 = vmatprep.subr.mxu0 0.0
    %3431 = vmatpush1.msra.mxu0 %v3402
    %3432 = vmatprep.subr.mxu0 0.0
    %3433 = vmatpush1.msra.mxu0 %v3403
    %3434 = vmatprep.subr.mxu0 0.0
    %3435 = vmatpush1.msra.mxu0 %v3404
    %3436 = vmatprep.subr.mxu0 0.0
    %3437 = vmatpush1.msra.mxu0 %v3405
    %3438 = vmatprep.subr.mxu0 0.0
    %3439 = vmatpush1.msra.mxu0 0.0
    %3440 = vmatprep.subr.mxu0 0.0
    %3441 = vmatpush1.msra.mxu0 0.0
    %3442 = vmatprep.subr.mxu0 0.0
    %3443 = vmatpush1.msra.mxu0 0.0
    %3444 = vmatprep.subr.mxu0 0.0
    %3445 = vmatpush1.msra.mxu0 0.0
    %3446 = vmatprep.subr.mxu0 0.0
    %3447 = vmatpush1.msra.mxu0 0.0
    %3448 = vmatprep.subr.mxu0 0.0
    %3449 = vmatpush1.msra.mxu0 0.0
    %3450 = vmatprep.subr.mxu0 0.0
    %3451 = vmatpush1.msra.mxu0 0.0
    %3452 = vmatprep.subr.mxu0 0.0
    %3453 = vmatpush1.msra.mxu0 0.0
    %3454 = vmatprep.subr.mxu0 0.0
    %3455 = vmatpush1.msra.mxu0 0.0
    %3456 = vmatprep.subr.mxu0 0.0
    %3457 = vmatpush1.msra.mxu0 0.0
    %3458 = vmatprep.subr.mxu0 0.0
    %3459 = vmatpush1.msra.mxu0 0.0
    %3460 = vmatprep.subr.mxu0 0.0
    %3461 = vmatpush1.msra.mxu0 0.0
    %3462 = vmatprep.subr.mxu0 0.0
    %3463 = vmatpush1.msra.mxu0 0.0
    %3464 = vmatprep.subr.mxu0 0.0
    %3465 = vmatpush1.msra.mxu0 0.0
    %3466 = vmatprep.subr.mxu0 0.0
    %3467 = vmatpush1.msra.mxu0 0.0
    %3468 = vmatprep.subr.mxu0 0.0
    %3469 = vmatpush1.msra.mxu0 0.0
    %3470 = vmatprep.mubr.f32.mxu0 0.0
    %3471 = vmatmul.mubr.f32.gmra.mrb[0].mxu0 %v3388
    %v3472 = vpop.f32.mrb[0].mxu0
    %v3473 = vadd.f32 0.0, %v3472
    %v3474 = vpop.f32.mrb[0].mxu0
    %3475 = vmatprep.mubr.f32.mxu0 0.0
    %3476 = vmatmul.mubr.f32.gmra.mrb[0].mxu0 %v3389
    %v3477 = vpop.f32.mrb[0].mxu0
    %v3478 = vadd.f32 0.0, %v3477
    %v3479 = vpop.f32.mrb[0].mxu0
    %3480 = vdwg.mxu0
    %3481 = vst [vmem:[#allocation5] sm:$0xff] 0.0
    %3482 = vst [vmem:[#allocation5 + $0x8] sm:$0xff] 0.0
    %vm3483 = vcmask 261120
    %3484 = vst.msk [vmem:[#allocation5 + $0x10] sm:$0xff] %vm3483, 0.0
    %3485 = vst [vmem:[#allocation5 + $0x18] sm:$0xff] 0.0
    %3486 = vst [vmem:[#allocation5 + $0x20] sm:$0xff] 0.0
    %3487 = vst.msk [vmem:[#allocation5 + $0x28] sm:$0xff] %vm3483, 0.0
    %3488 = vst.msk [vmem:[#allocation5 + $0x8] sm:$0xff] %vm3483, %v3473
    %3489 = vst.msk [vmem:[#allocation5 + $0x20] sm:$0xff] %vm3483, %v3478
    %v3490 = vld [vmem:[#allocation5] sm:$0xff]
    %v3491 = vld [vmem:[#allocation5 + $0x8] sm:$0xff]
    %v3492 = vld [vmem:[#allocation5 + $0x18] sm:$0xff]
    %v3493 = vld [vmem:[#allocation5 + $0x20] sm:$0xff]
    %v3494 = vld [vmem:[#allocation15] sm:$0xff]
    %v3495 = vld [vmem:[#allocation15 + $0x8] sm:$0xff]
    %v3496 = vld [vmem:[#allocation15 + $0x10] sm:$0xff]
    %v3497 = vld [vmem:[#allocation15 + $0x18] sm:$0xff]
    %3502 = vrot.lane.b32.xlu0 %v3490, 5
    %v3503 = vpop.permute.xlu0 %3502
    %3504 = vrot.lane.b32.xlu0 %v3491, 5
    %v3505 = vpop.permute.xlu0 %3504
    %3506 = vrot.lane.b32.xlu0 %v3492, 5
    %v3507 = vpop.permute.xlu0 %3506
    %3508 = vrot.lane.b32.xlu0 %v3493, 5
    %v3509 = vpop.permute.xlu0 %3508
    %vm3510 = vcmask 39936
    %v3511 = vsel %vm3510, %v3503, %v3505
    %v3512 = vsel %vm3510, %v3507, %v3509
    %v3516 = vsel %vm535, %v3494, 0
    %v3519 = vsel %vm535, %v3495, 0
    %v3522 = vsel %vm535, %v3496, 0
    %v3525 = vsel %vm535, %v3497, 0
    %3527 = vmatprep.subr.mxu0 0.0
    %3528 = vmatpush1.msra.mxu0 %v3511
    %3529 = vmatprep.subr.mxu0 0.0
    %3530 = vmatpush1.msra.mxu0 %v3512
    %3531 = vmatprep.subr.mxu0 0.0
    %3532 = vmatpush1.msra.mxu0 0.0
    %3533 = vmatprep.subr.mxu0 0.0
    %3534 = vmatpush1.msra.mxu0 0.0
    %3535 = vmatprep.subr.mxu0 0.0
    %3536 = vmatpush1.msra.mxu0 0.0
    %3537 = vmatprep.subr.mxu0 0.0
    %3538 = vmatpush1.msra.mxu0 0.0
    %3539 = vmatprep.subr.mxu0 0.0
    %3540 = vmatpush1.msra.mxu0 0.0
    %3541 = vmatprep.subr.mxu0 0.0
    %3542 = vmatpush1.msra.mxu0 0.0
    %3543 = vmatprep.subr.mxu0 0.0
    %3544 = vmatpush1.msra.mxu0 0.0
    %3545 = vmatprep.subr.mxu0 0.0
    %3546 = vmatpush1.msra.mxu0 0.0
    %3547 = vmatprep.subr.mxu0 0.0
    %3548 = vmatpush1.msra.mxu0 0.0
    %3549 = vmatprep.subr.mxu0 0.0
    %3550 = vmatpush1.msra.mxu0 0.0
    %3551 = vmatprep.subr.mxu0 0.0
    %3552 = vmatpush1.msra.mxu0 0.0
    %3553 = vmatprep.subr.mxu0 0.0
    %3554 = vmatpush1.msra.mxu0 0.0
    %3555 = vmatprep.subr.mxu0 0.0
    %3556 = vmatpush1.msra.mxu0 0.0
    %3557 = vmatprep.subr.mxu0 0.0
    %3558 = vmatpush1.msra.mxu0 0.0
    %3559 = vmatprep.subr.mxu0 0.0
    %3560 = vmatpush1.msra.mxu0 0.0
    %3561 = vmatprep.subr.mxu0 0.0
    %3562 = vmatpush1.msra.mxu0 0.0
    %3563 = vmatprep.subr.mxu0 0.0
    %3564 = vmatpush1.msra.mxu0 0.0
    %3565 = vmatprep.subr.mxu0 0.0
    %3566 = vmatpush1.msra.mxu0 0.0
    %3567 = vmatprep.subr.mxu0 0.0
    %3568 = vmatpush1.msra.mxu0 0.0
    %3569 = vmatprep.subr.mxu0 0.0
    %3570 = vmatpush1.msra.mxu0 0.0
    %3571 = vmatprep.subr.mxu0 0.0
    %3572 = vmatpush1.msra.mxu0 0.0
    %3573 = vmatprep.subr.mxu0 0.0
    %3574 = vmatpush1.msra.mxu0 0.0
    %3575 = vmatprep.subr.mxu0 0.0
    %3576 = vmatpush1.msra.mxu0 0.0
    %3577 = vmatprep.subr.mxu0 0.0
    %3578 = vmatpush1.msra.mxu0 0.0
    %3579 = vmatprep.subr.mxu0 0.0
    %3580 = vmatpush1.msra.mxu0 0.0
    %3581 = vmatprep.subr.mxu0 0.0
    %3582 = vmatpush1.msra.mxu0 0.0
    %3583 = vmatprep.subr.mxu0 0.0
    %3584 = vmatpush1.msra.mxu0 0.0
    %3585 = vmatprep.subr.mxu0 0.0
    %3586 = vmatpush1.msra.mxu0 0.0
    %3587 = vmatprep.subr.mxu0 0.0
    %3588 = vmatpush1.msra.mxu0 0.0
    %3589 = vmatprep.subr.mxu0 0.0
    %3590 = vmatpush1.msra.mxu0 0.0
    %3591 = vmatprep.mubr.f32.mxu0 0.0
    %3592 = vmatmul.mubr.f32.gmra.mrb[0].mxu0 %v3516
    %v3593 = vpop.f32.mrb[0].mxu0
    %v3594 = vadd.f32 0.0, %v3593
    %v3595 = vpop.f32.mrb[0].mxu0
    %3596 = vmatprep.mubr.f32.mxu0 0.0
    %3597 = vmatmul.mubr.f32.gmra.mrb[0].mxu0 %v3519
    %v3598 = vpop.f32.mrb[0].mxu0
    %v3599 = vadd.f32 0.0, %v3598
    %v3600 = vpop.f32.mrb[0].mxu0
    %3601 = vmatprep.mubr.f32.mxu0 0.0
    %3602 = vmatmul.mubr.f32.gmra.mrb[0].mxu0 %v3522
    %v3603 = vpop.f32.mrb[0].mxu0
    %v3604 = vadd.f32 0.0, %v3603
    %v3605 = vpop.f32.mrb[0].mxu0
    %3606 = vmatprep.mubr.f32.mxu0 0.0
    %3607 = vmatmul.mubr.f32.gmra.mrb[0].mxu0 %v3525
    %v3608 = vpop.f32.mrb[0].mxu0
    %v3609 = vadd.f32 0.0, %v3608
    %v3610 = vpop.f32.mrb[0].mxu0
    %3611 = vdwg.mxu0
    %v3612 = vld [vmem:[#allocation30] sm:$0x1]
    %v3613 = vlaneseq
    %v3614 = vshrl.u32 %v3613, 7
    %v3615 = vsub.s32 0, %v3614
    %v3616 = vrot.slane %v3612, %v3615
    %v3617 = vmul.f32 %v3594, %v3616
    %v3618 = vmul.f32 %v3599, %v3616
    %v3619 = vmul.f32 %v3604, %v3616
    %v3620 = vmul.f32 %v3609, %v3616
    %v3621 = vld [vmem:[#allocation15 + $0x20] sm:$0xff]
    %v3622 = vld [vmem:[#allocation15 + $0x28] sm:$0xff]
    %v3623 = vld [vmem:[#allocation15 + $0x30] sm:$0xff]
    %v3624 = vld [vmem:[#allocation15 + $0x38] sm:$0xff]
    %3625 = vrot.lane.b32.xlu0 %v3490, 4
    %v3626 = vpop.permute.xlu0 %3625
    %3627 = vrot.lane.b32.xlu0 %v3491, 4
    %v3628 = vpop.permute.xlu0 %3627
    %3629 = vrot.lane.b32.xlu0 %v3492, 4
    %v3630 = vpop.permute.xlu0 %3629
    %3631 = vrot.lane.b32.xlu0 %v3493, 4
    %v3632 = vpop.permute.xlu0 %3631
    %v3633 = vsel %vm335, %v3626, %v3628
    %v3634 = vsel %vm335, %v3630, %v3632
    %v3638 = vsel %vm535, %v3621, 0
    %v3641 = vsel %vm535, %v3622, 0
    %v3644 = vsel %vm535, %v3623, 0
    %v3647 = vsel %vm535, %v3624, 0
    %3649 = vmatprep.subr.mxu0 0.0
    %3650 = vmatpush1.msra.mxu0 %v3633
    %3651 = vmatprep.subr.mxu0 0.0
    %3652 = vmatpush1.msra.mxu0 %v3634
    %3653 = vmatprep.subr.mxu0 0.0
    %3654 = vmatpush1.msra.mxu0 0.0
    %3655 = vmatprep.subr.mxu0 0.0
    %3656 = vmatpush1.msra.mxu0 0.0
    %3657 = vmatprep.subr.mxu0 0.0
    %3658 = vmatpush1.msra.mxu0 0.0
    %3659 = vmatprep.subr.mxu0 0.0
    %3660 = vmatpush1.msra.mxu0 0.0
    %3661 = vmatprep.subr.mxu0 0.0
    %3662 = vmatpush1.msra.mxu0 0.0
    %3663 = vmatprep.subr.mxu0 0.0
    %3664 = vmatpush1.msra.mxu0 0.0
    %3665 = vmatprep.subr.mxu0 0.0
    %3666 = vmatpush1.msra.mxu0 0.0
    %3667 = vmatprep.subr.mxu0 0.0
    %3668 = vmatpush1.msra.mxu0 0.0
    %3669 = vmatprep.subr.mxu0 0.0
    %3670 = vmatpush1.msra.mxu0 0.0
    %3671 = vmatprep.subr.mxu0 0.0
    %3672 = vmatpush1.msra.mxu0 0.0
    %3673 = vmatprep.subr.mxu0 0.0
    %3674 = vmatpush1.msra.mxu0 0.0
    %3675 = vmatprep.subr.mxu0 0.0
    %3676 = vmatpush1.msra.mxu0 0.0
    %3677 = vmatprep.subr.mxu0 0.0
    %3678 = vmatpush1.msra.mxu0 0.0
    %3679 = vmatprep.subr.mxu0 0.0
    %3680 = vmatpush1.msra.mxu0 0.0
    %3681 = vmatprep.subr.mxu0 0.0
    %3682 = vmatpush1.msra.mxu0 0.0
    %3683 = vmatprep.subr.mxu0 0.0
    %3684 = vmatpush1.msra.mxu0 0.0
    %3685 = vmatprep.subr.mxu0 0.0
    %3686 = vmatpush1.msra.mxu0 0.0
    %3687 = vmatprep.subr.mxu0 0.0
    %3688 = vmatpush1.msra.mxu0 0.0
    %3689 = vmatprep.subr.mxu0 0.0
    %3690 = vmatpush1.msra.mxu0 0.0
    %3691 = vmatprep.subr.mxu0 0.0
    %3692 = vmatpush1.msra.mxu0 0.0
    %3693 = vmatprep.subr.mxu0 0.0
    %3694 = vmatpush1.msra.mxu0 0.0
    %3695 = vmatprep.subr.mxu0 0.0
    %3696 = vmatpush1.msra.mxu0 0.0
    %3697 = vmatprep.subr.mxu0 0.0
    %3698 = vmatpush1.msra.mxu0 0.0
    %3699 = vmatprep.subr.mxu0 0.0
    %3700 = vmatpush1.msra.mxu0 0.0
    %3701 = vmatprep.subr.mxu0 0.0
    %3702 = vmatpush1.msra.mxu0 0.0
    %3703 = vmatprep.subr.mxu0 0.0
    %3704 = vmatpush1.msra.mxu0 0.0
    %3705 = vmatprep.subr.mxu0 0.0
    %3706 = vmatpush1.msra.mxu0 0.0
    %3707 = vmatprep.subr.mxu0 0.0
    %3708 = vmatpush1.msra.mxu0 0.0
    %3709 = vmatprep.subr.mxu0 0.0
    %3710 = vmatpush1.msra.mxu0 0.0
    %3711 = vmatprep.subr.mxu0 0.0
    %3712 = vmatpush1.msra.mxu0 0.0
    %3713 = vmatprep.mubr.f32.mxu0 0.0
    %3714 = vmatmul.mubr.f32.gmra.mrb[0].mxu0 %v3638
    %v3715 = vpop.f32.mrb[0].mxu0
    %v3716 = vadd.f32 0.0, %v3715
    %v3717 = vpop.f32.mrb[0].mxu0
    %3718 = vmatprep.mubr.f32.mxu0 0.0
    %3719 = vmatmul.mubr.f32.gmra.mrb[0].mxu0 %v3641
    %v3720 = vpop.f32.mrb[0].mxu0
    %v3721 = vadd.f32 0.0, %v3720
    %v3722 = vpop.f32.mrb[0].mxu0
    %3723 = vmatprep.mubr.f32.mxu0 0.0
    %3724 = vmatmul.mubr.f32.gmra.mrb[0].mxu0 %v3644
    %v3725 = vpop.f32.mrb[0].mxu0
    %v3726 = vadd.f32 0.0, %v3725
    %v3727 = vpop.f32.mrb[0].mxu0
    %3728 = vmatprep.mubr.f32.mxu0 0.0
    %3729 = vmatmul.mubr.f32.gmra.mrb[0].mxu0 %v3647
    %v3730 = vpop.f32.mrb[0].mxu0
    %v3731 = vadd.f32 0.0, %v3730
    %v3732 = vpop.f32.mrb[0].mxu0
    %3733 = vdwg.mxu0
    %v3734 = vld [vmem:[#allocation30 + $0x1] sm:$0x1]
    %v3735 = vlaneseq
    %v3736 = vshrl.u32 %v3735, 7
    %v3737 = vsub.s32 0, %v3736
    %v3738 = vrot.slane %v3734, %v3737
    %v3739 = vmul.f32 %v3716, %v3738
    %v3740 = vmul.f32 %v3721, %v3738
    %v3741 = vmul.f32 %v3726, %v3738
    %v3742 = vmul.f32 %v3731, %v3738
    %v3743 = vadd.f32 %v3617, %v3739
    %v3744 = vadd.f32 %v3618, %v3740
    %v3745 = vadd.f32 %v3619, %v3741
    %v3746 = vadd.f32 %v3620, %v3742
    %v3747 = vld [vmem:[#allocation15 + $0x40] sm:$0xff]
    %v3748 = vld [vmem:[#allocation15 + $0x48] sm:$0xff]
    %v3749 = vld [vmem:[#allocation15 + $0x50] sm:$0xff]
    %v3750 = vld [vmem:[#allocation15 + $0x58] sm:$0xff]
    %3751 = vrot.lane.b32.xlu0 %v3490, 3
    %v3752 = vpop.permute.xlu0 %3751
    %3753 = vrot.lane.b32.xlu0 %v3491, 3
    %v3754 = vpop.permute.xlu0 %3753
    %3755 = vrot.lane.b32.xlu0 %v3492, 3
    %v3756 = vpop.permute.xlu0 %3755
    %3757 = vrot.lane.b32.xlu0 %v3493, 3
    %v3758 = vpop.permute.xlu0 %3757
    %vm3759 = vcmask 23552
    %v3760 = vsel %vm3759, %v3752, %v3754
    %v3761 = vsel %vm3759, %v3756, %v3758
    %v3765 = vsel %vm535, %v3747, 0
    %v3768 = vsel %vm535, %v3748, 0
    %v3771 = vsel %vm535, %v3749, 0
    %v3774 = vsel %vm535, %v3750, 0
    %3776 = vmatprep.subr.mxu0 0.0
    %3777 = vmatpush1.msra.mxu0 %v3760
    %3778 = vmatprep.subr.mxu0 0.0
    %3779 = vmatpush1.msra.mxu0 %v3761
    %3780 = vmatprep.subr.mxu0 0.0
    %3781 = vmatpush1.msra.mxu0 0.0
    %3782 = vmatprep.subr.mxu0 0.0
    %3783 = vmatpush1.msra.mxu0 0.0
    %3784 = vmatprep.subr.mxu0 0.0
    %3785 = vmatpush1.msra.mxu0 0.0
    %3786 = vmatprep.subr.mxu0 0.0
    %3787 = vmatpush1.msra.mxu0 0.0
    %3788 = vmatprep.subr.mxu0 0.0
    %3789 = vmatpush1.msra.mxu0 0.0
    %3790 = vmatprep.subr.mxu0 0.0
    %3791 = vmatpush1.msra.mxu0 0.0
    %3792 = vmatprep.subr.mxu0 0.0
    %3793 = vmatpush1.msra.mxu0 0.0
    %3794 = vmatprep.subr.mxu0 0.0
    %3795 = vmatpush1.msra.mxu0 0.0
    %3796 = vmatprep.subr.mxu0 0.0
    %3797 = vmatpush1.msra.mxu0 0.0
    %3798 = vmatprep.subr.mxu0 0.0
    %3799 = vmatpush1.msra.mxu0 0.0
    %3800 = vmatprep.subr.mxu0 0.0
    %3801 = vmatpush1.msra.mxu0 0.0
    %3802 = vmatprep.subr.mxu0 0.0
    %3803 = vmatpush1.msra.mxu0 0.0
    %3804 = vmatprep.subr.mxu0 0.0
    %3805 = vmatpush1.msra.mxu0 0.0
    %3806 = vmatprep.subr.mxu0 0.0
    %3807 = vmatpush1.msra.mxu0 0.0
    %3808 = vmatprep.subr.mxu0 0.0
    %3809 = vmatpush1.msra.mxu0 0.0
    %3810 = vmatprep.subr.mxu0 0.0
    %3811 = vmatpush1.msra.mxu0 0.0
    %3812 = vmatprep.subr.mxu0 0.0
    %3813 = vmatpush1.msra.mxu0 0.0
    %3814 = vmatprep.subr.mxu0 0.0
    %3815 = vmatpush1.msra.mxu0 0.0
    %3816 = vmatprep.subr.mxu0 0.0
    %3817 = vmatpush1.msra.mxu0 0.0
    %3818 = vmatprep.subr.mxu0 0.0
    %3819 = vmatpush1.msra.mxu0 0.0
    %3820 = vmatprep.subr.mxu0 0.0
    %3821 = vmatpush1.msra.mxu0 0.0
    %3822 = vmatprep.subr.mxu0 0.0
    %3823 = vmatpush1.msra.mxu0 0.0
    %3824 = vmatprep.subr.mxu0 0.0
    %3825 = vmatpush1.msra.mxu0 0.0
    %3826 = vmatprep.subr.mxu0 0.0
    %3827 = vmatpush1.msra.mxu0 0.0
    %3828 = vmatprep.subr.mxu0 0.0
    %3829 = vmatpush1.msra.mxu0 0.0
    %3830 = vmatprep.subr.mxu0 0.0
    %3831 = vmatpush1.msra.mxu0 0.0
    %3832 = vmatprep.subr.mxu0 0.0
    %3833 = vmatpush1.msra.mxu0 0.0
    %3834 = vmatprep.subr.mxu0 0.0
    %3835 = vmatpush1.msra.mxu0 0.0
    %3836 = vmatprep.subr.mxu0 0.0
    %3837 = vmatpush1.msra.mxu0 0.0
    %3838 = vmatprep.subr.mxu0 0.0
    %3839 = vmatpush1.msra.mxu0 0.0
    %3840 = vmatprep.mubr.f32.mxu0 0.0
    %3841 = vmatmul.mubr.f32.gmra.mrb[0].mxu0 %v3765
    %v3842 = vpop.f32.mrb[0].mxu0
    %v3843 = vadd.f32 0.0, %v3842
    %v3844 = vpop.f32.mrb[0].mxu0
    %3845 = vmatprep.mubr.f32.mxu0 0.0
    %3846 = vmatmul.mubr.f32.gmra.mrb[0].mxu0 %v3768
    %v3847 = vpop.f32.mrb[0].mxu0
    %v3848 = vadd.f32 0.0, %v3847
    %v3849 = vpop.f32.mrb[0].mxu0
    %3850 = vmatprep.mubr.f32.mxu0 0.0
    %3851 = vmatmul.mubr.f32.gmra.mrb[0].mxu0 %v3771
    %v3852 = vpop.f32.mrb[0].mxu0
    %v3853 = vadd.f32 0.0, %v3852
    %v3854 = vpop.f32.mrb[0].mxu0
    %3855 = vmatprep.mubr.f32.mxu0 0.0
    %3856 = vmatmul.mubr.f32.gmra.mrb[0].mxu0 %v3774
    %v3857 = vpop.f32.mrb[0].mxu0
    %v3858 = vadd.f32 0.0, %v3857
    %v3859 = vpop.f32.mrb[0].mxu0
    %3860 = vdwg.mxu0
    %v3861 = vld [vmem:[#allocation30 + $0x2] sm:$0x1]
    %v3862 = vlaneseq
    %v3863 = vshrl.u32 %v3862, 7
    %v3864 = vsub.s32 0, %v3863
    %v3865 = vrot.slane %v3861, %v3864
    %v3866 = vmul.f32 %v3843, %v3865
    %v3867 = vmul.f32 %v3848, %v3865
    %v3868 = vmul.f32 %v3853, %v3865
    %v3869 = vmul.f32 %v3858, %v3865
    %v3870 = vadd.f32 %v3743, %v3866
    %v3871 = vadd.f32 %v3744, %v3867
    %v3872 = vadd.f32 %v3745, %v3868
    %v3873 = vadd.f32 %v3746, %v3869
    %v3874 = vld [vmem:[#allocation15 + $0x60] sm:$0xff]
    %v3875 = vld [vmem:[#allocation15 + $0x68] sm:$0xff]
    %v3876 = vld [vmem:[#allocation15 + $0x70] sm:$0xff]
    %v3877 = vld [vmem:[#allocation15 + $0x78] sm:$0xff]
    %3878 = vrot.lane.b32.xlu0 %v3490, 1
    %v3879 = vpop.permute.xlu0 %3878
    %3880 = vrot.lane.b32.xlu0 %v3491, 1
    %v3881 = vpop.permute.xlu0 %3880
    %3882 = vrot.lane.b32.xlu0 %v3492, 1
    %v3883 = vpop.permute.xlu0 %3882
    %3884 = vrot.lane.b32.xlu0 %v3493, 1
    %v3885 = vpop.permute.xlu0 %3884
    %v3886 = vsel %vm951, %v3879, %v3881
    %v3887 = vsel %vm951, %v3883, %v3885
    %v3891 = vsel %vm535, %v3874, 0
    %v3894 = vsel %vm535, %v3875, 0
    %v3897 = vsel %vm535, %v3876, 0
    %v3900 = vsel %vm535, %v3877, 0
    %3902 = vmatprep.subr.mxu0 0.0
    %3903 = vmatpush1.msra.mxu0 %v3886
    %3904 = vmatprep.subr.mxu0 0.0
    %3905 = vmatpush1.msra.mxu0 %v3887
    %3906 = vmatprep.subr.mxu0 0.0
    %3907 = vmatpush1.msra.mxu0 0.0
    %3908 = vmatprep.subr.mxu0 0.0
    %3909 = vmatpush1.msra.mxu0 0.0
    %3910 = vmatprep.subr.mxu0 0.0
    %3911 = vmatpush1.msra.mxu0 0.0
    %3912 = vmatprep.subr.mxu0 0.0
    %3913 = vmatpush1.msra.mxu0 0.0
    %3914 = vmatprep.subr.mxu0 0.0
    %3915 = vmatpush1.msra.mxu0 0.0
    %3916 = vmatprep.subr.mxu0 0.0
    %3917 = vmatpush1.msra.mxu0 0.0
    %3918 = vmatprep.subr.mxu0 0.0
    %3919 = vmatpush1.msra.mxu0 0.0
    %3920 = vmatprep.subr.mxu0 0.0
    %3921 = vmatpush1.msra.mxu0 0.0
    %3922 = vmatprep.subr.mxu0 0.0
    %3923 = vmatpush1.msra.mxu0 0.0
    %3924 = vmatprep.subr.mxu0 0.0
    %3925 = vmatpush1.msra.mxu0 0.0
    %3926 = vmatprep.subr.mxu0 0.0
    %3927 = vmatpush1.msra.mxu0 0.0
    %3928 = vmatprep.subr.mxu0 0.0
    %3929 = vmatpush1.msra.mxu0 0.0
    %3930 = vmatprep.subr.mxu0 0.0
    %3931 = vmatpush1.msra.mxu0 0.0
    %3932 = vmatprep.subr.mxu0 0.0
    %3933 = vmatpush1.msra.mxu0 0.0
    %3934 = vmatprep.subr.mxu0 0.0
    %3935 = vmatpush1.msra.mxu0 0.0
    %3936 = vmatprep.subr.mxu0 0.0
    %3937 = vmatpush1.msra.mxu0 0.0
    %3938 = vmatprep.subr.mxu0 0.0
    %3939 = vmatpush1.msra.mxu0 0.0
    %3940 = vmatprep.subr.mxu0 0.0
    %3941 = vmatpush1.msra.mxu0 0.0
    %3942 = vmatprep.subr.mxu0 0.0
    %3943 = vmatpush1.msra.mxu0 0.0
    %3944 = vmatprep.subr.mxu0 0.0
    %3945 = vmatpush1.msra.mxu0 0.0
    %3946 = vmatprep.subr.mxu0 0.0
    %3947 = vmatpush1.msra.mxu0 0.0
    %3948 = vmatprep.subr.mxu0 0.0
    %3949 = vmatpush1.msra.mxu0 0.0
    %3950 = vmatprep.subr.mxu0 0.0
    %3951 = vmatpush1.msra.mxu0 0.0
    %3952 = vmatprep.subr.mxu0 0.0
    %3953 = vmatpush1.msra.mxu0 0.0
    %3954 = vmatprep.subr.mxu0 0.0
    %3955 = vmatpush1.msra.mxu0 0.0
    %3956 = vmatprep.subr.mxu0 0.0
    %3957 = vmatpush1.msra.mxu0 0.0
    %3958 = vmatprep.subr.mxu0 0.0
    %3959 = vmatpush1.msra.mxu0 0.0
    %3960 = vmatprep.subr.mxu0 0.0
    %3961 = vmatpush1.msra.mxu0 0.0
    %3962 = vmatprep.subr.mxu0 0.0
    %3963 = vmatpush1.msra.mxu0 0.0
    %3964 = vmatprep.subr.mxu0 0.0
    %3965 = vmatpush1.msra.mxu0 0.0
    %3966 = vmatprep.mubr.f32.mxu0 0.0
    %3967 = vmatmul.mubr.f32.gmra.mrb[0].mxu0 %v3891
    %v3968 = vpop.f32.mrb[0].mxu0
    %v3969 = vadd.f32 0.0, %v3968
    %v3970 = vpop.f32.mrb[0].mxu0
    %3971 = vmatprep.mubr.f32.mxu0 0.0
    %3972 = vmatmul.mubr.f32.gmra.mrb[0].mxu0 %v3894
    %v3973 = vpop.f32.mrb[0].mxu0
    %v3974 = vadd.f32 0.0, %v3973
    %v3975 = vpop.f32.mrb[0].mxu0
    %3976 = vmatprep.mubr.f32.mxu0 0.0
    %3977 = vmatmul.mubr.f32.gmra.mrb[0].mxu0 %v3897
    %v3978 = vpop.f32.mrb[0].mxu0
    %v3979 = vadd.f32 0.0, %v3978
    %v3980 = vpop.f32.mrb[0].mxu0
    %3981 = vmatprep.mubr.f32.mxu0 0.0
    %3982 = vmatmul.mubr.f32.gmra.mrb[0].mxu0 %v3900
    %v3983 = vpop.f32.mrb[0].mxu0
    %v3984 = vadd.f32 0.0, %v3983
    %v3985 = vpop.f32.mrb[0].mxu0
    %3986 = vdwg.mxu0
    %v3987 = vld [vmem:[#allocation30 + $0x3] sm:$0x1]
    %v3988 = vlaneseq
    %v3989 = vshrl.u32 %v3988, 7
    %v3990 = vsub.s32 0, %v3989
    %v3991 = vrot.slane %v3987, %v3990
    %v3992 = vmul.f32 %v3969, %v3991
    %v3993 = vmul.f32 %v3974, %v3991
    %v3994 = vmul.f32 %v3979, %v3991
    %v3995 = vmul.f32 %v3984, %v3991
    %v3996 = vadd.f32 %v3870, %v3992
    %v3997 = vadd.f32 %v3871, %v3993
    %v3998 = vadd.f32 %v3872, %v3994
    %v3999 = vadd.f32 %v3873, %v3995
    %v4000 = vld [vmem:[#allocation15 + $0x80] sm:$0xff]
    %v4001 = vld [vmem:[#allocation15 + $0x88] sm:$0xff]
    %v4002 = vld [vmem:[#allocation15 + $0x90] sm:$0xff]
    %v4003 = vld [vmem:[#allocation15 + $0x98] sm:$0xff]
    %v4005 = vsel %vm535, %v4000, 0
    %v4008 = vsel %vm535, %v4001, 0
    %v4011 = vsel %vm535, %v4002, 0
    %v4014 = vsel %vm535, %v4003, 0
    %4016 = vmatprep.subr.mxu0 0.0
    %4017 = vmatpush1.msra.mxu0 %v3491
    %4018 = vmatprep.subr.mxu0 0.0
    %4019 = vmatpush1.msra.mxu0 %v3493
    %4020 = vmatprep.subr.mxu0 0.0
    %4021 = vmatpush1.msra.mxu0 0.0
    %4022 = vmatprep.subr.mxu0 0.0
    %4023 = vmatpush1.msra.mxu0 0.0
    %4024 = vmatprep.subr.mxu0 0.0
    %4025 = vmatpush1.msra.mxu0 0.0
    %4026 = vmatprep.subr.mxu0 0.0
    %4027 = vmatpush1.msra.mxu0 0.0
    %4028 = vmatprep.subr.mxu0 0.0
    %4029 = vmatpush1.msra.mxu0 0.0
    %4030 = vmatprep.subr.mxu0 0.0
    %4031 = vmatpush1.msra.mxu0 0.0
    %4032 = vmatprep.subr.mxu0 0.0
    %4033 = vmatpush1.msra.mxu0 0.0
    %4034 = vmatprep.subr.mxu0 0.0
    %4035 = vmatpush1.msra.mxu0 0.0
    %4036 = vmatprep.subr.mxu0 0.0
    %4037 = vmatpush1.msra.mxu0 0.0
    %4038 = vmatprep.subr.mxu0 0.0
    %4039 = vmatpush1.msra.mxu0 0.0
    %4040 = vmatprep.subr.mxu0 0.0
    %4041 = vmatpush1.msra.mxu0 0.0
    %4042 = vmatprep.subr.mxu0 0.0
    %4043 = vmatpush1.msra.mxu0 0.0
    %4044 = vmatprep.subr.mxu0 0.0
    %4045 = vmatpush1.msra.mxu0 0.0
    %4046 = vmatprep.subr.mxu0 0.0
    %4047 = vmatpush1.msra.mxu0 0.0
    %4048 = vmatprep.subr.mxu0 0.0
    %4049 = vmatpush1.msra.mxu0 0.0
    %4050 = vmatprep.subr.mxu0 0.0
    %4051 = vmatpush1.msra.mxu0 0.0
    %4052 = vmatprep.subr.mxu0 0.0
    %4053 = vmatpush1.msra.mxu0 0.0
    %4054 = vmatprep.subr.mxu0 0.0
    %4055 = vmatpush1.msra.mxu0 0.0
    %4056 = vmatprep.subr.mxu0 0.0
    %4057 = vmatpush1.msra.mxu0 0.0
    %4058 = vmatprep.subr.mxu0 0.0
    %4059 = vmatpush1.msra.mxu0 0.0
    %4060 = vmatprep.subr.mxu0 0.0
    %4061 = vmatpush1.msra.mxu0 0.0
    %4062 = vmatprep.subr.mxu0 0.0
    %4063 = vmatpush1.msra.mxu0 0.0
    %4064 = vmatprep.subr.mxu0 0.0
    %4065 = vmatpush1.msra.mxu0 0.0
    %4066 = vmatprep.subr.mxu0 0.0
    %4067 = vmatpush1.msra.mxu0 0.0
    %4068 = vmatprep.subr.mxu0 0.0
    %4069 = vmatpush1.msra.mxu0 0.0
    %4070 = vmatprep.subr.mxu0 0.0
    %4071 = vmatpush1.msra.mxu0 0.0
    %4072 = vmatprep.subr.mxu0 0.0
    %4073 = vmatpush1.msra.mxu0 0.0
    %4074 = vmatprep.subr.mxu0 0.0
    %4075 = vmatpush1.msra.mxu0 0.0
    %4076 = vmatprep.subr.mxu0 0.0
    %4077 = vmatpush1.msra.mxu0 0.0
    %4078 = vmatprep.subr.mxu0 0.0
    %4079 = vmatpush1.msra.mxu0 0.0
    %4080 = vmatprep.mubr.f32.mxu0 0.0
    %4081 = vmatmul.mubr.f32.gmra.mrb[0].mxu0 %v4005
    %v4082 = vpop.f32.mrb[0].mxu0
    %v4083 = vadd.f32 0.0, %v4082
    %v4084 = vpop.f32.mrb[0].mxu0
    %4085 = vmatprep.mubr.f32.mxu0 0.0
    %4086 = vmatmul.mubr.f32.gmra.mrb[0].mxu0 %v4008
    %v4087 = vpop.f32.mrb[0].mxu0
    %v4088 = vadd.f32 0.0, %v4087
    %v4089 = vpop.f32.mrb[0].mxu0
    %4090 = vmatprep.mubr.f32.mxu0 0.0
    %4091 = vmatmul.mubr.f32.gmra.mrb[0].mxu0 %v4011
    %v4092 = vpop.f32.mrb[0].mxu0
    %v4093 = vadd.f32 0.0, %v4092
    %v4094 = vpop.f32.mrb[0].mxu0
    %4095 = vmatprep.mubr.f32.mxu0 0.0
    %4096 = vmatmul.mubr.f32.gmra.mrb[0].mxu0 %v4014
    %v4097 = vpop.f32.mrb[0].mxu0
    %v4098 = vadd.f32 0.0, %v4097
    %v4099 = vpop.f32.mrb[0].mxu0
    %4100 = vdwg.mxu0
    %v4101 = vadd.f32 %v3996, %v4083
    %v4102 = vadd.f32 %v3997, %v4088
    %v4103 = vadd.f32 %v3998, %v4093
    %v4104 = vadd.f32 %v3999, %v4098
    %v4105 = vld [vmem:[#allocation15 + $0xa0] sm:$0xff]
    %v4106 = vld [vmem:[#allocation15 + $0xa8] sm:$0xff]
    %v4107 = vld [vmem:[#allocation15 + $0xb0] sm:$0xff]
    %v4108 = vld [vmem:[#allocation15 + $0xb8] sm:$0xff]
    %4109 = vrot.lane.b32.xlu0 %v3491, 127
    %v4110 = vpop.permute.xlu0 %4109
    %4111 = vrot.lane.b32.xlu0 %v3493, 127
    %v4112 = vpop.permute.xlu0 %4111
    %v4116 = vsel %vm535, %v4105, 0
    %v4119 = vsel %vm535, %v4106, 0
    %v4122 = vsel %vm535, %v4107, 0
    %v4125 = vsel %vm535, %v4108, 0
    %4127 = vmatprep.subr.mxu0 0.0
    %4128 = vmatpush1.msra.mxu0 %v4110
    %4129 = vmatprep.subr.mxu0 0.0
    %4130 = vmatpush1.msra.mxu0 %v4112
    %4131 = vmatprep.subr.mxu0 0.0
    %4132 = vmatpush1.msra.mxu0 0.0
    %4133 = vmatprep.subr.mxu0 0.0
    %4134 = vmatpush1.msra.mxu0 0.0
    %4135 = vmatprep.subr.mxu0 0.0
    %4136 = vmatpush1.msra.mxu0 0.0
    %4137 = vmatprep.subr.mxu0 0.0
    %4138 = vmatpush1.msra.mxu0 0.0
    %4139 = vmatprep.subr.mxu0 0.0
    %4140 = vmatpush1.msra.mxu0 0.0
    %4141 = vmatprep.subr.mxu0 0.0
    %4142 = vmatpush1.msra.mxu0 0.0
    %4143 = vmatprep.subr.mxu0 0.0
    %4144 = vmatpush1.msra.mxu0 0.0
    %4145 = vmatprep.subr.mxu0 0.0
    %4146 = vmatpush1.msra.mxu0 0.0
    %4147 = vmatprep.subr.mxu0 0.0
    %4148 = vmatpush1.msra.mxu0 0.0
    %4149 = vmatprep.subr.mxu0 0.0
    %4150 = vmatpush1.msra.mxu0 0.0
    %4151 = vmatprep.subr.mxu0 0.0
    %4152 = vmatpush1.msra.mxu0 0.0
    %4153 = vmatprep.subr.mxu0 0.0
    %4154 = vmatpush1.msra.mxu0 0.0
    %4155 = vmatprep.subr.mxu0 0.0
    %4156 = vmatpush1.msra.mxu0 0.0
    %4157 = vmatprep.subr.mxu0 0.0
    %4158 = vmatpush1.msra.mxu0 0.0
    %4159 = vmatprep.subr.mxu0 0.0
    %4160 = vmatpush1.msra.mxu0 0.0
    %4161 = vmatprep.subr.mxu0 0.0
    %4162 = vmatpush1.msra.mxu0 0.0
    %4163 = vmatprep.subr.mxu0 0.0
    %4164 = vmatpush1.msra.mxu0 0.0
    %4165 = vmatprep.subr.mxu0 0.0
    %4166 = vmatpush1.msra.mxu0 0.0
    %4167 = vmatprep.subr.mxu0 0.0
    %4168 = vmatpush1.msra.mxu0 0.0
    %4169 = vmatprep.subr.mxu0 0.0
    %4170 = vmatpush1.msra.mxu0 0.0
    %4171 = vmatprep.subr.mxu0 0.0
    %4172 = vmatpush1.msra.mxu0 0.0
    %4173 = vmatprep.subr.mxu0 0.0
    %4174 = vmatpush1.msra.mxu0 0.0
    %4175 = vmatprep.subr.mxu0 0.0
    %4176 = vmatpush1.msra.mxu0 0.0
    %4177 = vmatprep.subr.mxu0 0.0
    %4178 = vmatpush1.msra.mxu0 0.0
    %4179 = vmatprep.subr.mxu0 0.0
    %4180 = vmatpush1.msra.mxu0 0.0
    %4181 = vmatprep.subr.mxu0 0.0
    %4182 = vmatpush1.msra.mxu0 0.0
    %4183 = vmatprep.subr.mxu0 0.0
    %4184 = vmatpush1.msra.mxu0 0.0
    %4185 = vmatprep.subr.mxu0 0.0
    %4186 = vmatpush1.msra.mxu0 0.0
    %4187 = vmatprep.subr.mxu0 0.0
    %4188 = vmatpush1.msra.mxu0 0.0
    %4189 = vmatprep.subr.mxu0 0.0
    %4190 = vmatpush1.msra.mxu0 0.0
    %4191 = vmatprep.mubr.f32.mxu0 0.0
    %4192 = vmatmul.mubr.f32.gmra.mrb[0].mxu0 %v4116
    %v4193 = vpop.f32.mrb[0].mxu0
    %v4194 = vadd.f32 0.0, %v4193
    %v4195 = vpop.f32.mrb[0].mxu0
    %4196 = vmatprep.mubr.f32.mxu0 0.0
    %4197 = vmatmul.mubr.f32.gmra.mrb[0].mxu0 %v4119
    %v4198 = vpop.f32.mrb[0].mxu0
    %v4199 = vadd.f32 0.0, %v4198
    %v4200 = vpop.f32.mrb[0].mxu0
    %4201 = vmatprep.mubr.f32.mxu0 0.0
    %4202 = vmatmul.mubr.f32.gmra.mrb[0].mxu0 %v4122
    %v4203 = vpop.f32.mrb[0].mxu0
    %v4204 = vadd.f32 0.0, %v4203
    %v4205 = vpop.f32.mrb[0].mxu0
    %4206 = vmatprep.mubr.f32.mxu0 0.0
    %4207 = vmatmul.mubr.f32.gmra.mrb[0].mxu0 %v4125
    %v4208 = vpop.f32.mrb[0].mxu0
    %v4209 = vadd.f32 0.0, %v4208
    %v4210 = vpop.f32.mrb[0].mxu0
    %4211 = vdwg.mxu0
    %v4212 = vld [vmem:[#allocation30 + $0x5] sm:$0x1]
    %v4213 = vlaneseq
    %v4214 = vshrl.u32 %v4213, 7
    %v4215 = vsub.s32 0, %v4214
    %v4216 = vrot.slane %v4212, %v4215
    %v4217 = vmul.f32 %v4194, %v4216
    %v4218 = vmul.f32 %v4199, %v4216
    %v4219 = vmul.f32 %v4204, %v4216
    %v4220 = vmul.f32 %v4209, %v4216
    %v4221 = vadd.f32 %v4101, %v4217
    %v4222 = vadd.f32 %v4102, %v4218
    %v4223 = vadd.f32 %v4103, %v4219
    %v4224 = vadd.f32 %v4104, %v4220
    %v4225 = vld [vmem:[#allocation15 + $0xc0] sm:$0xff]
    %v4226 = vld [vmem:[#allocation15 + $0xc8] sm:$0xff]
    %v4227 = vld [vmem:[#allocation15 + $0xd0] sm:$0xff]
    %v4228 = vld [vmem:[#allocation15 + $0xd8] sm:$0xff]
    %4229 = vrot.lane.b32.xlu0 %v3491, 125
    %v4230 = vpop.permute.xlu0 %4229
    %4231 = vrot.lane.b32.xlu0 %v3493, 125
    %v4232 = vpop.permute.xlu0 %4231
    %v4236 = vsel %vm535, %v4225, 0
    %v4239 = vsel %vm535, %v4226, 0
    %v4242 = vsel %vm535, %v4227, 0
    %v4245 = vsel %vm535, %v4228, 0
    %4247 = vmatprep.subr.mxu0 0.0
    %4248 = vmatpush1.msra.mxu0 %v4230
    %4249 = vmatprep.subr.mxu0 0.0
    %4250 = vmatpush1.msra.mxu0 %v4232
    %4251 = vmatprep.subr.mxu0 0.0
    %4252 = vmatpush1.msra.mxu0 0.0
    %4253 = vmatprep.subr.mxu0 0.0
    %4254 = vmatpush1.msra.mxu0 0.0
    %4255 = vmatprep.subr.mxu0 0.0
    %4256 = vmatpush1.msra.mxu0 0.0
    %4257 = vmatprep.subr.mxu0 0.0
    %4258 = vmatpush1.msra.mxu0 0.0
    %4259 = vmatprep.subr.mxu0 0.0
    %4260 = vmatpush1.msra.mxu0 0.0
    %4261 = vmatprep.subr.mxu0 0.0
    %4262 = vmatpush1.msra.mxu0 0.0
    %4263 = vmatprep.subr.mxu0 0.0
    %4264 = vmatpush1.msra.mxu0 0.0
    %4265 = vmatprep.subr.mxu0 0.0
    %4266 = vmatpush1.msra.mxu0 0.0
    %4267 = vmatprep.subr.mxu0 0.0
    %4268 = vmatpush1.msra.mxu0 0.0
    %4269 = vmatprep.subr.mxu0 0.0
    %4270 = vmatpush1.msra.mxu0 0.0
    %4271 = vmatprep.subr.mxu0 0.0
    %4272 = vmatpush1.msra.mxu0 0.0
    %4273 = vmatprep.subr.mxu0 0.0
    %4274 = vmatpush1.msra.mxu0 0.0
    %4275 = vmatprep.subr.mxu0 0.0
    %4276 = vmatpush1.msra.mxu0 0.0
    %4277 = vmatprep.subr.mxu0 0.0
    %4278 = vmatpush1.msra.mxu0 0.0
    %4279 = vmatprep.subr.mxu0 0.0
    %4280 = vmatpush1.msra.mxu0 0.0
    %4281 = vmatprep.subr.mxu0 0.0
    %4282 = vmatpush1.msra.mxu0 0.0
    %4283 = vmatprep.subr.mxu0 0.0
    %4284 = vmatpush1.msra.mxu0 0.0
    %4285 = vmatprep.subr.mxu0 0.0
    %4286 = vmatpush1.msra.mxu0 0.0
    %4287 = vmatprep.subr.mxu0 0.0
    %4288 = vmatpush1.msra.mxu0 0.0
    %4289 = vmatprep.subr.mxu0 0.0
    %4290 = vmatpush1.msra.mxu0 0.0
    %4291 = vmatprep.subr.mxu0 0.0
    %4292 = vmatpush1.msra.mxu0 0.0
    %4293 = vmatprep.subr.mxu0 0.0
    %4294 = vmatpush1.msra.mxu0 0.0
    %4295 = vmatprep.subr.mxu0 0.0
    %4296 = vmatpush1.msra.mxu0 0.0
    %4297 = vmatprep.subr.mxu0 0.0
    %4298 = vmatpush1.msra.mxu0 0.0
    %4299 = vmatprep.subr.mxu0 0.0
    %4300 = vmatpush1.msra.mxu0 0.0
    %4301 = vmatprep.subr.mxu0 0.0
    %4302 = vmatpush1.msra.mxu0 0.0
    %4303 = vmatprep.subr.mxu0 0.0
    %4304 = vmatpush1.msra.mxu0 0.0
    %4305 = vmatprep.subr.mxu0 0.0
    %4306 = vmatpush1.msra.mxu0 0.0
    %4307 = vmatprep.subr.mxu0 0.0
    %4308 = vmatpush1.msra.mxu0 0.0
    %4309 = vmatprep.subr.mxu0 0.0
    %4310 = vmatpush1.msra.mxu0 0.0
    %4311 = vmatprep.mubr.f32.mxu0 0.0
    %4312 = vmatmul.mubr.f32.gmra.mrb[0].mxu0 %v4236
    %v4313 = vpop.f32.mrb[0].mxu0
    %v4314 = vadd.f32 0.0, %v4313
    %v4315 = vpop.f32.mrb[0].mxu0
    %4316 = vmatprep.mubr.f32.mxu0 0.0
    %4317 = vmatmul.mubr.f32.gmra.mrb[0].mxu0 %v4239
    %v4318 = vpop.f32.mrb[0].mxu0
    %v4319 = vadd.f32 0.0, %v4318
    %v4320 = vpop.f32.mrb[0].mxu0
    %4321 = vmatprep.mubr.f32.mxu0 0.0
    %4322 = vmatmul.mubr.f32.gmra.mrb[0].mxu0 %v4242
    %v4323 = vpop.f32.mrb[0].mxu0
    %v4324 = vadd.f32 0.0, %v4323
    %v4325 = vpop.f32.mrb[0].mxu0
    %4326 = vmatprep.mubr.f32.mxu0 0.0
    %4327 = vmatmul.mubr.f32.gmra.mrb[0].mxu0 %v4245
    %v4328 = vpop.f32.mrb[0].mxu0
    %v4329 = vadd.f32 0.0, %v4328
    %v4330 = vpop.f32.mrb[0].mxu0
    %4331 = vdwg.mxu0
    %v4332 = vld [vmem:[#allocation30 + $0x6] sm:$0x1]
    %v4333 = vlaneseq
    %v4334 = vshrl.u32 %v4333, 7
    %v4335 = vsub.s32 0, %v4334
    %v4336 = vrot.slane %v4332, %v4335
    %v4337 = vmul.f32 %v4314, %v4336
    %v4338 = vmul.f32 %v4319, %v4336
    %v4339 = vmul.f32 %v4324, %v4336
    %v4340 = vmul.f32 %v4329, %v4336
    %v4341 = vadd.f32 %v4221, %v4337
    %v4342 = vadd.f32 %v4222, %v4338
    %v4343 = vadd.f32 %v4223, %v4339
    %v4344 = vadd.f32 %v4224, %v4340
    %v4345 = vld [vmem:[#allocation15 + $0xe0] sm:$0xff]
    %v4346 = vld [vmem:[#allocation15 + $0xe8] sm:$0xff]
    %v4347 = vld [vmem:[#allocation15 + $0xf0] sm:$0xff]
    %v4348 = vld [vmem:[#allocation15 + $0xf8] sm:$0xff]
    %4349 = vrot.lane.b32.xlu0 %v3491, 124
    %v4350 = vpop.permute.xlu0 %4349
    %4351 = vrot.lane.b32.xlu0 %v3493, 124
    %v4352 = vpop.permute.xlu0 %4351
    %v4356 = vsel %vm535, %v4345, 0
    %v4359 = vsel %vm535, %v4346, 0
    %v4362 = vsel %vm535, %v4347, 0
    %v4365 = vsel %vm535, %v4348, 0
    %4367 = vmatprep.subr.mxu0 0.0
    %4368 = vmatpush1.msra.mxu0 %v4350
    %4369 = vmatprep.subr.mxu0 0.0
    %4370 = vmatpush1.msra.mxu0 %v4352
    %4371 = vmatprep.subr.mxu0 0.0
    %4372 = vmatpush1.msra.mxu0 0.0
    %4373 = vmatprep.subr.mxu0 0.0
    %4374 = vmatpush1.msra.mxu0 0.0
    %4375 = vmatprep.subr.mxu0 0.0
    %4376 = vmatpush1.msra.mxu0 0.0
    %4377 = vmatprep.subr.mxu0 0.0
    %4378 = vmatpush1.msra.mxu0 0.0
    %4379 = vmatprep.subr.mxu0 0.0
    %4380 = vmatpush1.msra.mxu0 0.0
    %4381 = vmatprep.subr.mxu0 0.0
    %4382 = vmatpush1.msra.mxu0 0.0
    %4383 = vmatprep.subr.mxu0 0.0
    %4384 = vmatpush1.msra.mxu0 0.0
    %4385 = vmatprep.subr.mxu0 0.0
    %4386 = vmatpush1.msra.mxu0 0.0
    %4387 = vmatprep.subr.mxu0 0.0
    %4388 = vmatpush1.msra.mxu0 0.0
    %4389 = vmatprep.subr.mxu0 0.0
    %4390 = vmatpush1.msra.mxu0 0.0
    %4391 = vmatprep.subr.mxu0 0.0
    %4392 = vmatpush1.msra.mxu0 0.0
    %4393 = vmatprep.subr.mxu0 0.0
    %4394 = vmatpush1.msra.mxu0 0.0
    %4395 = vmatprep.subr.mxu0 0.0
    %4396 = vmatpush1.msra.mxu0 0.0
    %4397 = vmatprep.subr.mxu0 0.0
    %4398 = vmatpush1.msra.mxu0 0.0
    %4399 = vmatprep.subr.mxu0 0.0
    %4400 = vmatpush1.msra.mxu0 0.0
    %4401 = vmatprep.subr.mxu0 0.0
    %4402 = vmatpush1.msra.mxu0 0.0
    %4403 = vmatprep.subr.mxu0 0.0
    %4404 = vmatpush1.msra.mxu0 0.0
    %4405 = vmatprep.subr.mxu0 0.0
    %4406 = vmatpush1.msra.mxu0 0.0
    %4407 = vmatprep.subr.mxu0 0.0
    %4408 = vmatpush1.msra.mxu0 0.0
    %4409 = vmatprep.subr.mxu0 0.0
    %4410 = vmatpush1.msra.mxu0 0.0
    %4411 = vmatprep.subr.mxu0 0.0
    %4412 = vmatpush1.msra.mxu0 0.0
    %4413 = vmatprep.subr.mxu0 0.0
    %4414 = vmatpush1.msra.mxu0 0.0
    %4415 = vmatprep.subr.mxu0 0.0
    %4416 = vmatpush1.msra.mxu0 0.0
    %4417 = vmatprep.subr.mxu0 0.0
    %4418 = vmatpush1.msra.mxu0 0.0
    %4419 = vmatprep.subr.mxu0 0.0
    %4420 = vmatpush1.msra.mxu0 0.0
    %4421 = vmatprep.subr.mxu0 0.0
    %4422 = vmatpush1.msra.mxu0 0.0
    %4423 = vmatprep.subr.mxu0 0.0
    %4424 = vmatpush1.msra.mxu0 0.0
    %4425 = vmatprep.subr.mxu0 0.0
    %4426 = vmatpush1.msra.mxu0 0.0
    %4427 = vmatprep.subr.mxu0 0.0
    %4428 = vmatpush1.msra.mxu0 0.0
    %4429 = vmatprep.subr.mxu0 0.0
    %4430 = vmatpush1.msra.mxu0 0.0
    %4431 = vmatprep.mubr.f32.mxu0 0.0
    %4432 = vmatmul.mubr.f32.gmra.mrb[0].mxu0 %v4356
    %v4433 = vpop.f32.mrb[0].mxu0
    %v4434 = vadd.f32 0.0, %v4433
    %v4435 = vpop.f32.mrb[0].mxu0
    %4436 = vmatprep.mubr.f32.mxu0 0.0
    %4437 = vmatmul.mubr.f32.gmra.mrb[0].mxu0 %v4359
    %v4438 = vpop.f32.mrb[0].mxu0
    %v4439 = vadd.f32 0.0, %v4438
    %v4440 = vpop.f32.mrb[0].mxu0
    %4441 = vmatprep.mubr.f32.mxu0 0.0
    %4442 = vmatmul.mubr.f32.gmra.mrb[0].mxu0 %v4362
    %v4443 = vpop.f32.mrb[0].mxu0
    %v4444 = vadd.f32 0.0, %v4443
    %v4445 = vpop.f32.mrb[0].mxu0
    %4446 = vmatprep.mubr.f32.mxu0 0.0
    %4447 = vmatmul.mubr.f32.gmra.mrb[0].mxu0 %v4365
    %v4448 = vpop.f32.mrb[0].mxu0
    %v4449 = vadd.f32 0.0, %v4448
    %v4450 = vpop.f32.mrb[0].mxu0
    %4451 = vdwg.mxu0
    %v4452 = vld [vmem:[#allocation30 + $0x7] sm:$0x1]
    %v4453 = vlaneseq
    %v4454 = vshrl.u32 %v4453, 7
    %v4455 = vsub.s32 0, %v4454
    %v4456 = vrot.slane %v4452, %v4455
    %v4457 = vmul.f32 %v4434, %v4456
    %v4458 = vmul.f32 %v4439, %v4456
    %v4459 = vmul.f32 %v4444, %v4456
    %v4460 = vmul.f32 %v4449, %v4456
    %v4461 = vadd.f32 %v4341, %v4457
    %v4462 = vadd.f32 %v4342, %v4458
    %v4463 = vadd.f32 %v4343, %v4459
    %v4464 = vadd.f32 %v4344, %v4460
    %v4465 = vld [vmem:[#allocation15 + $0x100] sm:$0xff]
    %v4466 = vld [vmem:[#allocation15 + $0x108] sm:$0xff]
    %v4467 = vld [vmem:[#allocation15 + $0x110] sm:$0xff]
    %v4468 = vld [vmem:[#allocation15 + $0x118] sm:$0xff]
    %4469 = vrot.lane.b32.xlu0 %v3491, 123
    %v4470 = vpop.permute.xlu0 %4469
    %4471 = vrot.lane.b32.xlu0 %v3493, 123
    %v4472 = vpop.permute.xlu0 %4471
    %v4476 = vsel %vm535, %v4465, 0
    %v4479 = vsel %vm535, %v4466, 0
    %v4482 = vsel %vm535, %v4467, 0
    %v4485 = vsel %vm535, %v4468, 0
    %4487 = vmatprep.subr.mxu0 0.0
    %4488 = vmatpush1.msra.mxu0 %v4470
    %4489 = vmatprep.subr.mxu0 0.0
    %4490 = vmatpush1.msra.mxu0 %v4472
    %4491 = vmatprep.subr.mxu0 0.0
    %4492 = vmatpush1.msra.mxu0 0.0
    %4493 = vmatprep.subr.mxu0 0.0
    %4494 = vmatpush1.msra.mxu0 0.0
    %4495 = vmatprep.subr.mxu0 0.0
    %4496 = vmatpush1.msra.mxu0 0.0
    %4497 = vmatprep.subr.mxu0 0.0
    %4498 = vmatpush1.msra.mxu0 0.0
    %4499 = vmatprep.subr.mxu0 0.0
    %4500 = vmatpush1.msra.mxu0 0.0
    %4501 = vmatprep.subr.mxu0 0.0
    %4502 = vmatpush1.msra.mxu0 0.0
    %4503 = vmatprep.subr.mxu0 0.0
    %4504 = vmatpush1.msra.mxu0 0.0
    %4505 = vmatprep.subr.mxu0 0.0
    %4506 = vmatpush1.msra.mxu0 0.0
    %4507 = vmatprep.subr.mxu0 0.0
    %4508 = vmatpush1.msra.mxu0 0.0
    %4509 = vmatprep.subr.mxu0 0.0
    %4510 = vmatpush1.msra.mxu0 0.0
    %4511 = vmatprep.subr.mxu0 0.0
    %4512 = vmatpush1.msra.mxu0 0.0
    %4513 = vmatprep.subr.mxu0 0.0
    %4514 = vmatpush1.msra.mxu0 0.0
    %4515 = vmatprep.subr.mxu0 0.0
    %4516 = vmatpush1.msra.mxu0 0.0
    %4517 = vmatprep.subr.mxu0 0.0
    %4518 = vmatpush1.msra.mxu0 0.0
    %4519 = vmatprep.subr.mxu0 0.0
    %4520 = vmatpush1.msra.mxu0 0.0
    %4521 = vmatprep.subr.mxu0 0.0
    %4522 = vmatpush1.msra.mxu0 0.0
    %4523 = vmatprep.subr.mxu0 0.0
    %4524 = vmatpush1.msra.mxu0 0.0
    %4525 = vmatprep.subr.mxu0 0.0
    %4526 = vmatpush1.msra.mxu0 0.0
    %4527 = vmatprep.subr.mxu0 0.0
    %4528 = vmatpush1.msra.mxu0 0.0
    %4529 = vmatprep.subr.mxu0 0.0
    %4530 = vmatpush1.msra.mxu0 0.0
    %4531 = vmatprep.subr.mxu0 0.0
    %4532 = vmatpush1.msra.mxu0 0.0
    %4533 = vmatprep.subr.mxu0 0.0
    %4534 = vmatpush1.msra.mxu0 0.0
    %4535 = vmatprep.subr.mxu0 0.0
    %4536 = vmatpush1.msra.mxu0 0.0
    %4537 = vmatprep.subr.mxu0 0.0
    %4538 = vmatpush1.msra.mxu0 0.0
    %4539 = vmatprep.subr.mxu0 0.0
    %4540 = vmatpush1.msra.mxu0 0.0
    %4541 = vmatprep.subr.mxu0 0.0
    %4542 = vmatpush1.msra.mxu0 0.0
    %4543 = vmatprep.subr.mxu0 0.0
    %4544 = vmatpush1.msra.mxu0 0.0
    %4545 = vmatprep.subr.mxu0 0.0
    %4546 = vmatpush1.msra.mxu0 0.0
    %4547 = vmatprep.subr.mxu0 0.0
    %4548 = vmatpush1.msra.mxu0 0.0
    %4549 = vmatprep.subr.mxu0 0.0
    %4550 = vmatpush1.msra.mxu0 0.0
    %4551 = vmatprep.mubr.f32.mxu0 0.0
    %4552 = vmatmul.mubr.f32.gmra.mrb[0].mxu0 %v4476
    %v4553 = vpop.f32.mrb[0].mxu0
    %v4554 = vadd.f32 0.0, %v4553
    %v4555 = vpop.f32.mrb[0].mxu0
    %4556 = vmatprep.mubr.f32.mxu0 0.0
    %4557 = vmatmul.mubr.f32.gmra.mrb[0].mxu0 %v4479
    %v4558 = vpop.f32.mrb[0].mxu0
    %v4559 = vadd.f32 0.0, %v4558
    %v4560 = vpop.f32.mrb[0].mxu0
    %4561 = vmatprep.mubr.f32.mxu0 0.0
    %4562 = vmatmul.mubr.f32.gmra.mrb[0].mxu0 %v4482
    %v4563 = vpop.f32.mrb[0].mxu0
    %v4564 = vadd.f32 0.0, %v4563
    %v4565 = vpop.f32.mrb[0].mxu0
    %4566 = vmatprep.mubr.f32.mxu0 0.0
    %4567 = vmatmul.mubr.f32.gmra.mrb[0].mxu0 %v4485
    %v4568 = vpop.f32.mrb[0].mxu0
    %v4569 = vadd.f32 0.0, %v4568
    %v4570 = vpop.f32.mrb[0].mxu0
    %4571 = vdwg.mxu0
    %v4572 = vld [vmem:[#allocation30 + $0x8] sm:$0x1]
    %v4573 = vlaneseq
    %v4574 = vshrl.u32 %v4573, 7
    %v4575 = vsub.s32 0, %v4574
    %v4576 = vrot.slane %v4572, %v4575
    %v4577 = vmul.f32 %v4554, %v4576
    %v4578 = vmul.f32 %v4559, %v4576
    %v4579 = vmul.f32 %v4564, %v4576
    %v4580 = vmul.f32 %v4569, %v4576
    %v4581 = vadd.f32 %v4461, %v4577
    %v4582 = vadd.f32 %v4462, %v4578
    %v4583 = vadd.f32 %v4463, %v4579
    %v4584 = vadd.f32 %v4464, %v4580
    %v4585 = vld [vmem:[#allocation16] sm:$0xff]
    %v4586 = vld [vmem:[#allocation16 + $0x8] sm:$0xff]
    %v4587 = vld [vmem:[#allocation16 + $0x10] sm:$0xff]
    %v4588 = vld [vmem:[#allocation16 + $0x18] sm:$0xff]
    %4590 = vset.pattern.permute.xlu0 0
    %4591 = vperm.xlu0 %4590, %v4585
    %v4592 = vpop.permute.xlu0 %4591
    %4595 = vset.pattern.permute.xlu0 0
    %4596 = vperm.xlu0 %4595, %v4586
    %v4597 = vpop.permute.xlu0 %4596
    %4600 = vset.pattern.permute.xlu0 0
    %4601 = vperm.xlu0 %4600, %v4587
    %v4602 = vpop.permute.xlu0 %4601
    %4605 = vset.pattern.permute.xlu0 0
    %4606 = vperm.xlu0 %4605, %v4588
    %v4607 = vpop.permute.xlu0 %4606
    %v4609 = vadd.f32 %v4581, %v4592
    %v4610 = vadd.f32 %v4582, %v4597
    %v4611 = vadd.f32 %v4583, %v4602
    %v4612 = vadd.f32 %v4584, %v4607
    %v4613 = vmax.f32 %v4609, 0.0
    %v4614 = vmax.f32 %v4610, 0.0
    %v4615 = vmax.f32 %v4611, 0.0
    %v4616 = vmax.f32 %v4612, 0.0
    %v4617 = vld [vmem:[#allocation34] sm:$0xff]
    %v4618 = vld [vmem:[#allocation34 + $0x8] sm:$0xff]
    %v4619 = vld [vmem:[#allocation34 + $0x10] sm:$0xff]
    %v4620 = vld [vmem:[#allocation34 + $0x18] sm:$0xff]
    %v4622 = vsel %vm3483, %v4613, 0
    %v4625 = vsel %vm3483, %v4614, 0
    %v4628 = vsel %vm3483, %v4615, 0
    %v4631 = vsel %vm3483, %v4616, 0
    %4633 = vmatprep.subr.mxu0 0.0
    %4634 = vmatpush1.msra.mxu0 %v4617
    %4635 = vmatprep.subr.mxu0 0.0
    %4636 = vmatpush1.msra.mxu0 %v4618
    %4637 = vmatprep.subr.mxu0 0.0
    %4638 = vmatpush1.msra.mxu0 %v4619
    %4639 = vmatprep.subr.mxu0 0.0
    %4640 = vmatpush1.msra.mxu0 %v4620
    %4641 = vmatprep.subr.mxu0 0.0
    %4642 = vmatpush1.msra.mxu0 0.0
    %4643 = vmatprep.subr.mxu0 0.0
    %4644 = vmatpush1.msra.mxu0 0.0
    %4645 = vmatprep.subr.mxu0 0.0
    %4646 = vmatpush1.msra.mxu0 0.0
    %4647 = vmatprep.subr.mxu0 0.0
    %4648 = vmatpush1.msra.mxu0 0.0
    %4649 = vmatprep.subr.mxu0 0.0
    %4650 = vmatpush1.msra.mxu0 0.0
    %4651 = vmatprep.subr.mxu0 0.0
    %4652 = vmatpush1.msra.mxu0 0.0
    %4653 = vmatprep.subr.mxu0 0.0
    %4654 = vmatpush1.msra.mxu0 0.0
    %4655 = vmatprep.subr.mxu0 0.0
    %4656 = vmatpush1.msra.mxu0 0.0
    %4657 = vmatprep.subr.mxu0 0.0
    %4658 = vmatpush1.msra.mxu0 0.0
    %4659 = vmatprep.subr.mxu0 0.0
    %4660 = vmatpush1.msra.mxu0 0.0
    %4661 = vmatprep.subr.mxu0 0.0
    %4662 = vmatpush1.msra.mxu0 0.0
    %4663 = vmatprep.subr.mxu0 0.0
    %4664 = vmatpush1.msra.mxu0 0.0
    %4665 = vmatprep.subr.mxu0 0.0
    %4666 = vmatpush1.msra.mxu0 0.0
    %4667 = vmatprep.subr.mxu0 0.0
    %4668 = vmatpush1.msra.mxu0 0.0
    %4669 = vmatprep.subr.mxu0 0.0
    %4670 = vmatpush1.msra.mxu0 0.0
    %4671 = vmatprep.subr.mxu0 0.0
    %4672 = vmatpush1.msra.mxu0 0.0
    %4673 = vmatprep.subr.mxu0 0.0
    %4674 = vmatpush1.msra.mxu0 0.0
    %4675 = vmatprep.subr.mxu0 0.0
    %4676 = vmatpush1.msra.mxu0 0.0
    %4677 = vmatprep.subr.mxu0 0.0
    %4678 = vmatpush1.msra.mxu0 0.0
    %4679 = vmatprep.subr.mxu0 0.0
    %4680 = vmatpush1.msra.mxu0 0.0
    %4681 = vmatprep.subr.mxu0 0.0
    %4682 = vmatpush1.msra.mxu0 0.0
    %4683 = vmatprep.subr.mxu0 0.0
    %4684 = vmatpush1.msra.mxu0 0.0
    %4685 = vmatprep.subr.mxu0 0.0
    %4686 = vmatpush1.msra.mxu0 0.0
    %4687 = vmatprep.subr.mxu0 0.0
    %4688 = vmatpush1.msra.mxu0 0.0
    %4689 = vmatprep.subr.mxu0 0.0
    %4690 = vmatpush1.msra.mxu0 0.0
    %4691 = vmatprep.subr.mxu0 0.0
    %4692 = vmatpush1.msra.mxu0 0.0
    %4693 = vmatprep.subr.mxu0 0.0
    %4694 = vmatpush1.msra.mxu0 0.0
    %4695 = vmatprep.subr.mxu0 0.0
    %4696 = vmatpush1.msra.mxu0 0.0
    %4697 = vmatprep.mubr.f32.mxu0 0.0
    %4698 = vmatmul.mubr.f32.gmra.mrb[0].mxu0 %v4622
    %v4699 = vpop.f32.mrb[0].mxu0
    %v4700 = vadd.f32 0.0, %v4699
    %v4701 = vpop.f32.mrb[0].mxu0
    %4702 = vmatprep.mubr.f32.mxu0 0.0
    %4703 = vmatmul.mubr.f32.gmra.mrb[0].mxu0 %v4625
    %v4704 = vpop.f32.mrb[0].mxu0
    %v4705 = vadd.f32 0.0, %v4704
    %v4706 = vpop.f32.mrb[0].mxu0
    %4707 = vmatprep.mubr.f32.mxu0 0.0
    %4708 = vmatmul.mubr.f32.gmra.mrb[0].mxu0 %v4628
    %v4709 = vpop.f32.mrb[0].mxu0
    %v4710 = vadd.f32 0.0, %v4709
    %v4711 = vpop.f32.mrb[0].mxu0
    %4712 = vmatprep.mubr.f32.mxu0 0.0
    %4713 = vmatmul.mubr.f32.gmra.mrb[0].mxu0 %v4631
    %v4714 = vpop.f32.mrb[0].mxu0
    %v4715 = vadd.f32 0.0, %v4714
    %v4716 = vpop.f32.mrb[0].mxu0
    %4717 = vdwg.mxu0
    %4718 = vst [vmem:[#allocation6] sm:$0xff] 0.0
    %4719 = vst [vmem:[#allocation6 + $0x8] sm:$0xff] 0.0
    %4720 = vst [vmem:[#allocation6 + $0x10] sm:$0xff] 0.0
    %4721 = vst [vmem:[#allocation6 + $0x18] sm:$0xff] 0.0
    %4722 = vst [vmem:[#allocation6 + $0x20] sm:$0xff] 0.0
    %4723 = vst [vmem:[#allocation6 + $0x28] sm:$0xff] 0.0
    %4724 = vst [vmem:[#allocation6 + $0x30] sm:$0xff] 0.0
    %4725 = vst [vmem:[#allocation6 + $0x38] sm:$0xff] 0.0
    %4726 = vst [vmem:[#allocation6 + $0x40] sm:$0xff] 0.0
    %4727 = vst [vmem:[#allocation6 + $0x48] sm:$0xff] 0.0
    %4728 = vst [vmem:[#allocation6 + $0x50] sm:$0xff] 0.0
    %4729 = vst [vmem:[#allocation6 + $0x58] sm:$0xff] 0.0
    %4730 = vst [vmem:[#allocation6 + $0x8] sm:$0xff] %v4700
    %4731 = vst [vmem:[#allocation6 + $0x20] sm:$0xff] %v4705
    %4732 = vst [vmem:[#allocation6 + $0x38] sm:$0xff] %v4710
    %4733 = vst [vmem:[#allocation6 + $0x50] sm:$0xff] %v4715
    %v4734 = vld [vmem:[#allocation6] sm:$0xff]
    %v4735 = vld [vmem:[#allocation6 + $0x8] sm:$0xff]
    %v4736 = vld [vmem:[#allocation6 + $0x18] sm:$0xff]
    %v4737 = vld [vmem:[#allocation6 + $0x20] sm:$0xff]
    %v4738 = vld [vmem:[#allocation6 + $0x30] sm:$0xff]
    %v4739 = vld [vmem:[#allocation6 + $0x38] sm:$0xff]
    %v4740 = vld [vmem:[#allocation6 + $0x48] sm:$0xff]
    %v4741 = vld [vmem:[#allocation6 + $0x50] sm:$0xff]
    %v4742 = vld [vmem:[#allocation18] sm:$0xff]
    %v4743 = vld [vmem:[#allocation18 + $0x8] sm:$0xff]
    %4752 = vrot.lane.b32.xlu0 %v4734, 9
    %v4753 = vpop.permute.xlu0 %4752
    %4754 = vrot.lane.b32.xlu0 %v4735, 9
    %v4755 = vpop.permute.xlu0 %4754
    %4756 = vrot.lane.b32.xlu0 %v4736, 9
    %v4757 = vpop.permute.xlu0 %4756
    %4758 = vrot.lane.b32.xlu0 %v4737, 9
    %v4759 = vpop.permute.xlu0 %4758
    %4760 = vrot.lane.b32.xlu0 %v4738, 9
    %v4761 = vpop.permute.xlu0 %4760
    %4762 = vrot.lane.b32.xlu0 %v4739, 9
    %v4763 = vpop.permute.xlu0 %4762
    %4764 = vrot.lane.b32.xlu0 %v4740, 9
    %v4765 = vpop.permute.xlu0 %4764
    %4766 = vrot.lane.b32.xlu0 %v4741, 9
    %v4767 = vpop.permute.xlu0 %4766
    %v4768 = vsel %vm2447, %v4753, %v4755
    %v4769 = vsel %vm2447, %v4757, %v4759
    %v4770 = vsel %vm2447, %v4761, %v4763
    %v4771 = vsel %vm2447, %v4765, %v4767
    %v4777 = vsel %vm3483, %v4742, 0
    %v4780 = vsel %vm3483, %v4743, 0
    %4782 = vmatprep.subr.mxu0 0.0
    %4783 = vmatpush1.msra.mxu0 %v4768
    %4784 = vmatprep.subr.mxu0 0.0
    %4785 = vmatpush1.msra.mxu0 %v4769
    %4786 = vmatprep.subr.mxu0 0.0
    %4787 = vmatpush1.msra.mxu0 %v4770
    %4788 = vmatprep.subr.mxu0 0.0
    %4789 = vmatpush1.msra.mxu0 %v4771
    %4790 = vmatprep.subr.mxu0 0.0
    %4791 = vmatpush1.msra.mxu0 0.0
    %4792 = vmatprep.subr.mxu0 0.0
    %4793 = vmatpush1.msra.mxu0 0.0
    %4794 = vmatprep.subr.mxu0 0.0
    %4795 = vmatpush1.msra.mxu0 0.0
    %4796 = vmatprep.subr.mxu0 0.0
    %4797 = vmatpush1.msra.mxu0 0.0
    %4798 = vmatprep.subr.mxu0 0.0
    %4799 = vmatpush1.msra.mxu0 0.0
    %4800 = vmatprep.subr.mxu0 0.0
    %4801 = vmatpush1.msra.mxu0 0.0
    %4802 = vmatprep.subr.mxu0 0.0
    %4803 = vmatpush1.msra.mxu0 0.0
    %4804 = vmatprep.subr.mxu0 0.0
    %4805 = vmatpush1.msra.mxu0 0.0
    %4806 = vmatprep.subr.mxu0 0.0
    %4807 = vmatpush1.msra.mxu0 0.0
    %4808 = vmatprep.subr.mxu0 0.0
    %4809 = vmatpush1.msra.mxu0 0.0
    %4810 = vmatprep.subr.mxu0 0.0
    %4811 = vmatpush1.msra.mxu0 0.0
    %4812 = vmatprep.subr.mxu0 0.0
    %4813 = vmatpush1.msra.mxu0 0.0
    %4814 = vmatprep.subr.mxu0 0.0
    %4815 = vmatpush1.msra.mxu0 0.0
    %4816 = vmatprep.subr.mxu0 0.0
    %4817 = vmatpush1.msra.mxu0 0.0
    %4818 = vmatprep.subr.mxu0 0.0
    %4819 = vmatpush1.msra.mxu0 0.0
    %4820 = vmatprep.subr.mxu0 0.0
    %4821 = vmatpush1.msra.mxu0 0.0
    %4822 = vmatprep.subr.mxu0 0.0
    %4823 = vmatpush1.msra.mxu0 0.0
    %4824 = vmatprep.subr.mxu0 0.0
    %4825 = vmatpush1.msra.mxu0 0.0
    %4826 = vmatprep.subr.mxu0 0.0
    %4827 = vmatpush1.msra.mxu0 0.0
    %4828 = vmatprep.subr.mxu0 0.0
    %4829 = vmatpush1.msra.mxu0 0.0
    %4830 = vmatprep.subr.mxu0 0.0
    %4831 = vmatpush1.msra.mxu0 0.0
    %4832 = vmatprep.subr.mxu0 0.0
    %4833 = vmatpush1.msra.mxu0 0.0
    %4834 = vmatprep.subr.mxu0 0.0
    %4835 = vmatpush1.msra.mxu0 0.0
    %4836 = vmatprep.subr.mxu0 0.0
    %4837 = vmatpush1.msra.mxu0 0.0
    %4838 = vmatprep.subr.mxu0 0.0
    %4839 = vmatpush1.msra.mxu0 0.0
    %4840 = vmatprep.subr.mxu0 0.0
    %4841 = vmatpush1.msra.mxu0 0.0
    %4842 = vmatprep.subr.mxu0 0.0
    %4843 = vmatpush1.msra.mxu0 0.0
    %4844 = vmatprep.subr.mxu0 0.0
    %4845 = vmatpush1.msra.mxu0 0.0
    %4846 = vmatprep.mubr.f32.mxu0 0.0
    %4847 = vmatmul.mubr.f32.gmra.mrb[0].mxu0 %v4777
    %v4848 = vpop.f32.mrb[0].mxu0
    %v4849 = vadd.f32 0.0, %v4848
    %v4850 = vpop.f32.mrb[0].mxu0
    %4851 = vmatprep.mubr.f32.mxu0 0.0
    %4852 = vmatmul.mubr.f32.gmra.mrb[0].mxu0 %v4780
    %v4853 = vpop.f32.mrb[0].mxu0
    %v4854 = vadd.f32 0.0, %v4853
    %v4855 = vpop.f32.mrb[0].mxu0
    %4856 = vdwg.mxu0
    %v4857 = vld [vmem:[#allocation28] sm:$0x1]
    %v4858 = vlaneseq
    %v4859 = vshrl.u32 %v4858, 7
    %v4860 = vsub.s32 0, %v4859
    %v4861 = vrot.slane %v4857, %v4860
    %v4862 = vmul.f32 %v4849, %v4861
    %v4863 = vmul.f32 %v4854, %v4861
    %v4864 = vld [vmem:[#allocation18 + $0x10] sm:$0xff]
    %v4865 = vld [vmem:[#allocation18 + $0x18] sm:$0xff]
    %4866 = vrot.lane.b32.xlu0 %v4734, 8
    %v4867 = vpop.permute.xlu0 %4866
    %4868 = vrot.lane.b32.xlu0 %v4735, 8
    %v4869 = vpop.permute.xlu0 %4868
    %4870 = vrot.lane.b32.xlu0 %v4736, 8
    %v4871 = vpop.permute.xlu0 %4870
    %4872 = vrot.lane.b32.xlu0 %v4737, 8
    %v4873 = vpop.permute.xlu0 %4872
    %4874 = vrot.lane.b32.xlu0 %v4738, 8
    %v4875 = vpop.permute.xlu0 %4874
    %4876 = vrot.lane.b32.xlu0 %v4739, 8
    %v4877 = vpop.permute.xlu0 %4876
    %4878 = vrot.lane.b32.xlu0 %v4740, 8
    %v4879 = vpop.permute.xlu0 %4878
    %4880 = vrot.lane.b32.xlu0 %v4741, 8
    %v4881 = vpop.permute.xlu0 %4880
    %v4882 = vsel %vm2450, %v4867, %v4869
    %v4883 = vsel %vm2450, %v4871, %v4873
    %v4884 = vsel %vm2450, %v4875, %v4877
    %v4885 = vsel %vm2450, %v4879, %v4881
    %v4891 = vsel %vm3483, %v4864, 0
    %v4894 = vsel %vm3483, %v4865, 0
    %4896 = vmatprep.subr.mxu0 0.0
    %4897 = vmatpush1.msra.mxu0 %v4882
    %4898 = vmatprep.subr.mxu0 0.0
    %4899 = vmatpush1.msra.mxu0 %v4883
    %4900 = vmatprep.subr.mxu0 0.0
    %4901 = vmatpush1.msra.mxu0 %v4884
    %4902 = vmatprep.subr.mxu0 0.0
    %4903 = vmatpush1.msra.mxu0 %v4885
    %4904 = vmatprep.subr.mxu0 0.0
    %4905 = vmatpush1.msra.mxu0 0.0
    %4906 = vmatprep.subr.mxu0 0.0
    %4907 = vmatpush1.msra.mxu0 0.0
    %4908 = vmatprep.subr.mxu0 0.0
    %4909 = vmatpush1.msra.mxu0 0.0
    %4910 = vmatprep.subr.mxu0 0.0
    %4911 = vmatpush1.msra.mxu0 0.0
    %4912 = vmatprep.subr.mxu0 0.0
    %4913 = vmatpush1.msra.mxu0 0.0
    %4914 = vmatprep.subr.mxu0 0.0
    %4915 = vmatpush1.msra.mxu0 0.0
    %4916 = vmatprep.subr.mxu0 0.0
    %4917 = vmatpush1.msra.mxu0 0.0
    %4918 = vmatprep.subr.mxu0 0.0
    %4919 = vmatpush1.msra.mxu0 0.0
    %4920 = vmatprep.subr.mxu0 0.0
    %4921 = vmatpush1.msra.mxu0 0.0
    %4922 = vmatprep.subr.mxu0 0.0
    %4923 = vmatpush1.msra.mxu0 0.0
    %4924 = vmatprep.subr.mxu0 0.0
    %4925 = vmatpush1.msra.mxu0 0.0
    %4926 = vmatprep.subr.mxu0 0.0
    %4927 = vmatpush1.msra.mxu0 0.0
    %4928 = vmatprep.subr.mxu0 0.0
    %4929 = vmatpush1.msra.mxu0 0.0
    %4930 = vmatprep.subr.mxu0 0.0
    %4931 = vmatpush1.msra.mxu0 0.0
    %4932 = vmatprep.subr.mxu0 0.0
    %4933 = vmatpush1.msra.mxu0 0.0
    %4934 = vmatprep.subr.mxu0 0.0
    %4935 = vmatpush1.msra.mxu0 0.0
    %4936 = vmatprep.subr.mxu0 0.0
    %4937 = vmatpush1.msra.mxu0 0.0
    %4938 = vmatprep.subr.mxu0 0.0
    %4939 = vmatpush1.msra.mxu0 0.0
    %4940 = vmatprep.subr.mxu0 0.0
    %4941 = vmatpush1.msra.mxu0 0.0
    %4942 = vmatprep.subr.mxu0 0.0
    %4943 = vmatpush1.msra.mxu0 0.0
    %4944 = vmatprep.subr.mxu0 0.0
    %4945 = vmatpush1.msra.mxu0 0.0
    %4946 = vmatprep.subr.mxu0 0.0
    %4947 = vmatpush1.msra.mxu0 0.0
    %4948 = vmatprep.subr.mxu0 0.0
    %4949 = vmatpush1.msra.mxu0 0.0
    %4950 = vmatprep.subr.mxu0 0.0
    %4951 = vmatpush1.msra.mxu0 0.0
    %4952 = vmatprep.subr.mxu0 0.0
    %4953 = vmatpush1.msra.mxu0 0.0
    %4954 = vmatprep.subr.mxu0 0.0
    %4955 = vmatpush1.msra.mxu0 0.0
    %4956 = vmatprep.subr.mxu0 0.0
    %4957 = vmatpush1.msra.mxu0 0.0
    %4958 = vmatprep.subr.mxu0 0.0
    %4959 = vmatpush1.msra.mxu0 0.0
    %4960 = vmatprep.mubr.f32.mxu0 0.0
    %4961 = vmatmul.mubr.f32.gmra.mrb[0].mxu0 %v4891
    %v4962 = vpop.f32.mrb[0].mxu0
    %v4963 = vadd.f32 0.0, %v4962
    %v4964 = vpop.f32.mrb[0].mxu0
    %4965 = vmatprep.mubr.f32.mxu0 0.0
    %4966 = vmatmul.mubr.f32.gmra.mrb[0].mxu0 %v4894
    %v4967 = vpop.f32.mrb[0].mxu0
    %v4968 = vadd.f32 0.0, %v4967
    %v4969 = vpop.f32.mrb[0].mxu0
    %4970 = vdwg.mxu0
    %v4971 = vld [vmem:[#allocation28 + $0x1] sm:$0x1]
    %v4972 = vlaneseq
    %v4973 = vshrl.u32 %v4972, 7
    %v4974 = vsub.s32 0, %v4973
    %v4975 = vrot.slane %v4971, %v4974
    %v4976 = vmul.f32 %v4963, %v4975
    %v4977 = vmul.f32 %v4968, %v4975
    %v4978 = vadd.f32 %v4862, %v4976
    %v4979 = vadd.f32 %v4863, %v4977
    %v4980 = vld [vmem:[#allocation18 + $0x20] sm:$0xff]
    %v4981 = vld [vmem:[#allocation18 + $0x28] sm:$0xff]
    %4982 = vrot.lane.b32.xlu0 %v4734, 7
    %v4983 = vpop.permute.xlu0 %4982
    %4984 = vrot.lane.b32.xlu0 %v4735, 7
    %v4985 = vpop.permute.xlu0 %4984
    %4986 = vrot.lane.b32.xlu0 %v4736, 7
    %v4987 = vpop.permute.xlu0 %4986
    %4988 = vrot.lane.b32.xlu0 %v4737, 7
    %v4989 = vpop.permute.xlu0 %4988
    %4990 = vrot.lane.b32.xlu0 %v4738, 7
    %v4991 = vpop.permute.xlu0 %4990
    %4992 = vrot.lane.b32.xlu0 %v4739, 7
    %v4993 = vpop.permute.xlu0 %4992
    %4994 = vrot.lane.b32.xlu0 %v4740, 7
    %v4995 = vpop.permute.xlu0 %4994
    %4996 = vrot.lane.b32.xlu0 %v4741, 7
    %v4997 = vpop.permute.xlu0 %4996
    %v4998 = vsel %vm2643, %v4983, %v4985
    %v4999 = vsel %vm2643, %v4987, %v4989
    %v5000 = vsel %vm2643, %v4991, %v4993
    %v5001 = vsel %vm2643, %v4995, %v4997
    %v5007 = vsel %vm3483, %v4980, 0
    %v5010 = vsel %vm3483, %v4981, 0
    %5012 = vmatprep.subr.mxu0 0.0
    %5013 = vmatpush1.msra.mxu0 %v4998
    %5014 = vmatprep.subr.mxu0 0.0
    %5015 = vmatpush1.msra.mxu0 %v4999
    %5016 = vmatprep.subr.mxu0 0.0
    %5017 = vmatpush1.msra.mxu0 %v5000
    %5018 = vmatprep.subr.mxu0 0.0
    %5019 = vmatpush1.msra.mxu0 %v5001
    %5020 = vmatprep.subr.mxu0 0.0
    %5021 = vmatpush1.msra.mxu0 0.0
    %5022 = vmatprep.subr.mxu0 0.0
    %5023 = vmatpush1.msra.mxu0 0.0
    %5024 = vmatprep.subr.mxu0 0.0
    %5025 = vmatpush1.msra.mxu0 0.0
    %5026 = vmatprep.subr.mxu0 0.0
    %5027 = vmatpush1.msra.mxu0 0.0
    %5028 = vmatprep.subr.mxu0 0.0
    %5029 = vmatpush1.msra.mxu0 0.0
    %5030 = vmatprep.subr.mxu0 0.0
    %5031 = vmatpush1.msra.mxu0 0.0
    %5032 = vmatprep.subr.mxu0 0.0
    %5033 = vmatpush1.msra.mxu0 0.0
    %5034 = vmatprep.subr.mxu0 0.0
    %5035 = vmatpush1.msra.mxu0 0.0
    %5036 = vmatprep.subr.mxu0 0.0
    %5037 = vmatpush1.msra.mxu0 0.0
    %5038 = vmatprep.subr.mxu0 0.0
    %5039 = vmatpush1.msra.mxu0 0.0
    %5040 = vmatprep.subr.mxu0 0.0
    %5041 = vmatpush1.msra.mxu0 0.0
    %5042 = vmatprep.subr.mxu0 0.0
    %5043 = vmatpush1.msra.mxu0 0.0
    %5044 = vmatprep.subr.mxu0 0.0
    %5045 = vmatpush1.msra.mxu0 0.0
    %5046 = vmatprep.subr.mxu0 0.0
    %5047 = vmatpush1.msra.mxu0 0.0
    %5048 = vmatprep.subr.mxu0 0.0
    %5049 = vmatpush1.msra.mxu0 0.0
    %5050 = vmatprep.subr.mxu0 0.0
    %5051 = vmatpush1.msra.mxu0 0.0
    %5052 = vmatprep.subr.mxu0 0.0
    %5053 = vmatpush1.msra.mxu0 0.0
    %5054 = vmatprep.subr.mxu0 0.0
    %5055 = vmatpush1.msra.mxu0 0.0
    %5056 = vmatprep.subr.mxu0 0.0
    %5057 = vmatpush1.msra.mxu0 0.0
    %5058 = vmatprep.subr.mxu0 0.0
    %5059 = vmatpush1.msra.mxu0 0.0
    %5060 = vmatprep.subr.mxu0 0.0
    %5061 = vmatpush1.msra.mxu0 0.0
    %5062 = vmatprep.subr.mxu0 0.0
    %5063 = vmatpush1.msra.mxu0 0.0
    %5064 = vmatprep.subr.mxu0 0.0
    %5065 = vmatpush1.msra.mxu0 0.0
    %5066 = vmatprep.subr.mxu0 0.0
    %5067 = vmatpush1.msra.mxu0 0.0
    %5068 = vmatprep.subr.mxu0 0.0
    %5069 = vmatpush1.msra.mxu0 0.0
    %5070 = vmatprep.subr.mxu0 0.0
    %5071 = vmatpush1.msra.mxu0 0.0
    %5072 = vmatprep.subr.mxu0 0.0
    %5073 = vmatpush1.msra.mxu0 0.0
    %5074 = vmatprep.subr.mxu0 0.0
    %5075 = vmatpush1.msra.mxu0 0.0
    %5076 = vmatprep.mubr.f32.mxu0 0.0
    %5077 = vmatmul.mubr.f32.gmra.mrb[0].mxu0 %v5007
    %v5078 = vpop.f32.mrb[0].mxu0
    %v5079 = vadd.f32 0.0, %v5078
    %v5080 = vpop.f32.mrb[0].mxu0
    %5081 = vmatprep.mubr.f32.mxu0 0.0
    %5082 = vmatmul.mubr.f32.gmra.mrb[0].mxu0 %v5010
    %v5083 = vpop.f32.mrb[0].mxu0
    %v5084 = vadd.f32 0.0, %v5083
    %v5085 = vpop.f32.mrb[0].mxu0
    %5086 = vdwg.mxu0
    %v5087 = vld [vmem:[#allocation28 + $0x2] sm:$0x1]
    %v5088 = vlaneseq
    %v5089 = vshrl.u32 %v5088, 7
    %v5090 = vsub.s32 0, %v5089
    %v5091 = vrot.slane %v5087, %v5090
    %v5092 = vmul.f32 %v5079, %v5091
    %v5093 = vmul.f32 %v5084, %v5091
    %v5094 = vadd.f32 %v4978, %v5092
    %v5095 = vadd.f32 %v4979, %v5093
    %v5096 = vld [vmem:[#allocation18 + $0x30] sm:$0xff]
    %v5097 = vld [vmem:[#allocation18 + $0x38] sm:$0xff]
    %5098 = vrot.lane.b32.xlu0 %v4734, 1
    %v5099 = vpop.permute.xlu0 %5098
    %5100 = vrot.lane.b32.xlu0 %v4735, 1
    %v5101 = vpop.permute.xlu0 %5100
    %5102 = vrot.lane.b32.xlu0 %v4736, 1
    %v5103 = vpop.permute.xlu0 %5102
    %5104 = vrot.lane.b32.xlu0 %v4737, 1
    %v5105 = vpop.permute.xlu0 %5104
    %5106 = vrot.lane.b32.xlu0 %v4738, 1
    %v5107 = vpop.permute.xlu0 %5106
    %5108 = vrot.lane.b32.xlu0 %v4739, 1
    %v5109 = vpop.permute.xlu0 %5108
    %5110 = vrot.lane.b32.xlu0 %v4740, 1
    %v5111 = vpop.permute.xlu0 %5110
    %5112 = vrot.lane.b32.xlu0 %v4741, 1
    %v5113 = vpop.permute.xlu0 %5112
    %v5114 = vsel %vm951, %v5099, %v5101
    %v5115 = vsel %vm951, %v5103, %v5105
    %v5116 = vsel %vm951, %v5107, %v5109
    %v5117 = vsel %vm951, %v5111, %v5113
    %v5123 = vsel %vm3483, %v5096, 0
    %v5126 = vsel %vm3483, %v5097, 0
    %5128 = vmatprep.subr.mxu0 0.0
    %5129 = vmatpush1.msra.mxu0 %v5114
    %5130 = vmatprep.subr.mxu0 0.0
    %5131 = vmatpush1.msra.mxu0 %v5115
    %5132 = vmatprep.subr.mxu0 0.0
    %5133 = vmatpush1.msra.mxu0 %v5116
    %5134 = vmatprep.subr.mxu0 0.0
    %5135 = vmatpush1.msra.mxu0 %v5117
    %5136 = vmatprep.subr.mxu0 0.0
    %5137 = vmatpush1.msra.mxu0 0.0
    %5138 = vmatprep.subr.mxu0 0.0
    %5139 = vmatpush1.msra.mxu0 0.0
    %5140 = vmatprep.subr.mxu0 0.0
    %5141 = vmatpush1.msra.mxu0 0.0
    %5142 = vmatprep.subr.mxu0 0.0
    %5143 = vmatpush1.msra.mxu0 0.0
    %5144 = vmatprep.subr.mxu0 0.0
    %5145 = vmatpush1.msra.mxu0 0.0
    %5146 = vmatprep.subr.mxu0 0.0
    %5147 = vmatpush1.msra.mxu0 0.0
    %5148 = vmatprep.subr.mxu0 0.0
    %5149 = vmatpush1.msra.mxu0 0.0
    %5150 = vmatprep.subr.mxu0 0.0
    %5151 = vmatpush1.msra.mxu0 0.0
    %5152 = vmatprep.subr.mxu0 0.0
    %5153 = vmatpush1.msra.mxu0 0.0
    %5154 = vmatprep.subr.mxu0 0.0
    %5155 = vmatpush1.msra.mxu0 0.0
    %5156 = vmatprep.subr.mxu0 0.0
    %5157 = vmatpush1.msra.mxu0 0.0
    %5158 = vmatprep.subr.mxu0 0.0
    %5159 = vmatpush1.msra.mxu0 0.0
    %5160 = vmatprep.subr.mxu0 0.0
    %5161 = vmatpush1.msra.mxu0 0.0
    %5162 = vmatprep.subr.mxu0 0.0
    %5163 = vmatpush1.msra.mxu0 0.0
    %5164 = vmatprep.subr.mxu0 0.0
    %5165 = vmatpush1.msra.mxu0 0.0
    %5166 = vmatprep.subr.mxu0 0.0
    %5167 = vmatpush1.msra.mxu0 0.0
    %5168 = vmatprep.subr.mxu0 0.0
    %5169 = vmatpush1.msra.mxu0 0.0
    %5170 = vmatprep.subr.mxu0 0.0
    %5171 = vmatpush1.msra.mxu0 0.0
    %5172 = vmatprep.subr.mxu0 0.0
    %5173 = vmatpush1.msra.mxu0 0.0
    %5174 = vmatprep.subr.mxu0 0.0
    %5175 = vmatpush1.msra.mxu0 0.0
    %5176 = vmatprep.subr.mxu0 0.0
    %5177 = vmatpush1.msra.mxu0 0.0
    %5178 = vmatprep.subr.mxu0 0.0
    %5179 = vmatpush1.msra.mxu0 0.0
    %5180 = vmatprep.subr.mxu0 0.0
    %5181 = vmatpush1.msra.mxu0 0.0
    %5182 = vmatprep.subr.mxu0 0.0
    %5183 = vmatpush1.msra.mxu0 0.0
    %5184 = vmatprep.subr.mxu0 0.0
    %5185 = vmatpush1.msra.mxu0 0.0
    %5186 = vmatprep.subr.mxu0 0.0
    %5187 = vmatpush1.msra.mxu0 0.0
    %5188 = vmatprep.subr.mxu0 0.0
    %5189 = vmatpush1.msra.mxu0 0.0
    %5190 = vmatprep.subr.mxu0 0.0
    %5191 = vmatpush1.msra.mxu0 0.0
    %5192 = vmatprep.mubr.f32.mxu0 0.0
    %5193 = vmatmul.mubr.f32.gmra.mrb[0].mxu0 %v5123
    %v5194 = vpop.f32.mrb[0].mxu0
    %v5195 = vadd.f32 0.0, %v5194
    %v5196 = vpop.f32.mrb[0].mxu0
    %5197 = vmatprep.mubr.f32.mxu0 0.0
    %5198 = vmatmul.mubr.f32.gmra.mrb[0].mxu0 %v5126
    %v5199 = vpop.f32.mrb[0].mxu0
    %v5200 = vadd.f32 0.0, %v5199
    %v5201 = vpop.f32.mrb[0].mxu0
    %5202 = vdwg.mxu0
    %v5203 = vld [vmem:[#allocation28 + $0x3] sm:$0x1]
    %v5204 = vlaneseq
    %v5205 = vshrl.u32 %v5204, 7
    %v5206 = vsub.s32 0, %v5205
    %v5207 = vrot.slane %v5203, %v5206
    %v5208 = vmul.f32 %v5195, %v5207
    %v5209 = vmul.f32 %v5200, %v5207
    %v5210 = vadd.f32 %v5094, %v5208
    %v5211 = vadd.f32 %v5095, %v5209
    %v5212 = vld [vmem:[#allocation18 + $0x40] sm:$0xff]
    %v5213 = vld [vmem:[#allocation18 + $0x48] sm:$0xff]
    %v5215 = vsel %vm3483, %v5212, 0
    %v5218 = vsel %vm3483, %v5213, 0
    %5220 = vmatprep.subr.mxu0 0.0
    %5221 = vmatpush1.msra.mxu0 %v4735
    %5222 = vmatprep.subr.mxu0 0.0
    %5223 = vmatpush1.msra.mxu0 %v4737
    %5224 = vmatprep.subr.mxu0 0.0
    %5225 = vmatpush1.msra.mxu0 %v4739
    %5226 = vmatprep.subr.mxu0 0.0
    %5227 = vmatpush1.msra.mxu0 %v4741
    %5228 = vmatprep.subr.mxu0 0.0
    %5229 = vmatpush1.msra.mxu0 0.0
    %5230 = vmatprep.subr.mxu0 0.0
    %5231 = vmatpush1.msra.mxu0 0.0
    %5232 = vmatprep.subr.mxu0 0.0
    %5233 = vmatpush1.msra.mxu0 0.0
    %5234 = vmatprep.subr.mxu0 0.0
    %5235 = vmatpush1.msra.mxu0 0.0
    %5236 = vmatprep.subr.mxu0 0.0
    %5237 = vmatpush1.msra.mxu0 0.0
    %5238 = vmatprep.subr.mxu0 0.0
    %5239 = vmatpush1.msra.mxu0 0.0
    %5240 = vmatprep.subr.mxu0 0.0
    %5241 = vmatpush1.msra.mxu0 0.0
    %5242 = vmatprep.subr.mxu0 0.0
    %5243 = vmatpush1.msra.mxu0 0.0
    %5244 = vmatprep.subr.mxu0 0.0
    %5245 = vmatpush1.msra.mxu0 0.0
    %5246 = vmatprep.subr.mxu0 0.0
    %5247 = vmatpush1.msra.mxu0 0.0
    %5248 = vmatprep.subr.mxu0 0.0
    %5249 = vmatpush1.msra.mxu0 0.0
    %5250 = vmatprep.subr.mxu0 0.0
    %5251 = vmatpush1.msra.mxu0 0.0
    %5252 = vmatprep.subr.mxu0 0.0
    %5253 = vmatpush1.msra.mxu0 0.0
    %5254 = vmatprep.subr.mxu0 0.0
    %5255 = vmatpush1.msra.mxu0 0.0
    %5256 = vmatprep.subr.mxu0 0.0
    %5257 = vmatpush1.msra.mxu0 0.0
    %5258 = vmatprep.subr.mxu0 0.0
    %5259 = vmatpush1.msra.mxu0 0.0
    %5260 = vmatprep.subr.mxu0 0.0
    %5261 = vmatpush1.msra.mxu0 0.0
    %5262 = vmatprep.subr.mxu0 0.0
    %5263 = vmatpush1.msra.mxu0 0.0
    %5264 = vmatprep.subr.mxu0 0.0
    %5265 = vmatpush1.msra.mxu0 0.0
    %5266 = vmatprep.subr.mxu0 0.0
    %5267 = vmatpush1.msra.mxu0 0.0
    %5268 = vmatprep.subr.mxu0 0.0
    %5269 = vmatpush1.msra.mxu0 0.0
    %5270 = vmatprep.subr.mxu0 0.0
    %5271 = vmatpush1.msra.mxu0 0.0
    %5272 = vmatprep.subr.mxu0 0.0
    %5273 = vmatpush1.msra.mxu0 0.0
    %5274 = vmatprep.subr.mxu0 0.0
    %5275 = vmatpush1.msra.mxu0 0.0
    %5276 = vmatprep.subr.mxu0 0.0
    %5277 = vmatpush1.msra.mxu0 0.0
    %5278 = vmatprep.subr.mxu0 0.0
    %5279 = vmatpush1.msra.mxu0 0.0
    %5280 = vmatprep.subr.mxu0 0.0
    %5281 = vmatpush1.msra.mxu0 0.0
    %5282 = vmatprep.subr.mxu0 0.0
    %5283 = vmatpush1.msra.mxu0 0.0
    %5284 = vmatprep.mubr.f32.mxu0 0.0
    %5285 = vmatmul.mubr.f32.gmra.mrb[0].mxu0 %v5215
    %v5286 = vpop.f32.mrb[0].mxu0
    %v5287 = vadd.f32 0.0, %v5286
    %v5288 = vpop.f32.mrb[0].mxu0
    %5289 = vmatprep.mubr.f32.mxu0 0.0
    %5290 = vmatmul.mubr.f32.gmra.mrb[0].mxu0 %v5218
    %v5291 = vpop.f32.mrb[0].mxu0
    %v5292 = vadd.f32 0.0, %v5291
    %v5293 = vpop.f32.mrb[0].mxu0
    %5294 = vdwg.mxu0
    %v5295 = vadd.f32 %v5210, %v5287
    %v5296 = vadd.f32 %v5211, %v5292
    %v5297 = vld [vmem:[#allocation6 + $0x8] sm:$0xff]
    %v5298 = vld [vmem:[#allocation6 + $0x10] sm:$0xff]
    %v5299 = vld [vmem:[#allocation6 + $0x20] sm:$0xff]
    %v5300 = vld [vmem:[#allocation6 + $0x28] sm:$0xff]
    %v5301 = vld [vmem:[#allocation6 + $0x38] sm:$0xff]
    %v5302 = vld [vmem:[#allocation6 + $0x40] sm:$0xff]
    %v5303 = vld [vmem:[#allocation6 + $0x50] sm:$0xff]
    %v5304 = vld [vmem:[#allocation6 + $0x58] sm:$0xff]
    %v5305 = vld [vmem:[#allocation18 + $0x50] sm:$0xff]
    %v5306 = vld [vmem:[#allocation18 + $0x58] sm:$0xff]
    %5315 = vrot.lane.b32.xlu0 %v5297, 127
    %v5316 = vpop.permute.xlu0 %5315
    %5317 = vrot.lane.b32.xlu0 %v5298, 127
    %v5318 = vpop.permute.xlu0 %5317
    %5319 = vrot.lane.b32.xlu0 %v5299, 127
    %v5320 = vpop.permute.xlu0 %5319
    %5321 = vrot.lane.b32.xlu0 %v5300, 127
    %v5322 = vpop.permute.xlu0 %5321
    %5323 = vrot.lane.b32.xlu0 %v5301, 127
    %v5324 = vpop.permute.xlu0 %5323
    %5325 = vrot.lane.b32.xlu0 %v5302, 127
    %v5326 = vpop.permute.xlu0 %5325
    %5327 = vrot.lane.b32.xlu0 %v5303, 127
    %v5328 = vpop.permute.xlu0 %5327
    %5329 = vrot.lane.b32.xlu0 %v5304, 127
    %v5330 = vpop.permute.xlu0 %5329
    %v5331 = vsel %vm1323, %v5316, %v5318
    %v5332 = vsel %vm1323, %v5320, %v5322
    %v5333 = vsel %vm1323, %v5324, %v5326
    %v5334 = vsel %vm1323, %v5328, %v5330
    %v5340 = vsel %vm3483, %v5305, 0
    %v5343 = vsel %vm3483, %v5306, 0
    %5345 = vmatprep.subr.mxu0 0.0
    %5346 = vmatpush1.msra.mxu0 %v5331
    %5347 = vmatprep.subr.mxu0 0.0
    %5348 = vmatpush1.msra.mxu0 %v5332
    %5349 = vmatprep.subr.mxu0 0.0
    %5350 = vmatpush1.msra.mxu0 %v5333
    %5351 = vmatprep.subr.mxu0 0.0
    %5352 = vmatpush1.msra.mxu0 %v5334
    %5353 = vmatprep.subr.mxu0 0.0
    %5354 = vmatpush1.msra.mxu0 0.0
    %5355 = vmatprep.subr.mxu0 0.0
    %5356 = vmatpush1.msra.mxu0 0.0
    %5357 = vmatprep.subr.mxu0 0.0
    %5358 = vmatpush1.msra.mxu0 0.0
    %5359 = vmatprep.subr.mxu0 0.0
    %5360 = vmatpush1.msra.mxu0 0.0
    %5361 = vmatprep.subr.mxu0 0.0
    %5362 = vmatpush1.msra.mxu0 0.0
    %5363 = vmatprep.subr.mxu0 0.0
    %5364 = vmatpush1.msra.mxu0 0.0
    %5365 = vmatprep.subr.mxu0 0.0
    %5366 = vmatpush1.msra.mxu0 0.0
    %5367 = vmatprep.subr.mxu0 0.0
    %5368 = vmatpush1.msra.mxu0 0.0
    %5369 = vmatprep.subr.mxu0 0.0
    %5370 = vmatpush1.msra.mxu0 0.0
    %5371 = vmatprep.subr.mxu0 0.0
    %5372 = vmatpush1.msra.mxu0 0.0
    %5373 = vmatprep.subr.mxu0 0.0
    %5374 = vmatpush1.msra.mxu0 0.0
    %5375 = vmatprep.subr.mxu0 0.0
    %5376 = vmatpush1.msra.mxu0 0.0
    %5377 = vmatprep.subr.mxu0 0.0
    %5378 = vmatpush1.msra.mxu0 0.0
    %5379 = vmatprep.subr.mxu0 0.0
    %5380 = vmatpush1.msra.mxu0 0.0
    %5381 = vmatprep.subr.mxu0 0.0
    %5382 = vmatpush1.msra.mxu0 0.0
    %5383 = vmatprep.subr.mxu0 0.0
    %5384 = vmatpush1.msra.mxu0 0.0
    %5385 = vmatprep.subr.mxu0 0.0
    %5386 = vmatpush1.msra.mxu0 0.0
    %5387 = vmatprep.subr.mxu0 0.0
    %5388 = vmatpush1.msra.mxu0 0.0
    %5389 = vmatprep.subr.mxu0 0.0
    %5390 = vmatpush1.msra.mxu0 0.0
    %5391 = vmatprep.subr.mxu0 0.0
    %5392 = vmatpush1.msra.mxu0 0.0
    %5393 = vmatprep.subr.mxu0 0.0
    %5394 = vmatpush1.msra.mxu0 0.0
    %5395 = vmatprep.subr.mxu0 0.0
    %5396 = vmatpush1.msra.mxu0 0.0
    %5397 = vmatprep.subr.mxu0 0.0
    %5398 = vmatpush1.msra.mxu0 0.0
    %5399 = vmatprep.subr.mxu0 0.0
    %5400 = vmatpush1.msra.mxu0 0.0
    %5401 = vmatprep.subr.mxu0 0.0
    %5402 = vmatpush1.msra.mxu0 0.0
    %5403 = vmatprep.subr.mxu0 0.0
    %5404 = vmatpush1.msra.mxu0 0.0
    %5405 = vmatprep.subr.mxu0 0.0
    %5406 = vmatpush1.msra.mxu0 0.0
    %5407 = vmatprep.subr.mxu0 0.0
    %5408 = vmatpush1.msra.mxu0 0.0
    %5409 = vmatprep.mubr.f32.mxu0 0.0
    %5410 = vmatmul.mubr.f32.gmra.mrb[0].mxu0 %v5340
    %v5411 = vpop.f32.mrb[0].mxu0
    %v5412 = vadd.f32 0.0, %v5411
    %v5413 = vpop.f32.mrb[0].mxu0
    %5414 = vmatprep.mubr.f32.mxu0 0.0
    %5415 = vmatmul.mubr.f32.gmra.mrb[0].mxu0 %v5343
    %v5416 = vpop.f32.mrb[0].mxu0
    %v5417 = vadd.f32 0.0, %v5416
    %v5418 = vpop.f32.mrb[0].mxu0
    %5419 = vdwg.mxu0
    %v5420 = vld [vmem:[#allocation28 + $0x5] sm:$0x1]
    %v5421 = vlaneseq
    %v5422 = vshrl.u32 %v5421, 7
    %v5423 = vsub.s32 0, %v5422
    %v5424 = vrot.slane %v5420, %v5423
    %v5425 = vmul.f32 %v5412, %v5424
    %v5426 = vmul.f32 %v5417, %v5424
    %v5427 = vadd.f32 %v5295, %v5425
    %v5428 = vadd.f32 %v5296, %v5426
    %v5429 = vld [vmem:[#allocation18 + $0x60] sm:$0xff]
    %v5430 = vld [vmem:[#allocation18 + $0x68] sm:$0xff]
    %5431 = vrot.lane.b32.xlu0 %v5297, 121
    %v5432 = vpop.permute.xlu0 %5431
    %5433 = vrot.lane.b32.xlu0 %v5298, 121
    %v5434 = vpop.permute.xlu0 %5433
    %5435 = vrot.lane.b32.xlu0 %v5299, 121
    %v5436 = vpop.permute.xlu0 %5435
    %5437 = vrot.lane.b32.xlu0 %v5300, 121
    %v5438 = vpop.permute.xlu0 %5437
    %5439 = vrot.lane.b32.xlu0 %v5301, 121
    %v5440 = vpop.permute.xlu0 %5439
    %5441 = vrot.lane.b32.xlu0 %v5302, 121
    %v5442 = vpop.permute.xlu0 %5441
    %5443 = vrot.lane.b32.xlu0 %v5303, 121
    %v5444 = vpop.permute.xlu0 %5443
    %5445 = vrot.lane.b32.xlu0 %v5304, 121
    %v5446 = vpop.permute.xlu0 %5445
    %v5447 = vsel %vm3027, %v5432, %v5434
    %v5448 = vsel %vm3027, %v5436, %v5438
    %v5449 = vsel %vm3027, %v5440, %v5442
    %v5450 = vsel %vm3027, %v5444, %v5446
    %v5456 = vsel %vm3483, %v5429, 0
    %v5459 = vsel %vm3483, %v5430, 0
    %5461 = vmatprep.subr.mxu0 0.0
    %5462 = vmatpush1.msra.mxu0 %v5447
    %5463 = vmatprep.subr.mxu0 0.0
    %5464 = vmatpush1.msra.mxu0 %v5448
    %5465 = vmatprep.subr.mxu0 0.0
    %5466 = vmatpush1.msra.mxu0 %v5449
    %5467 = vmatprep.subr.mxu0 0.0
    %5468 = vmatpush1.msra.mxu0 %v5450
    %5469 = vmatprep.subr.mxu0 0.0
    %5470 = vmatpush1.msra.mxu0 0.0
    %5471 = vmatprep.subr.mxu0 0.0
    %5472 = vmatpush1.msra.mxu0 0.0
    %5473 = vmatprep.subr.mxu0 0.0
    %5474 = vmatpush1.msra.mxu0 0.0
    %5475 = vmatprep.subr.mxu0 0.0
    %5476 = vmatpush1.msra.mxu0 0.0
    %5477 = vmatprep.subr.mxu0 0.0
    %5478 = vmatpush1.msra.mxu0 0.0
    %5479 = vmatprep.subr.mxu0 0.0
    %5480 = vmatpush1.msra.mxu0 0.0
    %5481 = vmatprep.subr.mxu0 0.0
    %5482 = vmatpush1.msra.mxu0 0.0
    %5483 = vmatprep.subr.mxu0 0.0
    %5484 = vmatpush1.msra.mxu0 0.0
    %5485 = vmatprep.subr.mxu0 0.0
    %5486 = vmatpush1.msra.mxu0 0.0
    %5487 = vmatprep.subr.mxu0 0.0
    %5488 = vmatpush1.msra.mxu0 0.0
    %5489 = vmatprep.subr.mxu0 0.0
    %5490 = vmatpush1.msra.mxu0 0.0
    %5491 = vmatprep.subr.mxu0 0.0
    %5492 = vmatpush1.msra.mxu0 0.0
    %5493 = vmatprep.subr.mxu0 0.0
    %5494 = vmatpush1.msra.mxu0 0.0
    %5495 = vmatprep.subr.mxu0 0.0
    %5496 = vmatpush1.msra.mxu0 0.0
    %5497 = vmatprep.subr.mxu0 0.0
    %5498 = vmatpush1.msra.mxu0 0.0
    %5499 = vmatprep.subr.mxu0 0.0
    %5500 = vmatpush1.msra.mxu0 0.0
    %5501 = vmatprep.subr.mxu0 0.0
    %5502 = vmatpush1.msra.mxu0 0.0
    %5503 = vmatprep.subr.mxu0 0.0
    %5504 = vmatpush1.msra.mxu0 0.0
    %5505 = vmatprep.subr.mxu0 0.0
    %5506 = vmatpush1.msra.mxu0 0.0
    %5507 = vmatprep.subr.mxu0 0.0
    %5508 = vmatpush1.msra.mxu0 0.0
    %5509 = vmatprep.subr.mxu0 0.0
    %5510 = vmatpush1.msra.mxu0 0.0
    %5511 = vmatprep.subr.mxu0 0.0
    %5512 = vmatpush1.msra.mxu0 0.0
    %5513 = vmatprep.subr.mxu0 0.0
    %5514 = vmatpush1.msra.mxu0 0.0
    %5515 = vmatprep.subr.mxu0 0.0
    %5516 = vmatpush1.msra.mxu0 0.0
    %5517 = vmatprep.subr.mxu0 0.0
    %5518 = vmatpush1.msra.mxu0 0.0
    %5519 = vmatprep.subr.mxu0 0.0
    %5520 = vmatpush1.msra.mxu0 0.0
    %5521 = vmatprep.subr.mxu0 0.0
    %5522 = vmatpush1.msra.mxu0 0.0
    %5523 = vmatprep.subr.mxu0 0.0
    %5524 = vmatpush1.msra.mxu0 0.0
    %5525 = vmatprep.mubr.f32.mxu0 0.0
    %5526 = vmatmul.mubr.f32.gmra.mrb[0].mxu0 %v5456
    %v5527 = vpop.f32.mrb[0].mxu0
    %v5528 = vadd.f32 0.0, %v5527
    %v5529 = vpop.f32.mrb[0].mxu0
    %5530 = vmatprep.mubr.f32.mxu0 0.0
    %5531 = vmatmul.mubr.f32.gmra.mrb[0].mxu0 %v5459
    %v5532 = vpop.f32.mrb[0].mxu0
    %v5533 = vadd.f32 0.0, %v5532
    %v5534 = vpop.f32.mrb[0].mxu0
    %5535 = vdwg.mxu0
    %v5536 = vld [vmem:[#allocation28 + $0x6] sm:$0x1]
    %v5537 = vlaneseq
    %v5538 = vshrl.u32 %v5537, 7
    %v5539 = vsub.s32 0, %v5538
    %v5540 = vrot.slane %v5536, %v5539
    %v5541 = vmul.f32 %v5528, %v5540
    %v5542 = vmul.f32 %v5533, %v5540
    %v5543 = vadd.f32 %v5427, %v5541
    %v5544 = vadd.f32 %v5428, %v5542
    %v5545 = vld [vmem:[#allocation18 + $0x70] sm:$0xff]
    %v5546 = vld [vmem:[#allocation18 + $0x78] sm:$0xff]
    %5547 = vrot.lane.b32.xlu0 %v5297, 120
    %v5548 = vpop.permute.xlu0 %5547
    %5549 = vrot.lane.b32.xlu0 %v5298, 120
    %v5550 = vpop.permute.xlu0 %5549
    %5551 = vrot.lane.b32.xlu0 %v5299, 120
    %v5552 = vpop.permute.xlu0 %5551
    %5553 = vrot.lane.b32.xlu0 %v5300, 120
    %v5554 = vpop.permute.xlu0 %5553
    %5555 = vrot.lane.b32.xlu0 %v5301, 120
    %v5556 = vpop.permute.xlu0 %5555
    %5557 = vrot.lane.b32.xlu0 %v5302, 120
    %v5558 = vpop.permute.xlu0 %5557
    %5559 = vrot.lane.b32.xlu0 %v5303, 120
    %v5560 = vpop.permute.xlu0 %5559
    %5561 = vrot.lane.b32.xlu0 %v5304, 120
    %v5562 = vpop.permute.xlu0 %5561
    %v5563 = vsel %vm3126, %v5548, %v5550
    %v5564 = vsel %vm3126, %v5552, %v5554
    %v5565 = vsel %vm3126, %v5556, %v5558
    %v5566 = vsel %vm3126, %v5560, %v5562
    %v5572 = vsel %vm3483, %v5545, 0
    %v5575 = vsel %vm3483, %v5546, 0
    %5577 = vmatprep.subr.mxu0 0.0
    %5578 = vmatpush1.msra.mxu0 %v5563
    %5579 = vmatprep.subr.mxu0 0.0
    %5580 = vmatpush1.msra.mxu0 %v5564
    %5581 = vmatprep.subr.mxu0 0.0
    %5582 = vmatpush1.msra.mxu0 %v5565
    %5583 = vmatprep.subr.mxu0 0.0
    %5584 = vmatpush1.msra.mxu0 %v5566
    %5585 = vmatprep.subr.mxu0 0.0
    %5586 = vmatpush1.msra.mxu0 0.0
    %5587 = vmatprep.subr.mxu0 0.0
    %5588 = vmatpush1.msra.mxu0 0.0
    %5589 = vmatprep.subr.mxu0 0.0
    %5590 = vmatpush1.msra.mxu0 0.0
    %5591 = vmatprep.subr.mxu0 0.0
    %5592 = vmatpush1.msra.mxu0 0.0
    %5593 = vmatprep.subr.mxu0 0.0
    %5594 = vmatpush1.msra.mxu0 0.0
    %5595 = vmatprep.subr.mxu0 0.0
    %5596 = vmatpush1.msra.mxu0 0.0
    %5597 = vmatprep.subr.mxu0 0.0
    %5598 = vmatpush1.msra.mxu0 0.0
    %5599 = vmatprep.subr.mxu0 0.0
    %5600 = vmatpush1.msra.mxu0 0.0
    %5601 = vmatprep.subr.mxu0 0.0
    %5602 = vmatpush1.msra.mxu0 0.0
    %5603 = vmatprep.subr.mxu0 0.0
    %5604 = vmatpush1.msra.mxu0 0.0
    %5605 = vmatprep.subr.mxu0 0.0
    %5606 = vmatpush1.msra.mxu0 0.0
    %5607 = vmatprep.subr.mxu0 0.0
    %5608 = vmatpush1.msra.mxu0 0.0
    %5609 = vmatprep.subr.mxu0 0.0
    %5610 = vmatpush1.msra.mxu0 0.0
    %5611 = vmatprep.subr.mxu0 0.0
    %5612 = vmatpush1.msra.mxu0 0.0
    %5613 = vmatprep.subr.mxu0 0.0
    %5614 = vmatpush1.msra.mxu0 0.0
    %5615 = vmatprep.subr.mxu0 0.0
    %5616 = vmatpush1.msra.mxu0 0.0
    %5617 = vmatprep.subr.mxu0 0.0
    %5618 = vmatpush1.msra.mxu0 0.0
    %5619 = vmatprep.subr.mxu0 0.0
    %5620 = vmatpush1.msra.mxu0 0.0
    %5621 = vmatprep.subr.mxu0 0.0
    %5622 = vmatpush1.msra.mxu0 0.0
    %5623 = vmatprep.subr.mxu0 0.0
    %5624 = vmatpush1.msra.mxu0 0.0
    %5625 = vmatprep.subr.mxu0 0.0
    %5626 = vmatpush1.msra.mxu0 0.0
    %5627 = vmatprep.subr.mxu0 0.0
    %5628 = vmatpush1.msra.mxu0 0.0
    %5629 = vmatprep.subr.mxu0 0.0
    %5630 = vmatpush1.msra.mxu0 0.0
    %5631 = vmatprep.subr.mxu0 0.0
    %5632 = vmatpush1.msra.mxu0 0.0
    %5633 = vmatprep.subr.mxu0 0.0
    %5634 = vmatpush1.msra.mxu0 0.0
    %5635 = vmatprep.subr.mxu0 0.0
    %5636 = vmatpush1.msra.mxu0 0.0
    %5637 = vmatprep.subr.mxu0 0.0
    %5638 = vmatpush1.msra.mxu0 0.0
    %5639 = vmatprep.subr.mxu0 0.0
    %5640 = vmatpush1.msra.mxu0 0.0
    %5641 = vmatprep.mubr.f32.mxu0 0.0
    %5642 = vmatmul.mubr.f32.gmra.mrb[0].mxu0 %v5572
    %v5643 = vpop.f32.mrb[0].mxu0
    %v5644 = vadd.f32 0.0, %v5643
    %v5645 = vpop.f32.mrb[0].mxu0
    %5646 = vmatprep.mubr.f32.mxu0 0.0
    %5647 = vmatmul.mubr.f32.gmra.mrb[0].mxu0 %v5575
    %v5648 = vpop.f32.mrb[0].mxu0
    %v5649 = vadd.f32 0.0, %v5648
    %v5650 = vpop.f32.mrb[0].mxu0
    %5651 = vdwg.mxu0
    %v5652 = vld [vmem:[#allocation28 + $0x7] sm:$0x1]
    %v5653 = vlaneseq
    %v5654 = vshrl.u32 %v5653, 7
    %v5655 = vsub.s32 0, %v5654
    %v5656 = vrot.slane %v5652, %v5655
    %v5657 = vmul.f32 %v5644, %v5656
    %v5658 = vmul.f32 %v5649, %v5656
    %v5659 = vadd.f32 %v5543, %v5657
    %v5660 = vadd.f32 %v5544, %v5658
    %v5661 = vld [vmem:[#allocation18 + $0x80] sm:$0xff]
    %v5662 = vld [vmem:[#allocation18 + $0x88] sm:$0xff]
    %5663 = vrot.lane.b32.xlu0 %v5297, 119
    %v5664 = vpop.permute.xlu0 %5663
    %5665 = vrot.lane.b32.xlu0 %v5298, 119
    %v5666 = vpop.permute.xlu0 %5665
    %5667 = vrot.lane.b32.xlu0 %v5299, 119
    %v5668 = vpop.permute.xlu0 %5667
    %5669 = vrot.lane.b32.xlu0 %v5300, 119
    %v5670 = vpop.permute.xlu0 %5669
    %5671 = vrot.lane.b32.xlu0 %v5301, 119
    %v5672 = vpop.permute.xlu0 %5671
    %5673 = vrot.lane.b32.xlu0 %v5302, 119
    %v5674 = vpop.permute.xlu0 %5673
    %5675 = vrot.lane.b32.xlu0 %v5303, 119
    %v5676 = vpop.permute.xlu0 %5675
    %5677 = vrot.lane.b32.xlu0 %v5304, 119
    %v5678 = vpop.permute.xlu0 %5677
    %v5679 = vsel %vm3225, %v5664, %v5666
    %v5680 = vsel %vm3225, %v5668, %v5670
    %v5681 = vsel %vm3225, %v5672, %v5674
    %v5682 = vsel %vm3225, %v5676, %v5678
    %v5688 = vsel %vm3483, %v5661, 0
    %v5691 = vsel %vm3483, %v5662, 0
    %5693 = vmatprep.subr.mxu0 0.0
    %5694 = vmatpush1.msra.mxu0 %v5679
    %5695 = vmatprep.subr.mxu0 0.0
    %5696 = vmatpush1.msra.mxu0 %v5680
    %5697 = vmatprep.subr.mxu0 0.0
    %5698 = vmatpush1.msra.mxu0 %v5681
    %5699 = vmatprep.subr.mxu0 0.0
    %5700 = vmatpush1.msra.mxu0 %v5682
    %5701 = vmatprep.subr.mxu0 0.0
    %5702 = vmatpush1.msra.mxu0 0.0
    %5703 = vmatprep.subr.mxu0 0.0
    %5704 = vmatpush1.msra.mxu0 0.0
    %5705 = vmatprep.subr.mxu0 0.0
    %5706 = vmatpush1.msra.mxu0 0.0
    %5707 = vmatprep.subr.mxu0 0.0
    %5708 = vmatpush1.msra.mxu0 0.0
    %5709 = vmatprep.subr.mxu0 0.0
    %5710 = vmatpush1.msra.mxu0 0.0
    %5711 = vmatprep.subr.mxu0 0.0
    %5712 = vmatpush1.msra.mxu0 0.0
    %5713 = vmatprep.subr.mxu0 0.0
    %5714 = vmatpush1.msra.mxu0 0.0
    %5715 = vmatprep.subr.mxu0 0.0
    %5716 = vmatpush1.msra.mxu0 0.0
    %5717 = vmatprep.subr.mxu0 0.0
    %5718 = vmatpush1.msra.mxu0 0.0
    %5719 = vmatprep.subr.mxu0 0.0
    %5720 = vmatpush1.msra.mxu0 0.0
    %5721 = vmatprep.subr.mxu0 0.0
    %5722 = vmatpush1.msra.mxu0 0.0
    %5723 = vmatprep.subr.mxu0 0.0
    %5724 = vmatpush1.msra.mxu0 0.0
    %5725 = vmatprep.subr.mxu0 0.0
    %5726 = vmatpush1.msra.mxu0 0.0
    %5727 = vmatprep.subr.mxu0 0.0
    %5728 = vmatpush1.msra.mxu0 0.0
    %5729 = vmatprep.subr.mxu0 0.0
    %5730 = vmatpush1.msra.mxu0 0.0
    %5731 = vmatprep.subr.mxu0 0.0
    %5732 = vmatpush1.msra.mxu0 0.0
    %5733 = vmatprep.subr.mxu0 0.0
    %5734 = vmatpush1.msra.mxu0 0.0
    %5735 = vmatprep.subr.mxu0 0.0
    %5736 = vmatpush1.msra.mxu0 0.0
    %5737 = vmatprep.subr.mxu0 0.0
    %5738 = vmatpush1.msra.mxu0 0.0
    %5739 = vmatprep.subr.mxu0 0.0
    %5740 = vmatpush1.msra.mxu0 0.0
    %5741 = vmatprep.subr.mxu0 0.0
    %5742 = vmatpush1.msra.mxu0 0.0
    %5743 = vmatprep.subr.mxu0 0.0
    %5744 = vmatpush1.msra.mxu0 0.0
    %5745 = vmatprep.subr.mxu0 0.0
    %5746 = vmatpush1.msra.mxu0 0.0
    %5747 = vmatprep.subr.mxu0 0.0
    %5748 = vmatpush1.msra.mxu0 0.0
    %5749 = vmatprep.subr.mxu0 0.0
    %5750 = vmatpush1.msra.mxu0 0.0
    %5751 = vmatprep.subr.mxu0 0.0
    %5752 = vmatpush1.msra.mxu0 0.0
    %5753 = vmatprep.subr.mxu0 0.0
    %5754 = vmatpush1.msra.mxu0 0.0
    %5755 = vmatprep.subr.mxu0 0.0
    %5756 = vmatpush1.msra.mxu0 0.0
    %5757 = vmatprep.mubr.f32.mxu0 0.0
    %5758 = vmatmul.mubr.f32.gmra.mrb[0].mxu0 %v5688
    %v5759 = vpop.f32.mrb[0].mxu0
    %v5760 = vadd.f32 0.0, %v5759
    %v5761 = vpop.f32.mrb[0].mxu0
    %5762 = vmatprep.mubr.f32.mxu0 0.0
    %5763 = vmatmul.mubr.f32.gmra.mrb[0].mxu0 %v5691
    %v5764 = vpop.f32.mrb[0].mxu0
    %v5765 = vadd.f32 0.0, %v5764
    %v5766 = vpop.f32.mrb[0].mxu0
    %5767 = vdwg.mxu0
    %v5768 = vld [vmem:[#allocation28 + $0x8] sm:$0x1]
    %v5769 = vlaneseq
    %v5770 = vshrl.u32 %v5769, 7
    %v5771 = vsub.s32 0, %v5770
    %v5772 = vrot.slane %v5768, %v5771
    %v5773 = vmul.f32 %v5760, %v5772
    %v5774 = vmul.f32 %v5765, %v5772
    %v5775 = vadd.f32 %v5659, %v5773
    %v5776 = vadd.f32 %v5660, %v5774
    %v5777 = vld [vmem:[#allocation4] sm:$0xff]
    %v5778 = vld [vmem:[#allocation4 + $0x8] sm:$0xff]
    %v5779 = vld [vmem:[#allocation4 + $0x18] sm:$0xff]
    %v5780 = vld [vmem:[#allocation4 + $0x20] sm:$0xff]
    %v5781 = vld [vmem:[#allocation19] sm:$0xff]
    %v5782 = vld [vmem:[#allocation19 + $0x8] sm:$0xff]
    %5787 = vrot.lane.b32.xlu0 %v5777, 9
    %v5788 = vpop.permute.xlu0 %5787
    %5789 = vrot.lane.b32.xlu0 %v5778, 9
    %v5790 = vpop.permute.xlu0 %5789
    %5791 = vrot.lane.b32.xlu0 %v5779, 9
    %v5792 = vpop.permute.xlu0 %5791
    %5793 = vrot.lane.b32.xlu0 %v5780, 9
    %v5794 = vpop.permute.xlu0 %5793
    %v5795 = vsel %vm2447, %v5788, %v5790
    %v5796 = vsel %vm2447, %v5792, %v5794
    %v5800 = vsel %vm535, %v5781, 0
    %v5803 = vsel %vm535, %v5782, 0
    %5805 = vmatprep.subr.mxu0 0.0
    %5806 = vmatpush1.msra.mxu0 %v5795
    %5807 = vmatprep.subr.mxu0 0.0
    %5808 = vmatpush1.msra.mxu0 %v5796
    %5809 = vmatprep.subr.mxu0 0.0
    %5810 = vmatpush1.msra.mxu0 0.0
    %5811 = vmatprep.subr.mxu0 0.0
    %5812 = vmatpush1.msra.mxu0 0.0
    %5813 = vmatprep.subr.mxu0 0.0
    %5814 = vmatpush1.msra.mxu0 0.0
    %5815 = vmatprep.subr.mxu0 0.0
    %5816 = vmatpush1.msra.mxu0 0.0
    %5817 = vmatprep.subr.mxu0 0.0
    %5818 = vmatpush1.msra.mxu0 0.0
    %5819 = vmatprep.subr.mxu0 0.0
    %5820 = vmatpush1.msra.mxu0 0.0
    %5821 = vmatprep.subr.mxu0 0.0
    %5822 = vmatpush1.msra.mxu0 0.0
    %5823 = vmatprep.subr.mxu0 0.0
    %5824 = vmatpush1.msra.mxu0 0.0
    %5825 = vmatprep.subr.mxu0 0.0
    %5826 = vmatpush1.msra.mxu0 0.0
    %5827 = vmatprep.subr.mxu0 0.0
    %5828 = vmatpush1.msra.mxu0 0.0
    %5829 = vmatprep.subr.mxu0 0.0
    %5830 = vmatpush1.msra.mxu0 0.0
    %5831 = vmatprep.subr.mxu0 0.0
    %5832 = vmatpush1.msra.mxu0 0.0
    %5833 = vmatprep.subr.mxu0 0.0
    %5834 = vmatpush1.msra.mxu0 0.0
    %5835 = vmatprep.subr.mxu0 0.0
    %5836 = vmatpush1.msra.mxu0 0.0
    %5837 = vmatprep.subr.mxu0 0.0
    %5838 = vmatpush1.msra.mxu0 0.0
    %5839 = vmatprep.subr.mxu0 0.0
    %5840 = vmatpush1.msra.mxu0 0.0
    %5841 = vmatprep.subr.mxu0 0.0
    %5842 = vmatpush1.msra.mxu0 0.0
    %5843 = vmatprep.subr.mxu0 0.0
    %5844 = vmatpush1.msra.mxu0 0.0
    %5845 = vmatprep.subr.mxu0 0.0
    %5846 = vmatpush1.msra.mxu0 0.0
    %5847 = vmatprep.subr.mxu0 0.0
    %5848 = vmatpush1.msra.mxu0 0.0
    %5849 = vmatprep.subr.mxu0 0.0
    %5850 = vmatpush1.msra.mxu0 0.0
    %5851 = vmatprep.subr.mxu0 0.0
    %5852 = vmatpush1.msra.mxu0 0.0
    %5853 = vmatprep.subr.mxu0 0.0
    %5854 = vmatpush1.msra.mxu0 0.0
    %5855 = vmatprep.subr.mxu0 0.0
    %5856 = vmatpush1.msra.mxu0 0.0
    %5857 = vmatprep.subr.mxu0 0.0
    %5858 = vmatpush1.msra.mxu0 0.0
    %5859 = vmatprep.subr.mxu0 0.0
    %5860 = vmatpush1.msra.mxu0 0.0
    %5861 = vmatprep.subr.mxu0 0.0
    %5862 = vmatpush1.msra.mxu0 0.0
    %5863 = vmatprep.subr.mxu0 0.0
    %5864 = vmatpush1.msra.mxu0 0.0
    %5865 = vmatprep.subr.mxu0 0.0
    %5866 = vmatpush1.msra.mxu0 0.0
    %5867 = vmatprep.subr.mxu0 0.0
    %5868 = vmatpush1.msra.mxu0 0.0
    %5869 = vmatprep.mubr.f32.mxu0 0.0
    %5870 = vmatmul.mubr.f32.gmra.mrb[0].mxu0 %v5800
    %v5871 = vpop.f32.mrb[0].mxu0
    %v5872 = vadd.f32 0.0, %v5871
    %v5873 = vpop.f32.mrb[0].mxu0
    %5874 = vmatprep.mubr.f32.mxu0 0.0
    %5875 = vmatmul.mubr.f32.gmra.mrb[0].mxu0 %v5803
    %v5876 = vpop.f32.mrb[0].mxu0
    %v5877 = vadd.f32 0.0, %v5876
    %v5878 = vpop.f32.mrb[0].mxu0
    %5879 = vdwg.mxu0
    %v5880 = vmul.f32 %v5872, %v4861
    %v5881 = vmul.f32 %v5877, %v4861
    %v5882 = vld [vmem:[#allocation19 + $0x10] sm:$0xff]
    %v5883 = vld [vmem:[#allocation19 + $0x18] sm:$0xff]
    %5884 = vrot.lane.b32.xlu0 %v5777, 8
    %v5885 = vpop.permute.xlu0 %5884
    %5886 = vrot.lane.b32.xlu0 %v5778, 8
    %v5887 = vpop.permute.xlu0 %5886
    %5888 = vrot.lane.b32.xlu0 %v5779, 8
    %v5889 = vpop.permute.xlu0 %5888
    %5890 = vrot.lane.b32.xlu0 %v5780, 8
    %v5891 = vpop.permute.xlu0 %5890
    %v5892 = vsel %vm2450, %v5885, %v5887
    %v5893 = vsel %vm2450, %v5889, %v5891
    %v5897 = vsel %vm535, %v5882, 0
    %v5900 = vsel %vm535, %v5883, 0
    %5902 = vmatprep.subr.mxu0 0.0
    %5903 = vmatpush1.msra.mxu0 %v5892
    %5904 = vmatprep.subr.mxu0 0.0
    %5905 = vmatpush1.msra.mxu0 %v5893
    %5906 = vmatprep.subr.mxu0 0.0
    %5907 = vmatpush1.msra.mxu0 0.0
    %5908 = vmatprep.subr.mxu0 0.0
    %5909 = vmatpush1.msra.mxu0 0.0
    %5910 = vmatprep.subr.mxu0 0.0
    %5911 = vmatpush1.msra.mxu0 0.0
    %5912 = vmatprep.subr.mxu0 0.0
    %5913 = vmatpush1.msra.mxu0 0.0
    %5914 = vmatprep.subr.mxu0 0.0
    %5915 = vmatpush1.msra.mxu0 0.0
    %5916 = vmatprep.subr.mxu0 0.0
    %5917 = vmatpush1.msra.mxu0 0.0
    %5918 = vmatprep.subr.mxu0 0.0
    %5919 = vmatpush1.msra.mxu0 0.0
    %5920 = vmatprep.subr.mxu0 0.0
    %5921 = vmatpush1.msra.mxu0 0.0
    %5922 = vmatprep.subr.mxu0 0.0
    %5923 = vmatpush1.msra.mxu0 0.0
    %5924 = vmatprep.subr.mxu0 0.0
    %5925 = vmatpush1.msra.mxu0 0.0
    %5926 = vmatprep.subr.mxu0 0.0
    %5927 = vmatpush1.msra.mxu0 0.0
    %5928 = vmatprep.subr.mxu0 0.0
    %5929 = vmatpush1.msra.mxu0 0.0
    %5930 = vmatprep.subr.mxu0 0.0
    %5931 = vmatpush1.msra.mxu0 0.0
    %5932 = vmatprep.subr.mxu0 0.0
    %5933 = vmatpush1.msra.mxu0 0.0
    %5934 = vmatprep.subr.mxu0 0.0
    %5935 = vmatpush1.msra.mxu0 0.0
    %5936 = vmatprep.subr.mxu0 0.0
    %5937 = vmatpush1.msra.mxu0 0.0
    %5938 = vmatprep.subr.mxu0 0.0
    %5939 = vmatpush1.msra.mxu0 0.0
    %5940 = vmatprep.subr.mxu0 0.0
    %5941 = vmatpush1.msra.mxu0 0.0
    %5942 = vmatprep.subr.mxu0 0.0
    %5943 = vmatpush1.msra.mxu0 0.0
    %5944 = vmatprep.subr.mxu0 0.0
    %5945 = vmatpush1.msra.mxu0 0.0
    %5946 = vmatprep.subr.mxu0 0.0
    %5947 = vmatpush1.msra.mxu0 0.0
    %5948 = vmatprep.subr.mxu0 0.0
    %5949 = vmatpush1.msra.mxu0 0.0
    %5950 = vmatprep.subr.mxu0 0.0
    %5951 = vmatpush1.msra.mxu0 0.0
    %5952 = vmatprep.subr.mxu0 0.0
    %5953 = vmatpush1.msra.mxu0 0.0
    %5954 = vmatprep.subr.mxu0 0.0
    %5955 = vmatpush1.msra.mxu0 0.0
    %5956 = vmatprep.subr.mxu0 0.0
    %5957 = vmatpush1.msra.mxu0 0.0
    %5958 = vmatprep.subr.mxu0 0.0
    %5959 = vmatpush1.msra.mxu0 0.0
    %5960 = vmatprep.subr.mxu0 0.0
    %5961 = vmatpush1.msra.mxu0 0.0
    %5962 = vmatprep.subr.mxu0 0.0
    %5963 = vmatpush1.msra.mxu0 0.0
    %5964 = vmatprep.subr.mxu0 0.0
    %5965 = vmatpush1.msra.mxu0 0.0
    %5966 = vmatprep.mubr.f32.mxu0 0.0
    %5967 = vmatmul.mubr.f32.gmra.mrb[0].mxu0 %v5897
    %v5968 = vpop.f32.mrb[0].mxu0
    %v5969 = vadd.f32 0.0, %v5968
    %v5970 = vpop.f32.mrb[0].mxu0
    %5971 = vmatprep.mubr.f32.mxu0 0.0
    %5972 = vmatmul.mubr.f32.gmra.mrb[0].mxu0 %v5900
    %v5973 = vpop.f32.mrb[0].mxu0
    %v5974 = vadd.f32 0.0, %v5973
    %v5975 = vpop.f32.mrb[0].mxu0
    %5976 = vdwg.mxu0
    %v5977 = vmul.f32 %v5969, %v4975
    %v5978 = vmul.f32 %v5974, %v4975
    %v5979 = vadd.f32 %v5880, %v5977
    %v5980 = vadd.f32 %v5881, %v5978
    %v5981 = vld [vmem:[#allocation19 + $0x20] sm:$0xff]
    %v5982 = vld [vmem:[#allocation19 + $0x28] sm:$0xff]
    %5983 = vrot.lane.b32.xlu0 %v5777, 7
    %v5984 = vpop.permute.xlu0 %5983
    %5985 = vrot.lane.b32.xlu0 %v5778, 7
    %v5986 = vpop.permute.xlu0 %5985
    %5987 = vrot.lane.b32.xlu0 %v5779, 7
    %v5988 = vpop.permute.xlu0 %5987
    %5989 = vrot.lane.b32.xlu0 %v5780, 7
    %v5990 = vpop.permute.xlu0 %5989
    %v5991 = vsel %vm2643, %v5984, %v5986
    %v5992 = vsel %vm2643, %v5988, %v5990
    %v5996 = vsel %vm535, %v5981, 0
    %v5999 = vsel %vm535, %v5982, 0
    %6001 = vmatprep.subr.mxu0 0.0
    %6002 = vmatpush1.msra.mxu0 %v5991
    %6003 = vmatprep.subr.mxu0 0.0
    %6004 = vmatpush1.msra.mxu0 %v5992
    %6005 = vmatprep.subr.mxu0 0.0
    %6006 = vmatpush1.msra.mxu0 0.0
    %6007 = vmatprep.subr.mxu0 0.0
    %6008 = vmatpush1.msra.mxu0 0.0
    %6009 = vmatprep.subr.mxu0 0.0
    %6010 = vmatpush1.msra.mxu0 0.0
    %6011 = vmatprep.subr.mxu0 0.0
    %6012 = vmatpush1.msra.mxu0 0.0
    %6013 = vmatprep.subr.mxu0 0.0
    %6014 = vmatpush1.msra.mxu0 0.0
    %6015 = vmatprep.subr.mxu0 0.0
    %6016 = vmatpush1.msra.mxu0 0.0
    %6017 = vmatprep.subr.mxu0 0.0
    %6018 = vmatpush1.msra.mxu0 0.0
    %6019 = vmatprep.subr.mxu0 0.0
    %6020 = vmatpush1.msra.mxu0 0.0
    %6021 = vmatprep.subr.mxu0 0.0
    %6022 = vmatpush1.msra.mxu0 0.0
    %6023 = vmatprep.subr.mxu0 0.0
    %6024 = vmatpush1.msra.mxu0 0.0
    %6025 = vmatprep.subr.mxu0 0.0
    %6026 = vmatpush1.msra.mxu0 0.0
    %6027 = vmatprep.subr.mxu0 0.0
    %6028 = vmatpush1.msra.mxu0 0.0
    %6029 = vmatprep.subr.mxu0 0.0
    %6030 = vmatpush1.msra.mxu0 0.0
    %6031 = vmatprep.subr.mxu0 0.0
    %6032 = vmatpush1.msra.mxu0 0.0
    %6033 = vmatprep.subr.mxu0 0.0
    %6034 = vmatpush1.msra.mxu0 0.0
    %6035 = vmatprep.subr.mxu0 0.0
    %6036 = vmatpush1.msra.mxu0 0.0
    %6037 = vmatprep.subr.mxu0 0.0
    %6038 = vmatpush1.msra.mxu0 0.0
    %6039 = vmatprep.subr.mxu0 0.0
    %6040 = vmatpush1.msra.mxu0 0.0
    %6041 = vmatprep.subr.mxu0 0.0
    %6042 = vmatpush1.msra.mxu0 0.0
    %6043 = vmatprep.subr.mxu0 0.0
    %6044 = vmatpush1.msra.mxu0 0.0
    %6045 = vmatprep.subr.mxu0 0.0
    %6046 = vmatpush1.msra.mxu0 0.0
    %6047 = vmatprep.subr.mxu0 0.0
    %6048 = vmatpush1.msra.mxu0 0.0
    %6049 = vmatprep.subr.mxu0 0.0
    %6050 = vmatpush1.msra.mxu0 0.0
    %6051 = vmatprep.subr.mxu0 0.0
    %6052 = vmatpush1.msra.mxu0 0.0
    %6053 = vmatprep.subr.mxu0 0.0
    %6054 = vmatpush1.msra.mxu0 0.0
    %6055 = vmatprep.subr.mxu0 0.0
    %6056 = vmatpush1.msra.mxu0 0.0
    %6057 = vmatprep.subr.mxu0 0.0
    %6058 = vmatpush1.msra.mxu0 0.0
    %6059 = vmatprep.subr.mxu0 0.0
    %6060 = vmatpush1.msra.mxu0 0.0
    %6061 = vmatprep.subr.mxu0 0.0
    %6062 = vmatpush1.msra.mxu0 0.0
    %6063 = vmatprep.subr.mxu0 0.0
    %6064 = vmatpush1.msra.mxu0 0.0
    %6065 = vmatprep.mubr.f32.mxu0 0.0
    %6066 = vmatmul.mubr.f32.gmra.mrb[0].mxu0 %v5996
    %v6067 = vpop.f32.mrb[0].mxu0
    %v6068 = vadd.f32 0.0, %v6067
    %v6069 = vpop.f32.mrb[0].mxu0
    %6070 = vmatprep.mubr.f32.mxu0 0.0
    %6071 = vmatmul.mubr.f32.gmra.mrb[0].mxu0 %v5999
    %v6072 = vpop.f32.mrb[0].mxu0
    %v6073 = vadd.f32 0.0, %v6072
    %v6074 = vpop.f32.mrb[0].mxu0
    %6075 = vdwg.mxu0
    %v6076 = vmul.f32 %v6068, %v5091
    %v6077 = vmul.f32 %v6073, %v5091
    %v6078 = vadd.f32 %v5979, %v6076
    %v6079 = vadd.f32 %v5980, %v6077
    %v6080 = vld [vmem:[#allocation19 + $0x30] sm:$0xff]
    %v6081 = vld [vmem:[#allocation19 + $0x38] sm:$0xff]
    %6082 = vrot.lane.b32.xlu0 %v5777, 1
    %v6083 = vpop.permute.xlu0 %6082
    %6084 = vrot.lane.b32.xlu0 %v5778, 1
    %v6085 = vpop.permute.xlu0 %6084
    %6086 = vrot.lane.b32.xlu0 %v5779, 1
    %v6087 = vpop.permute.xlu0 %6086
    %6088 = vrot.lane.b32.xlu0 %v5780, 1
    %v6089 = vpop.permute.xlu0 %6088
    %v6090 = vsel %vm951, %v6083, %v6085
    %v6091 = vsel %vm951, %v6087, %v6089
    %v6095 = vsel %vm535, %v6080, 0
    %v6098 = vsel %vm535, %v6081, 0
    %6100 = vmatprep.subr.mxu0 0.0
    %6101 = vmatpush1.msra.mxu0 %v6090
    %6102 = vmatprep.subr.mxu0 0.0
    %6103 = vmatpush1.msra.mxu0 %v6091
    %6104 = vmatprep.subr.mxu0 0.0
    %6105 = vmatpush1.msra.mxu0 0.0
    %6106 = vmatprep.subr.mxu0 0.0
    %6107 = vmatpush1.msra.mxu0 0.0
    %6108 = vmatprep.subr.mxu0 0.0
    %6109 = vmatpush1.msra.mxu0 0.0
    %6110 = vmatprep.subr.mxu0 0.0
    %6111 = vmatpush1.msra.mxu0 0.0
    %6112 = vmatprep.subr.mxu0 0.0
    %6113 = vmatpush1.msra.mxu0 0.0
    %6114 = vmatprep.subr.mxu0 0.0
    %6115 = vmatpush1.msra.mxu0 0.0
    %6116 = vmatprep.subr.mxu0 0.0
    %6117 = vmatpush1.msra.mxu0 0.0
    %6118 = vmatprep.subr.mxu0 0.0
    %6119 = vmatpush1.msra.mxu0 0.0
    %6120 = vmatprep.subr.mxu0 0.0
    %6121 = vmatpush1.msra.mxu0 0.0
    %6122 = vmatprep.subr.mxu0 0.0
    %6123 = vmatpush1.msra.mxu0 0.0
    %6124 = vmatprep.subr.mxu0 0.0
    %6125 = vmatpush1.msra.mxu0 0.0
    %6126 = vmatprep.subr.mxu0 0.0
    %6127 = vmatpush1.msra.mxu0 0.0
    %6128 = vmatprep.subr.mxu0 0.0
    %6129 = vmatpush1.msra.mxu0 0.0
    %6130 = vmatprep.subr.mxu0 0.0
    %6131 = vmatpush1.msra.mxu0 0.0
    %6132 = vmatprep.subr.mxu0 0.0
    %6133 = vmatpush1.msra.mxu0 0.0
    %6134 = vmatprep.subr.mxu0 0.0
    %6135 = vmatpush1.msra.mxu0 0.0
    %6136 = vmatprep.subr.mxu0 0.0
    %6137 = vmatpush1.msra.mxu0 0.0
    %6138 = vmatprep.subr.mxu0 0.0
    %6139 = vmatpush1.msra.mxu0 0.0
    %6140 = vmatprep.subr.mxu0 0.0
    %6141 = vmatpush1.msra.mxu0 0.0
    %6142 = vmatprep.subr.mxu0 0.0
    %6143 = vmatpush1.msra.mxu0 0.0
    %6144 = vmatprep.subr.mxu0 0.0
    %6145 = vmatpush1.msra.mxu0 0.0
    %6146 = vmatprep.subr.mxu0 0.0
    %6147 = vmatpush1.msra.mxu0 0.0
    %6148 = vmatprep.subr.mxu0 0.0
    %6149 = vmatpush1.msra.mxu0 0.0
    %6150 = vmatprep.subr.mxu0 0.0
    %6151 = vmatpush1.msra.mxu0 0.0
    %6152 = vmatprep.subr.mxu0 0.0
    %6153 = vmatpush1.msra.mxu0 0.0
    %6154 = vmatprep.subr.mxu0 0.0
    %6155 = vmatpush1.msra.mxu0 0.0
    %6156 = vmatprep.subr.mxu0 0.0
    %6157 = vmatpush1.msra.mxu0 0.0
    %6158 = vmatprep.subr.mxu0 0.0
    %6159 = vmatpush1.msra.mxu0 0.0
    %6160 = vmatprep.subr.mxu0 0.0
    %6161 = vmatpush1.msra.mxu0 0.0
    %6162 = vmatprep.subr.mxu0 0.0
    %6163 = vmatpush1.msra.mxu0 0.0
    %6164 = vmatprep.mubr.f32.mxu0 0.0
    %6165 = vmatmul.mubr.f32.gmra.mrb[0].mxu0 %v6095
    %v6166 = vpop.f32.mrb[0].mxu0
    %v6167 = vadd.f32 0.0, %v6166
    %v6168 = vpop.f32.mrb[0].mxu0
    %6169 = vmatprep.mubr.f32.mxu0 0.0
    %6170 = vmatmul.mubr.f32.gmra.mrb[0].mxu0 %v6098
    %v6171 = vpop.f32.mrb[0].mxu0
    %v6172 = vadd.f32 0.0, %v6171
    %v6173 = vpop.f32.mrb[0].mxu0
    %6174 = vdwg.mxu0
    %v6175 = vmul.f32 %v6167, %v5207
    %v6176 = vmul.f32 %v6172, %v5207
    %v6177 = vadd.f32 %v6078, %v6175
    %v6178 = vadd.f32 %v6079, %v6176
    %v6179 = vld [vmem:[#allocation19 + $0x40] sm:$0xff]
    %v6180 = vld [vmem:[#allocation19 + $0x48] sm:$0xff]
    %v6182 = vsel %vm535, %v6179, 0
    %v6185 = vsel %vm535, %v6180, 0
    %6187 = vmatprep.subr.mxu0 0.0
    %6188 = vmatpush1.msra.mxu0 %v5778
    %6189 = vmatprep.subr.mxu0 0.0
    %6190 = vmatpush1.msra.mxu0 %v5780
    %6191 = vmatprep.subr.mxu0 0.0
    %6192 = vmatpush1.msra.mxu0 0.0
    %6193 = vmatprep.subr.mxu0 0.0
    %6194 = vmatpush1.msra.mxu0 0.0
    %6195 = vmatprep.subr.mxu0 0.0
    %6196 = vmatpush1.msra.mxu0 0.0
    %6197 = vmatprep.subr.mxu0 0.0
    %6198 = vmatpush1.msra.mxu0 0.0
    %6199 = vmatprep.subr.mxu0 0.0
    %6200 = vmatpush1.msra.mxu0 0.0
    %6201 = vmatprep.subr.mxu0 0.0
    %6202 = vmatpush1.msra.mxu0 0.0
    %6203 = vmatprep.subr.mxu0 0.0
    %6204 = vmatpush1.msra.mxu0 0.0
    %6205 = vmatprep.subr.mxu0 0.0
    %6206 = vmatpush1.msra.mxu0 0.0
    %6207 = vmatprep.subr.mxu0 0.0
    %6208 = vmatpush1.msra.mxu0 0.0
    %6209 = vmatprep.subr.mxu0 0.0
    %6210 = vmatpush1.msra.mxu0 0.0
    %6211 = vmatprep.subr.mxu0 0.0
    %6212 = vmatpush1.msra.mxu0 0.0
    %6213 = vmatprep.subr.mxu0 0.0
    %6214 = vmatpush1.msra.mxu0 0.0
    %6215 = vmatprep.subr.mxu0 0.0
    %6216 = vmatpush1.msra.mxu0 0.0
    %6217 = vmatprep.subr.mxu0 0.0
    %6218 = vmatpush1.msra.mxu0 0.0
    %6219 = vmatprep.subr.mxu0 0.0
    %6220 = vmatpush1.msra.mxu0 0.0
    %6221 = vmatprep.subr.mxu0 0.0
    %6222 = vmatpush1.msra.mxu0 0.0
    %6223 = vmatprep.subr.mxu0 0.0
    %6224 = vmatpush1.msra.mxu0 0.0
    %6225 = vmatprep.subr.mxu0 0.0
    %6226 = vmatpush1.msra.mxu0 0.0
    %6227 = vmatprep.subr.mxu0 0.0
    %6228 = vmatpush1.msra.mxu0 0.0
    %6229 = vmatprep.subr.mxu0 0.0
    %6230 = vmatpush1.msra.mxu0 0.0
    %6231 = vmatprep.subr.mxu0 0.0
    %6232 = vmatpush1.msra.mxu0 0.0
    %6233 = vmatprep.subr.mxu0 0.0
    %6234 = vmatpush1.msra.mxu0 0.0
    %6235 = vmatprep.subr.mxu0 0.0
    %6236 = vmatpush1.msra.mxu0 0.0
    %6237 = vmatprep.subr.mxu0 0.0
    %6238 = vmatpush1.msra.mxu0 0.0
    %6239 = vmatprep.subr.mxu0 0.0
    %6240 = vmatpush1.msra.mxu0 0.0
    %6241 = vmatprep.subr.mxu0 0.0
    %6242 = vmatpush1.msra.mxu0 0.0
    %6243 = vmatprep.subr.mxu0 0.0
    %6244 = vmatpush1.msra.mxu0 0.0
    %6245 = vmatprep.subr.mxu0 0.0
    %6246 = vmatpush1.msra.mxu0 0.0
    %6247 = vmatprep.subr.mxu0 0.0
    %6248 = vmatpush1.msra.mxu0 0.0
    %6249 = vmatprep.subr.mxu0 0.0
    %6250 = vmatpush1.msra.mxu0 0.0
    %6251 = vmatprep.mubr.f32.mxu0 0.0
    %6252 = vmatmul.mubr.f32.gmra.mrb[0].mxu0 %v6182
    %v6253 = vpop.f32.mrb[0].mxu0
    %v6254 = vadd.f32 0.0, %v6253
    %v6255 = vpop.f32.mrb[0].mxu0
    %6256 = vmatprep.mubr.f32.mxu0 0.0
    %6257 = vmatmul.mubr.f32.gmra.mrb[0].mxu0 %v6185
    %v6258 = vpop.f32.mrb[0].mxu0
    %v6259 = vadd.f32 0.0, %v6258
    %v6260 = vpop.f32.mrb[0].mxu0
    %6261 = vdwg.mxu0
    %v6262 = vadd.f32 %v6177, %v6254
    %v6263 = vadd.f32 %v6178, %v6259
    %v6264 = vld [vmem:[#allocation4 + $0x8] sm:$0xff]
    %v6265 = vld [vmem:[#allocation4 + $0x10] sm:$0xff]
    %v6266 = vld [vmem:[#allocation4 + $0x20] sm:$0xff]
    %v6267 = vld [vmem:[#allocation4 + $0x28] sm:$0xff]
    %v6268 = vld [vmem:[#allocation19 + $0x50] sm:$0xff]
    %v6269 = vld [vmem:[#allocation19 + $0x58] sm:$0xff]
    %6274 = vrot.lane.b32.xlu0 %v6264, 127
    %v6275 = vpop.permute.xlu0 %6274
    %6276 = vrot.lane.b32.xlu0 %v6265, 127
    %v6277 = vpop.permute.xlu0 %6276
    %6278 = vrot.lane.b32.xlu0 %v6266, 127
    %v6279 = vpop.permute.xlu0 %6278
    %6280 = vrot.lane.b32.xlu0 %v6267, 127
    %v6281 = vpop.permute.xlu0 %6280
    %v6282 = vsel %vm1323, %v6275, %v6277
    %v6283 = vsel %vm1323, %v6279, %v6281
    %v6287 = vsel %vm535, %v6268, 0
    %v6290 = vsel %vm535, %v6269, 0
    %6292 = vmatprep.subr.mxu0 0.0
    %6293 = vmatpush1.msra.mxu0 %v6282
    %6294 = vmatprep.subr.mxu0 0.0
    %6295 = vmatpush1.msra.mxu0 %v6283
    %6296 = vmatprep.subr.mxu0 0.0
    %6297 = vmatpush1.msra.mxu0 0.0
    %6298 = vmatprep.subr.mxu0 0.0
    %6299 = vmatpush1.msra.mxu0 0.0
    %6300 = vmatprep.subr.mxu0 0.0
    %6301 = vmatpush1.msra.mxu0 0.0
    %6302 = vmatprep.subr.mxu0 0.0
    %6303 = vmatpush1.msra.mxu0 0.0
    %6304 = vmatprep.subr.mxu0 0.0
    %6305 = vmatpush1.msra.mxu0 0.0
    %6306 = vmatprep.subr.mxu0 0.0
    %6307 = vmatpush1.msra.mxu0 0.0
    %6308 = vmatprep.subr.mxu0 0.0
    %6309 = vmatpush1.msra.mxu0 0.0
    %6310 = vmatprep.subr.mxu0 0.0
    %6311 = vmatpush1.msra.mxu0 0.0
    %6312 = vmatprep.subr.mxu0 0.0
    %6313 = vmatpush1.msra.mxu0 0.0
    %6314 = vmatprep.subr.mxu0 0.0
    %6315 = vmatpush1.msra.mxu0 0.0
    %6316 = vmatprep.subr.mxu0 0.0
    %6317 = vmatpush1.msra.mxu0 0.0
    %6318 = vmatprep.subr.mxu0 0.0
    %6319 = vmatpush1.msra.mxu0 0.0
    %6320 = vmatprep.subr.mxu0 0.0
    %6321 = vmatpush1.msra.mxu0 0.0
    %6322 = vmatprep.subr.mxu0 0.0
    %6323 = vmatpush1.msra.mxu0 0.0
    %6324 = vmatprep.subr.mxu0 0.0
    %6325 = vmatpush1.msra.mxu0 0.0
    %6326 = vmatprep.subr.mxu0 0.0
    %6327 = vmatpush1.msra.mxu0 0.0
    %6328 = vmatprep.subr.mxu0 0.0
    %6329 = vmatpush1.msra.mxu0 0.0
    %6330 = vmatprep.subr.mxu0 0.0
    %6331 = vmatpush1.msra.mxu0 0.0
    %6332 = vmatprep.subr.mxu0 0.0
    %6333 = vmatpush1.msra.mxu0 0.0
    %6334 = vmatprep.subr.mxu0 0.0
    %6335 = vmatpush1.msra.mxu0 0.0
    %6336 = vmatprep.subr.mxu0 0.0
    %6337 = vmatpush1.msra.mxu0 0.0
    %6338 = vmatprep.subr.mxu0 0.0
    %6339 = vmatpush1.msra.mxu0 0.0
    %6340 = vmatprep.subr.mxu0 0.0
    %6341 = vmatpush1.msra.mxu0 0.0
    %6342 = vmatprep.subr.mxu0 0.0
    %6343 = vmatpush1.msra.mxu0 0.0
    %6344 = vmatprep.subr.mxu0 0.0
    %6345 = vmatpush1.msra.mxu0 0.0
    %6346 = vmatprep.subr.mxu0 0.0
    %6347 = vmatpush1.msra.mxu0 0.0
    %6348 = vmatprep.subr.mxu0 0.0
    %6349 = vmatpush1.msra.mxu0 0.0
    %6350 = vmatprep.subr.mxu0 0.0
    %6351 = vmatpush1.msra.mxu0 0.0
    %6352 = vmatprep.subr.mxu0 0.0
    %6353 = vmatpush1.msra.mxu0 0.0
    %6354 = vmatprep.subr.mxu0 0.0
    %6355 = vmatpush1.msra.mxu0 0.0
    %6356 = vmatprep.mubr.f32.mxu0 0.0
    %6357 = vmatmul.mubr.f32.gmra.mrb[0].mxu0 %v6287
    %v6358 = vpop.f32.mrb[0].mxu0
    %v6359 = vadd.f32 0.0, %v6358
    %v6360 = vpop.f32.mrb[0].mxu0
    %6361 = vmatprep.mubr.f32.mxu0 0.0
    %6362 = vmatmul.mubr.f32.gmra.mrb[0].mxu0 %v6290
    %v6363 = vpop.f32.mrb[0].mxu0
    %v6364 = vadd.f32 0.0, %v6363
    %v6365 = vpop.f32.mrb[0].mxu0
    %6366 = vdwg.mxu0
    %v6367 = vmul.f32 %v6359, %v5424
    %v6368 = vmul.f32 %v6364, %v5424
    %v6369 = vadd.f32 %v6262, %v6367
    %v6370 = vadd.f32 %v6263, %v6368
    %v6371 = vld [vmem:[#allocation19 + $0x60] sm:$0xff]
    %v6372 = vld [vmem:[#allocation19 + $0x68] sm:$0xff]
    %6373 = vrot.lane.b32.xlu0 %v6264, 121
    %v6374 = vpop.permute.xlu0 %6373
    %6375 = vrot.lane.b32.xlu0 %v6265, 121
    %v6376 = vpop.permute.xlu0 %6375
    %6377 = vrot.lane.b32.xlu0 %v6266, 121
    %v6378 = vpop.permute.xlu0 %6377
    %6379 = vrot.lane.b32.xlu0 %v6267, 121
    %v6380 = vpop.permute.xlu0 %6379
    %v6381 = vsel %vm3027, %v6374, %v6376
    %v6382 = vsel %vm3027, %v6378, %v6380
    %v6386 = vsel %vm535, %v6371, 0
    %v6389 = vsel %vm535, %v6372, 0
    %6391 = vmatprep.subr.mxu0 0.0
    %6392 = vmatpush1.msra.mxu0 %v6381
    %6393 = vmatprep.subr.mxu0 0.0
    %6394 = vmatpush1.msra.mxu0 %v6382
    %6395 = vmatprep.subr.mxu0 0.0
    %6396 = vmatpush1.msra.mxu0 0.0
    %6397 = vmatprep.subr.mxu0 0.0
    %6398 = vmatpush1.msra.mxu0 0.0
    %6399 = vmatprep.subr.mxu0 0.0
    %6400 = vmatpush1.msra.mxu0 0.0
    %6401 = vmatprep.subr.mxu0 0.0
    %6402 = vmatpush1.msra.mxu0 0.0
    %6403 = vmatprep.subr.mxu0 0.0
    %6404 = vmatpush1.msra.mxu0 0.0
    %6405 = vmatprep.subr.mxu0 0.0
    %6406 = vmatpush1.msra.mxu0 0.0
    %6407 = vmatprep.subr.mxu0 0.0
    %6408 = vmatpush1.msra.mxu0 0.0
    %6409 = vmatprep.subr.mxu0 0.0
    %6410 = vmatpush1.msra.mxu0 0.0
    %6411 = vmatprep.subr.mxu0 0.0
    %6412 = vmatpush1.msra.mxu0 0.0
    %6413 = vmatprep.subr.mxu0 0.0
    %6414 = vmatpush1.msra.mxu0 0.0
    %6415 = vmatprep.subr.mxu0 0.0
    %6416 = vmatpush1.msra.mxu0 0.0
    %6417 = vmatprep.subr.mxu0 0.0
    %6418 = vmatpush1.msra.mxu0 0.0
    %6419 = vmatprep.subr.mxu0 0.0
    %6420 = vmatpush1.msra.mxu0 0.0
    %6421 = vmatprep.subr.mxu0 0.0
    %6422 = vmatpush1.msra.mxu0 0.0
    %6423 = vmatprep.subr.mxu0 0.0
    %6424 = vmatpush1.msra.mxu0 0.0
    %6425 = vmatprep.subr.mxu0 0.0
    %6426 = vmatpush1.msra.mxu0 0.0
    %6427 = vmatprep.subr.mxu0 0.0
    %6428 = vmatpush1.msra.mxu0 0.0
    %6429 = vmatprep.subr.mxu0 0.0
    %6430 = vmatpush1.msra.mxu0 0.0
    %6431 = vmatprep.subr.mxu0 0.0
    %6432 = vmatpush1.msra.mxu0 0.0
    %6433 = vmatprep.subr.mxu0 0.0
    %6434 = vmatpush1.msra.mxu0 0.0
    %6435 = vmatprep.subr.mxu0 0.0
    %6436 = vmatpush1.msra.mxu0 0.0
    %6437 = vmatprep.subr.mxu0 0.0
    %6438 = vmatpush1.msra.mxu0 0.0
    %6439 = vmatprep.subr.mxu0 0.0
    %6440 = vmatpush1.msra.mxu0 0.0
    %6441 = vmatprep.subr.mxu0 0.0
    %6442 = vmatpush1.msra.mxu0 0.0
    %6443 = vmatprep.subr.mxu0 0.0
    %6444 = vmatpush1.msra.mxu0 0.0
    %6445 = vmatprep.subr.mxu0 0.0
    %6446 = vmatpush1.msra.mxu0 0.0
    %6447 = vmatprep.subr.mxu0 0.0
    %6448 = vmatpush1.msra.mxu0 0.0
    %6449 = vmatprep.subr.mxu0 0.0
    %6450 = vmatpush1.msra.mxu0 0.0
    %6451 = vmatprep.subr.mxu0 0.0
    %6452 = vmatpush1.msra.mxu0 0.0
    %6453 = vmatprep.subr.mxu0 0.0
    %6454 = vmatpush1.msra.mxu0 0.0
    %6455 = vmatprep.mubr.f32.mxu0 0.0
    %6456 = vmatmul.mubr.f32.gmra.mrb[0].mxu0 %v6386
    %v6457 = vpop.f32.mrb[0].mxu0
    %v6458 = vadd.f32 0.0, %v6457
    %v6459 = vpop.f32.mrb[0].mxu0
    %6460 = vmatprep.mubr.f32.mxu0 0.0
    %6461 = vmatmul.mubr.f32.gmra.mrb[0].mxu0 %v6389
    %v6462 = vpop.f32.mrb[0].mxu0
    %v6463 = vadd.f32 0.0, %v6462
    %v6464 = vpop.f32.mrb[0].mxu0
    %6465 = vdwg.mxu0
    %v6466 = vmul.f32 %v6458, %v5540
    %v6467 = vmul.f32 %v6463, %v5540
    %v6468 = vadd.f32 %v6369, %v6466
    %v6469 = vadd.f32 %v6370, %v6467
    %v6470 = vld [vmem:[#allocation19 + $0x70] sm:$0xff]
    %v6471 = vld [vmem:[#allocation19 + $0x78] sm:$0xff]
    %6472 = vrot.lane.b32.xlu0 %v6264, 120
    %v6473 = vpop.permute.xlu0 %6472
    %6474 = vrot.lane.b32.xlu0 %v6265, 120
    %v6475 = vpop.permute.xlu0 %6474
    %6476 = vrot.lane.b32.xlu0 %v6266, 120
    %v6477 = vpop.permute.xlu0 %6476
    %6478 = vrot.lane.b32.xlu0 %v6267, 120
    %v6479 = vpop.permute.xlu0 %6478
    %v6480 = vsel %vm3126, %v6473, %v6475
    %v6481 = vsel %vm3126, %v6477, %v6479
    %v6485 = vsel %vm535, %v6470, 0
    %v6488 = vsel %vm535, %v6471, 0
    %6490 = vmatprep.subr.mxu0 0.0
    %6491 = vmatpush1.msra.mxu0 %v6480
    %6492 = vmatprep.subr.mxu0 0.0
    %6493 = vmatpush1.msra.mxu0 %v6481
    %6494 = vmatprep.subr.mxu0 0.0
    %6495 = vmatpush1.msra.mxu0 0.0
    %6496 = vmatprep.subr.mxu0 0.0
    %6497 = vmatpush1.msra.mxu0 0.0
    %6498 = vmatprep.subr.mxu0 0.0
    %6499 = vmatpush1.msra.mxu0 0.0
    %6500 = vmatprep.subr.mxu0 0.0
    %6501 = vmatpush1.msra.mxu0 0.0
    %6502 = vmatprep.subr.mxu0 0.0
    %6503 = vmatpush1.msra.mxu0 0.0
    %6504 = vmatprep.subr.mxu0 0.0
    %6505 = vmatpush1.msra.mxu0 0.0
    %6506 = vmatprep.subr.mxu0 0.0
    %6507 = vmatpush1.msra.mxu0 0.0
    %6508 = vmatprep.subr.mxu0 0.0
    %6509 = vmatpush1.msra.mxu0 0.0
    %6510 = vmatprep.subr.mxu0 0.0
    %6511 = vmatpush1.msra.mxu0 0.0
    %6512 = vmatprep.subr.mxu0 0.0
    %6513 = vmatpush1.msra.mxu0 0.0
    %6514 = vmatprep.subr.mxu0 0.0
    %6515 = vmatpush1.msra.mxu0 0.0
    %6516 = vmatprep.subr.mxu0 0.0
    %6517 = vmatpush1.msra.mxu0 0.0
    %6518 = vmatprep.subr.mxu0 0.0
    %6519 = vmatpush1.msra.mxu0 0.0
    %6520 = vmatprep.subr.mxu0 0.0
    %6521 = vmatpush1.msra.mxu0 0.0
    %6522 = vmatprep.subr.mxu0 0.0
    %6523 = vmatpush1.msra.mxu0 0.0
    %6524 = vmatprep.subr.mxu0 0.0
    %6525 = vmatpush1.msra.mxu0 0.0
    %6526 = vmatprep.subr.mxu0 0.0
    %6527 = vmatpush1.msra.mxu0 0.0
    %6528 = vmatprep.subr.mxu0 0.0
    %6529 = vmatpush1.msra.mxu0 0.0
    %6530 = vmatprep.subr.mxu0 0.0
    %6531 = vmatpush1.msra.mxu0 0.0
    %6532 = vmatprep.subr.mxu0 0.0
    %6533 = vmatpush1.msra.mxu0 0.0
    %6534 = vmatprep.subr.mxu0 0.0
    %6535 = vmatpush1.msra.mxu0 0.0
    %6536 = vmatprep.subr.mxu0 0.0
    %6537 = vmatpush1.msra.mxu0 0.0
    %6538 = vmatprep.subr.mxu0 0.0
    %6539 = vmatpush1.msra.mxu0 0.0
    %6540 = vmatprep.subr.mxu0 0.0
    %6541 = vmatpush1.msra.mxu0 0.0
    %6542 = vmatprep.subr.mxu0 0.0
    %6543 = vmatpush1.msra.mxu0 0.0
    %6544 = vmatprep.subr.mxu0 0.0
    %6545 = vmatpush1.msra.mxu0 0.0
    %6546 = vmatprep.subr.mxu0 0.0
    %6547 = vmatpush1.msra.mxu0 0.0
    %6548 = vmatprep.subr.mxu0 0.0
    %6549 = vmatpush1.msra.mxu0 0.0
    %6550 = vmatprep.subr.mxu0 0.0
    %6551 = vmatpush1.msra.mxu0 0.0
    %6552 = vmatprep.subr.mxu0 0.0
    %6553 = vmatpush1.msra.mxu0 0.0
    %6554 = vmatprep.mubr.f32.mxu0 0.0
    %6555 = vmatmul.mubr.f32.gmra.mrb[0].mxu0 %v6485
    %v6556 = vpop.f32.mrb[0].mxu0
    %v6557 = vadd.f32 0.0, %v6556
    %v6558 = vpop.f32.mrb[0].mxu0
    %6559 = vmatprep.mubr.f32.mxu0 0.0
    %6560 = vmatmul.mubr.f32.gmra.mrb[0].mxu0 %v6488
    %v6561 = vpop.f32.mrb[0].mxu0
    %v6562 = vadd.f32 0.0, %v6561
    %v6563 = vpop.f32.mrb[0].mxu0
    %6564 = vdwg.mxu0
    %v6565 = vmul.f32 %v6557, %v5656
    %v6566 = vmul.f32 %v6562, %v5656
    %v6567 = vadd.f32 %v6468, %v6565
    %v6568 = vadd.f32 %v6469, %v6566
    %v6569 = vld [vmem:[#allocation19 + $0x80] sm:$0xff]
    %v6570 = vld [vmem:[#allocation19 + $0x88] sm:$0xff]
    %6571 = vrot.lane.b32.xlu0 %v6264, 119
    %v6572 = vpop.permute.xlu0 %6571
    %6573 = vrot.lane.b32.xlu0 %v6265, 119
    %v6574 = vpop.permute.xlu0 %6573
    %6575 = vrot.lane.b32.xlu0 %v6266, 119
    %v6576 = vpop.permute.xlu0 %6575
    %6577 = vrot.lane.b32.xlu0 %v6267, 119
    %v6578 = vpop.permute.xlu0 %6577
    %v6579 = vsel %vm3225, %v6572, %v6574
    %v6580 = vsel %vm3225, %v6576, %v6578
    %v6584 = vsel %vm535, %v6569, 0
    %v6587 = vsel %vm535, %v6570, 0
    %6589 = vmatprep.subr.mxu0 0.0
    %6590 = vmatpush1.msra.mxu0 %v6579
    %6591 = vmatprep.subr.mxu0 0.0
    %6592 = vmatpush1.msra.mxu0 %v6580
    %6593 = vmatprep.subr.mxu0 0.0
    %6594 = vmatpush1.msra.mxu0 0.0
    %6595 = vmatprep.subr.mxu0 0.0
    %6596 = vmatpush1.msra.mxu0 0.0
    %6597 = vmatprep.subr.mxu0 0.0
    %6598 = vmatpush1.msra.mxu0 0.0
    %6599 = vmatprep.subr.mxu0 0.0
    %6600 = vmatpush1.msra.mxu0 0.0
    %6601 = vmatprep.subr.mxu0 0.0
    %6602 = vmatpush1.msra.mxu0 0.0
    %6603 = vmatprep.subr.mxu0 0.0
    %6604 = vmatpush1.msra.mxu0 0.0
    %6605 = vmatprep.subr.mxu0 0.0
    %6606 = vmatpush1.msra.mxu0 0.0
    %6607 = vmatprep.subr.mxu0 0.0
    %6608 = vmatpush1.msra.mxu0 0.0
    %6609 = vmatprep.subr.mxu0 0.0
    %6610 = vmatpush1.msra.mxu0 0.0
    %6611 = vmatprep.subr.mxu0 0.0
    %6612 = vmatpush1.msra.mxu0 0.0
    %6613 = vmatprep.subr.mxu0 0.0
    %6614 = vmatpush1.msra.mxu0 0.0
    %6615 = vmatprep.subr.mxu0 0.0
    %6616 = vmatpush1.msra.mxu0 0.0
    %6617 = vmatprep.subr.mxu0 0.0
    %6618 = vmatpush1.msra.mxu0 0.0
    %6619 = vmatprep.subr.mxu0 0.0
    %6620 = vmatpush1.msra.mxu0 0.0
    %6621 = vmatprep.subr.mxu0 0.0
    %6622 = vmatpush1.msra.mxu0 0.0
    %6623 = vmatprep.subr.mxu0 0.0
    %6624 = vmatpush1.msra.mxu0 0.0
    %6625 = vmatprep.subr.mxu0 0.0
    %6626 = vmatpush1.msra.mxu0 0.0
    %6627 = vmatprep.subr.mxu0 0.0
    %6628 = vmatpush1.msra.mxu0 0.0
    %6629 = vmatprep.subr.mxu0 0.0
    %6630 = vmatpush1.msra.mxu0 0.0
    %6631 = vmatprep.subr.mxu0 0.0
    %6632 = vmatpush1.msra.mxu0 0.0
    %6633 = vmatprep.subr.mxu0 0.0
    %6634 = vmatpush1.msra.mxu0 0.0
    %6635 = vmatprep.subr.mxu0 0.0
    %6636 = vmatpush1.msra.mxu0 0.0
    %6637 = vmatprep.subr.mxu0 0.0
    %6638 = vmatpush1.msra.mxu0 0.0
    %6639 = vmatprep.subr.mxu0 0.0
    %6640 = vmatpush1.msra.mxu0 0.0
    %6641 = vmatprep.subr.mxu0 0.0
    %6642 = vmatpush1.msra.mxu0 0.0
    %6643 = vmatprep.subr.mxu0 0.0
    %6644 = vmatpush1.msra.mxu0 0.0
    %6645 = vmatprep.subr.mxu0 0.0
    %6646 = vmatpush1.msra.mxu0 0.0
    %6647 = vmatprep.subr.mxu0 0.0
    %6648 = vmatpush1.msra.mxu0 0.0
    %6649 = vmatprep.subr.mxu0 0.0
    %6650 = vmatpush1.msra.mxu0 0.0
    %6651 = vmatprep.subr.mxu0 0.0
    %6652 = vmatpush1.msra.mxu0 0.0
    %6653 = vmatprep.mubr.f32.mxu0 0.0
    %6654 = vmatmul.mubr.f32.gmra.mrb[0].mxu0 %v6584
    %v6655 = vpop.f32.mrb[0].mxu0
    %v6656 = vadd.f32 0.0, %v6655
    %v6657 = vpop.f32.mrb[0].mxu0
    %6658 = vmatprep.mubr.f32.mxu0 0.0
    %6659 = vmatmul.mubr.f32.gmra.mrb[0].mxu0 %v6587
    %v6660 = vpop.f32.mrb[0].mxu0
    %v6661 = vadd.f32 0.0, %v6660
    %v6662 = vpop.f32.mrb[0].mxu0
    %6663 = vdwg.mxu0
    %v6664 = vmul.f32 %v6656, %v5772
    %v6665 = vmul.f32 %v6661, %v5772
    %v6666 = vadd.f32 %v6567, %v6664
    %v6667 = vadd.f32 %v6568, %v6665
    %v6668 = vadd.f32 %v5775, %v6666
    %v6669 = vadd.f32 %v5776, %v6667
    %v6670 = vld [vmem:[#allocation21] sm:$0xff]
    %v6671 = vld [vmem:[#allocation21 + $0x8] sm:$0xff]
    %6673 = vset.pattern.permute.xlu0 0
    %6674 = vperm.xlu0 %6673, %v6670
    %v6675 = vpop.permute.xlu0 %6674
    %6678 = vset.pattern.permute.xlu0 0
    %6679 = vperm.xlu0 %6678, %v6671
    %v6680 = vpop.permute.xlu0 %6679
    %v6682 = vadd.f32 %v6668, %v6675
    %v6683 = vadd.f32 %v6669, %v6680
    %v6684 = vmax.f32 %v6682, 0.0
    %v6685 = vmax.f32 %v6683, 0.0
    %v6686 = vld [vmem:[%s21] sm:$0xff]
    %v6687 = vld [vmem:[%s21 + $0x8] sm:$0xff]
    %v6688 = vld [vmem:[%s21 + $0x10] sm:$0xff]
    %v6689 = vld [vmem:[%s21 + $0x18] sm:$0xff]
    %v6690 = vld [vmem:[%s21 + $0x20] sm:$0xff]
    %v6691 = vld [vmem:[%s21 + $0x28] sm:$0xff]
    %v6692 = vld [vmem:[%s21 + $0x30] sm:$0xff]
    %v6693 = vld [vmem:[%s21 + $0x38] sm:$0xff]
    %v6694 = vld [vmem:[%s21 + $0x40] sm:$0xff]
    %v6695 = vld [vmem:[%s21 + $0x48] sm:$0xff]
    %v6696 = vld [vmem:[%s21 + $0x50] sm:$0xff]
    %v6697 = vld [vmem:[%s21 + $0x58] sm:$0xff]
    %v6698 = vld [vmem:[%s21 + $0x60] sm:$0xff]
    %v6699 = vld [vmem:[%s21 + $0x68] sm:$0xff]
    %v6700 = vld [vmem:[%s21 + $0x70] sm:$0xff]
    %v6701 = vld [vmem:[%s21 + $0x78] sm:$0xff]
    %v6702 = vld [vmem:[%s21 + $0x80] sm:$0xff]
    %v6703 = vld [vmem:[%s21 + $0x88] sm:$0xff]
    %v6704 = vld [vmem:[%s21 + $0x90] sm:$0xff]
    %v6705 = vld [vmem:[%s21 + $0x98] sm:$0xff]
    %v6706 = vld [vmem:[%s21 + $0xa0] sm:$0xff]
    %v6707 = vld [vmem:[%s21 + $0xa8] sm:$0xff]
    %v6708 = vld [vmem:[%s21 + $0xb0] sm:$0xff]
    %v6709 = vld [vmem:[%s21 + $0xb8] sm:$0xff]
    %v6710 = vld [vmem:[%s21 + $0xc0] sm:$0xff]
    %v6711 = vld [vmem:[%s21 + $0xc8] sm:$0xff]
    %v6712 = vld [vmem:[%s21 + $0xd0] sm:$0xff]
    %v6713 = vld [vmem:[%s21 + $0xd8] sm:$0xff]
    %v6714 = vld [vmem:[%s21 + $0xe0] sm:$0xff]
    %v6715 = vld [vmem:[%s21 + $0xe8] sm:$0xff]
    %v6716 = vld [vmem:[%s21 + $0xf0] sm:$0xff]
    %v6717 = vld [vmem:[%s21 + $0xf8] sm:$0xff]
    %v6718 = vld [vmem:[%s21 + $0x100] sm:$0xff]
    %v6719 = vld [vmem:[%s21 + $0x108] sm:$0xff]
    %v6720 = vld [vmem:[%s21 + $0x110] sm:$0xff]
    %v6721 = vld [vmem:[%s21 + $0x118] sm:$0xff]
    %v6722 = vld [vmem:[%s21 + $0x120] sm:$0xff]
    %v6723 = vld [vmem:[%s21 + $0x128] sm:$0xff]
    %v6724 = vld [vmem:[%s21 + $0x130] sm:$0xff]
    %v6725 = vld [vmem:[%s21 + $0x138] sm:$0xff]
    %v6726 = vld [vmem:[%s21 + $0x140] sm:$0xff]
    %v6727 = vld [vmem:[%s21 + $0x148] sm:$0xff]
    %v6728 = vld [vmem:[%s21 + $0x150] sm:$0xff]
    %v6729 = vld [vmem:[%s21 + $0x158] sm:$0xff]
    %v6730 = vld [vmem:[%s21 + $0x160] sm:$0xff]
    %v6731 = vld [vmem:[%s21 + $0x168] sm:$0xff]
    %v6732 = vld [vmem:[%s21 + $0x170] sm:$0xff]
    %v6733 = vld [vmem:[%s21 + $0x178] sm:$0xff]
    %v6734 = vld [vmem:[%s21 + $0x180] sm:$0xff]
    %v6735 = vld [vmem:[%s21 + $0x188] sm:$0xff]
    %v6736 = vld [vmem:[%s21 + $0x190] sm:$0xff]
    %v6737 = vld [vmem:[%s21 + $0x198] sm:$0xff]
    %v6738 = vld [vmem:[%s21 + $0x1a0] sm:$0xff]
    %v6739 = vld [vmem:[%s21 + $0x1a8] sm:$0xff]
    %v6740 = vld [vmem:[%s21 + $0x1b0] sm:$0xff]
    %v6741 = vld [vmem:[%s21 + $0x1b8] sm:$0xff]
    %v6742 = vld [vmem:[%s21 + $0x1c0] sm:$0xff]
    %v6743 = vld [vmem:[%s21 + $0x1c8] sm:$0xff]
    %v6744 = vld [vmem:[%s21 + $0x1d0] sm:$0xff]
    %v6745 = vld [vmem:[%s21 + $0x1d8] sm:$0xff]
    %v6746 = vld [vmem:[%s21 + $0x1e0] sm:$0xff]
    %v6747 = vld [vmem:[%s21 + $0x1e8] sm:$0xff]
    %v6748 = vld [vmem:[%s21 + $0x1f0] sm:$0xff]
    %v6749 = vld [vmem:[%s21 + $0x1f8] sm:$0xff]
    %6750 = vmatprep.subr.mxu0 %v6687
    %6751 = vmatpush1.msra.mxu0 %v6686
    %6752 = vmatprep.subr.mxu0 %v6691
    %6753 = vmatpush1.msra.mxu0 %v6690
    %6754 = vmatprep.subr.mxu0 %v6695
    %6755 = vmatpush1.msra.mxu0 %v6694
    %6756 = vmatprep.subr.mxu0 %v6699
    %6757 = vmatpush1.msra.mxu0 %v6698
    %6758 = vmatprep.subr.mxu0 %v6703
    %6759 = vmatpush1.msra.mxu0 %v6702
    %6760 = vmatprep.subr.mxu0 %v6707
    %6761 = vmatpush1.msra.mxu0 %v6706
    %6762 = vmatprep.subr.mxu0 %v6711
    %6763 = vmatpush1.msra.mxu0 %v6710
    %6764 = vmatprep.subr.mxu0 %v6715
    %6765 = vmatpush1.msra.mxu0 %v6714
    %6766 = vmatprep.subr.mxu0 %v6719
    %6767 = vmatpush1.msra.mxu0 %v6718
    %6768 = vmatprep.subr.mxu0 %v6723
    %6769 = vmatpush1.msra.mxu0 %v6722
    %6770 = vmatprep.subr.mxu0 %v6727
    %6771 = vmatpush1.msra.mxu0 %v6726
    %6772 = vmatprep.subr.mxu0 %v6731
    %6773 = vmatpush1.msra.mxu0 %v6730
    %6774 = vmatprep.subr.mxu0 %v6735
    %6775 = vmatpush1.msra.mxu0 %v6734
    %6776 = vmatprep.subr.mxu0 %v6739
    %6777 = vmatpush1.msra.mxu0 %v6738
    %6778 = vmatprep.subr.mxu0 %v6743
    %6779 = vmatpush1.msra.mxu0 %v6742
    %6780 = vmatprep.subr.mxu0 %v6747
    %6781 = vmatpush1.msra.mxu0 %v6746
    %6782 = vmatprep.subr.mxu0 0.0
    %6783 = vmatpush1.msra.mxu0 0.0
    %6784 = vmatprep.subr.mxu0 0.0
    %6785 = vmatpush1.msra.mxu0 0.0
    %6786 = vmatprep.subr.mxu0 0.0
    %6787 = vmatpush1.msra.mxu0 0.0
    %6788 = vmatprep.subr.mxu0 0.0
    %6789 = vmatpush1.msra.mxu0 0.0
    %6790 = vmatprep.subr.mxu0 0.0
    %6791 = vmatpush1.msra.mxu0 0.0
    %6792 = vmatprep.subr.mxu0 0.0
    %6793 = vmatpush1.msra.mxu0 0.0
    %6794 = vmatprep.subr.mxu0 0.0
    %6795 = vmatpush1.msra.mxu0 0.0
    %6796 = vmatprep.subr.mxu0 0.0
    %6797 = vmatpush1.msra.mxu0 0.0
    %6798 = vmatprep.subr.mxu0 0.0
    %6799 = vmatpush1.msra.mxu0 0.0
    %6800 = vmatprep.subr.mxu0 0.0
    %6801 = vmatpush1.msra.mxu0 0.0
    %6802 = vmatprep.subr.mxu0 0.0
    %6803 = vmatpush1.msra.mxu0 0.0
    %6804 = vmatprep.subr.mxu0 0.0
    %6805 = vmatpush1.msra.mxu0 0.0
    %6806 = vmatprep.subr.mxu0 0.0
    %6807 = vmatpush1.msra.mxu0 0.0
    %6808 = vmatprep.subr.mxu0 0.0
    %6809 = vmatpush1.msra.mxu0 0.0
    %6810 = vmatprep.subr.mxu0 0.0
    %6811 = vmatpush1.msra.mxu0 0.0
    %6812 = vmatprep.subr.mxu0 0.0
    %6813 = vmatpush1.msra.mxu0 0.0
    %6814 = vmatprep.mubr.f32.mxu0 0.0
    %6815 = vmatmul.mubr.f32.gmra.mrb[0].mxu0 %v6684
    %v6816 = vpop.f32.mrb[0].mxu0
    %v6817 = vadd.f32 0.0, %v6816
    %v6818 = vpop.f32.mrb[0].mxu0
    %v6819 = vadd.f32 0.0, %v6818
    %6820 = vmatprep.mubr.f32.mxu0 0.0
    %6821 = vmatmul.mubr.f32.gmra.mrb[0].mxu0 %v6685
    %v6822 = vpop.f32.mrb[0].mxu0
    %v6823 = vadd.f32 0.0, %v6822
    %v6824 = vpop.f32.mrb[0].mxu0
    %v6825 = vadd.f32 0.0, %v6824
    %6826 = vdwg.mxu0
    %6827 = vmatprep.subr.mxu0 %v6689
    %6828 = vmatpush1.msra.mxu0 %v6688
    %6829 = vmatprep.subr.mxu0 %v6693
    %6830 = vmatpush1.msra.mxu0 %v6692
    %6831 = vmatprep.subr.mxu0 %v6697
    %6832 = vmatpush1.msra.mxu0 %v6696
    %6833 = vmatprep.subr.mxu0 %v6701
    %6834 = vmatpush1.msra.mxu0 %v6700
    %6835 = vmatprep.subr.mxu0 %v6705
    %6836 = vmatpush1.msra.mxu0 %v6704
    %6837 = vmatprep.subr.mxu0 %v6709
    %6838 = vmatpush1.msra.mxu0 %v6708
    %6839 = vmatprep.subr.mxu0 %v6713
    %6840 = vmatpush1.msra.mxu0 %v6712
    %6841 = vmatprep.subr.mxu0 %v6717
    %6842 = vmatpush1.msra.mxu0 %v6716
    %6843 = vmatprep.subr.mxu0 %v6721
    %6844 = vmatpush1.msra.mxu0 %v6720
    %6845 = vmatprep.subr.mxu0 %v6725
    %6846 = vmatpush1.msra.mxu0 %v6724
    %6847 = vmatprep.subr.mxu0 %v6729
    %6848 = vmatpush1.msra.mxu0 %v6728
    %6849 = vmatprep.subr.mxu0 %v6733
    %6850 = vmatpush1.msra.mxu0 %v6732
    %6851 = vmatprep.subr.mxu0 %v6737
    %6852 = vmatpush1.msra.mxu0 %v6736
    %6853 = vmatprep.subr.mxu0 %v6741
    %6854 = vmatpush1.msra.mxu0 %v6740
    %6855 = vmatprep.subr.mxu0 %v6745
    %6856 = vmatpush1.msra.mxu0 %v6744
    %6857 = vmatprep.subr.mxu0 %v6749
    %6858 = vmatpush1.msra.mxu0 %v6748
    %6859 = vmatprep.subr.mxu0 0.0
    %6860 = vmatpush1.msra.mxu0 0.0
    %6861 = vmatprep.subr.mxu0 0.0
    %6862 = vmatpush1.msra.mxu0 0.0
    %6863 = vmatprep.subr.mxu0 0.0
    %6864 = vmatpush1.msra.mxu0 0.0
    %6865 = vmatprep.subr.mxu0 0.0
    %6866 = vmatpush1.msra.mxu0 0.0
    %6867 = vmatprep.subr.mxu0 0.0
    %6868 = vmatpush1.msra.mxu0 0.0
    %6869 = vmatprep.subr.mxu0 0.0
    %6870 = vmatpush1.msra.mxu0 0.0
    %6871 = vmatprep.subr.mxu0 0.0
    %6872 = vmatpush1.msra.mxu0 0.0
    %6873 = vmatprep.subr.mxu0 0.0
    %6874 = vmatpush1.msra.mxu0 0.0
    %6875 = vmatprep.subr.mxu0 0.0
    %6876 = vmatpush1.msra.mxu0 0.0
    %6877 = vmatprep.subr.mxu0 0.0
    %6878 = vmatpush1.msra.mxu0 0.0
    %6879 = vmatprep.subr.mxu0 0.0
    %6880 = vmatpush1.msra.mxu0 0.0
    %6881 = vmatprep.subr.mxu0 0.0
    %6882 = vmatpush1.msra.mxu0 0.0
    %6883 = vmatprep.subr.mxu0 0.0
    %6884 = vmatpush1.msra.mxu0 0.0
    %6885 = vmatprep.subr.mxu0 0.0
    %6886 = vmatpush1.msra.mxu0 0.0
    %6887 = vmatprep.subr.mxu0 0.0
    %6888 = vmatpush1.msra.mxu0 0.0
    %6889 = vmatprep.subr.mxu0 0.0
    %6890 = vmatpush1.msra.mxu0 0.0
    %6891 = vmatprep.mubr.f32.mxu0 0.0
    %6892 = vmatmul.mubr.f32.gmra.mrb[0].mxu0 %v6684
    %v6893 = vpop.f32.mrb[0].mxu0
    %v6894 = vadd.f32 0.0, %v6893
    %v6895 = vpop.f32.mrb[0].mxu0
    %v6896 = vadd.f32 0.0, %v6895
    %6897 = vmatprep.mubr.f32.mxu0 0.0
    %6898 = vmatmul.mubr.f32.gmra.mrb[0].mxu0 %v6685
    %v6899 = vpop.f32.mrb[0].mxu0
    %v6900 = vadd.f32 0.0, %v6899
    %v6901 = vpop.f32.mrb[0].mxu0
    %v6902 = vadd.f32 0.0, %v6901
    %6903 = vdwg.mxu0
    %6904 = vst [vmem:[#allocation7] sm:$0xff] 0.0
    %6905 = vst [vmem:[#allocation7 + $0x8] sm:$0xff] 0.0
    %6906 = vst [vmem:[#allocation7 + $0x10] sm:$0xff] 0.0
    %6907 = vst [vmem:[#allocation7 + $0x18] sm:$0xff] 0.0
    %6908 = vst [vmem:[#allocation7 + $0x20] sm:$0xff] 0.0
    %6909 = vst [vmem:[#allocation7 + $0x28] sm:$0xff] 0.0
    %6910 = vst [vmem:[#allocation7 + $0x30] sm:$0xff] 0.0
    %6911 = vst [vmem:[#allocation7 + $0x38] sm:$0xff] 0.0
    %6912 = vst [vmem:[#allocation7 + $0x40] sm:$0xff] 0.0
    %6913 = vst [vmem:[#allocation7 + $0x48] sm:$0xff] 0.0
    %6914 = vst [vmem:[#allocation7 + $0x50] sm:$0xff] 0.0
    %6915 = vst [vmem:[#allocation7 + $0x58] sm:$0xff] 0.0
    %6916 = vst [vmem:[#allocation7 + $0x8] sm:$0xff] %v6817
    %6917 = vst [vmem:[#allocation7 + $0x10] sm:$0xff] %v6819
    %6918 = vst [vmem:[#allocation7 + $0x18] sm:$0xff] %v6894
    %6919 = vst [vmem:[#allocation7 + $0x20] sm:$0xff] %v6896
    %6920 = vst [vmem:[#allocation7 + $0x38] sm:$0xff] %v6823
    %6921 = vst [vmem:[#allocation7 + $0x40] sm:$0xff] %v6825
    %6922 = vst [vmem:[#allocation7 + $0x48] sm:$0xff] %v6900
    %6923 = vst [vmem:[#allocation7 + $0x50] sm:$0xff] %v6902
    %v6924 = vld [vmem:[#allocation7] sm:$0xff]
    %v6925 = vld [vmem:[#allocation7 + $0x8] sm:$0xff]
    %v6926 = vld [vmem:[#allocation7 + $0x10] sm:$0xff]
    %v6927 = vld [vmem:[#allocation7 + $0x18] sm:$0xff]
    %v6928 = vld [vmem:[#allocation7 + $0x20] sm:$0xff]
    %v6929 = vld [vmem:[#allocation7 + $0x30] sm:$0xff]
    %v6930 = vld [vmem:[#allocation7 + $0x38] sm:$0xff]
    %v6931 = vld [vmem:[#allocation7 + $0x40] sm:$0xff]
    %v6932 = vld [vmem:[#allocation7 + $0x48] sm:$0xff]
    %v6933 = vld [vmem:[#allocation7 + $0x50] sm:$0xff]
    %v6934 = vld [vmem:[#allocation22] sm:$0xff]
    %6945 = vrot.lane.b32.xlu0 %v6924, 17
    %v6946 = vpop.permute.xlu0 %6945
    %6947 = vrot.lane.b32.xlu0 %v6925, 17
    %v6948 = vpop.permute.xlu0 %6947
    %6949 = vrot.lane.b32.xlu0 %v6926, 17
    %v6950 = vpop.permute.xlu0 %6949
    %6951 = vrot.lane.b32.xlu0 %v6927, 17
    %v6952 = vpop.permute.xlu0 %6951
    %6953 = vrot.lane.b32.xlu0 %v6928, 17
    %v6954 = vpop.permute.xlu0 %6953
    %6955 = vrot.lane.b32.xlu0 %v6929, 17
    %v6956 = vpop.permute.xlu0 %6955
    %6957 = vrot.lane.b32.xlu0 %v6930, 17
    %v6958 = vpop.permute.xlu0 %6957
    %6959 = vrot.lane.b32.xlu0 %v6931, 17
    %v6960 = vpop.permute.xlu0 %6959
    %6961 = vrot.lane.b32.xlu0 %v6932, 17
    %v6962 = vpop.permute.xlu0 %6961
    %6963 = vrot.lane.b32.xlu0 %v6933, 17
    %v6964 = vpop.permute.xlu0 %6963
    %v6965 = vsel %vm330, %v6946, %v6948
    %v6966 = vsel %vm330, %v6948, %v6950
    %v6967 = vsel %vm330, %v6950, %v6952
    %v6968 = vsel %vm330, %v6952, %v6954
    %v6969 = vsel %vm330, %v6956, %v6958
    %v6970 = vsel %vm330, %v6958, %v6960
    %v6971 = vsel %vm330, %v6960, %v6962
    %v6972 = vsel %vm330, %v6962, %v6964
    %v6982 = vsel %vm535, %v6934, 0
    %6984 = vmatprep.subr.mxu0 %v6966
    %6985 = vmatpush1.msra.mxu0 %v6965
    %6986 = vmatprep.subr.mxu0 %v6970
    %6987 = vmatpush1.msra.mxu0 %v6969
    %6988 = vmatprep.subr.mxu0 0.0
    %6989 = vmatpush1.msra.mxu0 0.0
    %6990 = vmatprep.subr.mxu0 0.0
    %6991 = vmatpush1.msra.mxu0 0.0
    %6992 = vmatprep.subr.mxu0 0.0
    %6993 = vmatpush1.msra.mxu0 0.0
    %6994 = vmatprep.subr.mxu0 0.0
    %6995 = vmatpush1.msra.mxu0 0.0
    %6996 = vmatprep.subr.mxu0 0.0
    %6997 = vmatpush1.msra.mxu0 0.0
    %6998 = vmatprep.subr.mxu0 0.0
    %6999 = vmatpush1.msra.mxu0 0.0
    %7000 = vmatprep.subr.mxu0 0.0
    %7001 = vmatpush1.msra.mxu0 0.0
    %7002 = vmatprep.subr.mxu0 0.0
    %7003 = vmatpush1.msra.mxu0 0.0
    %7004 = vmatprep.subr.mxu0 0.0
    %7005 = vmatpush1.msra.mxu0 0.0
    %7006 = vmatprep.subr.mxu0 0.0
    %7007 = vmatpush1.msra.mxu0 0.0
    %7008 = vmatprep.subr.mxu0 0.0
    %7009 = vmatpush1.msra.mxu0 0.0
    %7010 = vmatprep.subr.mxu0 0.0
    %7011 = vmatpush1.msra.mxu0 0.0
    %7012 = vmatprep.subr.mxu0 0.0
    %7013 = vmatpush1.msra.mxu0 0.0
    %7014 = vmatprep.subr.mxu0 0.0
    %7015 = vmatpush1.msra.mxu0 0.0
    %7016 = vmatprep.subr.mxu0 0.0
    %7017 = vmatpush1.msra.mxu0 0.0
    %7018 = vmatprep.subr.mxu0 0.0
    %7019 = vmatpush1.msra.mxu0 0.0
    %7020 = vmatprep.subr.mxu0 0.0
    %7021 = vmatpush1.msra.mxu0 0.0
    %7022 = vmatprep.subr.mxu0 0.0
    %7023 = vmatpush1.msra.mxu0 0.0
    %7024 = vmatprep.subr.mxu0 0.0
    %7025 = vmatpush1.msra.mxu0 0.0
    %7026 = vmatprep.subr.mxu0 0.0
    %7027 = vmatpush1.msra.mxu0 0.0
    %7028 = vmatprep.subr.mxu0 0.0
    %7029 = vmatpush1.msra.mxu0 0.0
    %7030 = vmatprep.subr.mxu0 0.0
    %7031 = vmatpush1.msra.mxu0 0.0
    %7032 = vmatprep.subr.mxu0 0.0
    %7033 = vmatpush1.msra.mxu0 0.0
    %7034 = vmatprep.subr.mxu0 0.0
    %7035 = vmatpush1.msra.mxu0 0.0
    %7036 = vmatprep.subr.mxu0 0.0
    %7037 = vmatpush1.msra.mxu0 0.0
    %7038 = vmatprep.subr.mxu0 0.0
    %7039 = vmatpush1.msra.mxu0 0.0
    %7040 = vmatprep.subr.mxu0 0.0
    %7041 = vmatpush1.msra.mxu0 0.0
    %7042 = vmatprep.subr.mxu0 0.0
    %7043 = vmatpush1.msra.mxu0 0.0
    %7044 = vmatprep.subr.mxu0 0.0
    %7045 = vmatpush1.msra.mxu0 0.0
    %7046 = vmatprep.subr.mxu0 0.0
    %7047 = vmatpush1.msra.mxu0 0.0
    %7048 = vmatprep.mubr.f32.mxu0 0.0
    %7049 = vmatmul.mubr.f32.gmra.mrb[0].mxu0 %v6982
    %v7050 = vpop.f32.mrb[0].mxu0
    %v7051 = vadd.f32 0.0, %v7050
    %v7052 = vpop.f32.mrb[0].mxu0
    %v7053 = vadd.f32 0.0, %v7052
    %7054 = vdwg.mxu0
    %7055 = vmatprep.subr.mxu0 %v6968
    %7056 = vmatpush1.msra.mxu0 %v6967
    %7057 = vmatprep.subr.mxu0 %v6972
    %7058 = vmatpush1.msra.mxu0 %v6971
    %7059 = vmatprep.subr.mxu0 0.0
    %7060 = vmatpush1.msra.mxu0 0.0
    %7061 = vmatprep.subr.mxu0 0.0
    %7062 = vmatpush1.msra.mxu0 0.0
    %7063 = vmatprep.subr.mxu0 0.0
    %7064 = vmatpush1.msra.mxu0 0.0
    %7065 = vmatprep.subr.mxu0 0.0
    %7066 = vmatpush1.msra.mxu0 0.0
    %7067 = vmatprep.subr.mxu0 0.0
    %7068 = vmatpush1.msra.mxu0 0.0
    %7069 = vmatprep.subr.mxu0 0.0
    %7070 = vmatpush1.msra.mxu0 0.0
    %7071 = vmatprep.subr.mxu0 0.0
    %7072 = vmatpush1.msra.mxu0 0.0
    %7073 = vmatprep.subr.mxu0 0.0
    %7074 = vmatpush1.msra.mxu0 0.0
    %7075 = vmatprep.subr.mxu0 0.0
    %7076 = vmatpush1.msra.mxu0 0.0
    %7077 = vmatprep.subr.mxu0 0.0
    %7078 = vmatpush1.msra.mxu0 0.0
    %7079 = vmatprep.subr.mxu0 0.0
    %7080 = vmatpush1.msra.mxu0 0.0
    %7081 = vmatprep.subr.mxu0 0.0
    %7082 = vmatpush1.msra.mxu0 0.0
    %7083 = vmatprep.subr.mxu0 0.0
    %7084 = vmatpush1.msra.mxu0 0.0
    %7085 = vmatprep.subr.mxu0 0.0
    %7086 = vmatpush1.msra.mxu0 0.0
    %7087 = vmatprep.subr.mxu0 0.0
    %7088 = vmatpush1.msra.mxu0 0.0
    %7089 = vmatprep.subr.mxu0 0.0
    %7090 = vmatpush1.msra.mxu0 0.0
    %7091 = vmatprep.subr.mxu0 0.0
    %7092 = vmatpush1.msra.mxu0 0.0
    %7093 = vmatprep.subr.mxu0 0.0
    %7094 = vmatpush1.msra.mxu0 0.0
    %7095 = vmatprep.subr.mxu0 0.0
    %7096 = vmatpush1.msra.mxu0 0.0
    %7097 = vmatprep.subr.mxu0 0.0
    %7098 = vmatpush1.msra.mxu0 0.0
    %7099 = vmatprep.subr.mxu0 0.0
    %7100 = vmatpush1.msra.mxu0 0.0
    %7101 = vmatprep.subr.mxu0 0.0
    %7102 = vmatpush1.msra.mxu0 0.0
    %7103 = vmatprep.subr.mxu0 0.0
    %7104 = vmatpush1.msra.mxu0 0.0
    %7105 = vmatprep.subr.mxu0 0.0
    %7106 = vmatpush1.msra.mxu0 0.0
    %7107 = vmatprep.subr.mxu0 0.0
    %7108 = vmatpush1.msra.mxu0 0.0
    %7109 = vmatprep.subr.mxu0 0.0
    %7110 = vmatpush1.msra.mxu0 0.0
    %7111 = vmatprep.subr.mxu0 0.0
    %7112 = vmatpush1.msra.mxu0 0.0
    %7113 = vmatprep.subr.mxu0 0.0
    %7114 = vmatpush1.msra.mxu0 0.0
    %7115 = vmatprep.subr.mxu0 0.0
    %7116 = vmatpush1.msra.mxu0 0.0
    %7117 = vmatprep.subr.mxu0 0.0
    %7118 = vmatpush1.msra.mxu0 0.0
    %7119 = vmatprep.mubr.f32.mxu0 0.0
    %7120 = vmatmul.mubr.f32.gmra.mrb[0].mxu0 %v6982
    %v7121 = vpop.f32.mrb[0].mxu0
    %v7122 = vadd.f32 0.0, %v7121
    %v7123 = vpop.f32.mrb[0].mxu0
    %v7124 = vadd.f32 0.0, %v7123
    %7125 = vdwg.mxu0
    %v7126 = vld [vmem:[#allocation27] ss:$8 sm:$0xf]
    %v7128 = vlaneseq
    %v7129 = vshrl.u32 %v7128, 7
    %v7130 = vsub.s32 0, %v7129
    %v7131 = vrot.slane %v7126, %v7130
    %v7132 = vlaneseq
    %v7133 = vshrl.u32 %v7132, 7
    %v7134 = vsub.s32 1, %v7133
    %v7135 = vrot.slane %v7126, %v7134
    %v7136 = vlaneseq
    %v7137 = vshrl.u32 %v7136, 7
    %v7138 = vsub.s32 2, %v7137
    %v7139 = vrot.slane %v7126, %v7138
    %v7140 = vlaneseq
    %v7141 = vshrl.u32 %v7140, 7
    %v7142 = vsub.s32 3, %v7141
    %v7143 = vrot.slane %v7126, %v7142
    %v7148 = vmul.f32 %v7051, %v7131
    %v7149 = vmul.f32 %v7053, %v7135
    %v7150 = vmul.f32 %v7122, %v7139
    %v7151 = vmul.f32 %v7124, %v7143
    %v7152 = vld [vmem:[#allocation22 + $0x8] sm:$0xff]
    %7153 = vrot.lane.b32.xlu0 %v6924, 16
    %v7154 = vpop.permute.xlu0 %7153
    %7155 = vrot.lane.b32.xlu0 %v6925, 16
    %v7156 = vpop.permute.xlu0 %7155
    %7157 = vrot.lane.b32.xlu0 %v6926, 16
    %v7158 = vpop.permute.xlu0 %7157
    %7159 = vrot.lane.b32.xlu0 %v6927, 16
    %v7160 = vpop.permute.xlu0 %7159
    %7161 = vrot.lane.b32.xlu0 %v6928, 16
    %v7162 = vpop.permute.xlu0 %7161
    %7163 = vrot.lane.b32.xlu0 %v6929, 16
    %v7164 = vpop.permute.xlu0 %7163
    %7165 = vrot.lane.b32.xlu0 %v6930, 16
    %v7166 = vpop.permute.xlu0 %7165
    %7167 = vrot.lane.b32.xlu0 %v6931, 16
    %v7168 = vpop.permute.xlu0 %7167
    %7169 = vrot.lane.b32.xlu0 %v6932, 16
    %v7170 = vpop.permute.xlu0 %7169
    %7171 = vrot.lane.b32.xlu0 %v6933, 16
    %v7172 = vpop.permute.xlu0 %7171
    %v7173 = vsel %vm535, %v7154, %v7156
    %v7174 = vsel %vm535, %v7156, %v7158
    %v7175 = vsel %vm535, %v7158, %v7160
    %v7176 = vsel %vm535, %v7160, %v7162
    %v7177 = vsel %vm535, %v7164, %v7166
    %v7178 = vsel %vm535, %v7166, %v7168
    %v7179 = vsel %vm535, %v7168, %v7170
    %v7180 = vsel %vm535, %v7170, %v7172
    %v7190 = vsel %vm535, %v7152, 0
    %7192 = vmatprep.subr.mxu0 %v7174
    %7193 = vmatpush1.msra.mxu0 %v7173
    %7194 = vmatprep.subr.mxu0 %v7178
    %7195 = vmatpush1.msra.mxu0 %v7177
    %7196 = vmatprep.subr.mxu0 0.0
    %7197 = vmatpush1.msra.mxu0 0.0
    %7198 = vmatprep.subr.mxu0 0.0
    %7199 = vmatpush1.msra.mxu0 0.0
    %7200 = vmatprep.subr.mxu0 0.0
    %7201 = vmatpush1.msra.mxu0 0.0
    %7202 = vmatprep.subr.mxu0 0.0
    %7203 = vmatpush1.msra.mxu0 0.0
    %7204 = vmatprep.subr.mxu0 0.0
    %7205 = vmatpush1.msra.mxu0 0.0
    %7206 = vmatprep.subr.mxu0 0.0
    %7207 = vmatpush1.msra.mxu0 0.0
    %7208 = vmatprep.subr.mxu0 0.0
    %7209 = vmatpush1.msra.mxu0 0.0
    %7210 = vmatprep.subr.mxu0 0.0
    %7211 = vmatpush1.msra.mxu0 0.0
    %7212 = vmatprep.subr.mxu0 0.0
    %7213 = vmatpush1.msra.mxu0 0.0
    %7214 = vmatprep.subr.mxu0 0.0
    %7215 = vmatpush1.msra.mxu0 0.0
    %7216 = vmatprep.subr.mxu0 0.0
    %7217 = vmatpush1.msra.mxu0 0.0
    %7218 = vmatprep.subr.mxu0 0.0
    %7219 = vmatpush1.msra.mxu0 0.0
    %7220 = vmatprep.subr.mxu0 0.0
    %7221 = vmatpush1.msra.mxu0 0.0
    %7222 = vmatprep.subr.mxu0 0.0
    %7223 = vmatpush1.msra.mxu0 0.0
    %7224 = vmatprep.subr.mxu0 0.0
    %7225 = vmatpush1.msra.mxu0 0.0
    %7226 = vmatprep.subr.mxu0 0.0
    %7227 = vmatpush1.msra.mxu0 0.0
    %7228 = vmatprep.subr.mxu0 0.0
    %7229 = vmatpush1.msra.mxu0 0.0
    %7230 = vmatprep.subr.mxu0 0.0
    %7231 = vmatpush1.msra.mxu0 0.0
    %7232 = vmatprep.subr.mxu0 0.0
    %7233 = vmatpush1.msra.mxu0 0.0
    %7234 = vmatprep.subr.mxu0 0.0
    %7235 = vmatpush1.msra.mxu0 0.0
    %7236 = vmatprep.subr.mxu0 0.0
    %7237 = vmatpush1.msra.mxu0 0.0
    %7238 = vmatprep.subr.mxu0 0.0
    %7239 = vmatpush1.msra.mxu0 0.0
    %7240 = vmatprep.subr.mxu0 0.0
    %7241 = vmatpush1.msra.mxu0 0.0
    %7242 = vmatprep.subr.mxu0 0.0
    %7243 = vmatpush1.msra.mxu0 0.0
    %7244 = vmatprep.subr.mxu0 0.0
    %7245 = vmatpush1.msra.mxu0 0.0
    %7246 = vmatprep.subr.mxu0 0.0
    %7247 = vmatpush1.msra.mxu0 0.0
    %7248 = vmatprep.subr.mxu0 0.0
    %7249 = vmatpush1.msra.mxu0 0.0
    %7250 = vmatprep.subr.mxu0 0.0
    %7251 = vmatpush1.msra.mxu0 0.0
    %7252 = vmatprep.subr.mxu0 0.0
    %7253 = vmatpush1.msra.mxu0 0.0
    %7254 = vmatprep.subr.mxu0 0.0
    %7255 = vmatpush1.msra.mxu0 0.0
    %7256 = vmatprep.mubr.f32.mxu0 0.0
    %7257 = vmatmul.mubr.f32.gmra.mrb[0].mxu0 %v7190
    %v7258 = vpop.f32.mrb[0].mxu0
    %v7259 = vadd.f32 0.0, %v7258
    %v7260 = vpop.f32.mrb[0].mxu0
    %v7261 = vadd.f32 0.0, %v7260
    %7262 = vdwg.mxu0
    %7263 = vmatprep.subr.mxu0 %v7176
    %7264 = vmatpush1.msra.mxu0 %v7175
    %7265 = vmatprep.subr.mxu0 %v7180
    %7266 = vmatpush1.msra.mxu0 %v7179
    %7267 = vmatprep.subr.mxu0 0.0
    %7268 = vmatpush1.msra.mxu0 0.0
    %7269 = vmatprep.subr.mxu0 0.0
    %7270 = vmatpush1.msra.mxu0 0.0
    %7271 = vmatprep.subr.mxu0 0.0
    %7272 = vmatpush1.msra.mxu0 0.0
    %7273 = vmatprep.subr.mxu0 0.0
    %7274 = vmatpush1.msra.mxu0 0.0
    %7275 = vmatprep.subr.mxu0 0.0
    %7276 = vmatpush1.msra.mxu0 0.0
    %7277 = vmatprep.subr.mxu0 0.0
    %7278 = vmatpush1.msra.mxu0 0.0
    %7279 = vmatprep.subr.mxu0 0.0
    %7280 = vmatpush1.msra.mxu0 0.0
    %7281 = vmatprep.subr.mxu0 0.0
    %7282 = vmatpush1.msra.mxu0 0.0
    %7283 = vmatprep.subr.mxu0 0.0
    %7284 = vmatpush1.msra.mxu0 0.0
    %7285 = vmatprep.subr.mxu0 0.0
    %7286 = vmatpush1.msra.mxu0 0.0
    %7287 = vmatprep.subr.mxu0 0.0
    %7288 = vmatpush1.msra.mxu0 0.0
    %7289 = vmatprep.subr.mxu0 0.0
    %7290 = vmatpush1.msra.mxu0 0.0
    %7291 = vmatprep.subr.mxu0 0.0
    %7292 = vmatpush1.msra.mxu0 0.0
    %7293 = vmatprep.subr.mxu0 0.0
    %7294 = vmatpush1.msra.mxu0 0.0
    %7295 = vmatprep.subr.mxu0 0.0
    %7296 = vmatpush1.msra.mxu0 0.0
    %7297 = vmatprep.subr.mxu0 0.0
    %7298 = vmatpush1.msra.mxu0 0.0
    %7299 = vmatprep.subr.mxu0 0.0
    %7300 = vmatpush1.msra.mxu0 0.0
    %7301 = vmatprep.subr.mxu0 0.0
    %7302 = vmatpush1.msra.mxu0 0.0
    %7303 = vmatprep.subr.mxu0 0.0
    %7304 = vmatpush1.msra.mxu0 0.0
    %7305 = vmatprep.subr.mxu0 0.0
    %7306 = vmatpush1.msra.mxu0 0.0
    %7307 = vmatprep.subr.mxu0 0.0
    %7308 = vmatpush1.msra.mxu0 0.0
    %7309 = vmatprep.subr.mxu0 0.0
    %7310 = vmatpush1.msra.mxu0 0.0
    %7311 = vmatprep.subr.mxu0 0.0
    %7312 = vmatpush1.msra.mxu0 0.0
    %7313 = vmatprep.subr.mxu0 0.0
    %7314 = vmatpush1.msra.mxu0 0.0
    %7315 = vmatprep.subr.mxu0 0.0
    %7316 = vmatpush1.msra.mxu0 0.0
    %7317 = vmatprep.subr.mxu0 0.0
    %7318 = vmatpush1.msra.mxu0 0.0
    %7319 = vmatprep.subr.mxu0 0.0
    %7320 = vmatpush1.msra.mxu0 0.0
    %7321 = vmatprep.subr.mxu0 0.0
    %7322 = vmatpush1.msra.mxu0 0.0
    %7323 = vmatprep.subr.mxu0 0.0
    %7324 = vmatpush1.msra.mxu0 0.0
    %7325 = vmatprep.subr.mxu0 0.0
    %7326 = vmatpush1.msra.mxu0 0.0
    %7327 = vmatprep.mubr.f32.mxu0 0.0
    %7328 = vmatmul.mubr.f32.gmra.mrb[0].mxu0 %v7190
    %v7329 = vpop.f32.mrb[0].mxu0
    %v7330 = vadd.f32 0.0, %v7329
    %v7331 = vpop.f32.mrb[0].mxu0
    %v7332 = vadd.f32 0.0, %v7331
    %7333 = vdwg.mxu0
    %v7334 = vld [vmem:[%s693] ss:$8 sm:$0xf]
    %v7336 = vlaneseq
    %v7337 = vshrl.u32 %v7336, 7
    %v7338 = vsub.s32 0, %v7337
    %v7339 = vrot.slane %v7334, %v7338
    %v7340 = vlaneseq
    %v7341 = vshrl.u32 %v7340, 7
    %v7342 = vsub.s32 1, %v7341
    %v7343 = vrot.slane %v7334, %v7342
    %v7344 = vlaneseq
    %v7345 = vshrl.u32 %v7344, 7
    %v7346 = vsub.s32 2, %v7345
    %v7347 = vrot.slane %v7334, %v7346
    %v7348 = vlaneseq
    %v7349 = vshrl.u32 %v7348, 7
    %v7350 = vsub.s32 3, %v7349
    %v7351 = vrot.slane %v7334, %v7350
    %v7356 = vmul.f32 %v7259, %v7339
    %v7357 = vmul.f32 %v7261, %v7343
    %v7358 = vmul.f32 %v7330, %v7347
    %v7359 = vmul.f32 %v7332, %v7351
    %v7360 = vadd.f32 %v7148, %v7356
    %v7361 = vadd.f32 %v7149, %v7357
    %v7362 = vadd.f32 %v7150, %v7358
    %v7363 = vadd.f32 %v7151, %v7359
    %v7364 = vld [vmem:[#allocation22 + $0x10] sm:$0xff]
    %7365 = vrot.lane.b32.xlu0 %v6924, 15
    %v7366 = vpop.permute.xlu0 %7365
    %7367 = vrot.lane.b32.xlu0 %v6925, 15
    %v7368 = vpop.permute.xlu0 %7367
    %7369 = vrot.lane.b32.xlu0 %v6926, 15
    %v7370 = vpop.permute.xlu0 %7369
    %7371 = vrot.lane.b32.xlu0 %v6927, 15
    %v7372 = vpop.permute.xlu0 %7371
    %7373 = vrot.lane.b32.xlu0 %v6928, 15
    %v7374 = vpop.permute.xlu0 %7373
    %7375 = vrot.lane.b32.xlu0 %v6929, 15
    %v7376 = vpop.permute.xlu0 %7375
    %7377 = vrot.lane.b32.xlu0 %v6930, 15
    %v7378 = vpop.permute.xlu0 %7377
    %7379 = vrot.lane.b32.xlu0 %v6931, 15
    %v7380 = vpop.permute.xlu0 %7379
    %7381 = vrot.lane.b32.xlu0 %v6932, 15
    %v7382 = vpop.permute.xlu0 %7381
    %7383 = vrot.lane.b32.xlu0 %v6933, 15
    %v7384 = vpop.permute.xlu0 %7383
    %v7385 = vsel %vm743, %v7366, %v7368
    %v7386 = vsel %vm743, %v7368, %v7370
    %v7387 = vsel %vm743, %v7370, %v7372
    %v7388 = vsel %vm743, %v7372, %v7374
    %v7389 = vsel %vm743, %v7376, %v7378
    %v7390 = vsel %vm743, %v7378, %v7380
    %v7391 = vsel %vm743, %v7380, %v7382
    %v7392 = vsel %vm743, %v7382, %v7384
    %v7402 = vsel %vm535, %v7364, 0
    %7404 = vmatprep.subr.mxu0 %v7386
    %7405 = vmatpush1.msra.mxu0 %v7385
    %7406 = vmatprep.subr.mxu0 %v7390
    %7407 = vmatpush1.msra.mxu0 %v7389
    %7408 = vmatprep.subr.mxu0 0.0
    %7409 = vmatpush1.msra.mxu0 0.0
    %7410 = vmatprep.subr.mxu0 0.0
    %7411 = vmatpush1.msra.mxu0 0.0
    %7412 = vmatprep.subr.mxu0 0.0
    %7413 = vmatpush1.msra.mxu0 0.0
    %7414 = vmatprep.subr.mxu0 0.0
    %7415 = vmatpush1.msra.mxu0 0.0
    %7416 = vmatprep.subr.mxu0 0.0
    %7417 = vmatpush1.msra.mxu0 0.0
    %7418 = vmatprep.subr.mxu0 0.0
    %7419 = vmatpush1.msra.mxu0 0.0
    %7420 = vmatprep.subr.mxu0 0.0
    %7421 = vmatpush1.msra.mxu0 0.0
    %7422 = vmatprep.subr.mxu0 0.0
    %7423 = vmatpush1.msra.mxu0 0.0
    %7424 = vmatprep.subr.mxu0 0.0
    %7425 = vmatpush1.msra.mxu0 0.0
    %7426 = vmatprep.subr.mxu0 0.0
    %7427 = vmatpush1.msra.mxu0 0.0
    %7428 = vmatprep.subr.mxu0 0.0
    %7429 = vmatpush1.msra.mxu0 0.0
    %7430 = vmatprep.subr.mxu0 0.0
    %7431 = vmatpush1.msra.mxu0 0.0
    %7432 = vmatprep.subr.mxu0 0.0
    %7433 = vmatpush1.msra.mxu0 0.0
    %7434 = vmatprep.subr.mxu0 0.0
    %7435 = vmatpush1.msra.mxu0 0.0
    %7436 = vmatprep.subr.mxu0 0.0
    %7437 = vmatpush1.msra.mxu0 0.0
    %7438 = vmatprep.subr.mxu0 0.0
    %7439 = vmatpush1.msra.mxu0 0.0
    %7440 = vmatprep.subr.mxu0 0.0
    %7441 = vmatpush1.msra.mxu0 0.0
    %7442 = vmatprep.subr.mxu0 0.0
    %7443 = vmatpush1.msra.mxu0 0.0
    %7444 = vmatprep.subr.mxu0 0.0
    %7445 = vmatpush1.msra.mxu0 0.0
    %7446 = vmatprep.subr.mxu0 0.0
    %7447 = vmatpush1.msra.mxu0 0.0
    %7448 = vmatprep.subr.mxu0 0.0
    %7449 = vmatpush1.msra.mxu0 0.0
    %7450 = vmatprep.subr.mxu0 0.0
    %7451 = vmatpush1.msra.mxu0 0.0
    %7452 = vmatprep.subr.mxu0 0.0
    %7453 = vmatpush1.msra.mxu0 0.0
    %7454 = vmatprep.subr.mxu0 0.0
    %7455 = vmatpush1.msra.mxu0 0.0
    %7456 = vmatprep.subr.mxu0 0.0
    %7457 = vmatpush1.msra.mxu0 0.0
    %7458 = vmatprep.subr.mxu0 0.0
    %7459 = vmatpush1.msra.mxu0 0.0
    %7460 = vmatprep.subr.mxu0 0.0
    %7461 = vmatpush1.msra.mxu0 0.0
    %7462 = vmatprep.subr.mxu0 0.0
    %7463 = vmatpush1.msra.mxu0 0.0
    %7464 = vmatprep.subr.mxu0 0.0
    %7465 = vmatpush1.msra.mxu0 0.0
    %7466 = vmatprep.subr.mxu0 0.0
    %7467 = vmatpush1.msra.mxu0 0.0
    %7468 = vmatprep.mubr.f32.mxu0 0.0
    %7469 = vmatmul.mubr.f32.gmra.mrb[0].mxu0 %v7402
    %v7470 = vpop.f32.mrb[0].mxu0
    %v7471 = vadd.f32 0.0, %v7470
    %v7472 = vpop.f32.mrb[0].mxu0
    %v7473 = vadd.f32 0.0, %v7472
    %7474 = vdwg.mxu0
    %7475 = vmatprep.subr.mxu0 %v7388
    %7476 = vmatpush1.msra.mxu0 %v7387
    %7477 = vmatprep.subr.mxu0 %v7392
    %7478 = vmatpush1.msra.mxu0 %v7391
    %7479 = vmatprep.subr.mxu0 0.0
    %7480 = vmatpush1.msra.mxu0 0.0
    %7481 = vmatprep.subr.mxu0 0.0
    %7482 = vmatpush1.msra.mxu0 0.0
    %7483 = vmatprep.subr.mxu0 0.0
    %7484 = vmatpush1.msra.mxu0 0.0
    %7485 = vmatprep.subr.mxu0 0.0
    %7486 = vmatpush1.msra.mxu0 0.0
    %7487 = vmatprep.subr.mxu0 0.0
    %7488 = vmatpush1.msra.mxu0 0.0
    %7489 = vmatprep.subr.mxu0 0.0
    %7490 = vmatpush1.msra.mxu0 0.0
    %7491 = vmatprep.subr.mxu0 0.0
    %7492 = vmatpush1.msra.mxu0 0.0
    %7493 = vmatprep.subr.mxu0 0.0
    %7494 = vmatpush1.msra.mxu0 0.0
    %7495 = vmatprep.subr.mxu0 0.0
    %7496 = vmatpush1.msra.mxu0 0.0
    %7497 = vmatprep.subr.mxu0 0.0
    %7498 = vmatpush1.msra.mxu0 0.0
    %7499 = vmatprep.subr.mxu0 0.0
    %7500 = vmatpush1.msra.mxu0 0.0
    %7501 = vmatprep.subr.mxu0 0.0
    %7502 = vmatpush1.msra.mxu0 0.0
    %7503 = vmatprep.subr.mxu0 0.0
    %7504 = vmatpush1.msra.mxu0 0.0
    %7505 = vmatprep.subr.mxu0 0.0
    %7506 = vmatpush1.msra.mxu0 0.0
    %7507 = vmatprep.subr.mxu0 0.0
    %7508 = vmatpush1.msra.mxu0 0.0
    %7509 = vmatprep.subr.mxu0 0.0
    %7510 = vmatpush1.msra.mxu0 0.0
    %7511 = vmatprep.subr.mxu0 0.0
    %7512 = vmatpush1.msra.mxu0 0.0
    %7513 = vmatprep.subr.mxu0 0.0
    %7514 = vmatpush1.msra.mxu0 0.0
    %7515 = vmatprep.subr.mxu0 0.0
    %7516 = vmatpush1.msra.mxu0 0.0
    %7517 = vmatprep.subr.mxu0 0.0
    %7518 = vmatpush1.msra.mxu0 0.0
    %7519 = vmatprep.subr.mxu0 0.0
    %7520 = vmatpush1.msra.mxu0 0.0
    %7521 = vmatprep.subr.mxu0 0.0
    %7522 = vmatpush1.msra.mxu0 0.0
    %7523 = vmatprep.subr.mxu0 0.0
    %7524 = vmatpush1.msra.mxu0 0.0
    %7525 = vmatprep.subr.mxu0 0.0
    %7526 = vmatpush1.msra.mxu0 0.0
    %7527 = vmatprep.subr.mxu0 0.0
    %7528 = vmatpush1.msra.mxu0 0.0
    %7529 = vmatprep.subr.mxu0 0.0
    %7530 = vmatpush1.msra.mxu0 0.0
    %7531 = vmatprep.subr.mxu0 0.0
    %7532 = vmatpush1.msra.mxu0 0.0
    %7533 = vmatprep.subr.mxu0 0.0
    %7534 = vmatpush1.msra.mxu0 0.0
    %7535 = vmatprep.subr.mxu0 0.0
    %7536 = vmatpush1.msra.mxu0 0.0
    %7537 = vmatprep.subr.mxu0 0.0
    %7538 = vmatpush1.msra.mxu0 0.0
    %7539 = vmatprep.mubr.f32.mxu0 0.0
    %7540 = vmatmul.mubr.f32.gmra.mrb[0].mxu0 %v7402
    %v7541 = vpop.f32.mrb[0].mxu0
    %v7542 = vadd.f32 0.0, %v7541
    %v7543 = vpop.f32.mrb[0].mxu0
    %v7544 = vadd.f32 0.0, %v7543
    %7545 = vdwg.mxu0
    %v7546 = vld [vmem:[%s901] ss:$8 sm:$0xf]
    %v7548 = vlaneseq
    %v7549 = vshrl.u32 %v7548, 7
    %v7550 = vsub.s32 0, %v7549
    %v7551 = vrot.slane %v7546, %v7550
    %v7552 = vlaneseq
    %v7553 = vshrl.u32 %v7552, 7
    %v7554 = vsub.s32 1, %v7553
    %v7555 = vrot.slane %v7546, %v7554
    %v7556 = vlaneseq
    %v7557 = vshrl.u32 %v7556, 7
    %v7558 = vsub.s32 2, %v7557
    %v7559 = vrot.slane %v7546, %v7558
    %v7560 = vlaneseq
    %v7561 = vshrl.u32 %v7560, 7
    %v7562 = vsub.s32 3, %v7561
    %v7563 = vrot.slane %v7546, %v7562
    %v7568 = vmul.f32 %v7471, %v7551
    %v7569 = vmul.f32 %v7473, %v7555
    %v7570 = vmul.f32 %v7542, %v7559
    %v7571 = vmul.f32 %v7544, %v7563
    %v7572 = vadd.f32 %v7360, %v7568
    %v7573 = vadd.f32 %v7361, %v7569
    %v7574 = vadd.f32 %v7362, %v7570
    %v7575 = vadd.f32 %v7363, %v7571
    %v7576 = vld [vmem:[#allocation22 + $0x18] sm:$0xff]
    %7577 = vrot.lane.b32.xlu0 %v6924, 1
    %v7578 = vpop.permute.xlu0 %7577
    %7579 = vrot.lane.b32.xlu0 %v6925, 1
    %v7580 = vpop.permute.xlu0 %7579
    %7581 = vrot.lane.b32.xlu0 %v6926, 1
    %v7582 = vpop.permute.xlu0 %7581
    %7583 = vrot.lane.b32.xlu0 %v6927, 1
    %v7584 = vpop.permute.xlu0 %7583
    %7585 = vrot.lane.b32.xlu0 %v6928, 1
    %v7586 = vpop.permute.xlu0 %7585
    %7587 = vrot.lane.b32.xlu0 %v6929, 1
    %v7588 = vpop.permute.xlu0 %7587
    %7589 = vrot.lane.b32.xlu0 %v6930, 1
    %v7590 = vpop.permute.xlu0 %7589
    %7591 = vrot.lane.b32.xlu0 %v6931, 1
    %v7592 = vpop.permute.xlu0 %7591
    %7593 = vrot.lane.b32.xlu0 %v6932, 1
    %v7594 = vpop.permute.xlu0 %7593
    %7595 = vrot.lane.b32.xlu0 %v6933, 1
    %v7596 = vpop.permute.xlu0 %7595
    %v7597 = vsel %vm951, %v7578, %v7580
    %v7598 = vsel %vm951, %v7580, %v7582
    %v7599 = vsel %vm951, %v7582, %v7584
    %v7600 = vsel %vm951, %v7584, %v7586
    %v7601 = vsel %vm951, %v7588, %v7590
    %v7602 = vsel %vm951, %v7590, %v7592
    %v7603 = vsel %vm951, %v7592, %v7594
    %v7604 = vsel %vm951, %v7594, %v7596
    %v7614 = vsel %vm535, %v7576, 0
    %7616 = vmatprep.subr.mxu0 %v7598
    %7617 = vmatpush1.msra.mxu0 %v7597
    %7618 = vmatprep.subr.mxu0 %v7602
    %7619 = vmatpush1.msra.mxu0 %v7601
    %7620 = vmatprep.subr.mxu0 0.0
    %7621 = vmatpush1.msra.mxu0 0.0
    %7622 = vmatprep.subr.mxu0 0.0
    %7623 = vmatpush1.msra.mxu0 0.0
    %7624 = vmatprep.subr.mxu0 0.0
    %7625 = vmatpush1.msra.mxu0 0.0
    %7626 = vmatprep.subr.mxu0 0.0
    %7627 = vmatpush1.msra.mxu0 0.0
    %7628 = vmatprep.subr.mxu0 0.0
    %7629 = vmatpush1.msra.mxu0 0.0
    %7630 = vmatprep.subr.mxu0 0.0
    %7631 = vmatpush1.msra.mxu0 0.0
    %7632 = vmatprep.subr.mxu0 0.0
    %7633 = vmatpush1.msra.mxu0 0.0
    %7634 = vmatprep.subr.mxu0 0.0
    %7635 = vmatpush1.msra.mxu0 0.0
    %7636 = vmatprep.subr.mxu0 0.0
    %7637 = vmatpush1.msra.mxu0 0.0
    %7638 = vmatprep.subr.mxu0 0.0
    %7639 = vmatpush1.msra.mxu0 0.0
    %7640 = vmatprep.subr.mxu0 0.0
    %7641 = vmatpush1.msra.mxu0 0.0
    %7642 = vmatprep.subr.mxu0 0.0
    %7643 = vmatpush1.msra.mxu0 0.0
    %7644 = vmatprep.subr.mxu0 0.0
    %7645 = vmatpush1.msra.mxu0 0.0
    %7646 = vmatprep.subr.mxu0 0.0
    %7647 = vmatpush1.msra.mxu0 0.0
    %7648 = vmatprep.subr.mxu0 0.0
    %7649 = vmatpush1.msra.mxu0 0.0
    %7650 = vmatprep.subr.mxu0 0.0
    %7651 = vmatpush1.msra.mxu0 0.0
    %7652 = vmatprep.subr.mxu0 0.0
    %7653 = vmatpush1.msra.mxu0 0.0
    %7654 = vmatprep.subr.mxu0 0.0
    %7655 = vmatpush1.msra.mxu0 0.0
    %7656 = vmatprep.subr.mxu0 0.0
    %7657 = vmatpush1.msra.mxu0 0.0
    %7658 = vmatprep.subr.mxu0 0.0
    %7659 = vmatpush1.msra.mxu0 0.0
    %7660 = vmatprep.subr.mxu0 0.0
    %7661 = vmatpush1.msra.mxu0 0.0
    %7662 = vmatprep.subr.mxu0 0.0
    %7663 = vmatpush1.msra.mxu0 0.0
    %7664 = vmatprep.subr.mxu0 0.0
    %7665 = vmatpush1.msra.mxu0 0.0
    %7666 = vmatprep.subr.mxu0 0.0
    %7667 = vmatpush1.msra.mxu0 0.0
    %7668 = vmatprep.subr.mxu0 0.0
    %7669 = vmatpush1.msra.mxu0 0.0
    %7670 = vmatprep.subr.mxu0 0.0
    %7671 = vmatpush1.msra.mxu0 0.0
    %7672 = vmatprep.subr.mxu0 0.0
    %7673 = vmatpush1.msra.mxu0 0.0
    %7674 = vmatprep.subr.mxu0 0.0
    %7675 = vmatpush1.msra.mxu0 0.0
    %7676 = vmatprep.subr.mxu0 0.0
    %7677 = vmatpush1.msra.mxu0 0.0
    %7678 = vmatprep.subr.mxu0 0.0
    %7679 = vmatpush1.msra.mxu0 0.0
    %7680 = vmatprep.mubr.f32.mxu0 0.0
    %7681 = vmatmul.mubr.f32.gmra.mrb[0].mxu0 %v7614
    %v7682 = vpop.f32.mrb[0].mxu0
    %v7683 = vadd.f32 0.0, %v7682
    %v7684 = vpop.f32.mrb[0].mxu0
    %v7685 = vadd.f32 0.0, %v7684
    %7686 = vdwg.mxu0
    %7687 = vmatprep.subr.mxu0 %v7600
    %7688 = vmatpush1.msra.mxu0 %v7599
    %7689 = vmatprep.subr.mxu0 %v7604
    %7690 = vmatpush1.msra.mxu0 %v7603
    %7691 = vmatprep.subr.mxu0 0.0
    %7692 = vmatpush1.msra.mxu0 0.0
    %7693 = vmatprep.subr.mxu0 0.0
    %7694 = vmatpush1.msra.mxu0 0.0
    %7695 = vmatprep.subr.mxu0 0.0
    %7696 = vmatpush1.msra.mxu0 0.0
    %7697 = vmatprep.subr.mxu0 0.0
    %7698 = vmatpush1.msra.mxu0 0.0
    %7699 = vmatprep.subr.mxu0 0.0
    %7700 = vmatpush1.msra.mxu0 0.0
    %7701 = vmatprep.subr.mxu0 0.0
    %7702 = vmatpush1.msra.mxu0 0.0
    %7703 = vmatprep.subr.mxu0 0.0
    %7704 = vmatpush1.msra.mxu0 0.0
    %7705 = vmatprep.subr.mxu0 0.0
    %7706 = vmatpush1.msra.mxu0 0.0
    %7707 = vmatprep.subr.mxu0 0.0
    %7708 = vmatpush1.msra.mxu0 0.0
    %7709 = vmatprep.subr.mxu0 0.0
    %7710 = vmatpush1.msra.mxu0 0.0
    %7711 = vmatprep.subr.mxu0 0.0
    %7712 = vmatpush1.msra.mxu0 0.0
    %7713 = vmatprep.subr.mxu0 0.0
    %7714 = vmatpush1.msra.mxu0 0.0
    %7715 = vmatprep.subr.mxu0 0.0
    %7716 = vmatpush1.msra.mxu0 0.0
    %7717 = vmatprep.subr.mxu0 0.0
    %7718 = vmatpush1.msra.mxu0 0.0
    %7719 = vmatprep.subr.mxu0 0.0
    %7720 = vmatpush1.msra.mxu0 0.0
    %7721 = vmatprep.subr.mxu0 0.0
    %7722 = vmatpush1.msra.mxu0 0.0
    %7723 = vmatprep.subr.mxu0 0.0
    %7724 = vmatpush1.msra.mxu0 0.0
    %7725 = vmatprep.subr.mxu0 0.0
    %7726 = vmatpush1.msra.mxu0 0.0
    %7727 = vmatprep.subr.mxu0 0.0
    %7728 = vmatpush1.msra.mxu0 0.0
    %7729 = vmatprep.subr.mxu0 0.0
    %7730 = vmatpush1.msra.mxu0 0.0
    %7731 = vmatprep.subr.mxu0 0.0
    %7732 = vmatpush1.msra.mxu0 0.0
    %7733 = vmatprep.subr.mxu0 0.0
    %7734 = vmatpush1.msra.mxu0 0.0
    %7735 = vmatprep.subr.mxu0 0.0
    %7736 = vmatpush1.msra.mxu0 0.0
    %7737 = vmatprep.subr.mxu0 0.0
    %7738 = vmatpush1.msra.mxu0 0.0
    %7739 = vmatprep.subr.mxu0 0.0
    %7740 = vmatpush1.msra.mxu0 0.0
    %7741 = vmatprep.subr.mxu0 0.0
    %7742 = vmatpush1.msra.mxu0 0.0
    %7743 = vmatprep.subr.mxu0 0.0
    %7744 = vmatpush1.msra.mxu0 0.0
    %7745 = vmatprep.subr.mxu0 0.0
    %7746 = vmatpush1.msra.mxu0 0.0
    %7747 = vmatprep.subr.mxu0 0.0
    %7748 = vmatpush1.msra.mxu0 0.0
    %7749 = vmatprep.subr.mxu0 0.0
    %7750 = vmatpush1.msra.mxu0 0.0
    %7751 = vmatprep.mubr.f32.mxu0 0.0
    %7752 = vmatmul.mubr.f32.gmra.mrb[0].mxu0 %v7614
    %v7753 = vpop.f32.mrb[0].mxu0
    %v7754 = vadd.f32 0.0, %v7753
    %v7755 = vpop.f32.mrb[0].mxu0
    %v7756 = vadd.f32 0.0, %v7755
    %7757 = vdwg.mxu0
    %v7758 = vld [vmem:[%s1109] ss:$8 sm:$0xf]
    %v7760 = vlaneseq
    %v7761 = vshrl.u32 %v7760, 7
    %v7762 = vsub.s32 0, %v7761
    %v7763 = vrot.slane %v7758, %v7762
    %v7764 = vlaneseq
    %v7765 = vshrl.u32 %v7764, 7
    %v7766 = vsub.s32 1, %v7765
    %v7767 = vrot.slane %v7758, %v7766
    %v7768 = vlaneseq
    %v7769 = vshrl.u32 %v7768, 7
    %v7770 = vsub.s32 2, %v7769
    %v7771 = vrot.slane %v7758, %v7770
    %v7772 = vlaneseq
    %v7773 = vshrl.u32 %v7772, 7
    %v7774 = vsub.s32 3, %v7773
    %v7775 = vrot.slane %v7758, %v7774
    %v7780 = vmul.f32 %v7683, %v7763
    %v7781 = vmul.f32 %v7685, %v7767
    %v7782 = vmul.f32 %v7754, %v7771
    %v7783 = vmul.f32 %v7756, %v7775
    %v7784 = vadd.f32 %v7572, %v7780
    %v7785 = vadd.f32 %v7573, %v7781
    %v7786 = vadd.f32 %v7574, %v7782
    %v7787 = vadd.f32 %v7575, %v7783
    %v7788 = vld [vmem:[#allocation22 + $0x20] sm:$0xff]
    %v7790 = vsel %vm535, %v7788, 0
    %7792 = vmatprep.subr.mxu0 %v6926
    %7793 = vmatpush1.msra.mxu0 %v6925
    %7794 = vmatprep.subr.mxu0 %v6931
    %7795 = vmatpush1.msra.mxu0 %v6930
    %7796 = vmatprep.subr.mxu0 0.0
    %7797 = vmatpush1.msra.mxu0 0.0
    %7798 = vmatprep.subr.mxu0 0.0
    %7799 = vmatpush1.msra.mxu0 0.0
    %7800 = vmatprep.subr.mxu0 0.0
    %7801 = vmatpush1.msra.mxu0 0.0
    %7802 = vmatprep.subr.mxu0 0.0
    %7803 = vmatpush1.msra.mxu0 0.0
    %7804 = vmatprep.subr.mxu0 0.0
    %7805 = vmatpush1.msra.mxu0 0.0
    %7806 = vmatprep.subr.mxu0 0.0
    %7807 = vmatpush1.msra.mxu0 0.0
    %7808 = vmatprep.subr.mxu0 0.0
    %7809 = vmatpush1.msra.mxu0 0.0
    %7810 = vmatprep.subr.mxu0 0.0
    %7811 = vmatpush1.msra.mxu0 0.0
    %7812 = vmatprep.subr.mxu0 0.0
    %7813 = vmatpush1.msra.mxu0 0.0
    %7814 = vmatprep.subr.mxu0 0.0
    %7815 = vmatpush1.msra.mxu0 0.0
    %7816 = vmatprep.subr.mxu0 0.0
    %7817 = vmatpush1.msra.mxu0 0.0
    %7818 = vmatprep.subr.mxu0 0.0
    %7819 = vmatpush1.msra.mxu0 0.0
    %7820 = vmatprep.subr.mxu0 0.0
    %7821 = vmatpush1.msra.mxu0 0.0
    %7822 = vmatprep.subr.mxu0 0.0
    %7823 = vmatpush1.msra.mxu0 0.0
    %7824 = vmatprep.subr.mxu0 0.0
    %7825 = vmatpush1.msra.mxu0 0.0
    %7826 = vmatprep.subr.mxu0 0.0
    %7827 = vmatpush1.msra.mxu0 0.0
    %7828 = vmatprep.subr.mxu0 0.0
    %7829 = vmatpush1.msra.mxu0 0.0
    %7830 = vmatprep.subr.mxu0 0.0
    %7831 = vmatpush1.msra.mxu0 0.0
    %7832 = vmatprep.subr.mxu0 0.0
    %7833 = vmatpush1.msra.mxu0 0.0
    %7834 = vmatprep.subr.mxu0 0.0
    %7835 = vmatpush1.msra.mxu0 0.0
    %7836 = vmatprep.subr.mxu0 0.0
    %7837 = vmatpush1.msra.mxu0 0.0
    %7838 = vmatprep.subr.mxu0 0.0
    %7839 = vmatpush1.msra.mxu0 0.0
    %7840 = vmatprep.subr.mxu0 0.0
    %7841 = vmatpush1.msra.mxu0 0.0
    %7842 = vmatprep.subr.mxu0 0.0
    %7843 = vmatpush1.msra.mxu0 0.0
    %7844 = vmatprep.subr.mxu0 0.0
    %7845 = vmatpush1.msra.mxu0 0.0
    %7846 = vmatprep.subr.mxu0 0.0
    %7847 = vmatpush1.msra.mxu0 0.0
    %7848 = vmatprep.subr.mxu0 0.0
    %7849 = vmatpush1.msra.mxu0 0.0
    %7850 = vmatprep.subr.mxu0 0.0
    %7851 = vmatpush1.msra.mxu0 0.0
    %7852 = vmatprep.subr.mxu0 0.0
    %7853 = vmatpush1.msra.mxu0 0.0
    %7854 = vmatprep.subr.mxu0 0.0
    %7855 = vmatpush1.msra.mxu0 0.0
    %7856 = vmatprep.mubr.f32.mxu0 0.0
    %7857 = vmatmul.mubr.f32.gmra.mrb[0].mxu0 %v7790
    %v7858 = vpop.f32.mrb[0].mxu0
    %v7859 = vadd.f32 0.0, %v7858
    %v7860 = vpop.f32.mrb[0].mxu0
    %v7861 = vadd.f32 0.0, %v7860
    %7862 = vdwg.mxu0
    %7863 = vmatprep.subr.mxu0 %v6928
    %7864 = vmatpush1.msra.mxu0 %v6927
    %7865 = vmatprep.subr.mxu0 %v6933
    %7866 = vmatpush1.msra.mxu0 %v6932
    %7867 = vmatprep.subr.mxu0 0.0
    %7868 = vmatpush1.msra.mxu0 0.0
    %7869 = vmatprep.subr.mxu0 0.0
    %7870 = vmatpush1.msra.mxu0 0.0
    %7871 = vmatprep.subr.mxu0 0.0
    %7872 = vmatpush1.msra.mxu0 0.0
    %7873 = vmatprep.subr.mxu0 0.0
    %7874 = vmatpush1.msra.mxu0 0.0
    %7875 = vmatprep.subr.mxu0 0.0
    %7876 = vmatpush1.msra.mxu0 0.0
    %7877 = vmatprep.subr.mxu0 0.0
    %7878 = vmatpush1.msra.mxu0 0.0
    %7879 = vmatprep.subr.mxu0 0.0
    %7880 = vmatpush1.msra.mxu0 0.0
    %7881 = vmatprep.subr.mxu0 0.0
    %7882 = vmatpush1.msra.mxu0 0.0
    %7883 = vmatprep.subr.mxu0 0.0
    %7884 = vmatpush1.msra.mxu0 0.0
    %7885 = vmatprep.subr.mxu0 0.0
    %7886 = vmatpush1.msra.mxu0 0.0
    %7887 = vmatprep.subr.mxu0 0.0
    %7888 = vmatpush1.msra.mxu0 0.0
    %7889 = vmatprep.subr.mxu0 0.0
    %7890 = vmatpush1.msra.mxu0 0.0
    %7891 = vmatprep.subr.mxu0 0.0
    %7892 = vmatpush1.msra.mxu0 0.0
    %7893 = vmatprep.subr.mxu0 0.0
    %7894 = vmatpush1.msra.mxu0 0.0
    %7895 = vmatprep.subr.mxu0 0.0
    %7896 = vmatpush1.msra.mxu0 0.0
    %7897 = vmatprep.subr.mxu0 0.0
    %7898 = vmatpush1.msra.mxu0 0.0
    %7899 = vmatprep.subr.mxu0 0.0
    %7900 = vmatpush1.msra.mxu0 0.0
    %7901 = vmatprep.subr.mxu0 0.0
    %7902 = vmatpush1.msra.mxu0 0.0
    %7903 = vmatprep.subr.mxu0 0.0
    %7904 = vmatpush1.msra.mxu0 0.0
    %7905 = vmatprep.subr.mxu0 0.0
    %7906 = vmatpush1.msra.mxu0 0.0
    %7907 = vmatprep.subr.mxu0 0.0
    %7908 = vmatpush1.msra.mxu0 0.0
    %7909 = vmatprep.subr.mxu0 0.0
    %7910 = vmatpush1.msra.mxu0 0.0
    %7911 = vmatprep.subr.mxu0 0.0
    %7912 = vmatpush1.msra.mxu0 0.0
    %7913 = vmatprep.subr.mxu0 0.0
    %7914 = vmatpush1.msra.mxu0 0.0
    %7915 = vmatprep.subr.mxu0 0.0
    %7916 = vmatpush1.msra.mxu0 0.0
    %7917 = vmatprep.subr.mxu0 0.0
    %7918 = vmatpush1.msra.mxu0 0.0
    %7919 = vmatprep.subr.mxu0 0.0
    %7920 = vmatpush1.msra.mxu0 0.0
    %7921 = vmatprep.subr.mxu0 0.0
    %7922 = vmatpush1.msra.mxu0 0.0
    %7923 = vmatprep.subr.mxu0 0.0
    %7924 = vmatpush1.msra.mxu0 0.0
    %7925 = vmatprep.subr.mxu0 0.0
    %7926 = vmatpush1.msra.mxu0 0.0
    %7927 = vmatprep.mubr.f32.mxu0 0.0
    %7928 = vmatmul.mubr.f32.gmra.mrb[0].mxu0 %v7790
    %v7929 = vpop.f32.mrb[0].mxu0
    %v7930 = vadd.f32 0.0, %v7929
    %v7931 = vpop.f32.mrb[0].mxu0
    %v7932 = vadd.f32 0.0, %v7931
    %7933 = vdwg.mxu0
    %v7934 = vadd.f32 %v7784, %v7859
    %v7935 = vadd.f32 %v7785, %v7861
    %v7936 = vadd.f32 %v7786, %v7930
    %v7937 = vadd.f32 %v7787, %v7932
    %v7938 = vld [vmem:[#allocation7 + $0x8] sm:$0xff]
    %v7939 = vld [vmem:[#allocation7 + $0x10] sm:$0xff]
    %v7940 = vld [vmem:[#allocation7 + $0x18] sm:$0xff]
    %v7941 = vld [vmem:[#allocation7 + $0x20] sm:$0xff]
    %v7942 = vld [vmem:[#allocation7 + $0x28] sm:$0xff]
    %v7943 = vld [vmem:[#allocation7 + $0x38] sm:$0xff]
    %v7944 = vld [vmem:[#allocation7 + $0x40] sm:$0xff]
    %v7945 = vld [vmem:[#allocation7 + $0x48] sm:$0xff]
    %v7946 = vld [vmem:[#allocation7 + $0x50] sm:$0xff]
    %v7947 = vld [vmem:[#allocation7 + $0x58] sm:$0xff]
    %v7948 = vld [vmem:[#allocation22 + $0x28] sm:$0xff]
    %7959 = vrot.lane.b32.xlu0 %v7938, 127
    %v7960 = vpop.permute.xlu0 %7959
    %7961 = vrot.lane.b32.xlu0 %v7939, 127
    %v7962 = vpop.permute.xlu0 %7961
    %7963 = vrot.lane.b32.xlu0 %v7940, 127
    %v7964 = vpop.permute.xlu0 %7963
    %7965 = vrot.lane.b32.xlu0 %v7941, 127
    %v7966 = vpop.permute.xlu0 %7965
    %7967 = vrot.lane.b32.xlu0 %v7942, 127
    %v7968 = vpop.permute.xlu0 %7967
    %7969 = vrot.lane.b32.xlu0 %v7943, 127
    %v7970 = vpop.permute.xlu0 %7969
    %7971 = vrot.lane.b32.xlu0 %v7944, 127
    %v7972 = vpop.permute.xlu0 %7971
    %7973 = vrot.lane.b32.xlu0 %v7945, 127
    %v7974 = vpop.permute.xlu0 %7973
    %7975 = vrot.lane.b32.xlu0 %v7946, 127
    %v7976 = vpop.permute.xlu0 %7975
    %7977 = vrot.lane.b32.xlu0 %v7947, 127
    %v7978 = vpop.permute.xlu0 %7977
    %v7979 = vsel %vm1323, %v7960, %v7962
    %v7980 = vsel %vm1323, %v7962, %v7964
    %v7981 = vsel %vm1323, %v7964, %v7966
    %v7982 = vsel %vm1323, %v7966, %v7968
    %v7983 = vsel %vm1323, %v7970, %v7972
    %v7984 = vsel %vm1323, %v7972, %v7974
    %v7985 = vsel %vm1323, %v7974, %v7976
    %v7986 = vsel %vm1323, %v7976, %v7978
    %v7996 = vsel %vm535, %v7948, 0
    %7998 = vmatprep.subr.mxu0 %v7980
    %7999 = vmatpush1.msra.mxu0 %v7979
    %8000 = vmatprep.subr.mxu0 %v7984
    %8001 = vmatpush1.msra.mxu0 %v7983
    %8002 = vmatprep.subr.mxu0 0.0
    %8003 = vmatpush1.msra.mxu0 0.0
    %8004 = vmatprep.subr.mxu0 0.0
    %8005 = vmatpush1.msra.mxu0 0.0
    %8006 = vmatprep.subr.mxu0 0.0
    %8007 = vmatpush1.msra.mxu0 0.0
    %8008 = vmatprep.subr.mxu0 0.0
    %8009 = vmatpush1.msra.mxu0 0.0
    %8010 = vmatprep.subr.mxu0 0.0
    %8011 = vmatpush1.msra.mxu0 0.0
    %8012 = vmatprep.subr.mxu0 0.0
    %8013 = vmatpush1.msra.mxu0 0.0
    %8014 = vmatprep.subr.mxu0 0.0
    %8015 = vmatpush1.msra.mxu0 0.0
    %8016 = vmatprep.subr.mxu0 0.0
    %8017 = vmatpush1.msra.mxu0 0.0
    %8018 = vmatprep.subr.mxu0 0.0
    %8019 = vmatpush1.msra.mxu0 0.0
    %8020 = vmatprep.subr.mxu0 0.0
    %8021 = vmatpush1.msra.mxu0 0.0
    %8022 = vmatprep.subr.mxu0 0.0
    %8023 = vmatpush1.msra.mxu0 0.0
    %8024 = vmatprep.subr.mxu0 0.0
    %8025 = vmatpush1.msra.mxu0 0.0
    %8026 = vmatprep.subr.mxu0 0.0
    %8027 = vmatpush1.msra.mxu0 0.0
    %8028 = vmatprep.subr.mxu0 0.0
    %8029 = vmatpush1.msra.mxu0 0.0
    %8030 = vmatprep.subr.mxu0 0.0
    %8031 = vmatpush1.msra.mxu0 0.0
    %8032 = vmatprep.subr.mxu0 0.0
    %8033 = vmatpush1.msra.mxu0 0.0
    %8034 = vmatprep.subr.mxu0 0.0
    %8035 = vmatpush1.msra.mxu0 0.0
    %8036 = vmatprep.subr.mxu0 0.0
    %8037 = vmatpush1.msra.mxu0 0.0
    %8038 = vmatprep.subr.mxu0 0.0
    %8039 = vmatpush1.msra.mxu0 0.0
    %8040 = vmatprep.subr.mxu0 0.0
    %8041 = vmatpush1.msra.mxu0 0.0
    %8042 = vmatprep.subr.mxu0 0.0
    %8043 = vmatpush1.msra.mxu0 0.0
    %8044 = vmatprep.subr.mxu0 0.0
    %8045 = vmatpush1.msra.mxu0 0.0
    %8046 = vmatprep.subr.mxu0 0.0
    %8047 = vmatpush1.msra.mxu0 0.0
    %8048 = vmatprep.subr.mxu0 0.0
    %8049 = vmatpush1.msra.mxu0 0.0
    %8050 = vmatprep.subr.mxu0 0.0
    %8051 = vmatpush1.msra.mxu0 0.0
    %8052 = vmatprep.subr.mxu0 0.0
    %8053 = vmatpush1.msra.mxu0 0.0
    %8054 = vmatprep.subr.mxu0 0.0
    %8055 = vmatpush1.msra.mxu0 0.0
    %8056 = vmatprep.subr.mxu0 0.0
    %8057 = vmatpush1.msra.mxu0 0.0
    %8058 = vmatprep.subr.mxu0 0.0
    %8059 = vmatpush1.msra.mxu0 0.0
    %8060 = vmatprep.subr.mxu0 0.0
    %8061 = vmatpush1.msra.mxu0 0.0
    %8062 = vmatprep.mubr.f32.mxu0 0.0
    %8063 = vmatmul.mubr.f32.gmra.mrb[0].mxu0 %v7996
    %v8064 = vpop.f32.mrb[0].mxu0
    %v8065 = vadd.f32 0.0, %v8064
    %v8066 = vpop.f32.mrb[0].mxu0
    %v8067 = vadd.f32 0.0, %v8066
    %8068 = vdwg.mxu0
    %8069 = vmatprep.subr.mxu0 %v7982
    %8070 = vmatpush1.msra.mxu0 %v7981
    %8071 = vmatprep.subr.mxu0 %v7986
    %8072 = vmatpush1.msra.mxu0 %v7985
    %8073 = vmatprep.subr.mxu0 0.0
    %8074 = vmatpush1.msra.mxu0 0.0
    %8075 = vmatprep.subr.mxu0 0.0
    %8076 = vmatpush1.msra.mxu0 0.0
    %8077 = vmatprep.subr.mxu0 0.0
    %8078 = vmatpush1.msra.mxu0 0.0
    %8079 = vmatprep.subr.mxu0 0.0
    %8080 = vmatpush1.msra.mxu0 0.0
    %8081 = vmatprep.subr.mxu0 0.0
    %8082 = vmatpush1.msra.mxu0 0.0
    %8083 = vmatprep.subr.mxu0 0.0
    %8084 = vmatpush1.msra.mxu0 0.0
    %8085 = vmatprep.subr.mxu0 0.0
    %8086 = vmatpush1.msra.mxu0 0.0
    %8087 = vmatprep.subr.mxu0 0.0
    %8088 = vmatpush1.msra.mxu0 0.0
    %8089 = vmatprep.subr.mxu0 0.0
    %8090 = vmatpush1.msra.mxu0 0.0
    %8091 = vmatprep.subr.mxu0 0.0
    %8092 = vmatpush1.msra.mxu0 0.0
    %8093 = vmatprep.subr.mxu0 0.0
    %8094 = vmatpush1.msra.mxu0 0.0
    %8095 = vmatprep.subr.mxu0 0.0
    %8096 = vmatpush1.msra.mxu0 0.0
    %8097 = vmatprep.subr.mxu0 0.0
    %8098 = vmatpush1.msra.mxu0 0.0
    %8099 = vmatprep.subr.mxu0 0.0
    %8100 = vmatpush1.msra.mxu0 0.0
    %8101 = vmatprep.subr.mxu0 0.0
    %8102 = vmatpush1.msra.mxu0 0.0
    %8103 = vmatprep.subr.mxu0 0.0
    %8104 = vmatpush1.msra.mxu0 0.0
    %8105 = vmatprep.subr.mxu0 0.0
    %8106 = vmatpush1.msra.mxu0 0.0
    %8107 = vmatprep.subr.mxu0 0.0
    %8108 = vmatpush1.msra.mxu0 0.0
    %8109 = vmatprep.subr.mxu0 0.0
    %8110 = vmatpush1.msra.mxu0 0.0
    %8111 = vmatprep.subr.mxu0 0.0
    %8112 = vmatpush1.msra.mxu0 0.0
    %8113 = vmatprep.subr.mxu0 0.0
    %8114 = vmatpush1.msra.mxu0 0.0
    %8115 = vmatprep.subr.mxu0 0.0
    %8116 = vmatpush1.msra.mxu0 0.0
    %8117 = vmatprep.subr.mxu0 0.0
    %8118 = vmatpush1.msra.mxu0 0.0
    %8119 = vmatprep.subr.mxu0 0.0
    %8120 = vmatpush1.msra.mxu0 0.0
    %8121 = vmatprep.subr.mxu0 0.0
    %8122 = vmatpush1.msra.mxu0 0.0
    %8123 = vmatprep.subr.mxu0 0.0
    %8124 = vmatpush1.msra.mxu0 0.0
    %8125 = vmatprep.subr.mxu0 0.0
    %8126 = vmatpush1.msra.mxu0 0.0
    %8127 = vmatprep.subr.mxu0 0.0
    %8128 = vmatpush1.msra.mxu0 0.0
    %8129 = vmatprep.subr.mxu0 0.0
    %8130 = vmatpush1.msra.mxu0 0.0
    %8131 = vmatprep.subr.mxu0 0.0
    %8132 = vmatpush1.msra.mxu0 0.0
    %8133 = vmatprep.mubr.f32.mxu0 0.0
    %8134 = vmatmul.mubr.f32.gmra.mrb[0].mxu0 %v7996
    %v8135 = vpop.f32.mrb[0].mxu0
    %v8136 = vadd.f32 0.0, %v8135
    %v8137 = vpop.f32.mrb[0].mxu0
    %v8138 = vadd.f32 0.0, %v8137
    %8139 = vdwg.mxu0
    %v8140 = vld [vmem:[%s1481] ss:$8 sm:$0xf]
    %v8142 = vlaneseq
    %v8143 = vshrl.u32 %v8142, 7
    %v8144 = vsub.s32 0, %v8143
    %v8145 = vrot.slane %v8140, %v8144
    %v8146 = vlaneseq
    %v8147 = vshrl.u32 %v8146, 7
    %v8148 = vsub.s32 1, %v8147
    %v8149 = vrot.slane %v8140, %v8148
    %v8150 = vlaneseq
    %v8151 = vshrl.u32 %v8150, 7
    %v8152 = vsub.s32 2, %v8151
    %v8153 = vrot.slane %v8140, %v8152
    %v8154 = vlaneseq
    %v8155 = vshrl.u32 %v8154, 7
    %v8156 = vsub.s32 3, %v8155
    %v8157 = vrot.slane %v8140, %v8156
    %v8162 = vmul.f32 %v8065, %v8145
    %v8163 = vmul.f32 %v8067, %v8149
    %v8164 = vmul.f32 %v8136, %v8153
    %v8165 = vmul.f32 %v8138, %v8157
    %v8166 = vadd.f32 %v7934, %v8162
    %v8167 = vadd.f32 %v7935, %v8163
    %v8168 = vadd.f32 %v7936, %v8164
    %v8169 = vadd.f32 %v7937, %v8165
    %v8170 = vld [vmem:[#allocation22 + $0x30] sm:$0xff]
    %8171 = vrot.lane.b32.xlu0 %v7938, 113
    %v8172 = vpop.permute.xlu0 %8171
    %8173 = vrot.lane.b32.xlu0 %v7939, 113
    %v8174 = vpop.permute.xlu0 %8173
    %8175 = vrot.lane.b32.xlu0 %v7940, 113
    %v8176 = vpop.permute.xlu0 %8175
    %8177 = vrot.lane.b32.xlu0 %v7941, 113
    %v8178 = vpop.permute.xlu0 %8177
    %8179 = vrot.lane.b32.xlu0 %v7942, 113
    %v8180 = vpop.permute.xlu0 %8179
    %8181 = vrot.lane.b32.xlu0 %v7943, 113
    %v8182 = vpop.permute.xlu0 %8181
    %8183 = vrot.lane.b32.xlu0 %v7944, 113
    %v8184 = vpop.permute.xlu0 %8183
    %8185 = vrot.lane.b32.xlu0 %v7945, 113
    %v8186 = vpop.permute.xlu0 %8185
    %8187 = vrot.lane.b32.xlu0 %v7946, 113
    %v8188 = vpop.permute.xlu0 %8187
    %8189 = vrot.lane.b32.xlu0 %v7947, 113
    %v8190 = vpop.permute.xlu0 %8189
    %v8191 = vsel %vm1531, %v8172, %v8174
    %v8192 = vsel %vm1531, %v8174, %v8176
    %v8193 = vsel %vm1531, %v8176, %v8178
    %v8194 = vsel %vm1531, %v8178, %v8180
    %v8195 = vsel %vm1531, %v8182, %v8184
    %v8196 = vsel %vm1531, %v8184, %v8186
    %v8197 = vsel %vm1531, %v8186, %v8188
    %v8198 = vsel %vm1531, %v8188, %v8190
    %v8208 = vsel %vm535, %v8170, 0
    %8210 = vmatprep.subr.mxu0 %v8192
    %8211 = vmatpush1.msra.mxu0 %v8191
    %8212 = vmatprep.subr.mxu0 %v8196
    %8213 = vmatpush1.msra.mxu0 %v8195
    %8214 = vmatprep.subr.mxu0 0.0
    %8215 = vmatpush1.msra.mxu0 0.0
    %8216 = vmatprep.subr.mxu0 0.0
    %8217 = vmatpush1.msra.mxu0 0.0
    %8218 = vmatprep.subr.mxu0 0.0
    %8219 = vmatpush1.msra.mxu0 0.0
    %8220 = vmatprep.subr.mxu0 0.0
    %8221 = vmatpush1.msra.mxu0 0.0
    %8222 = vmatprep.subr.mxu0 0.0
    %8223 = vmatpush1.msra.mxu0 0.0
    %8224 = vmatprep.subr.mxu0 0.0
    %8225 = vmatpush1.msra.mxu0 0.0
    %8226 = vmatprep.subr.mxu0 0.0
    %8227 = vmatpush1.msra.mxu0 0.0
    %8228 = vmatprep.subr.mxu0 0.0
    %8229 = vmatpush1.msra.mxu0 0.0
    %8230 = vmatprep.subr.mxu0 0.0
    %8231 = vmatpush1.msra.mxu0 0.0
    %8232 = vmatprep.subr.mxu0 0.0
    %8233 = vmatpush1.msra.mxu0 0.0
    %8234 = vmatprep.subr.mxu0 0.0
    %8235 = vmatpush1.msra.mxu0 0.0
    %8236 = vmatprep.subr.mxu0 0.0
    %8237 = vmatpush1.msra.mxu0 0.0
    %8238 = vmatprep.subr.mxu0 0.0
    %8239 = vmatpush1.msra.mxu0 0.0
    %8240 = vmatprep.subr.mxu0 0.0
    %8241 = vmatpush1.msra.mxu0 0.0
    %8242 = vmatprep.subr.mxu0 0.0
    %8243 = vmatpush1.msra.mxu0 0.0
    %8244 = vmatprep.subr.mxu0 0.0
    %8245 = vmatpush1.msra.mxu0 0.0
    %8246 = vmatprep.subr.mxu0 0.0
    %8247 = vmatpush1.msra.mxu0 0.0
    %8248 = vmatprep.subr.mxu0 0.0
    %8249 = vmatpush1.msra.mxu0 0.0
    %8250 = vmatprep.subr.mxu0 0.0
    %8251 = vmatpush1.msra.mxu0 0.0
    %8252 = vmatprep.subr.mxu0 0.0
    %8253 = vmatpush1.msra.mxu0 0.0
    %8254 = vmatprep.subr.mxu0 0.0
    %8255 = vmatpush1.msra.mxu0 0.0
    %8256 = vmatprep.subr.mxu0 0.0
    %8257 = vmatpush1.msra.mxu0 0.0
    %8258 = vmatprep.subr.mxu0 0.0
    %8259 = vmatpush1.msra.mxu0 0.0
    %8260 = vmatprep.subr.mxu0 0.0
    %8261 = vmatpush1.msra.mxu0 0.0
    %8262 = vmatprep.subr.mxu0 0.0
    %8263 = vmatpush1.msra.mxu0 0.0
    %8264 = vmatprep.subr.mxu0 0.0
    %8265 = vmatpush1.msra.mxu0 0.0
    %8266 = vmatprep.subr.mxu0 0.0
    %8267 = vmatpush1.msra.mxu0 0.0
    %8268 = vmatprep.subr.mxu0 0.0
    %8269 = vmatpush1.msra.mxu0 0.0
    %8270 = vmatprep.subr.mxu0 0.0
    %8271 = vmatpush1.msra.mxu0 0.0
    %8272 = vmatprep.subr.mxu0 0.0
    %8273 = vmatpush1.msra.mxu0 0.0
    %8274 = vmatprep.mubr.f32.mxu0 0.0
    %8275 = vmatmul.mubr.f32.gmra.mrb[0].mxu0 %v8208
    %v8276 = vpop.f32.mrb[0].mxu0
    %v8277 = vadd.f32 0.0, %v8276
    %v8278 = vpop.f32.mrb[0].mxu0
    %v8279 = vadd.f32 0.0, %v8278
    %8280 = vdwg.mxu0
    %8281 = vmatprep.subr.mxu0 %v8194
    %8282 = vmatpush1.msra.mxu0 %v8193
    %8283 = vmatprep.subr.mxu0 %v8198
    %8284 = vmatpush1.msra.mxu0 %v8197
    %8285 = vmatprep.subr.mxu0 0.0
    %8286 = vmatpush1.msra.mxu0 0.0
    %8287 = vmatprep.subr.mxu0 0.0
    %8288 = vmatpush1.msra.mxu0 0.0
    %8289 = vmatprep.subr.mxu0 0.0
    %8290 = vmatpush1.msra.mxu0 0.0
    %8291 = vmatprep.subr.mxu0 0.0
    %8292 = vmatpush1.msra.mxu0 0.0
    %8293 = vmatprep.subr.mxu0 0.0
    %8294 = vmatpush1.msra.mxu0 0.0
    %8295 = vmatprep.subr.mxu0 0.0
    %8296 = vmatpush1.msra.mxu0 0.0
    %8297 = vmatprep.subr.mxu0 0.0
    %8298 = vmatpush1.msra.mxu0 0.0
    %8299 = vmatprep.subr.mxu0 0.0
    %8300 = vmatpush1.msra.mxu0 0.0
    %8301 = vmatprep.subr.mxu0 0.0
    %8302 = vmatpush1.msra.mxu0 0.0
    %8303 = vmatprep.subr.mxu0 0.0
    %8304 = vmatpush1.msra.mxu0 0.0
    %8305 = vmatprep.subr.mxu0 0.0
    %8306 = vmatpush1.msra.mxu0 0.0
    %8307 = vmatprep.subr.mxu0 0.0
    %8308 = vmatpush1.msra.mxu0 0.0
    %8309 = vmatprep.subr.mxu0 0.0
    %8310 = vmatpush1.msra.mxu0 0.0
    %8311 = vmatprep.subr.mxu0 0.0
    %8312 = vmatpush1.msra.mxu0 0.0
    %8313 = vmatprep.subr.mxu0 0.0
    %8314 = vmatpush1.msra.mxu0 0.0
    %8315 = vmatprep.subr.mxu0 0.0
    %8316 = vmatpush1.msra.mxu0 0.0
    %8317 = vmatprep.subr.mxu0 0.0
    %8318 = vmatpush1.msra.mxu0 0.0
    %8319 = vmatprep.subr.mxu0 0.0
    %8320 = vmatpush1.msra.mxu0 0.0
    %8321 = vmatprep.subr.mxu0 0.0
    %8322 = vmatpush1.msra.mxu0 0.0
    %8323 = vmatprep.subr.mxu0 0.0
    %8324 = vmatpush1.msra.mxu0 0.0
    %8325 = vmatprep.subr.mxu0 0.0
    %8326 = vmatpush1.msra.mxu0 0.0
    %8327 = vmatprep.subr.mxu0 0.0
    %8328 = vmatpush1.msra.mxu0 0.0
    %8329 = vmatprep.subr.mxu0 0.0
    %8330 = vmatpush1.msra.mxu0 0.0
    %8331 = vmatprep.subr.mxu0 0.0
    %8332 = vmatpush1.msra.mxu0 0.0
    %8333 = vmatprep.subr.mxu0 0.0
    %8334 = vmatpush1.msra.mxu0 0.0
    %8335 = vmatprep.subr.mxu0 0.0
    %8336 = vmatpush1.msra.mxu0 0.0
    %8337 = vmatprep.subr.mxu0 0.0
    %8338 = vmatpush1.msra.mxu0 0.0
    %8339 = vmatprep.subr.mxu0 0.0
    %8340 = vmatpush1.msra.mxu0 0.0
    %8341 = vmatprep.subr.mxu0 0.0
    %8342 = vmatpush1.msra.mxu0 0.0
    %8343 = vmatprep.subr.mxu0 0.0
    %8344 = vmatpush1.msra.mxu0 0.0
    %8345 = vmatprep.mubr.f32.mxu0 0.0
    %8346 = vmatmul.mubr.f32.gmra.mrb[0].mxu0 %v8208
    %v8347 = vpop.f32.mrb[0].mxu0
    %v8348 = vadd.f32 0.0, %v8347
    %v8349 = vpop.f32.mrb[0].mxu0
    %v8350 = vadd.f32 0.0, %v8349
    %8351 = vdwg.mxu0
    %v8352 = vld [vmem:[%s1689] ss:$8 sm:$0xf]
    %v8354 = vlaneseq
    %v8355 = vshrl.u32 %v8354, 7
    %v8356 = vsub.s32 0, %v8355
    %v8357 = vrot.slane %v8352, %v8356
    %v8358 = vlaneseq
    %v8359 = vshrl.u32 %v8358, 7
    %v8360 = vsub.s32 1, %v8359
    %v8361 = vrot.slane %v8352, %v8360
    %v8362 = vlaneseq
    %v8363 = vshrl.u32 %v8362, 7
    %v8364 = vsub.s32 2, %v8363
    %v8365 = vrot.slane %v8352, %v8364
    %v8366 = vlaneseq
    %v8367 = vshrl.u32 %v8366, 7
    %v8368 = vsub.s32 3, %v8367
    %v8369 = vrot.slane %v8352, %v8368
    %v8374 = vmul.f32 %v8277, %v8357
    %v8375 = vmul.f32 %v8279, %v8361
    %v8376 = vmul.f32 %v8348, %v8365
    %v8377 = vmul.f32 %v8350, %v8369
    %v8378 = vadd.f32 %v8166, %v8374
    %v8379 = vadd.f32 %v8167, %v8375
    %v8380 = vadd.f32 %v8168, %v8376
    %v8381 = vadd.f32 %v8169, %v8377
    %v8382 = vld [vmem:[#allocation22 + $0x38] sm:$0xff]
    %8383 = vrot.lane.b32.xlu0 %v7938, 112
    %v8384 = vpop.permute.xlu0 %8383
    %8385 = vrot.lane.b32.xlu0 %v7939, 112
    %v8386 = vpop.permute.xlu0 %8385
    %8387 = vrot.lane.b32.xlu0 %v7940, 112
    %v8388 = vpop.permute.xlu0 %8387
    %8389 = vrot.lane.b32.xlu0 %v7941, 112
    %v8390 = vpop.permute.xlu0 %8389
    %8391 = vrot.lane.b32.xlu0 %v7942, 112
    %v8392 = vpop.permute.xlu0 %8391
    %8393 = vrot.lane.b32.xlu0 %v7943, 112
    %v8394 = vpop.permute.xlu0 %8393
    %8395 = vrot.lane.b32.xlu0 %v7944, 112
    %v8396 = vpop.permute.xlu0 %8395
    %8397 = vrot.lane.b32.xlu0 %v7945, 112
    %v8398 = vpop.permute.xlu0 %8397
    %8399 = vrot.lane.b32.xlu0 %v7946, 112
    %v8400 = vpop.permute.xlu0 %8399
    %8401 = vrot.lane.b32.xlu0 %v7947, 112
    %v8402 = vpop.permute.xlu0 %8401
    %v8403 = vsel %vm1739, %v8384, %v8386
    %v8404 = vsel %vm1739, %v8386, %v8388
    %v8405 = vsel %vm1739, %v8388, %v8390
    %v8406 = vsel %vm1739, %v8390, %v8392
    %v8407 = vsel %vm1739, %v8394, %v8396
    %v8408 = vsel %vm1739, %v8396, %v8398
    %v8409 = vsel %vm1739, %v8398, %v8400
    %v8410 = vsel %vm1739, %v8400, %v8402
    %v8420 = vsel %vm535, %v8382, 0
    %8422 = vmatprep.subr.mxu0 %v8404
    %8423 = vmatpush1.msra.mxu0 %v8403
    %8424 = vmatprep.subr.mxu0 %v8408
    %8425 = vmatpush1.msra.mxu0 %v8407
    %8426 = vmatprep.subr.mxu0 0.0
    %8427 = vmatpush1.msra.mxu0 0.0
    %8428 = vmatprep.subr.mxu0 0.0
    %8429 = vmatpush1.msra.mxu0 0.0
    %8430 = vmatprep.subr.mxu0 0.0
    %8431 = vmatpush1.msra.mxu0 0.0
    %8432 = vmatprep.subr.mxu0 0.0
    %8433 = vmatpush1.msra.mxu0 0.0
    %8434 = vmatprep.subr.mxu0 0.0
    %8435 = vmatpush1.msra.mxu0 0.0
    %8436 = vmatprep.subr.mxu0 0.0
    %8437 = vmatpush1.msra.mxu0 0.0
    %8438 = vmatprep.subr.mxu0 0.0
    %8439 = vmatpush1.msra.mxu0 0.0
    %8440 = vmatprep.subr.mxu0 0.0
    %8441 = vmatpush1.msra.mxu0 0.0
    %8442 = vmatprep.subr.mxu0 0.0
    %8443 = vmatpush1.msra.mxu0 0.0
    %8444 = vmatprep.subr.mxu0 0.0
    %8445 = vmatpush1.msra.mxu0 0.0
    %8446 = vmatprep.subr.mxu0 0.0
    %8447 = vmatpush1.msra.mxu0 0.0
    %8448 = vmatprep.subr.mxu0 0.0
    %8449 = vmatpush1.msra.mxu0 0.0
    %8450 = vmatprep.subr.mxu0 0.0
    %8451 = vmatpush1.msra.mxu0 0.0
    %8452 = vmatprep.subr.mxu0 0.0
    %8453 = vmatpush1.msra.mxu0 0.0
    %8454 = vmatprep.subr.mxu0 0.0
    %8455 = vmatpush1.msra.mxu0 0.0
    %8456 = vmatprep.subr.mxu0 0.0
    %8457 = vmatpush1.msra.mxu0 0.0
    %8458 = vmatprep.subr.mxu0 0.0
    %8459 = vmatpush1.msra.mxu0 0.0
    %8460 = vmatprep.subr.mxu0 0.0
    %8461 = vmatpush1.msra.mxu0 0.0
    %8462 = vmatprep.subr.mxu0 0.0
    %8463 = vmatpush1.msra.mxu0 0.0
    %8464 = vmatprep.subr.mxu0 0.0
    %8465 = vmatpush1.msra.mxu0 0.0
    %8466 = vmatprep.subr.mxu0 0.0
    %8467 = vmatpush1.msra.mxu0 0.0
    %8468 = vmatprep.subr.mxu0 0.0
    %8469 = vmatpush1.msra.mxu0 0.0
    %8470 = vmatprep.subr.mxu0 0.0
    %8471 = vmatpush1.msra.mxu0 0.0
    %8472 = vmatprep.subr.mxu0 0.0
    %8473 = vmatpush1.msra.mxu0 0.0
    %8474 = vmatprep.subr.mxu0 0.0
    %8475 = vmatpush1.msra.mxu0 0.0
    %8476 = vmatprep.subr.mxu0 0.0
    %8477 = vmatpush1.msra.mxu0 0.0
    %8478 = vmatprep.subr.mxu0 0.0
    %8479 = vmatpush1.msra.mxu0 0.0
    %8480 = vmatprep.subr.mxu0 0.0
    %8481 = vmatpush1.msra.mxu0 0.0
    %8482 = vmatprep.subr.mxu0 0.0
    %8483 = vmatpush1.msra.mxu0 0.0
    %8484 = vmatprep.subr.mxu0 0.0
    %8485 = vmatpush1.msra.mxu0 0.0
    %8486 = vmatprep.mubr.f32.mxu0 0.0
    %8487 = vmatmul.mubr.f32.gmra.mrb[0].mxu0 %v8420
    %v8488 = vpop.f32.mrb[0].mxu0
    %v8489 = vadd.f32 0.0, %v8488
    %v8490 = vpop.f32.mrb[0].mxu0
    %v8491 = vadd.f32 0.0, %v8490
    %8492 = vdwg.mxu0
    %8493 = vmatprep.subr.mxu0 %v8406
    %8494 = vmatpush1.msra.mxu0 %v8405
    %8495 = vmatprep.subr.mxu0 %v8410
    %8496 = vmatpush1.msra.mxu0 %v8409
    %8497 = vmatprep.subr.mxu0 0.0
    %8498 = vmatpush1.msra.mxu0 0.0
    %8499 = vmatprep.subr.mxu0 0.0
    %8500 = vmatpush1.msra.mxu0 0.0
    %8501 = vmatprep.subr.mxu0 0.0
    %8502 = vmatpush1.msra.mxu0 0.0
    %8503 = vmatprep.subr.mxu0 0.0
    %8504 = vmatpush1.msra.mxu0 0.0
    %8505 = vmatprep.subr.mxu0 0.0
    %8506 = vmatpush1.msra.mxu0 0.0
    %8507 = vmatprep.subr.mxu0 0.0
    %8508 = vmatpush1.msra.mxu0 0.0
    %8509 = vmatprep.subr.mxu0 0.0
    %8510 = vmatpush1.msra.mxu0 0.0
    %8511 = vmatprep.subr.mxu0 0.0
    %8512 = vmatpush1.msra.mxu0 0.0
    %8513 = vmatprep.subr.mxu0 0.0
    %8514 = vmatpush1.msra.mxu0 0.0
    %8515 = vmatprep.subr.mxu0 0.0
    %8516 = vmatpush1.msra.mxu0 0.0
    %8517 = vmatprep.subr.mxu0 0.0
    %8518 = vmatpush1.msra.mxu0 0.0
    %8519 = vmatprep.subr.mxu0 0.0
    %8520 = vmatpush1.msra.mxu0 0.0
    %8521 = vmatprep.subr.mxu0 0.0
    %8522 = vmatpush1.msra.mxu0 0.0
    %8523 = vmatprep.subr.mxu0 0.0
    %8524 = vmatpush1.msra.mxu0 0.0
    %8525 = vmatprep.subr.mxu0 0.0
    %8526 = vmatpush1.msra.mxu0 0.0
    %8527 = vmatprep.subr.mxu0 0.0
    %8528 = vmatpush1.msra.mxu0 0.0
    %8529 = vmatprep.subr.mxu0 0.0
    %8530 = vmatpush1.msra.mxu0 0.0
    %8531 = vmatprep.subr.mxu0 0.0
    %8532 = vmatpush1.msra.mxu0 0.0
    %8533 = vmatprep.subr.mxu0 0.0
    %8534 = vmatpush1.msra.mxu0 0.0
    %8535 = vmatprep.subr.mxu0 0.0
    %8536 = vmatpush1.msra.mxu0 0.0
    %8537 = vmatprep.subr.mxu0 0.0
    %8538 = vmatpush1.msra.mxu0 0.0
    %8539 = vmatprep.subr.mxu0 0.0
    %8540 = vmatpush1.msra.mxu0 0.0
    %8541 = vmatprep.subr.mxu0 0.0
    %8542 = vmatpush1.msra.mxu0 0.0
    %8543 = vmatprep.subr.mxu0 0.0
    %8544 = vmatpush1.msra.mxu0 0.0
    %8545 = vmatprep.subr.mxu0 0.0
    %8546 = vmatpush1.msra.mxu0 0.0
    %8547 = vmatprep.subr.mxu0 0.0
    %8548 = vmatpush1.msra.mxu0 0.0
    %8549 = vmatprep.subr.mxu0 0.0
    %8550 = vmatpush1.msra.mxu0 0.0
    %8551 = vmatprep.subr.mxu0 0.0
    %8552 = vmatpush1.msra.mxu0 0.0
    %8553 = vmatprep.subr.mxu0 0.0
    %8554 = vmatpush1.msra.mxu0 0.0
    %8555 = vmatprep.subr.mxu0 0.0
    %8556 = vmatpush1.msra.mxu0 0.0
    %8557 = vmatprep.mubr.f32.mxu0 0.0
    %8558 = vmatmul.mubr.f32.gmra.mrb[0].mxu0 %v8420
    %v8559 = vpop.f32.mrb[0].mxu0
    %v8560 = vadd.f32 0.0, %v8559
    %v8561 = vpop.f32.mrb[0].mxu0
    %v8562 = vadd.f32 0.0, %v8561
    %8563 = vdwg.mxu0
    %v8564 = vld [vmem:[%s1897] ss:$8 sm:$0xf]
    %v8566 = vlaneseq
    %v8567 = vshrl.u32 %v8566, 7
    %v8568 = vsub.s32 0, %v8567
    %v8569 = vrot.slane %v8564, %v8568
    %v8570 = vlaneseq
    %v8571 = vshrl.u32 %v8570, 7
    %v8572 = vsub.s32 1, %v8571
    %v8573 = vrot.slane %v8564, %v8572
    %v8574 = vlaneseq
    %v8575 = vshrl.u32 %v8574, 7
    %v8576 = vsub.s32 2, %v8575
    %v8577 = vrot.slane %v8564, %v8576
    %v8578 = vlaneseq
    %v8579 = vshrl.u32 %v8578, 7
    %v8580 = vsub.s32 3, %v8579
    %v8581 = vrot.slane %v8564, %v8580
    %v8586 = vmul.f32 %v8489, %v8569
    %v8587 = vmul.f32 %v8491, %v8573
    %v8588 = vmul.f32 %v8560, %v8577
    %v8589 = vmul.f32 %v8562, %v8581
    %v8590 = vadd.f32 %v8378, %v8586
    %v8591 = vadd.f32 %v8379, %v8587
    %v8592 = vadd.f32 %v8380, %v8588
    %v8593 = vadd.f32 %v8381, %v8589
    %v8594 = vld [vmem:[#allocation22 + $0x40] sm:$0xff]
    %8595 = vrot.lane.b32.xlu0 %v7938, 111
    %v8596 = vpop.permute.xlu0 %8595
    %8597 = vrot.lane.b32.xlu0 %v7939, 111
    %v8598 = vpop.permute.xlu0 %8597
    %8599 = vrot.lane.b32.xlu0 %v7940, 111
    %v8600 = vpop.permute.xlu0 %8599
    %8601 = vrot.lane.b32.xlu0 %v7941, 111
    %v8602 = vpop.permute.xlu0 %8601
    %8603 = vrot.lane.b32.xlu0 %v7942, 111
    %v8604 = vpop.permute.xlu0 %8603
    %8605 = vrot.lane.b32.xlu0 %v7943, 111
    %v8606 = vpop.permute.xlu0 %8605
    %8607 = vrot.lane.b32.xlu0 %v7944, 111
    %v8608 = vpop.permute.xlu0 %8607
    %8609 = vrot.lane.b32.xlu0 %v7945, 111
    %v8610 = vpop.permute.xlu0 %8609
    %8611 = vrot.lane.b32.xlu0 %v7946, 111
    %v8612 = vpop.permute.xlu0 %8611
    %8613 = vrot.lane.b32.xlu0 %v7947, 111
    %v8614 = vpop.permute.xlu0 %8613
    %v8615 = vsel %vm1947, %v8596, %v8598
    %v8616 = vsel %vm1947, %v8598, %v8600
    %v8617 = vsel %vm1947, %v8600, %v8602
    %v8618 = vsel %vm1947, %v8602, %v8604
    %v8619 = vsel %vm1947, %v8606, %v8608
    %v8620 = vsel %vm1947, %v8608, %v8610
    %v8621 = vsel %vm1947, %v8610, %v8612
    %v8622 = vsel %vm1947, %v8612, %v8614
    %v8632 = vsel %vm535, %v8594, 0
    %8634 = vmatprep.subr.mxu0 %v8616
    %8635 = vmatpush1.msra.mxu0 %v8615
    %8636 = vmatprep.subr.mxu0 %v8620
    %8637 = vmatpush1.msra.mxu0 %v8619
    %8638 = vmatprep.subr.mxu0 0.0
    %8639 = vmatpush1.msra.mxu0 0.0
    %8640 = vmatprep.subr.mxu0 0.0
    %8641 = vmatpush1.msra.mxu0 0.0
    %8642 = vmatprep.subr.mxu0 0.0
    %8643 = vmatpush1.msra.mxu0 0.0
    %8644 = vmatprep.subr.mxu0 0.0
    %8645 = vmatpush1.msra.mxu0 0.0
    %8646 = vmatprep.subr.mxu0 0.0
    %8647 = vmatpush1.msra.mxu0 0.0
    %8648 = vmatprep.subr.mxu0 0.0
    %8649 = vmatpush1.msra.mxu0 0.0
    %8650 = vmatprep.subr.mxu0 0.0
    %8651 = vmatpush1.msra.mxu0 0.0
    %8652 = vmatprep.subr.mxu0 0.0
    %8653 = vmatpush1.msra.mxu0 0.0
    %8654 = vmatprep.subr.mxu0 0.0
    %8655 = vmatpush1.msra.mxu0 0.0
    %8656 = vmatprep.subr.mxu0 0.0
    %8657 = vmatpush1.msra.mxu0 0.0
    %8658 = vmatprep.subr.mxu0 0.0
    %8659 = vmatpush1.msra.mxu0 0.0
    %8660 = vmatprep.subr.mxu0 0.0
    %8661 = vmatpush1.msra.mxu0 0.0
    %8662 = vmatprep.subr.mxu0 0.0
    %8663 = vmatpush1.msra.mxu0 0.0
    %8664 = vmatprep.subr.mxu0 0.0
    %8665 = vmatpush1.msra.mxu0 0.0
    %8666 = vmatprep.subr.mxu0 0.0
    %8667 = vmatpush1.msra.mxu0 0.0
    %8668 = vmatprep.subr.mxu0 0.0
    %8669 = vmatpush1.msra.mxu0 0.0
    %8670 = vmatprep.subr.mxu0 0.0
    %8671 = vmatpush1.msra.mxu0 0.0
    %8672 = vmatprep.subr.mxu0 0.0
    %8673 = vmatpush1.msra.mxu0 0.0
    %8674 = vmatprep.subr.mxu0 0.0
    %8675 = vmatpush1.msra.mxu0 0.0
    %8676 = vmatprep.subr.mxu0 0.0
    %8677 = vmatpush1.msra.mxu0 0.0
    %8678 = vmatprep.subr.mxu0 0.0
    %8679 = vmatpush1.msra.mxu0 0.0
    %8680 = vmatprep.subr.mxu0 0.0
    %8681 = vmatpush1.msra.mxu0 0.0
    %8682 = vmatprep.subr.mxu0 0.0
    %8683 = vmatpush1.msra.mxu0 0.0
    %8684 = vmatprep.subr.mxu0 0.0
    %8685 = vmatpush1.msra.mxu0 0.0
    %8686 = vmatprep.subr.mxu0 0.0
    %8687 = vmatpush1.msra.mxu0 0.0
    %8688 = vmatprep.subr.mxu0 0.0
    %8689 = vmatpush1.msra.mxu0 0.0
    %8690 = vmatprep.subr.mxu0 0.0
    %8691 = vmatpush1.msra.mxu0 0.0
    %8692 = vmatprep.subr.mxu0 0.0
    %8693 = vmatpush1.msra.mxu0 0.0
    %8694 = vmatprep.subr.mxu0 0.0
    %8695 = vmatpush1.msra.mxu0 0.0
    %8696 = vmatprep.subr.mxu0 0.0
    %8697 = vmatpush1.msra.mxu0 0.0
    %8698 = vmatprep.mubr.f32.mxu0 0.0
    %8699 = vmatmul.mubr.f32.gmra.mrb[0].mxu0 %v8632
    %v8700 = vpop.f32.mrb[0].mxu0
    %v8701 = vadd.f32 0.0, %v8700
    %v8702 = vpop.f32.mrb[0].mxu0
    %v8703 = vadd.f32 0.0, %v8702
    %8704 = vdwg.mxu0
    %8705 = vmatprep.subr.mxu0 %v8618
    %8706 = vmatpush1.msra.mxu0 %v8617
    %8707 = vmatprep.subr.mxu0 %v8622
    %8708 = vmatpush1.msra.mxu0 %v8621
    %8709 = vmatprep.subr.mxu0 0.0
    %8710 = vmatpush1.msra.mxu0 0.0
    %8711 = vmatprep.subr.mxu0 0.0
    %8712 = vmatpush1.msra.mxu0 0.0
    %8713 = vmatprep.subr.mxu0 0.0
    %8714 = vmatpush1.msra.mxu0 0.0
    %8715 = vmatprep.subr.mxu0 0.0
    %8716 = vmatpush1.msra.mxu0 0.0
    %8717 = vmatprep.subr.mxu0 0.0
    %8718 = vmatpush1.msra.mxu0 0.0
    %8719 = vmatprep.subr.mxu0 0.0
    %8720 = vmatpush1.msra.mxu0 0.0
    %8721 = vmatprep.subr.mxu0 0.0
    %8722 = vmatpush1.msra.mxu0 0.0
    %8723 = vmatprep.subr.mxu0 0.0
    %8724 = vmatpush1.msra.mxu0 0.0
    %8725 = vmatprep.subr.mxu0 0.0
    %8726 = vmatpush1.msra.mxu0 0.0
    %8727 = vmatprep.subr.mxu0 0.0
    %8728 = vmatpush1.msra.mxu0 0.0
    %8729 = vmatprep.subr.mxu0 0.0
    %8730 = vmatpush1.msra.mxu0 0.0
    %8731 = vmatprep.subr.mxu0 0.0
    %8732 = vmatpush1.msra.mxu0 0.0
    %8733 = vmatprep.subr.mxu0 0.0
    %8734 = vmatpush1.msra.mxu0 0.0
    %8735 = vmatprep.subr.mxu0 0.0
    %8736 = vmatpush1.msra.mxu0 0.0
    %8737 = vmatprep.subr.mxu0 0.0
    %8738 = vmatpush1.msra.mxu0 0.0
    %8739 = vmatprep.subr.mxu0 0.0
    %8740 = vmatpush1.msra.mxu0 0.0
    %8741 = vmatprep.subr.mxu0 0.0
    %8742 = vmatpush1.msra.mxu0 0.0
    %8743 = vmatprep.subr.mxu0 0.0
    %8744 = vmatpush1.msra.mxu0 0.0
    %8745 = vmatprep.subr.mxu0 0.0
    %8746 = vmatpush1.msra.mxu0 0.0
    %8747 = vmatprep.subr.mxu0 0.0
    %8748 = vmatpush1.msra.mxu0 0.0
    %8749 = vmatprep.subr.mxu0 0.0
    %8750 = vmatpush1.msra.mxu0 0.0
    %8751 = vmatprep.subr.mxu0 0.0
    %8752 = vmatpush1.msra.mxu0 0.0
    %8753 = vmatprep.subr.mxu0 0.0
    %8754 = vmatpush1.msra.mxu0 0.0
    %8755 = vmatprep.subr.mxu0 0.0
    %8756 = vmatpush1.msra.mxu0 0.0
    %8757 = vmatprep.subr.mxu0 0.0
    %8758 = vmatpush1.msra.mxu0 0.0
    %8759 = vmatprep.subr.mxu0 0.0
    %8760 = vmatpush1.msra.mxu0 0.0
    %8761 = vmatprep.subr.mxu0 0.0
    %8762 = vmatpush1.msra.mxu0 0.0
    %8763 = vmatprep.subr.mxu0 0.0
    %8764 = vmatpush1.msra.mxu0 0.0
    %8765 = vmatprep.subr.mxu0 0.0
    %8766 = vmatpush1.msra.mxu0 0.0
    %8767 = vmatprep.subr.mxu0 0.0
    %8768 = vmatpush1.msra.mxu0 0.0
    %8769 = vmatprep.mubr.f32.mxu0 0.0
    %8770 = vmatmul.mubr.f32.gmra.mrb[0].mxu0 %v8632
    %v8771 = vpop.f32.mrb[0].mxu0
    %v8772 = vadd.f32 0.0, %v8771
    %v8773 = vpop.f32.mrb[0].mxu0
    %v8774 = vadd.f32 0.0, %v8773
    %8775 = vdwg.mxu0
    %v8776 = vld [vmem:[%s2105] ss:$8 sm:$0xf]
    %v8778 = vlaneseq
    %v8779 = vshrl.u32 %v8778, 7
    %v8780 = vsub.s32 0, %v8779
    %v8781 = vrot.slane %v8776, %v8780
    %v8782 = vlaneseq
    %v8783 = vshrl.u32 %v8782, 7
    %v8784 = vsub.s32 1, %v8783
    %v8785 = vrot.slane %v8776, %v8784
    %v8786 = vlaneseq
    %v8787 = vshrl.u32 %v8786, 7
    %v8788 = vsub.s32 2, %v8787
    %v8789 = vrot.slane %v8776, %v8788
    %v8790 = vlaneseq
    %v8791 = vshrl.u32 %v8790, 7
    %v8792 = vsub.s32 3, %v8791
    %v8793 = vrot.slane %v8776, %v8792
    %v8798 = vmul.f32 %v8701, %v8781
    %v8799 = vmul.f32 %v8703, %v8785
    %v8800 = vmul.f32 %v8772, %v8789
    %v8801 = vmul.f32 %v8774, %v8793
    %v8802 = vadd.f32 %v8590, %v8798
    %v8803 = vadd.f32 %v8591, %v8799
    %v8804 = vadd.f32 %v8592, %v8800
    %v8805 = vadd.f32 %v8593, %v8801
    %v8806 = vld [vmem:[#allocation2] sm:$0xff]
    %v8807 = vld [vmem:[#allocation2 + $0x8] sm:$0xff]
    %v8808 = vld [vmem:[#allocation2 + $0x10] sm:$0xff]
    %v8809 = vld [vmem:[#allocation2 + $0x18] sm:$0xff]
    %v8810 = vld [vmem:[#allocation2 + $0x20] sm:$0xff]
    %v8811 = vld [vmem:[#allocation24] sm:$0xff]
    %8817 = vrot.lane.b32.xlu0 %v8806, 17
    %v8818 = vpop.permute.xlu0 %8817
    %8819 = vrot.lane.b32.xlu0 %v8807, 17
    %v8820 = vpop.permute.xlu0 %8819
    %8821 = vrot.lane.b32.xlu0 %v8808, 17
    %v8822 = vpop.permute.xlu0 %8821
    %8823 = vrot.lane.b32.xlu0 %v8809, 17
    %v8824 = vpop.permute.xlu0 %8823
    %8825 = vrot.lane.b32.xlu0 %v8810, 17
    %v8826 = vpop.permute.xlu0 %8825
    %v8827 = vsel %vm330, %v8818, %v8820
    %v8828 = vsel %vm330, %v8820, %v8822
    %v8829 = vsel %vm330, %v8822, %v8824
    %v8830 = vsel %vm330, %v8824, %v8826
    %v8836 = vsel %vm2450, %v8811, 0
    %8838 = vmatprep.subr.mxu0 %v8828
    %8839 = vmatpush1.msra.mxu0 %v8827
    %8840 = vmatprep.subr.mxu0 0.0
    %8841 = vmatpush1.msra.mxu0 0.0
    %8842 = vmatprep.subr.mxu0 0.0
    %8843 = vmatpush1.msra.mxu0 0.0
    %8844 = vmatprep.subr.mxu0 0.0
    %8845 = vmatpush1.msra.mxu0 0.0
    %8846 = vmatprep.subr.mxu0 0.0
    %8847 = vmatpush1.msra.mxu0 0.0
    %8848 = vmatprep.subr.mxu0 0.0
    %8849 = vmatpush1.msra.mxu0 0.0
    %8850 = vmatprep.subr.mxu0 0.0
    %8851 = vmatpush1.msra.mxu0 0.0
    %8852 = vmatprep.subr.mxu0 0.0
    %8853 = vmatpush1.msra.mxu0 0.0
    %8854 = vmatprep.subr.mxu0 0.0
    %8855 = vmatpush1.msra.mxu0 0.0
    %8856 = vmatprep.subr.mxu0 0.0
    %8857 = vmatpush1.msra.mxu0 0.0
    %8858 = vmatprep.subr.mxu0 0.0
    %8859 = vmatpush1.msra.mxu0 0.0
    %8860 = vmatprep.subr.mxu0 0.0
    %8861 = vmatpush1.msra.mxu0 0.0
    %8862 = vmatprep.subr.mxu0 0.0
    %8863 = vmatpush1.msra.mxu0 0.0
    %8864 = vmatprep.subr.mxu0 0.0
    %8865 = vmatpush1.msra.mxu0 0.0
    %8866 = vmatprep.subr.mxu0 0.0
    %8867 = vmatpush1.msra.mxu0 0.0
    %8868 = vmatprep.subr.mxu0 0.0
    %8869 = vmatpush1.msra.mxu0 0.0
    %8870 = vmatprep.subr.mxu0 0.0
    %8871 = vmatpush1.msra.mxu0 0.0
    %8872 = vmatprep.subr.mxu0 0.0
    %8873 = vmatpush1.msra.mxu0 0.0
    %8874 = vmatprep.subr.mxu0 0.0
    %8875 = vmatpush1.msra.mxu0 0.0
    %8876 = vmatprep.subr.mxu0 0.0
    %8877 = vmatpush1.msra.mxu0 0.0
    %8878 = vmatprep.subr.mxu0 0.0
    %8879 = vmatpush1.msra.mxu0 0.0
    %8880 = vmatprep.subr.mxu0 0.0
    %8881 = vmatpush1.msra.mxu0 0.0
    %8882 = vmatprep.subr.mxu0 0.0
    %8883 = vmatpush1.msra.mxu0 0.0
    %8884 = vmatprep.subr.mxu0 0.0
    %8885 = vmatpush1.msra.mxu0 0.0
    %8886 = vmatprep.subr.mxu0 0.0
    %8887 = vmatpush1.msra.mxu0 0.0
    %8888 = vmatprep.subr.mxu0 0.0
    %8889 = vmatpush1.msra.mxu0 0.0
    %8890 = vmatprep.subr.mxu0 0.0
    %8891 = vmatpush1.msra.mxu0 0.0
    %8892 = vmatprep.subr.mxu0 0.0
    %8893 = vmatpush1.msra.mxu0 0.0
    %8894 = vmatprep.subr.mxu0 0.0
    %8895 = vmatpush1.msra.mxu0 0.0
    %8896 = vmatprep.subr.mxu0 0.0
    %8897 = vmatpush1.msra.mxu0 0.0
    %8898 = vmatprep.subr.mxu0 0.0
    %8899 = vmatpush1.msra.mxu0 0.0
    %8900 = vmatprep.subr.mxu0 0.0
    %8901 = vmatpush1.msra.mxu0 0.0
    %8902 = vmatprep.mubr.f32.mxu0 0.0
    %8903 = vmatmul.mubr.f32.gmra.mrb[0].mxu0 %v8836
    %v8904 = vpop.f32.mrb[0].mxu0
    %v8905 = vadd.f32 0.0, %v8904
    %v8906 = vpop.f32.mrb[0].mxu0
    %v8907 = vadd.f32 0.0, %v8906
    %8908 = vdwg.mxu0
    %8909 = vmatprep.subr.mxu0 %v8830
    %8910 = vmatpush1.msra.mxu0 %v8829
    %8911 = vmatprep.subr.mxu0 0.0
    %8912 = vmatpush1.msra.mxu0 0.0
    %8913 = vmatprep.subr.mxu0 0.0
    %8914 = vmatpush1.msra.mxu0 0.0
    %8915 = vmatprep.subr.mxu0 0.0
    %8916 = vmatpush1.msra.mxu0 0.0
    %8917 = vmatprep.subr.mxu0 0.0
    %8918 = vmatpush1.msra.mxu0 0.0
    %8919 = vmatprep.subr.mxu0 0.0
    %8920 = vmatpush1.msra.mxu0 0.0
    %8921 = vmatprep.subr.mxu0 0.0
    %8922 = vmatpush1.msra.mxu0 0.0
    %8923 = vmatprep.subr.mxu0 0.0
    %8924 = vmatpush1.msra.mxu0 0.0
    %8925 = vmatprep.subr.mxu0 0.0
    %8926 = vmatpush1.msra.mxu0 0.0
    %8927 = vmatprep.subr.mxu0 0.0
    %8928 = vmatpush1.msra.mxu0 0.0
    %8929 = vmatprep.subr.mxu0 0.0
    %8930 = vmatpush1.msra.mxu0 0.0
    %8931 = vmatprep.subr.mxu0 0.0
    %8932 = vmatpush1.msra.mxu0 0.0
    %8933 = vmatprep.subr.mxu0 0.0
    %8934 = vmatpush1.msra.mxu0 0.0
    %8935 = vmatprep.subr.mxu0 0.0
    %8936 = vmatpush1.msra.mxu0 0.0
    %8937 = vmatprep.subr.mxu0 0.0
    %8938 = vmatpush1.msra.mxu0 0.0
    %8939 = vmatprep.subr.mxu0 0.0
    %8940 = vmatpush1.msra.mxu0 0.0
    %8941 = vmatprep.subr.mxu0 0.0
    %8942 = vmatpush1.msra.mxu0 0.0
    %8943 = vmatprep.subr.mxu0 0.0
    %8944 = vmatpush1.msra.mxu0 0.0
    %8945 = vmatprep.subr.mxu0 0.0
    %8946 = vmatpush1.msra.mxu0 0.0
    %8947 = vmatprep.subr.mxu0 0.0
    %8948 = vmatpush1.msra.mxu0 0.0
    %8949 = vmatprep.subr.mxu0 0.0
    %8950 = vmatpush1.msra.mxu0 0.0
    %8951 = vmatprep.subr.mxu0 0.0
    %8952 = vmatpush1.msra.mxu0 0.0
    %8953 = vmatprep.subr.mxu0 0.0
    %8954 = vmatpush1.msra.mxu0 0.0
    %8955 = vmatprep.subr.mxu0 0.0
    %8956 = vmatpush1.msra.mxu0 0.0
    %8957 = vmatprep.subr.mxu0 0.0
    %8958 = vmatpush1.msra.mxu0 0.0
    %8959 = vmatprep.subr.mxu0 0.0
    %8960 = vmatpush1.msra.mxu0 0.0
    %8961 = vmatprep.subr.mxu0 0.0
    %8962 = vmatpush1.msra.mxu0 0.0
    %8963 = vmatprep.subr.mxu0 0.0
    %8964 = vmatpush1.msra.mxu0 0.0
    %8965 = vmatprep.subr.mxu0 0.0
    %8966 = vmatpush1.msra.mxu0 0.0
    %8967 = vmatprep.subr.mxu0 0.0
    %8968 = vmatpush1.msra.mxu0 0.0
    %8969 = vmatprep.subr.mxu0 0.0
    %8970 = vmatpush1.msra.mxu0 0.0
    %8971 = vmatprep.subr.mxu0 0.0
    %8972 = vmatpush1.msra.mxu0 0.0
    %8973 = vmatprep.mubr.f32.mxu0 0.0
    %8974 = vmatmul.mubr.f32.gmra.mrb[0].mxu0 %v8836
    %v8975 = vpop.f32.mrb[0].mxu0
    %v8976 = vadd.f32 0.0, %v8975
    %v8977 = vpop.f32.mrb[0].mxu0
    %v8978 = vadd.f32 0.0, %v8977
    %8979 = vdwg.mxu0
    %v8980 = vmul.f32 %v8905, %v7131
    %v8981 = vmul.f32 %v8907, %v7135
    %v8982 = vmul.f32 %v8976, %v7139
    %v8983 = vmul.f32 %v8978, %v7143
    %v8984 = vld [vmem:[#allocation24 + $0x8] sm:$0xff]
    %8985 = vrot.lane.b32.xlu0 %v8806, 16
    %v8986 = vpop.permute.xlu0 %8985
    %8987 = vrot.lane.b32.xlu0 %v8807, 16
    %v8988 = vpop.permute.xlu0 %8987
    %8989 = vrot.lane.b32.xlu0 %v8808, 16
    %v8990 = vpop.permute.xlu0 %8989
    %8991 = vrot.lane.b32.xlu0 %v8809, 16
    %v8992 = vpop.permute.xlu0 %8991
    %8993 = vrot.lane.b32.xlu0 %v8810, 16
    %v8994 = vpop.permute.xlu0 %8993
    %v8995 = vsel %vm535, %v8986, %v8988
    %v8996 = vsel %vm535, %v8988, %v8990
    %v8997 = vsel %vm535, %v8990, %v8992
    %v8998 = vsel %vm535, %v8992, %v8994
    %v9004 = vsel %vm2450, %v8984, 0
    %9006 = vmatprep.subr.mxu0 %v8996
    %9007 = vmatpush1.msra.mxu0 %v8995
    %9008 = vmatprep.subr.mxu0 0.0
    %9009 = vmatpush1.msra.mxu0 0.0
    %9010 = vmatprep.subr.mxu0 0.0
    %9011 = vmatpush1.msra.mxu0 0.0
    %9012 = vmatprep.subr.mxu0 0.0
    %9013 = vmatpush1.msra.mxu0 0.0
    %9014 = vmatprep.subr.mxu0 0.0
    %9015 = vmatpush1.msra.mxu0 0.0
    %9016 = vmatprep.subr.mxu0 0.0
    %9017 = vmatpush1.msra.mxu0 0.0
    %9018 = vmatprep.subr.mxu0 0.0
    %9019 = vmatpush1.msra.mxu0 0.0
    %9020 = vmatprep.subr.mxu0 0.0
    %9021 = vmatpush1.msra.mxu0 0.0
    %9022 = vmatprep.subr.mxu0 0.0
    %9023 = vmatpush1.msra.mxu0 0.0
    %9024 = vmatprep.subr.mxu0 0.0
    %9025 = vmatpush1.msra.mxu0 0.0
    %9026 = vmatprep.subr.mxu0 0.0
    %9027 = vmatpush1.msra.mxu0 0.0
    %9028 = vmatprep.subr.mxu0 0.0
    %9029 = vmatpush1.msra.mxu0 0.0
    %9030 = vmatprep.subr.mxu0 0.0
    %9031 = vmatpush1.msra.mxu0 0.0
    %9032 = vmatprep.subr.mxu0 0.0
    %9033 = vmatpush1.msra.mxu0 0.0
    %9034 = vmatprep.subr.mxu0 0.0
    %9035 = vmatpush1.msra.mxu0 0.0
    %9036 = vmatprep.subr.mxu0 0.0
    %9037 = vmatpush1.msra.mxu0 0.0
    %9038 = vmatprep.subr.mxu0 0.0
    %9039 = vmatpush1.msra.mxu0 0.0
    %9040 = vmatprep.subr.mxu0 0.0
    %9041 = vmatpush1.msra.mxu0 0.0
    %9042 = vmatprep.subr.mxu0 0.0
    %9043 = vmatpush1.msra.mxu0 0.0
    %9044 = vmatprep.subr.mxu0 0.0
    %9045 = vmatpush1.msra.mxu0 0.0
    %9046 = vmatprep.subr.mxu0 0.0
    %9047 = vmatpush1.msra.mxu0 0.0
    %9048 = vmatprep.subr.mxu0 0.0
    %9049 = vmatpush1.msra.mxu0 0.0
    %9050 = vmatprep.subr.mxu0 0.0
    %9051 = vmatpush1.msra.mxu0 0.0
    %9052 = vmatprep.subr.mxu0 0.0
    %9053 = vmatpush1.msra.mxu0 0.0
    %9054 = vmatprep.subr.mxu0 0.0
    %9055 = vmatpush1.msra.mxu0 0.0
    %9056 = vmatprep.subr.mxu0 0.0
    %9057 = vmatpush1.msra.mxu0 0.0
    %9058 = vmatprep.subr.mxu0 0.0
    %9059 = vmatpush1.msra.mxu0 0.0
    %9060 = vmatprep.subr.mxu0 0.0
    %9061 = vmatpush1.msra.mxu0 0.0
    %9062 = vmatprep.subr.mxu0 0.0
    %9063 = vmatpush1.msra.mxu0 0.0
    %9064 = vmatprep.subr.mxu0 0.0
    %9065 = vmatpush1.msra.mxu0 0.0
    %9066 = vmatprep.subr.mxu0 0.0
    %9067 = vmatpush1.msra.mxu0 0.0
    %9068 = vmatprep.subr.mxu0 0.0
    %9069 = vmatpush1.msra.mxu0 0.0
    %9070 = vmatprep.mubr.f32.mxu0 0.0
    %9071 = vmatmul.mubr.f32.gmra.mrb[0].mxu0 %v9004
    %v9072 = vpop.f32.mrb[0].mxu0
    %v9073 = vadd.f32 0.0, %v9072
    %v9074 = vpop.f32.mrb[0].mxu0
    %v9075 = vadd.f32 0.0, %v9074
    %9076 = vdwg.mxu0
    %9077 = vmatprep.subr.mxu0 %v8998
    %9078 = vmatpush1.msra.mxu0 %v8997
    %9079 = vmatprep.subr.mxu0 0.0
    %9080 = vmatpush1.msra.mxu0 0.0
    %9081 = vmatprep.subr.mxu0 0.0
    %9082 = vmatpush1.msra.mxu0 0.0
    %9083 = vmatprep.subr.mxu0 0.0
    %9084 = vmatpush1.msra.mxu0 0.0
    %9085 = vmatprep.subr.mxu0 0.0
    %9086 = vmatpush1.msra.mxu0 0.0
    %9087 = vmatprep.subr.mxu0 0.0
    %9088 = vmatpush1.msra.mxu0 0.0
    %9089 = vmatprep.subr.mxu0 0.0
    %9090 = vmatpush1.msra.mxu0 0.0
    %9091 = vmatprep.subr.mxu0 0.0
    %9092 = vmatpush1.msra.mxu0 0.0
    %9093 = vmatprep.subr.mxu0 0.0
    %9094 = vmatpush1.msra.mxu0 0.0
    %9095 = vmatprep.subr.mxu0 0.0
    %9096 = vmatpush1.msra.mxu0 0.0
    %9097 = vmatprep.subr.mxu0 0.0
    %9098 = vmatpush1.msra.mxu0 0.0
    %9099 = vmatprep.subr.mxu0 0.0
    %9100 = vmatpush1.msra.mxu0 0.0
    %9101 = vmatprep.subr.mxu0 0.0
    %9102 = vmatpush1.msra.mxu0 0.0
    %9103 = vmatprep.subr.mxu0 0.0
    %9104 = vmatpush1.msra.mxu0 0.0
    %9105 = vmatprep.subr.mxu0 0.0
    %9106 = vmatpush1.msra.mxu0 0.0
    %9107 = vmatprep.subr.mxu0 0.0
    %9108 = vmatpush1.msra.mxu0 0.0
    %9109 = vmatprep.subr.mxu0 0.0
    %9110 = vmatpush1.msra.mxu0 0.0
    %9111 = vmatprep.subr.mxu0 0.0
    %9112 = vmatpush1.msra.mxu0 0.0
    %9113 = vmatprep.subr.mxu0 0.0
    %9114 = vmatpush1.msra.mxu0 0.0
    %9115 = vmatprep.subr.mxu0 0.0
    %9116 = vmatpush1.msra.mxu0 0.0
    %9117 = vmatprep.subr.mxu0 0.0
    %9118 = vmatpush1.msra.mxu0 0.0
    %9119 = vmatprep.subr.mxu0 0.0
    %9120 = vmatpush1.msra.mxu0 0.0
    %9121 = vmatprep.subr.mxu0 0.0
    %9122 = vmatpush1.msra.mxu0 0.0
    %9123 = vmatprep.subr.mxu0 0.0
    %9124 = vmatpush1.msra.mxu0 0.0
    %9125 = vmatprep.subr.mxu0 0.0
    %9126 = vmatpush1.msra.mxu0 0.0
    %9127 = vmatprep.subr.mxu0 0.0
    %9128 = vmatpush1.msra.mxu0 0.0
    %9129 = vmatprep.subr.mxu0 0.0
    %9130 = vmatpush1.msra.mxu0 0.0
    %9131 = vmatprep.subr.mxu0 0.0
    %9132 = vmatpush1.msra.mxu0 0.0
    %9133 = vmatprep.subr.mxu0 0.0
    %9134 = vmatpush1.msra.mxu0 0.0
    %9135 = vmatprep.subr.mxu0 0.0
    %9136 = vmatpush1.msra.mxu0 0.0
    %9137 = vmatprep.subr.mxu0 0.0
    %9138 = vmatpush1.msra.mxu0 0.0
    %9139 = vmatprep.subr.mxu0 0.0
    %9140 = vmatpush1.msra.mxu0 0.0
    %9141 = vmatprep.mubr.f32.mxu0 0.0
    %9142 = vmatmul.mubr.f32.gmra.mrb[0].mxu0 %v9004
    %v9143 = vpop.f32.mrb[0].mxu0
    %v9144 = vadd.f32 0.0, %v9143
    %v9145 = vpop.f32.mrb[0].mxu0
    %v9146 = vadd.f32 0.0, %v9145
    %9147 = vdwg.mxu0
    %v9148 = vmul.f32 %v9073, %v7339
    %v9149 = vmul.f32 %v9075, %v7343
    %v9150 = vmul.f32 %v9144, %v7347
    %v9151 = vmul.f32 %v9146, %v7351
    %v9152 = vadd.f32 %v8980, %v9148
    %v9153 = vadd.f32 %v8981, %v9149
    %v9154 = vadd.f32 %v8982, %v9150
    %v9155 = vadd.f32 %v8983, %v9151
    %v9156 = vld [vmem:[#allocation24 + $0x10] sm:$0xff]
    %9157 = vrot.lane.b32.xlu0 %v8806, 15
    %v9158 = vpop.permute.xlu0 %9157
    %9159 = vrot.lane.b32.xlu0 %v8807, 15
    %v9160 = vpop.permute.xlu0 %9159
    %9161 = vrot.lane.b32.xlu0 %v8808, 15
    %v9162 = vpop.permute.xlu0 %9161
    %9163 = vrot.lane.b32.xlu0 %v8809, 15
    %v9164 = vpop.permute.xlu0 %9163
    %9165 = vrot.lane.b32.xlu0 %v8810, 15
    %v9166 = vpop.permute.xlu0 %9165
    %v9167 = vsel %vm743, %v9158, %v9160
    %v9168 = vsel %vm743, %v9160, %v9162
    %v9169 = vsel %vm743, %v9162, %v9164
    %v9170 = vsel %vm743, %v9164, %v9166
    %v9176 = vsel %vm2450, %v9156, 0
    %9178 = vmatprep.subr.mxu0 %v9168
    %9179 = vmatpush1.msra.mxu0 %v9167
    %9180 = vmatprep.subr.mxu0 0.0
    %9181 = vmatpush1.msra.mxu0 0.0
    %9182 = vmatprep.subr.mxu0 0.0
    %9183 = vmatpush1.msra.mxu0 0.0
    %9184 = vmatprep.subr.mxu0 0.0
    %9185 = vmatpush1.msra.mxu0 0.0
    %9186 = vmatprep.subr.mxu0 0.0
    %9187 = vmatpush1.msra.mxu0 0.0
    %9188 = vmatprep.subr.mxu0 0.0
    %9189 = vmatpush1.msra.mxu0 0.0
    %9190 = vmatprep.subr.mxu0 0.0
    %9191 = vmatpush1.msra.mxu0 0.0
    %9192 = vmatprep.subr.mxu0 0.0
    %9193 = vmatpush1.msra.mxu0 0.0
    %9194 = vmatprep.subr.mxu0 0.0
    %9195 = vmatpush1.msra.mxu0 0.0
    %9196 = vmatprep.subr.mxu0 0.0
    %9197 = vmatpush1.msra.mxu0 0.0
    %9198 = vmatprep.subr.mxu0 0.0
    %9199 = vmatpush1.msra.mxu0 0.0
    %9200 = vmatprep.subr.mxu0 0.0
    %9201 = vmatpush1.msra.mxu0 0.0
    %9202 = vmatprep.subr.mxu0 0.0
    %9203 = vmatpush1.msra.mxu0 0.0
    %9204 = vmatprep.subr.mxu0 0.0
    %9205 = vmatpush1.msra.mxu0 0.0
    %9206 = vmatprep.subr.mxu0 0.0
    %9207 = vmatpush1.msra.mxu0 0.0
    %9208 = vmatprep.subr.mxu0 0.0
    %9209 = vmatpush1.msra.mxu0 0.0
    %9210 = vmatprep.subr.mxu0 0.0
    %9211 = vmatpush1.msra.mxu0 0.0
    %9212 = vmatprep.subr.mxu0 0.0
    %9213 = vmatpush1.msra.mxu0 0.0
    %9214 = vmatprep.subr.mxu0 0.0
    %9215 = vmatpush1.msra.mxu0 0.0
    %9216 = vmatprep.subr.mxu0 0.0
    %9217 = vmatpush1.msra.mxu0 0.0
    %9218 = vmatprep.subr.mxu0 0.0
    %9219 = vmatpush1.msra.mxu0 0.0
    %9220 = vmatprep.subr.mxu0 0.0
    %9221 = vmatpush1.msra.mxu0 0.0
    %9222 = vmatprep.subr.mxu0 0.0
    %9223 = vmatpush1.msra.mxu0 0.0
    %9224 = vmatprep.subr.mxu0 0.0
    %9225 = vmatpush1.msra.mxu0 0.0
    %9226 = vmatprep.subr.mxu0 0.0
    %9227 = vmatpush1.msra.mxu0 0.0
    %9228 = vmatprep.subr.mxu0 0.0
    %9229 = vmatpush1.msra.mxu0 0.0
    %9230 = vmatprep.subr.mxu0 0.0
    %9231 = vmatpush1.msra.mxu0 0.0
    %9232 = vmatprep.subr.mxu0 0.0
    %9233 = vmatpush1.msra.mxu0 0.0
    %9234 = vmatprep.subr.mxu0 0.0
    %9235 = vmatpush1.msra.mxu0 0.0
    %9236 = vmatprep.subr.mxu0 0.0
    %9237 = vmatpush1.msra.mxu0 0.0
    %9238 = vmatprep.subr.mxu0 0.0
    %9239 = vmatpush1.msra.mxu0 0.0
    %9240 = vmatprep.subr.mxu0 0.0
    %9241 = vmatpush1.msra.mxu0 0.0
    %9242 = vmatprep.mubr.f32.mxu0 0.0
    %9243 = vmatmul.mubr.f32.gmra.mrb[0].mxu0 %v9176
    %v9244 = vpop.f32.mrb[0].mxu0
    %v9245 = vadd.f32 0.0, %v9244
    %v9246 = vpop.f32.mrb[0].mxu0
    %v9247 = vadd.f32 0.0, %v9246
    %9248 = vdwg.mxu0
    %9249 = vmatprep.subr.mxu0 %v9170
    %9250 = vmatpush1.msra.mxu0 %v9169
    %9251 = vmatprep.subr.mxu0 0.0
    %9252 = vmatpush1.msra.mxu0 0.0
    %9253 = vmatprep.subr.mxu0 0.0
    %9254 = vmatpush1.msra.mxu0 0.0
    %9255 = vmatprep.subr.mxu0 0.0
    %9256 = vmatpush1.msra.mxu0 0.0
    %9257 = vmatprep.subr.mxu0 0.0
    %9258 = vmatpush1.msra.mxu0 0.0
    %9259 = vmatprep.subr.mxu0 0.0
    %9260 = vmatpush1.msra.mxu0 0.0
    %9261 = vmatprep.subr.mxu0 0.0
    %9262 = vmatpush1.msra.mxu0 0.0
    %9263 = vmatprep.subr.mxu0 0.0
    %9264 = vmatpush1.msra.mxu0 0.0
    %9265 = vmatprep.subr.mxu0 0.0
    %9266 = vmatpush1.msra.mxu0 0.0
    %9267 = vmatprep.subr.mxu0 0.0
    %9268 = vmatpush1.msra.mxu0 0.0
    %9269 = vmatprep.subr.mxu0 0.0
    %9270 = vmatpush1.msra.mxu0 0.0
    %9271 = vmatprep.subr.mxu0 0.0
    %9272 = vmatpush1.msra.mxu0 0.0
    %9273 = vmatprep.subr.mxu0 0.0
    %9274 = vmatpush1.msra.mxu0 0.0
    %9275 = vmatprep.subr.mxu0 0.0
    %9276 = vmatpush1.msra.mxu0 0.0
    %9277 = vmatprep.subr.mxu0 0.0
    %9278 = vmatpush1.msra.mxu0 0.0
    %9279 = vmatprep.subr.mxu0 0.0
    %9280 = vmatpush1.msra.mxu0 0.0
    %9281 = vmatprep.subr.mxu0 0.0
    %9282 = vmatpush1.msra.mxu0 0.0
    %9283 = vmatprep.subr.mxu0 0.0
    %9284 = vmatpush1.msra.mxu0 0.0
    %9285 = vmatprep.subr.mxu0 0.0
    %9286 = vmatpush1.msra.mxu0 0.0
    %9287 = vmatprep.subr.mxu0 0.0
    %9288 = vmatpush1.msra.mxu0 0.0
    %9289 = vmatprep.subr.mxu0 0.0
    %9290 = vmatpush1.msra.mxu0 0.0
    %9291 = vmatprep.subr.mxu0 0.0
    %9292 = vmatpush1.msra.mxu0 0.0
    %9293 = vmatprep.subr.mxu0 0.0
    %9294 = vmatpush1.msra.mxu0 0.0
    %9295 = vmatprep.subr.mxu0 0.0
    %9296 = vmatpush1.msra.mxu0 0.0
    %9297 = vmatprep.subr.mxu0 0.0
    %9298 = vmatpush1.msra.mxu0 0.0
    %9299 = vmatprep.subr.mxu0 0.0
    %9300 = vmatpush1.msra.mxu0 0.0
    %9301 = vmatprep.subr.mxu0 0.0
    %9302 = vmatpush1.msra.mxu0 0.0
    %9303 = vmatprep.subr.mxu0 0.0
    %9304 = vmatpush1.msra.mxu0 0.0
    %9305 = vmatprep.subr.mxu0 0.0
    %9306 = vmatpush1.msra.mxu0 0.0
    %9307 = vmatprep.subr.mxu0 0.0
    %9308 = vmatpush1.msra.mxu0 0.0
    %9309 = vmatprep.subr.mxu0 0.0
    %9310 = vmatpush1.msra.mxu0 0.0
    %9311 = vmatprep.subr.mxu0 0.0
    %9312 = vmatpush1.msra.mxu0 0.0
    %9313 = vmatprep.mubr.f32.mxu0 0.0
    %9314 = vmatmul.mubr.f32.gmra.mrb[0].mxu0 %v9176
    %v9315 = vpop.f32.mrb[0].mxu0
    %v9316 = vadd.f32 0.0, %v9315
    %v9317 = vpop.f32.mrb[0].mxu0
    %v9318 = vadd.f32 0.0, %v9317
    %9319 = vdwg.mxu0
    %v9320 = vmul.f32 %v9245, %v7551
    %v9321 = vmul.f32 %v9247, %v7555
    %v9322 = vmul.f32 %v9316, %v7559
    %v9323 = vmul.f32 %v9318, %v7563
    %v9324 = vadd.f32 %v9152, %v9320
    %v9325 = vadd.f32 %v9153, %v9321
    %v9326 = vadd.f32 %v9154, %v9322
    %v9327 = vadd.f32 %v9155, %v9323
    %v9328 = vld [vmem:[#allocation24 + $0x18] sm:$0xff]
    %9329 = vrot.lane.b32.xlu0 %v8806, 1
    %v9330 = vpop.permute.xlu0 %9329
    %9331 = vrot.lane.b32.xlu0 %v8807, 1
    %v9332 = vpop.permute.xlu0 %9331
    %9333 = vrot.lane.b32.xlu0 %v8808, 1
    %v9334 = vpop.permute.xlu0 %9333
    %9335 = vrot.lane.b32.xlu0 %v8809, 1
    %v9336 = vpop.permute.xlu0 %9335
    %9337 = vrot.lane.b32.xlu0 %v8810, 1
    %v9338 = vpop.permute.xlu0 %9337
    %v9339 = vsel %vm951, %v9330, %v9332
    %v9340 = vsel %vm951, %v9332, %v9334
    %v9341 = vsel %vm951, %v9334, %v9336
    %v9342 = vsel %vm951, %v9336, %v9338
    %v9348 = vsel %vm2450, %v9328, 0
    %9350 = vmatprep.subr.mxu0 %v9340
    %9351 = vmatpush1.msra.mxu0 %v9339
    %9352 = vmatprep.subr.mxu0 0.0
    %9353 = vmatpush1.msra.mxu0 0.0
    %9354 = vmatprep.subr.mxu0 0.0
    %9355 = vmatpush1.msra.mxu0 0.0
    %9356 = vmatprep.subr.mxu0 0.0
    %9357 = vmatpush1.msra.mxu0 0.0
    %9358 = vmatprep.subr.mxu0 0.0
    %9359 = vmatpush1.msra.mxu0 0.0
    %9360 = vmatprep.subr.mxu0 0.0
    %9361 = vmatpush1.msra.mxu0 0.0
    %9362 = vmatprep.subr.mxu0 0.0
    %9363 = vmatpush1.msra.mxu0 0.0
    %9364 = vmatprep.subr.mxu0 0.0
    %9365 = vmatpush1.msra.mxu0 0.0
    %9366 = vmatprep.subr.mxu0 0.0
    %9367 = vmatpush1.msra.mxu0 0.0
    %9368 = vmatprep.subr.mxu0 0.0
    %9369 = vmatpush1.msra.mxu0 0.0
    %9370 = vmatprep.subr.mxu0 0.0
    %9371 = vmatpush1.msra.mxu0 0.0
    %9372 = vmatprep.subr.mxu0 0.0
    %9373 = vmatpush1.msra.mxu0 0.0
    %9374 = vmatprep.subr.mxu0 0.0
    %9375 = vmatpush1.msra.mxu0 0.0
    %9376 = vmatprep.subr.mxu0 0.0
    %9377 = vmatpush1.msra.mxu0 0.0
    %9378 = vmatprep.subr.mxu0 0.0
    %9379 = vmatpush1.msra.mxu0 0.0
    %9380 = vmatprep.subr.mxu0 0.0
    %9381 = vmatpush1.msra.mxu0 0.0
    %9382 = vmatprep.subr.mxu0 0.0
    %9383 = vmatpush1.msra.mxu0 0.0
    %9384 = vmatprep.subr.mxu0 0.0
    %9385 = vmatpush1.msra.mxu0 0.0
    %9386 = vmatprep.subr.mxu0 0.0
    %9387 = vmatpush1.msra.mxu0 0.0
    %9388 = vmatprep.subr.mxu0 0.0
    %9389 = vmatpush1.msra.mxu0 0.0
    %9390 = vmatprep.subr.mxu0 0.0
    %9391 = vmatpush1.msra.mxu0 0.0
    %9392 = vmatprep.subr.mxu0 0.0
    %9393 = vmatpush1.msra.mxu0 0.0
    %9394 = vmatprep.subr.mxu0 0.0
    %9395 = vmatpush1.msra.mxu0 0.0
    %9396 = vmatprep.subr.mxu0 0.0
    %9397 = vmatpush1.msra.mxu0 0.0
    %9398 = vmatprep.subr.mxu0 0.0
    %9399 = vmatpush1.msra.mxu0 0.0
    %9400 = vmatprep.subr.mxu0 0.0
    %9401 = vmatpush1.msra.mxu0 0.0
    %9402 = vmatprep.subr.mxu0 0.0
    %9403 = vmatpush1.msra.mxu0 0.0
    %9404 = vmatprep.subr.mxu0 0.0
    %9405 = vmatpush1.msra.mxu0 0.0
    %9406 = vmatprep.subr.mxu0 0.0
    %9407 = vmatpush1.msra.mxu0 0.0
    %9408 = vmatprep.subr.mxu0 0.0
    %9409 = vmatpush1.msra.mxu0 0.0
    %9410 = vmatprep.subr.mxu0 0.0
    %9411 = vmatpush1.msra.mxu0 0.0
    %9412 = vmatprep.subr.mxu0 0.0
    %9413 = vmatpush1.msra.mxu0 0.0
    %9414 = vmatprep.mubr.f32.mxu0 0.0
    %9415 = vmatmul.mubr.f32.gmra.mrb[0].mxu0 %v9348
    %v9416 = vpop.f32.mrb[0].mxu0
    %v9417 = vadd.f32 0.0, %v9416
    %v9418 = vpop.f32.mrb[0].mxu0
    %v9419 = vadd.f32 0.0, %v9418
    %9420 = vdwg.mxu0
    %9421 = vmatprep.subr.mxu0 %v9342
    %9422 = vmatpush1.msra.mxu0 %v9341
    %9423 = vmatprep.subr.mxu0 0.0
    %9424 = vmatpush1.msra.mxu0 0.0
    %9425 = vmatprep.subr.mxu0 0.0
    %9426 = vmatpush1.msra.mxu0 0.0
    %9427 = vmatprep.subr.mxu0 0.0
    %9428 = vmatpush1.msra.mxu0 0.0
    %9429 = vmatprep.subr.mxu0 0.0
    %9430 = vmatpush1.msra.mxu0 0.0
    %9431 = vmatprep.subr.mxu0 0.0
    %9432 = vmatpush1.msra.mxu0 0.0
    %9433 = vmatprep.subr.mxu0 0.0
    %9434 = vmatpush1.msra.mxu0 0.0
    %9435 = vmatprep.subr.mxu0 0.0
    %9436 = vmatpush1.msra.mxu0 0.0
    %9437 = vmatprep.subr.mxu0 0.0
    %9438 = vmatpush1.msra.mxu0 0.0
    %9439 = vmatprep.subr.mxu0 0.0
    %9440 = vmatpush1.msra.mxu0 0.0
    %9441 = vmatprep.subr.mxu0 0.0
    %9442 = vmatpush1.msra.mxu0 0.0
    %9443 = vmatprep.subr.mxu0 0.0
    %9444 = vmatpush1.msra.mxu0 0.0
    %9445 = vmatprep.subr.mxu0 0.0
    %9446 = vmatpush1.msra.mxu0 0.0
    %9447 = vmatprep.subr.mxu0 0.0
    %9448 = vmatpush1.msra.mxu0 0.0
    %9449 = vmatprep.subr.mxu0 0.0
    %9450 = vmatpush1.msra.mxu0 0.0
    %9451 = vmatprep.subr.mxu0 0.0
    %9452 = vmatpush1.msra.mxu0 0.0
    %9453 = vmatprep.subr.mxu0 0.0
    %9454 = vmatpush1.msra.mxu0 0.0
    %9455 = vmatprep.subr.mxu0 0.0
    %9456 = vmatpush1.msra.mxu0 0.0
    %9457 = vmatprep.subr.mxu0 0.0
    %9458 = vmatpush1.msra.mxu0 0.0
    %9459 = vmatprep.subr.mxu0 0.0
    %9460 = vmatpush1.msra.mxu0 0.0
    %9461 = vmatprep.subr.mxu0 0.0
    %9462 = vmatpush1.msra.mxu0 0.0
    %9463 = vmatprep.subr.mxu0 0.0
    %9464 = vmatpush1.msra.mxu0 0.0
    %9465 = vmatprep.subr.mxu0 0.0
    %9466 = vmatpush1.msra.mxu0 0.0
    %9467 = vmatprep.subr.mxu0 0.0
    %9468 = vmatpush1.msra.mxu0 0.0
    %9469 = vmatprep.subr.mxu0 0.0
    %9470 = vmatpush1.msra.mxu0 0.0
    %9471 = vmatprep.subr.mxu0 0.0
    %9472 = vmatpush1.msra.mxu0 0.0
    %9473 = vmatprep.subr.mxu0 0.0
    %9474 = vmatpush1.msra.mxu0 0.0
    %9475 = vmatprep.subr.mxu0 0.0
    %9476 = vmatpush1.msra.mxu0 0.0
    %9477 = vmatprep.subr.mxu0 0.0
    %9478 = vmatpush1.msra.mxu0 0.0
    %9479 = vmatprep.subr.mxu0 0.0
    %9480 = vmatpush1.msra.mxu0 0.0
    %9481 = vmatprep.subr.mxu0 0.0
    %9482 = vmatpush1.msra.mxu0 0.0
    %9483 = vmatprep.subr.mxu0 0.0
    %9484 = vmatpush1.msra.mxu0 0.0
    %9485 = vmatprep.mubr.f32.mxu0 0.0
    %9486 = vmatmul.mubr.f32.gmra.mrb[0].mxu0 %v9348
    %v9487 = vpop.f32.mrb[0].mxu0
    %v9488 = vadd.f32 0.0, %v9487
    %v9489 = vpop.f32.mrb[0].mxu0
    %v9490 = vadd.f32 0.0, %v9489
    %9491 = vdwg.mxu0
    %v9492 = vmul.f32 %v9417, %v7763
    %v9493 = vmul.f32 %v9419, %v7767
    %v9494 = vmul.f32 %v9488, %v7771
    %v9495 = vmul.f32 %v9490, %v7775
    %v9496 = vadd.f32 %v9324, %v9492
    %v9497 = vadd.f32 %v9325, %v9493
    %v9498 = vadd.f32 %v9326, %v9494
    %v9499 = vadd.f32 %v9327, %v9495
    %v9500 = vld [vmem:[#allocation24 + $0x20] sm:$0xff]
    %v9502 = vsel %vm2450, %v9500, 0
    %9504 = vmatprep.subr.mxu0 %v8808
    %9505 = vmatpush1.msra.mxu0 %v8807
    %9506 = vmatprep.subr.mxu0 0.0
    %9507 = vmatpush1.msra.mxu0 0.0
    %9508 = vmatprep.subr.mxu0 0.0
    %9509 = vmatpush1.msra.mxu0 0.0
    %9510 = vmatprep.subr.mxu0 0.0
    %9511 = vmatpush1.msra.mxu0 0.0
    %9512 = vmatprep.subr.mxu0 0.0
    %9513 = vmatpush1.msra.mxu0 0.0
    %9514 = vmatprep.subr.mxu0 0.0
    %9515 = vmatpush1.msra.mxu0 0.0
    %9516 = vmatprep.subr.mxu0 0.0
    %9517 = vmatpush1.msra.mxu0 0.0
    %9518 = vmatprep.subr.mxu0 0.0
    %9519 = vmatpush1.msra.mxu0 0.0
    %9520 = vmatprep.subr.mxu0 0.0
    %9521 = vmatpush1.msra.mxu0 0.0
    %9522 = vmatprep.subr.mxu0 0.0
    %9523 = vmatpush1.msra.mxu0 0.0
    %9524 = vmatprep.subr.mxu0 0.0
    %9525 = vmatpush1.msra.mxu0 0.0
    %9526 = vmatprep.subr.mxu0 0.0
    %9527 = vmatpush1.msra.mxu0 0.0
    %9528 = vmatprep.subr.mxu0 0.0
    %9529 = vmatpush1.msra.mxu0 0.0
    %9530 = vmatprep.subr.mxu0 0.0
    %9531 = vmatpush1.msra.mxu0 0.0
    %9532 = vmatprep.subr.mxu0 0.0
    %9533 = vmatpush1.msra.mxu0 0.0
    %9534 = vmatprep.subr.mxu0 0.0
    %9535 = vmatpush1.msra.mxu0 0.0
    %9536 = vmatprep.subr.mxu0 0.0
    %9537 = vmatpush1.msra.mxu0 0.0
    %9538 = vmatprep.subr.mxu0 0.0
    %9539 = vmatpush1.msra.mxu0 0.0
    %9540 = vmatprep.subr.mxu0 0.0
    %9541 = vmatpush1.msra.mxu0 0.0
    %9542 = vmatprep.subr.mxu0 0.0
    %9543 = vmatpush1.msra.mxu0 0.0
    %9544 = vmatprep.subr.mxu0 0.0
    %9545 = vmatpush1.msra.mxu0 0.0
    %9546 = vmatprep.subr.mxu0 0.0
    %9547 = vmatpush1.msra.mxu0 0.0
    %9548 = vmatprep.subr.mxu0 0.0
    %9549 = vmatpush1.msra.mxu0 0.0
    %9550 = vmatprep.subr.mxu0 0.0
    %9551 = vmatpush1.msra.mxu0 0.0
    %9552 = vmatprep.subr.mxu0 0.0
    %9553 = vmatpush1.msra.mxu0 0.0
    %9554 = vmatprep.subr.mxu0 0.0
    %9555 = vmatpush1.msra.mxu0 0.0
    %9556 = vmatprep.subr.mxu0 0.0
    %9557 = vmatpush1.msra.mxu0 0.0
    %9558 = vmatprep.subr.mxu0 0.0
    %9559 = vmatpush1.msra.mxu0 0.0
    %9560 = vmatprep.subr.mxu0 0.0
    %9561 = vmatpush1.msra.mxu0 0.0
    %9562 = vmatprep.subr.mxu0 0.0
    %9563 = vmatpush1.msra.mxu0 0.0
    %9564 = vmatprep.subr.mxu0 0.0
    %9565 = vmatpush1.msra.mxu0 0.0
    %9566 = vmatprep.subr.mxu0 0.0
    %9567 = vmatpush1.msra.mxu0 0.0
    %9568 = vmatprep.mubr.f32.mxu0 0.0
    %9569 = vmatmul.mubr.f32.gmra.mrb[0].mxu0 %v9502
    %v9570 = vpop.f32.mrb[0].mxu0
    %v9571 = vadd.f32 0.0, %v9570
    %v9572 = vpop.f32.mrb[0].mxu0
    %v9573 = vadd.f32 0.0, %v9572
    %9574 = vdwg.mxu0
    %9575 = vmatprep.subr.mxu0 %v8810
    %9576 = vmatpush1.msra.mxu0 %v8809
    %9577 = vmatprep.subr.mxu0 0.0
    %9578 = vmatpush1.msra.mxu0 0.0
    %9579 = vmatprep.subr.mxu0 0.0
    %9580 = vmatpush1.msra.mxu0 0.0
    %9581 = vmatprep.subr.mxu0 0.0
    %9582 = vmatpush1.msra.mxu0 0.0
    %9583 = vmatprep.subr.mxu0 0.0
    %9584 = vmatpush1.msra.mxu0 0.0
    %9585 = vmatprep.subr.mxu0 0.0
    %9586 = vmatpush1.msra.mxu0 0.0
    %9587 = vmatprep.subr.mxu0 0.0
    %9588 = vmatpush1.msra.mxu0 0.0
    %9589 = vmatprep.subr.mxu0 0.0
    %9590 = vmatpush1.msra.mxu0 0.0
    %9591 = vmatprep.subr.mxu0 0.0
    %9592 = vmatpush1.msra.mxu0 0.0
    %9593 = vmatprep.subr.mxu0 0.0
    %9594 = vmatpush1.msra.mxu0 0.0
    %9595 = vmatprep.subr.mxu0 0.0
    %9596 = vmatpush1.msra.mxu0 0.0
    %9597 = vmatprep.subr.mxu0 0.0
    %9598 = vmatpush1.msra.mxu0 0.0
    %9599 = vmatprep.subr.mxu0 0.0
    %9600 = vmatpush1.msra.mxu0 0.0
    %9601 = vmatprep.subr.mxu0 0.0
    %9602 = vmatpush1.msra.mxu0 0.0
    %9603 = vmatprep.subr.mxu0 0.0
    %9604 = vmatpush1.msra.mxu0 0.0
    %9605 = vmatprep.subr.mxu0 0.0
    %9606 = vmatpush1.msra.mxu0 0.0
    %9607 = vmatprep.subr.mxu0 0.0
    %9608 = vmatpush1.msra.mxu0 0.0
    %9609 = vmatprep.subr.mxu0 0.0
    %9610 = vmatpush1.msra.mxu0 0.0
    %9611 = vmatprep.subr.mxu0 0.0
    %9612 = vmatpush1.msra.mxu0 0.0
    %9613 = vmatprep.subr.mxu0 0.0
    %9614 = vmatpush1.msra.mxu0 0.0
    %9615 = vmatprep.subr.mxu0 0.0
    %9616 = vmatpush1.msra.mxu0 0.0
    %9617 = vmatprep.subr.mxu0 0.0
    %9618 = vmatpush1.msra.mxu0 0.0
    %9619 = vmatprep.subr.mxu0 0.0
    %9620 = vmatpush1.msra.mxu0 0.0
    %9621 = vmatprep.subr.mxu0 0.0
    %9622 = vmatpush1.msra.mxu0 0.0
    %9623 = vmatprep.subr.mxu0 0.0
    %9624 = vmatpush1.msra.mxu0 0.0
    %9625 = vmatprep.subr.mxu0 0.0
    %9626 = vmatpush1.msra.mxu0 0.0
    %9627 = vmatprep.subr.mxu0 0.0
    %9628 = vmatpush1.msra.mxu0 0.0
    %9629 = vmatprep.subr.mxu0 0.0
    %9630 = vmatpush1.msra.mxu0 0.0
    %9631 = vmatprep.subr.mxu0 0.0
    %9632 = vmatpush1.msra.mxu0 0.0
    %9633 = vmatprep.subr.mxu0 0.0
    %9634 = vmatpush1.msra.mxu0 0.0
    %9635 = vmatprep.subr.mxu0 0.0
    %9636 = vmatpush1.msra.mxu0 0.0
    %9637 = vmatprep.subr.mxu0 0.0
    %9638 = vmatpush1.msra.mxu0 0.0
    %9639 = vmatprep.mubr.f32.mxu0 0.0
    %9640 = vmatmul.mubr.f32.gmra.mrb[0].mxu0 %v9502
    %v9641 = vpop.f32.mrb[0].mxu0
    %v9642 = vadd.f32 0.0, %v9641
    %v9643 = vpop.f32.mrb[0].mxu0
    %v9644 = vadd.f32 0.0, %v9643
    %9645 = vdwg.mxu0
    %v9646 = vadd.f32 %v9496, %v9571
    %v9647 = vadd.f32 %v9497, %v9573
    %v9648 = vadd.f32 %v9498, %v9642
    %v9649 = vadd.f32 %v9499, %v9644
    %v9650 = vld [vmem:[#allocation2 + $0x8] sm:$0xff]
    %v9651 = vld [vmem:[#allocation2 + $0x10] sm:$0xff]
    %v9652 = vld [vmem:[#allocation2 + $0x18] sm:$0xff]
    %v9653 = vld [vmem:[#allocation2 + $0x20] sm:$0xff]
    %v9654 = vld [vmem:[#allocation2 + $0x28] sm:$0xff]
    %v9655 = vld [vmem:[#allocation24 + $0x28] sm:$0xff]
    %9661 = vrot.lane.b32.xlu0 %v9650, 127
    %v9662 = vpop.permute.xlu0 %9661
    %9663 = vrot.lane.b32.xlu0 %v9651, 127
    %v9664 = vpop.permute.xlu0 %9663
    %9665 = vrot.lane.b32.xlu0 %v9652, 127
    %v9666 = vpop.permute.xlu0 %9665
    %9667 = vrot.lane.b32.xlu0 %v9653, 127
    %v9668 = vpop.permute.xlu0 %9667
    %9669 = vrot.lane.b32.xlu0 %v9654, 127
    %v9670 = vpop.permute.xlu0 %9669
    %v9671 = vsel %vm1323, %v9662, %v9664
    %v9672 = vsel %vm1323, %v9664, %v9666
    %v9673 = vsel %vm1323, %v9666, %v9668
    %v9674 = vsel %vm1323, %v9668, %v9670
    %v9680 = vsel %vm2450, %v9655, 0
    %9682 = vmatprep.subr.mxu0 %v9672
    %9683 = vmatpush1.msra.mxu0 %v9671
    %9684 = vmatprep.subr.mxu0 0.0
    %9685 = vmatpush1.msra.mxu0 0.0
    %9686 = vmatprep.subr.mxu0 0.0
    %9687 = vmatpush1.msra.mxu0 0.0
    %9688 = vmatprep.subr.mxu0 0.0
    %9689 = vmatpush1.msra.mxu0 0.0
    %9690 = vmatprep.subr.mxu0 0.0
    %9691 = vmatpush1.msra.mxu0 0.0
    %9692 = vmatprep.subr.mxu0 0.0
    %9693 = vmatpush1.msra.mxu0 0.0
    %9694 = vmatprep.subr.mxu0 0.0
    %9695 = vmatpush1.msra.mxu0 0.0
    %9696 = vmatprep.subr.mxu0 0.0
    %9697 = vmatpush1.msra.mxu0 0.0
    %9698 = vmatprep.subr.mxu0 0.0
    %9699 = vmatpush1.msra.mxu0 0.0
    %9700 = vmatprep.subr.mxu0 0.0
    %9701 = vmatpush1.msra.mxu0 0.0
    %9702 = vmatprep.subr.mxu0 0.0
    %9703 = vmatpush1.msra.mxu0 0.0
    %9704 = vmatprep.subr.mxu0 0.0
    %9705 = vmatpush1.msra.mxu0 0.0
    %9706 = vmatprep.subr.mxu0 0.0
    %9707 = vmatpush1.msra.mxu0 0.0
    %9708 = vmatprep.subr.mxu0 0.0
    %9709 = vmatpush1.msra.mxu0 0.0
    %9710 = vmatprep.subr.mxu0 0.0
    %9711 = vmatpush1.msra.mxu0 0.0
    %9712 = vmatprep.subr.mxu0 0.0
    %9713 = vmatpush1.msra.mxu0 0.0
    %9714 = vmatprep.subr.mxu0 0.0
    %9715 = vmatpush1.msra.mxu0 0.0
    %9716 = vmatprep.subr.mxu0 0.0
    %9717 = vmatpush1.msra.mxu0 0.0
    %9718 = vmatprep.subr.mxu0 0.0
    %9719 = vmatpush1.msra.mxu0 0.0
    %9720 = vmatprep.subr.mxu0 0.0
    %9721 = vmatpush1.msra.mxu0 0.0
    %9722 = vmatprep.subr.mxu0 0.0
    %9723 = vmatpush1.msra.mxu0 0.0
    %9724 = vmatprep.subr.mxu0 0.0
    %9725 = vmatpush1.msra.mxu0 0.0
    %9726 = vmatprep.subr.mxu0 0.0
    %9727 = vmatpush1.msra.mxu0 0.0
    %9728 = vmatprep.subr.mxu0 0.0
    %9729 = vmatpush1.msra.mxu0 0.0
    %9730 = vmatprep.subr.mxu0 0.0
    %9731 = vmatpush1.msra.mxu0 0.0
    %9732 = vmatprep.subr.mxu0 0.0
    %9733 = vmatpush1.msra.mxu0 0.0
    %9734 = vmatprep.subr.mxu0 0.0
    %9735 = vmatpush1.msra.mxu0 0.0
    %9736 = vmatprep.subr.mxu0 0.0
    %9737 = vmatpush1.msra.mxu0 0.0
    %9738 = vmatprep.subr.mxu0 0.0
    %9739 = vmatpush1.msra.mxu0 0.0
    %9740 = vmatprep.subr.mxu0 0.0
    %9741 = vmatpush1.msra.mxu0 0.0
    %9742 = vmatprep.subr.mxu0 0.0
    %9743 = vmatpush1.msra.mxu0 0.0
    %9744 = vmatprep.subr.mxu0 0.0
    %9745 = vmatpush1.msra.mxu0 0.0
    %9746 = vmatprep.mubr.f32.mxu0 0.0
    %9747 = vmatmul.mubr.f32.gmra.mrb[0].mxu0 %v9680
    %v9748 = vpop.f32.mrb[0].mxu0
    %v9749 = vadd.f32 0.0, %v9748
    %v9750 = vpop.f32.mrb[0].mxu0
    %v9751 = vadd.f32 0.0, %v9750
    %9752 = vdwg.mxu0
    %9753 = vmatprep.subr.mxu0 %v9674
    %9754 = vmatpush1.msra.mxu0 %v9673
    %9755 = vmatprep.subr.mxu0 0.0
    %9756 = vmatpush1.msra.mxu0 0.0
    %9757 = vmatprep.subr.mxu0 0.0
    %9758 = vmatpush1.msra.mxu0 0.0
    %9759 = vmatprep.subr.mxu0 0.0
    %9760 = vmatpush1.msra.mxu0 0.0
    %9761 = vmatprep.subr.mxu0 0.0
    %9762 = vmatpush1.msra.mxu0 0.0
    %9763 = vmatprep.subr.mxu0 0.0
    %9764 = vmatpush1.msra.mxu0 0.0
    %9765 = vmatprep.subr.mxu0 0.0
    %9766 = vmatpush1.msra.mxu0 0.0
    %9767 = vmatprep.subr.mxu0 0.0
    %9768 = vmatpush1.msra.mxu0 0.0
    %9769 = vmatprep.subr.mxu0 0.0
    %9770 = vmatpush1.msra.mxu0 0.0
    %9771 = vmatprep.subr.mxu0 0.0
    %9772 = vmatpush1.msra.mxu0 0.0
    %9773 = vmatprep.subr.mxu0 0.0
    %9774 = vmatpush1.msra.mxu0 0.0
    %9775 = vmatprep.subr.mxu0 0.0
    %9776 = vmatpush1.msra.mxu0 0.0
    %9777 = vmatprep.subr.mxu0 0.0
    %9778 = vmatpush1.msra.mxu0 0.0
    %9779 = vmatprep.subr.mxu0 0.0
    %9780 = vmatpush1.msra.mxu0 0.0
    %9781 = vmatprep.subr.mxu0 0.0
    %9782 = vmatpush1.msra.mxu0 0.0
    %9783 = vmatprep.subr.mxu0 0.0
    %9784 = vmatpush1.msra.mxu0 0.0
    %9785 = vmatprep.subr.mxu0 0.0
    %9786 = vmatpush1.msra.mxu0 0.0
    %9787 = vmatprep.subr.mxu0 0.0
    %9788 = vmatpush1.msra.mxu0 0.0
    %9789 = vmatprep.subr.mxu0 0.0
    %9790 = vmatpush1.msra.mxu0 0.0
    %9791 = vmatprep.subr.mxu0 0.0
    %9792 = vmatpush1.msra.mxu0 0.0
    %9793 = vmatprep.subr.mxu0 0.0
    %9794 = vmatpush1.msra.mxu0 0.0
    %9795 = vmatprep.subr.mxu0 0.0
    %9796 = vmatpush1.msra.mxu0 0.0
    %9797 = vmatprep.subr.mxu0 0.0
    %9798 = vmatpush1.msra.mxu0 0.0
    %9799 = vmatprep.subr.mxu0 0.0
    %9800 = vmatpush1.msra.mxu0 0.0
    %9801 = vmatprep.subr.mxu0 0.0
    %9802 = vmatpush1.msra.mxu0 0.0
    %9803 = vmatprep.subr.mxu0 0.0
    %9804 = vmatpush1.msra.mxu0 0.0
    %9805 = vmatprep.subr.mxu0 0.0
    %9806 = vmatpush1.msra.mxu0 0.0
    %9807 = vmatprep.subr.mxu0 0.0
    %9808 = vmatpush1.msra.mxu0 0.0
    %9809 = vmatprep.subr.mxu0 0.0
    %9810 = vmatpush1.msra.mxu0 0.0
    %9811 = vmatprep.subr.mxu0 0.0
    %9812 = vmatpush1.msra.mxu0 0.0
    %9813 = vmatprep.subr.mxu0 0.0
    %9814 = vmatpush1.msra.mxu0 0.0
    %9815 = vmatprep.subr.mxu0 0.0
    %9816 = vmatpush1.msra.mxu0 0.0
    %9817 = vmatprep.mubr.f32.mxu0 0.0
    %9818 = vmatmul.mubr.f32.gmra.mrb[0].mxu0 %v9680
    %v9819 = vpop.f32.mrb[0].mxu0
    %v9820 = vadd.f32 0.0, %v9819
    %v9821 = vpop.f32.mrb[0].mxu0
    %v9822 = vadd.f32 0.0, %v9821
    %9823 = vdwg.mxu0
    %v9824 = vmul.f32 %v9749, %v8145
    %v9825 = vmul.f32 %v9751, %v8149
    %v9826 = vmul.f32 %v9820, %v8153
    %v9827 = vmul.f32 %v9822, %v8157
    %v9828 = vadd.f32 %v9646, %v9824
    %v9829 = vadd.f32 %v9647, %v9825
    %v9830 = vadd.f32 %v9648, %v9826
    %v9831 = vadd.f32 %v9649, %v9827
    %v9832 = vld [vmem:[#allocation24 + $0x30] sm:$0xff]
    %9833 = vrot.lane.b32.xlu0 %v9650, 113
    %v9834 = vpop.permute.xlu0 %9833
    %9835 = vrot.lane.b32.xlu0 %v9651, 113
    %v9836 = vpop.permute.xlu0 %9835
    %9837 = vrot.lane.b32.xlu0 %v9652, 113
    %v9838 = vpop.permute.xlu0 %9837
    %9839 = vrot.lane.b32.xlu0 %v9653, 113
    %v9840 = vpop.permute.xlu0 %9839
    %9841 = vrot.lane.b32.xlu0 %v9654, 113
    %v9842 = vpop.permute.xlu0 %9841
    %v9843 = vsel %vm1531, %v9834, %v9836
    %v9844 = vsel %vm1531, %v9836, %v9838
    %v9845 = vsel %vm1531, %v9838, %v9840
    %v9846 = vsel %vm1531, %v9840, %v9842
    %v9852 = vsel %vm2450, %v9832, 0
    %9854 = vmatprep.subr.mxu0 %v9844
    %9855 = vmatpush1.msra.mxu0 %v9843
    %9856 = vmatprep.subr.mxu0 0.0
    %9857 = vmatpush1.msra.mxu0 0.0
    %9858 = vmatprep.subr.mxu0 0.0
    %9859 = vmatpush1.msra.mxu0 0.0
    %9860 = vmatprep.subr.mxu0 0.0
    %9861 = vmatpush1.msra.mxu0 0.0
    %9862 = vmatprep.subr.mxu0 0.0
    %9863 = vmatpush1.msra.mxu0 0.0
    %9864 = vmatprep.subr.mxu0 0.0
    %9865 = vmatpush1.msra.mxu0 0.0
    %9866 = vmatprep.subr.mxu0 0.0
    %9867 = vmatpush1.msra.mxu0 0.0
    %9868 = vmatprep.subr.mxu0 0.0
    %9869 = vmatpush1.msra.mxu0 0.0
    %9870 = vmatprep.subr.mxu0 0.0
    %9871 = vmatpush1.msra.mxu0 0.0
    %9872 = vmatprep.subr.mxu0 0.0
    %9873 = vmatpush1.msra.mxu0 0.0
    %9874 = vmatprep.subr.mxu0 0.0
    %9875 = vmatpush1.msra.mxu0 0.0
    %9876 = vmatprep.subr.mxu0 0.0
    %9877 = vmatpush1.msra.mxu0 0.0
    %9878 = vmatprep.subr.mxu0 0.0
    %9879 = vmatpush1.msra.mxu0 0.0
    %9880 = vmatprep.subr.mxu0 0.0
    %9881 = vmatpush1.msra.mxu0 0.0
    %9882 = vmatprep.subr.mxu0 0.0
    %9883 = vmatpush1.msra.mxu0 0.0
    %9884 = vmatprep.subr.mxu0 0.0
    %9885 = vmatpush1.msra.mxu0 0.0
    %9886 = vmatprep.subr.mxu0 0.0
    %9887 = vmatpush1.msra.mxu0 0.0
    %9888 = vmatprep.subr.mxu0 0.0
    %9889 = vmatpush1.msra.mxu0 0.0
    %9890 = vmatprep.subr.mxu0 0.0
    %9891 = vmatpush1.msra.mxu0 0.0
    %9892 = vmatprep.subr.mxu0 0.0
    %9893 = vmatpush1.msra.mxu0 0.0
    %9894 = vmatprep.subr.mxu0 0.0
    %9895 = vmatpush1.msra.mxu0 0.0
    %9896 = vmatprep.subr.mxu0 0.0
    %9897 = vmatpush1.msra.mxu0 0.0
    %9898 = vmatprep.subr.mxu0 0.0
    %9899 = vmatpush1.msra.mxu0 0.0
    %9900 = vmatprep.subr.mxu0 0.0
    %9901 = vmatpush1.msra.mxu0 0.0
    %9902 = vmatprep.subr.mxu0 0.0
    %9903 = vmatpush1.msra.mxu0 0.0
    %9904 = vmatprep.subr.mxu0 0.0
    %9905 = vmatpush1.msra.mxu0 0.0
    %9906 = vmatprep.subr.mxu0 0.0
    %9907 = vmatpush1.msra.mxu0 0.0
    %9908 = vmatprep.subr.mxu0 0.0
    %9909 = vmatpush1.msra.mxu0 0.0
    %9910 = vmatprep.subr.mxu0 0.0
    %9911 = vmatpush1.msra.mxu0 0.0
    %9912 = vmatprep.subr.mxu0 0.0
    %9913 = vmatpush1.msra.mxu0 0.0
    %9914 = vmatprep.subr.mxu0 0.0
    %9915 = vmatpush1.msra.mxu0 0.0
    %9916 = vmatprep.subr.mxu0 0.0
    %9917 = vmatpush1.msra.mxu0 0.0
    %9918 = vmatprep.mubr.f32.mxu0 0.0
    %9919 = vmatmul.mubr.f32.gmra.mrb[0].mxu0 %v9852
    %v9920 = vpop.f32.mrb[0].mxu0
    %v9921 = vadd.f32 0.0, %v9920
    %v9922 = vpop.f32.mrb[0].mxu0
    %v9923 = vadd.f32 0.0, %v9922
    %9924 = vdwg.mxu0
    %9925 = vmatprep.subr.mxu0 %v9846
    %9926 = vmatpush1.msra.mxu0 %v9845
    %9927 = vmatprep.subr.mxu0 0.0
    %9928 = vmatpush1.msra.mxu0 0.0
    %9929 = vmatprep.subr.mxu0 0.0
    %9930 = vmatpush1.msra.mxu0 0.0
    %9931 = vmatprep.subr.mxu0 0.0
    %9932 = vmatpush1.msra.mxu0 0.0
    %9933 = vmatprep.subr.mxu0 0.0
    %9934 = vmatpush1.msra.mxu0 0.0
    %9935 = vmatprep.subr.mxu0 0.0
    %9936 = vmatpush1.msra.mxu0 0.0
    %9937 = vmatprep.subr.mxu0 0.0
    %9938 = vmatpush1.msra.mxu0 0.0
    %9939 = vmatprep.subr.mxu0 0.0
    %9940 = vmatpush1.msra.mxu0 0.0
    %9941 = vmatprep.subr.mxu0 0.0
    %9942 = vmatpush1.msra.mxu0 0.0
    %9943 = vmatprep.subr.mxu0 0.0
    %9944 = vmatpush1.msra.mxu0 0.0
    %9945 = vmatprep.subr.mxu0 0.0
    %9946 = vmatpush1.msra.mxu0 0.0
    %9947 = vmatprep.subr.mxu0 0.0
    %9948 = vmatpush1.msra.mxu0 0.0
    %9949 = vmatprep.subr.mxu0 0.0
    %9950 = vmatpush1.msra.mxu0 0.0
    %9951 = vmatprep.subr.mxu0 0.0
    %9952 = vmatpush1.msra.mxu0 0.0
    %9953 = vmatprep.subr.mxu0 0.0
    %9954 = vmatpush1.msra.mxu0 0.0
    %9955 = vmatprep.subr.mxu0 0.0
    %9956 = vmatpush1.msra.mxu0 0.0
    %9957 = vmatprep.subr.mxu0 0.0
    %9958 = vmatpush1.msra.mxu0 0.0
    %9959 = vmatprep.subr.mxu0 0.0
    %9960 = vmatpush1.msra.mxu0 0.0
    %9961 = vmatprep.subr.mxu0 0.0
    %9962 = vmatpush1.msra.mxu0 0.0
    %9963 = vmatprep.subr.mxu0 0.0
    %9964 = vmatpush1.msra.mxu0 0.0
    %9965 = vmatprep.subr.mxu0 0.0
    %9966 = vmatpush1.msra.mxu0 0.0
    %9967 = vmatprep.subr.mxu0 0.0
    %9968 = vmatpush1.msra.mxu0 0.0
    %9969 = vmatprep.subr.mxu0 0.0
    %9970 = vmatpush1.msra.mxu0 0.0
    %9971 = vmatprep.subr.mxu0 0.0
    %9972 = vmatpush1.msra.mxu0 0.0
    %9973 = vmatprep.subr.mxu0 0.0
    %9974 = vmatpush1.msra.mxu0 0.0
    %9975 = vmatprep.subr.mxu0 0.0
    %9976 = vmatpush1.msra.mxu0 0.0
    %9977 = vmatprep.subr.mxu0 0.0
    %9978 = vmatpush1.msra.mxu0 0.0
    %9979 = vmatprep.subr.mxu0 0.0
    %9980 = vmatpush1.msra.mxu0 0.0
    %9981 = vmatprep.subr.mxu0 0.0
    %9982 = vmatpush1.msra.mxu0 0.0
    %9983 = vmatprep.subr.mxu0 0.0
    %9984 = vmatpush1.msra.mxu0 0.0
    %9985 = vmatprep.subr.mxu0 0.0
    %9986 = vmatpush1.msra.mxu0 0.0
    %9987 = vmatprep.subr.mxu0 0.0
    %9988 = vmatpush1.msra.mxu0 0.0
    %9989 = vmatprep.mubr.f32.mxu0 0.0
    %9990 = vmatmul.mubr.f32.gmra.mrb[0].mxu0 %v9852
    %v9991 = vpop.f32.mrb[0].mxu0
    %v9992 = vadd.f32 0.0, %v9991
    %v9993 = vpop.f32.mrb[0].mxu0
    %v9994 = vadd.f32 0.0, %v9993
    %9995 = vdwg.mxu0
    %v9996 = vmul.f32 %v9921, %v8357
    %v9997 = vmul.f32 %v9923, %v8361
    %v9998 = vmul.f32 %v9992, %v8365
    %v9999 = vmul.f32 %v9994, %v8369
    %v10000 = vadd.f32 %v9828, %v9996
    %v10001 = vadd.f32 %v9829, %v9997
    %v10002 = vadd.f32 %v9830, %v9998
    %v10003 = vadd.f32 %v9831, %v9999
    %v10004 = vld [vmem:[#allocation24 + $0x38] sm:$0xff]
    %10005 = vrot.lane.b32.xlu0 %v9650, 112
    %v10006 = vpop.permute.xlu0 %10005
    %10007 = vrot.lane.b32.xlu0 %v9651, 112
    %v10008 = vpop.permute.xlu0 %10007
    %10009 = vrot.lane.b32.xlu0 %v9652, 112
    %v10010 = vpop.permute.xlu0 %10009
    %10011 = vrot.lane.b32.xlu0 %v9653, 112
    %v10012 = vpop.permute.xlu0 %10011
    %10013 = vrot.lane.b32.xlu0 %v9654, 112
    %v10014 = vpop.permute.xlu0 %10013
    %v10015 = vsel %vm1739, %v10006, %v10008
    %v10016 = vsel %vm1739, %v10008, %v10010
    %v10017 = vsel %vm1739, %v10010, %v10012
    %v10018 = vsel %vm1739, %v10012, %v10014
    %v10024 = vsel %vm2450, %v10004, 0
    %10026 = vmatprep.subr.mxu0 %v10016
    %10027 = vmatpush1.msra.mxu0 %v10015
    %10028 = vmatprep.subr.mxu0 0.0
    %10029 = vmatpush1.msra.mxu0 0.0
    %10030 = vmatprep.subr.mxu0 0.0
    %10031 = vmatpush1.msra.mxu0 0.0
    %10032 = vmatprep.subr.mxu0 0.0
    %10033 = vmatpush1.msra.mxu0 0.0
    %10034 = vmatprep.subr.mxu0 0.0
    %10035 = vmatpush1.msra.mxu0 0.0
    %10036 = vmatprep.subr.mxu0 0.0
    %10037 = vmatpush1.msra.mxu0 0.0
    %10038 = vmatprep.subr.mxu0 0.0
    %10039 = vmatpush1.msra.mxu0 0.0
    %10040 = vmatprep.subr.mxu0 0.0
    %10041 = vmatpush1.msra.mxu0 0.0
    %10042 = vmatprep.subr.mxu0 0.0
    %10043 = vmatpush1.msra.mxu0 0.0
    %10044 = vmatprep.subr.mxu0 0.0
    %10045 = vmatpush1.msra.mxu0 0.0
    %10046 = vmatprep.subr.mxu0 0.0
    %10047 = vmatpush1.msra.mxu0 0.0
    %10048 = vmatprep.subr.mxu0 0.0
    %10049 = vmatpush1.msra.mxu0 0.0
    %10050 = vmatprep.subr.mxu0 0.0
    %10051 = vmatpush1.msra.mxu0 0.0
    %10052 = vmatprep.subr.mxu0 0.0
    %10053 = vmatpush1.msra.mxu0 0.0
    %10054 = vmatprep.subr.mxu0 0.0
    %10055 = vmatpush1.msra.mxu0 0.0
    %10056 = vmatprep.subr.mxu0 0.0
    %10057 = vmatpush1.msra.mxu0 0.0
    %10058 = vmatprep.subr.mxu0 0.0
    %10059 = vmatpush1.msra.mxu0 0.0
    %10060 = vmatprep.subr.mxu0 0.0
    %10061 = vmatpush1.msra.mxu0 0.0
    %10062 = vmatprep.subr.mxu0 0.0
    %10063 = vmatpush1.msra.mxu0 0.0
    %10064 = vmatprep.subr.mxu0 0.0
    %10065 = vmatpush1.msra.mxu0 0.0
    %10066 = vmatprep.subr.mxu0 0.0
    %10067 = vmatpush1.msra.mxu0 0.0
    %10068 = vmatprep.subr.mxu0 0.0
    %10069 = vmatpush1.msra.mxu0 0.0
    %10070 = vmatprep.subr.mxu0 0.0
    %10071 = vmatpush1.msra.mxu0 0.0
    %10072 = vmatprep.subr.mxu0 0.0
    %10073 = vmatpush1.msra.mxu0 0.0
    %10074 = vmatprep.subr.mxu0 0.0
    %10075 = vmatpush1.msra.mxu0 0.0
    %10076 = vmatprep.subr.mxu0 0.0
    %10077 = vmatpush1.msra.mxu0 0.0
    %10078 = vmatprep.subr.mxu0 0.0
    %10079 = vmatpush1.msra.mxu0 0.0
    %10080 = vmatprep.subr.mxu0 0.0
    %10081 = vmatpush1.msra.mxu0 0.0
    %10082 = vmatprep.subr.mxu0 0.0
    %10083 = vmatpush1.msra.mxu0 0.0
    %10084 = vmatprep.subr.mxu0 0.0
    %10085 = vmatpush1.msra.mxu0 0.0
    %10086 = vmatprep.subr.mxu0 0.0
    %10087 = vmatpush1.msra.mxu0 0.0
    %10088 = vmatprep.subr.mxu0 0.0
    %10089 = vmatpush1.msra.mxu0 0.0
    %10090 = vmatprep.mubr.f32.mxu0 0.0
    %10091 = vmatmul.mubr.f32.gmra.mrb[0].mxu0 %v10024
    %v10092 = vpop.f32.mrb[0].mxu0
    %v10093 = vadd.f32 0.0, %v10092
    %v10094 = vpop.f32.mrb[0].mxu0
    %v10095 = vadd.f32 0.0, %v10094
    %10096 = vdwg.mxu0
    %10097 = vmatprep.subr.mxu0 %v10018
    %10098 = vmatpush1.msra.mxu0 %v10017
    %10099 = vmatprep.subr.mxu0 0.0
    %10100 = vmatpush1.msra.mxu0 0.0
    %10101 = vmatprep.subr.mxu0 0.0
    %10102 = vmatpush1.msra.mxu0 0.0
    %10103 = vmatprep.subr.mxu0 0.0
    %10104 = vmatpush1.msra.mxu0 0.0
    %10105 = vmatprep.subr.mxu0 0.0
    %10106 = vmatpush1.msra.mxu0 0.0
    %10107 = vmatprep.subr.mxu0 0.0
    %10108 = vmatpush1.msra.mxu0 0.0
    %10109 = vmatprep.subr.mxu0 0.0
    %10110 = vmatpush1.msra.mxu0 0.0
    %10111 = vmatprep.subr.mxu0 0.0
    %10112 = vmatpush1.msra.mxu0 0.0
    %10113 = vmatprep.subr.mxu0 0.0
    %10114 = vmatpush1.msra.mxu0 0.0
    %10115 = vmatprep.subr.mxu0 0.0
    %10116 = vmatpush1.msra.mxu0 0.0
    %10117 = vmatprep.subr.mxu0 0.0
    %10118 = vmatpush1.msra.mxu0 0.0
    %10119 = vmatprep.subr.mxu0 0.0
    %10120 = vmatpush1.msra.mxu0 0.0
    %10121 = vmatprep.subr.mxu0 0.0
    %10122 = vmatpush1.msra.mxu0 0.0
    %10123 = vmatprep.subr.mxu0 0.0
    %10124 = vmatpush1.msra.mxu0 0.0
    %10125 = vmatprep.subr.mxu0 0.0
    %10126 = vmatpush1.msra.mxu0 0.0
    %10127 = vmatprep.subr.mxu0 0.0
    %10128 = vmatpush1.msra.mxu0 0.0
    %10129 = vmatprep.subr.mxu0 0.0
    %10130 = vmatpush1.msra.mxu0 0.0
    %10131 = vmatprep.subr.mxu0 0.0
    %10132 = vmatpush1.msra.mxu0 0.0
    %10133 = vmatprep.subr.mxu0 0.0
    %10134 = vmatpush1.msra.mxu0 0.0
    %10135 = vmatprep.subr.mxu0 0.0
    %10136 = vmatpush1.msra.mxu0 0.0
    %10137 = vmatprep.subr.mxu0 0.0
    %10138 = vmatpush1.msra.mxu0 0.0
    %10139 = vmatprep.subr.mxu0 0.0
    %10140 = vmatpush1.msra.mxu0 0.0
    %10141 = vmatprep.subr.mxu0 0.0
    %10142 = vmatpush1.msra.mxu0 0.0
    %10143 = vmatprep.subr.mxu0 0.0
    %10144 = vmatpush1.msra.mxu0 0.0
    %10145 = vmatprep.subr.mxu0 0.0
    %10146 = vmatpush1.msra.mxu0 0.0
    %10147 = vmatprep.subr.mxu0 0.0
    %10148 = vmatpush1.msra.mxu0 0.0
    %10149 = vmatprep.subr.mxu0 0.0
    %10150 = vmatpush1.msra.mxu0 0.0
    %10151 = vmatprep.subr.mxu0 0.0
    %10152 = vmatpush1.msra.mxu0 0.0
    %10153 = vmatprep.subr.mxu0 0.0
    %10154 = vmatpush1.msra.mxu0 0.0
    %10155 = vmatprep.subr.mxu0 0.0
    %10156 = vmatpush1.msra.mxu0 0.0
    %10157 = vmatprep.subr.mxu0 0.0
    %10158 = vmatpush1.msra.mxu0 0.0
    %10159 = vmatprep.subr.mxu0 0.0
    %10160 = vmatpush1.msra.mxu0 0.0
    %10161 = vmatprep.mubr.f32.mxu0 0.0
    %10162 = vmatmul.mubr.f32.gmra.mrb[0].mxu0 %v10024
    %v10163 = vpop.f32.mrb[0].mxu0
    %v10164 = vadd.f32 0.0, %v10163
    %v10165 = vpop.f32.mrb[0].mxu0
    %v10166 = vadd.f32 0.0, %v10165
    %10167 = vdwg.mxu0
    %v10168 = vmul.f32 %v10093, %v8569
    %v10169 = vmul.f32 %v10095, %v8573
    %v10170 = vmul.f32 %v10164, %v8577
    %v10171 = vmul.f32 %v10166, %v8581
    %v10172 = vadd.f32 %v10000, %v10168
    %v10173 = vadd.f32 %v10001, %v10169
    %v10174 = vadd.f32 %v10002, %v10170
    %v10175 = vadd.f32 %v10003, %v10171
    %v10176 = vld [vmem:[#allocation24 + $0x40] sm:$0xff]
    %10177 = vrot.lane.b32.xlu0 %v9650, 111
    %v10178 = vpop.permute.xlu0 %10177
    %10179 = vrot.lane.b32.xlu0 %v9651, 111
    %v10180 = vpop.permute.xlu0 %10179
    %10181 = vrot.lane.b32.xlu0 %v9652, 111
    %v10182 = vpop.permute.xlu0 %10181
    %10183 = vrot.lane.b32.xlu0 %v9653, 111
    %v10184 = vpop.permute.xlu0 %10183
    %10185 = vrot.lane.b32.xlu0 %v9654, 111
    %v10186 = vpop.permute.xlu0 %10185
    %v10187 = vsel %vm1947, %v10178, %v10180
    %v10188 = vsel %vm1947, %v10180, %v10182
    %v10189 = vsel %vm1947, %v10182, %v10184
    %v10190 = vsel %vm1947, %v10184, %v10186
    %v10196 = vsel %vm2450, %v10176, 0
    %10198 = vmatprep.subr.mxu0 %v10188
    %10199 = vmatpush1.msra.mxu0 %v10187
    %10200 = vmatprep.subr.mxu0 0.0
    %10201 = vmatpush1.msra.mxu0 0.0
    %10202 = vmatprep.subr.mxu0 0.0
    %10203 = vmatpush1.msra.mxu0 0.0
    %10204 = vmatprep.subr.mxu0 0.0
    %10205 = vmatpush1.msra.mxu0 0.0
    %10206 = vmatprep.subr.mxu0 0.0
    %10207 = vmatpush1.msra.mxu0 0.0
    %10208 = vmatprep.subr.mxu0 0.0
    %10209 = vmatpush1.msra.mxu0 0.0
    %10210 = vmatprep.subr.mxu0 0.0
    %10211 = vmatpush1.msra.mxu0 0.0
    %10212 = vmatprep.subr.mxu0 0.0
    %10213 = vmatpush1.msra.mxu0 0.0
    %10214 = vmatprep.subr.mxu0 0.0
    %10215 = vmatpush1.msra.mxu0 0.0
    %10216 = vmatprep.subr.mxu0 0.0
    %10217 = vmatpush1.msra.mxu0 0.0
    %10218 = vmatprep.subr.mxu0 0.0
    %10219 = vmatpush1.msra.mxu0 0.0
    %10220 = vmatprep.subr.mxu0 0.0
    %10221 = vmatpush1.msra.mxu0 0.0
    %10222 = vmatprep.subr.mxu0 0.0
    %10223 = vmatpush1.msra.mxu0 0.0
    %10224 = vmatprep.subr.mxu0 0.0
    %10225 = vmatpush1.msra.mxu0 0.0
    %10226 = vmatprep.subr.mxu0 0.0
    %10227 = vmatpush1.msra.mxu0 0.0
    %10228 = vmatprep.subr.mxu0 0.0
    %10229 = vmatpush1.msra.mxu0 0.0
    %10230 = vmatprep.subr.mxu0 0.0
    %10231 = vmatpush1.msra.mxu0 0.0
    %10232 = vmatprep.subr.mxu0 0.0
    %10233 = vmatpush1.msra.mxu0 0.0
    %10234 = vmatprep.subr.mxu0 0.0
    %10235 = vmatpush1.msra.mxu0 0.0
    %10236 = vmatprep.subr.mxu0 0.0
    %10237 = vmatpush1.msra.mxu0 0.0
    %10238 = vmatprep.subr.mxu0 0.0
    %10239 = vmatpush1.msra.mxu0 0.0
    %10240 = vmatprep.subr.mxu0 0.0
    %10241 = vmatpush1.msra.mxu0 0.0
    %10242 = vmatprep.subr.mxu0 0.0
    %10243 = vmatpush1.msra.mxu0 0.0
    %10244 = vmatprep.subr.mxu0 0.0
    %10245 = vmatpush1.msra.mxu0 0.0
    %10246 = vmatprep.subr.mxu0 0.0
    %10247 = vmatpush1.msra.mxu0 0.0
    %10248 = vmatprep.subr.mxu0 0.0
    %10249 = vmatpush1.msra.mxu0 0.0
    %10250 = vmatprep.subr.mxu0 0.0
    %10251 = vmatpush1.msra.mxu0 0.0
    %10252 = vmatprep.subr.mxu0 0.0
    %10253 = vmatpush1.msra.mxu0 0.0
    %10254 = vmatprep.subr.mxu0 0.0
    %10255 = vmatpush1.msra.mxu0 0.0
    %10256 = vmatprep.subr.mxu0 0.0
    %10257 = vmatpush1.msra.mxu0 0.0
    %10258 = vmatprep.subr.mxu0 0.0
    %10259 = vmatpush1.msra.mxu0 0.0
    %10260 = vmatprep.subr.mxu0 0.0
    %10261 = vmatpush1.msra.mxu0 0.0
    %10262 = vmatprep.mubr.f32.mxu0 0.0
    %10263 = vmatmul.mubr.f32.gmra.mrb[0].mxu0 %v10196
    %v10264 = vpop.f32.mrb[0].mxu0
    %v10265 = vadd.f32 0.0, %v10264
    %v10266 = vpop.f32.mrb[0].mxu0
    %v10267 = vadd.f32 0.0, %v10266
    %10268 = vdwg.mxu0
    %10269 = vmatprep.subr.mxu0 %v10190
    %10270 = vmatpush1.msra.mxu0 %v10189
    %10271 = vmatprep.subr.mxu0 0.0
    %10272 = vmatpush1.msra.mxu0 0.0
    %10273 = vmatprep.subr.mxu0 0.0
    %10274 = vmatpush1.msra.mxu0 0.0
    %10275 = vmatprep.subr.mxu0 0.0
    %10276 = vmatpush1.msra.mxu0 0.0
    %10277 = vmatprep.subr.mxu0 0.0
    %10278 = vmatpush1.msra.mxu0 0.0
    %10279 = vmatprep.subr.mxu0 0.0
    %10280 = vmatpush1.msra.mxu0 0.0
    %10281 = vmatprep.subr.mxu0 0.0
    %10282 = vmatpush1.msra.mxu0 0.0
    %10283 = vmatprep.subr.mxu0 0.0
    %10284 = vmatpush1.msra.mxu0 0.0
    %10285 = vmatprep.subr.mxu0 0.0
    %10286 = vmatpush1.msra.mxu0 0.0
    %10287 = vmatprep.subr.mxu0 0.0
    %10288 = vmatpush1.msra.mxu0 0.0
    %10289 = vmatprep.subr.mxu0 0.0
    %10290 = vmatpush1.msra.mxu0 0.0
    %10291 = vmatprep.subr.mxu0 0.0
    %10292 = vmatpush1.msra.mxu0 0.0
    %10293 = vmatprep.subr.mxu0 0.0
    %10294 = vmatpush1.msra.mxu0 0.0
    %10295 = vmatprep.subr.mxu0 0.0
    %10296 = vmatpush1.msra.mxu0 0.0
    %10297 = vmatprep.subr.mxu0 0.0
    %10298 = vmatpush1.msra.mxu0 0.0
    %10299 = vmatprep.subr.mxu0 0.0
    %10300 = vmatpush1.msra.mxu0 0.0
    %10301 = vmatprep.subr.mxu0 0.0
    %10302 = vmatpush1.msra.mxu0 0.0
    %10303 = vmatprep.subr.mxu0 0.0
    %10304 = vmatpush1.msra.mxu0 0.0
    %10305 = vmatprep.subr.mxu0 0.0
    %10306 = vmatpush1.msra.mxu0 0.0
    %10307 = vmatprep.subr.mxu0 0.0
    %10308 = vmatpush1.msra.mxu0 0.0
    %10309 = vmatprep.subr.mxu0 0.0
    %10310 = vmatpush1.msra.mxu0 0.0
    %10311 = vmatprep.subr.mxu0 0.0
    %10312 = vmatpush1.msra.mxu0 0.0
    %10313 = vmatprep.subr.mxu0 0.0
    %10314 = vmatpush1.msra.mxu0 0.0
    %10315 = vmatprep.subr.mxu0 0.0
    %10316 = vmatpush1.msra.mxu0 0.0
    %10317 = vmatprep.subr.mxu0 0.0
    %10318 = vmatpush1.msra.mxu0 0.0
    %10319 = vmatprep.subr.mxu0 0.0
    %10320 = vmatpush1.msra.mxu0 0.0
    %10321 = vmatprep.subr.mxu0 0.0
    %10322 = vmatpush1.msra.mxu0 0.0
    %10323 = vmatprep.subr.mxu0 0.0
    %10324 = vmatpush1.msra.mxu0 0.0
    %10325 = vmatprep.subr.mxu0 0.0
    %10326 = vmatpush1.msra.mxu0 0.0
    %10327 = vmatprep.subr.mxu0 0.0
    %10328 = vmatpush1.msra.mxu0 0.0
    %10329 = vmatprep.subr.mxu0 0.0
    %10330 = vmatpush1.msra.mxu0 0.0
    %10331 = vmatprep.subr.mxu0 0.0
    %10332 = vmatpush1.msra.mxu0 0.0
    %10333 = vmatprep.mubr.f32.mxu0 0.0
    %10334 = vmatmul.mubr.f32.gmra.mrb[0].mxu0 %v10196
    %v10335 = vpop.f32.mrb[0].mxu0
    %v10336 = vadd.f32 0.0, %v10335
    %v10337 = vpop.f32.mrb[0].mxu0
    %v10338 = vadd.f32 0.0, %v10337
    %10339 = vdwg.mxu0
    %v10340 = vmul.f32 %v10265, %v8781
    %v10341 = vmul.f32 %v10267, %v8785
    %v10342 = vmul.f32 %v10336, %v8789
    %v10343 = vmul.f32 %v10338, %v8793
    %v10344 = vadd.f32 %v10172, %v10340
    %v10345 = vadd.f32 %v10173, %v10341
    %v10346 = vadd.f32 %v10174, %v10342
    %v10347 = vadd.f32 %v10175, %v10343
    %v10348 = vadd.f32 %v8802, %v10344
    %v10349 = vadd.f32 %v8803, %v10345
    %v10350 = vadd.f32 %v8804, %v10346
    %v10351 = vadd.f32 %v8805, %v10347
    %v10352 = vld [vmem:[%s12] sm:$0xff]
    %10354 = vset.pattern.permute.xlu0 0
    %10355 = vperm.xlu0 %10354, %v10352
    %v10356 = vpop.permute.xlu0 %10355
    %v10358 = vadd.f32 %v10348, %v10356
    %v10359 = vadd.f32 %v10349, %v10356
    %v10360 = vadd.f32 %v10350, %v10356
    %v10361 = vadd.f32 %v10351, %v10356
    %v10362 = vmax.f32 %v10358, 0.0
    %v10363 = vmax.f32 %v10359, 0.0
    %v10364 = vmax.f32 %v10360, 0.0
    %v10365 = vmax.f32 %v10361, 0.0
    %v10366 = vld [vmem:[#allocation25] sm:$0x1]
    %v10367 = vld [vmem:[%s14] sm:$0x1]
    %10369 = vset.pattern.permute.xlu0 0
    %10370 = vperm.xlu0 %10369, %v10367
    %v10371 = vpop.permute.xlu0 %10370
    %v10374 = vsel %vm2450, %v10366, 0
    %10376 = vmatprep.subr.mxu0 %v10363
    %10377 = vmatpush1.msra.mxu0 %v10362
    %10378 = vmatprep.subr.mxu0 0.0
    %10379 = vmatpush1.msra.mxu0 0.0
    %10380 = vmatprep.subr.mxu0 0.0
    %10381 = vmatpush1.msra.mxu0 0.0
    %10382 = vmatprep.subr.mxu0 0.0
    %10383 = vmatpush1.msra.mxu0 0.0
    %10384 = vmatprep.subr.mxu0 0.0
    %10385 = vmatpush1.msra.mxu0 0.0
    %10386 = vmatprep.subr.mxu0 0.0
    %10387 = vmatpush1.msra.mxu0 0.0
    %10388 = vmatprep.subr.mxu0 0.0
    %10389 = vmatpush1.msra.mxu0 0.0
    %10390 = vmatprep.subr.mxu0 0.0
    %10391 = vmatpush1.msra.mxu0 0.0
    %10392 = vmatprep.subr.mxu0 0.0
    %10393 = vmatpush1.msra.mxu0 0.0
    %10394 = vmatprep.subr.mxu0 0.0
    %10395 = vmatpush1.msra.mxu0 0.0
    %10396 = vmatprep.subr.mxu0 0.0
    %10397 = vmatpush1.msra.mxu0 0.0
    %10398 = vmatprep.subr.mxu0 0.0
    %10399 = vmatpush1.msra.mxu0 0.0
    %10400 = vmatprep.subr.mxu0 0.0
    %10401 = vmatpush1.msra.mxu0 0.0
    %10402 = vmatprep.subr.mxu0 0.0
    %10403 = vmatpush1.msra.mxu0 0.0
    %10404 = vmatprep.subr.mxu0 0.0
    %10405 = vmatpush1.msra.mxu0 0.0
    %10406 = vmatprep.subr.mxu0 0.0
    %10407 = vmatpush1.msra.mxu0 0.0
    %10408 = vmatprep.subr.mxu0 0.0
    %10409 = vmatpush1.msra.mxu0 0.0
    %10410 = vmatprep.subr.mxu0 0.0
    %10411 = vmatpush1.msra.mxu0 0.0
    %10412 = vmatprep.subr.mxu0 0.0
    %10413 = vmatpush1.msra.mxu0 0.0
    %10414 = vmatprep.subr.mxu0 0.0
    %10415 = vmatpush1.msra.mxu0 0.0
    %10416 = vmatprep.subr.mxu0 0.0
    %10417 = vmatpush1.msra.mxu0 0.0
    %10418 = vmatprep.subr.mxu0 0.0
    %10419 = vmatpush1.msra.mxu0 0.0
    %10420 = vmatprep.subr.mxu0 0.0
    %10421 = vmatpush1.msra.mxu0 0.0
    %10422 = vmatprep.subr.mxu0 0.0
    %10423 = vmatpush1.msra.mxu0 0.0
    %10424 = vmatprep.subr.mxu0 0.0
    %10425 = vmatpush1.msra.mxu0 0.0
    %10426 = vmatprep.subr.mxu0 0.0
    %10427 = vmatpush1.msra.mxu0 0.0
    %10428 = vmatprep.subr.mxu0 0.0
    %10429 = vmatpush1.msra.mxu0 0.0
    %10430 = vmatprep.subr.mxu0 0.0
    %10431 = vmatpush1.msra.mxu0 0.0
    %10432 = vmatprep.subr.mxu0 0.0
    %10433 = vmatpush1.msra.mxu0 0.0
    %10434 = vmatprep.subr.mxu0 0.0
    %10435 = vmatpush1.msra.mxu0 0.0
    %10436 = vmatprep.subr.mxu0 0.0
    %10437 = vmatpush1.msra.mxu0 0.0
    %10438 = vmatprep.subr.mxu0 0.0
    %10439 = vmatpush1.msra.mxu0 0.0
    %10440 = vmatprep.mubr.f32.mxu0 0.0
    %10441 = vmatmul.mubr.f32.gmra.mrb[0].mxu0 %v10374
    %v10442 = vpop.f32.mrb[0].mxu0
    %v10443 = vadd.f32 %v10371, %v10442
    %v10444 = vpop.f32.mrb[0].mxu0
    %v10445 = vadd.f32 %v10371, %v10444
    %10446 = vdwg.mxu0
    %10447 = vmatprep.subr.mxu0 %v10365
    %10448 = vmatpush1.msra.mxu0 %v10364
    %10449 = vmatprep.subr.mxu0 0.0
    %10450 = vmatpush1.msra.mxu0 0.0
    %10451 = vmatprep.subr.mxu0 0.0
    %10452 = vmatpush1.msra.mxu0 0.0
    %10453 = vmatprep.subr.mxu0 0.0
    %10454 = vmatpush1.msra.mxu0 0.0
    %10455 = vmatprep.subr.mxu0 0.0
    %10456 = vmatpush1.msra.mxu0 0.0
    %10457 = vmatprep.subr.mxu0 0.0
    %10458 = vmatpush1.msra.mxu0 0.0
    %10459 = vmatprep.subr.mxu0 0.0
    %10460 = vmatpush1.msra.mxu0 0.0
    %10461 = vmatprep.subr.mxu0 0.0
    %10462 = vmatpush1.msra.mxu0 0.0
    %10463 = vmatprep.subr.mxu0 0.0
    %10464 = vmatpush1.msra.mxu0 0.0
    %10465 = vmatprep.subr.mxu0 0.0
    %10466 = vmatpush1.msra.mxu0 0.0
    %10467 = vmatprep.subr.mxu0 0.0
    %10468 = vmatpush1.msra.mxu0 0.0
    %10469 = vmatprep.subr.mxu0 0.0
    %10470 = vmatpush1.msra.mxu0 0.0
    %10471 = vmatprep.subr.mxu0 0.0
    %10472 = vmatpush1.msra.mxu0 0.0
    %10473 = vmatprep.subr.mxu0 0.0
    %10474 = vmatpush1.msra.mxu0 0.0
    %10475 = vmatprep.subr.mxu0 0.0
    %10476 = vmatpush1.msra.mxu0 0.0
    %10477 = vmatprep.subr.mxu0 0.0
    %10478 = vmatpush1.msra.mxu0 0.0
    %10479 = vmatprep.subr.mxu0 0.0
    %10480 = vmatpush1.msra.mxu0 0.0
    %10481 = vmatprep.subr.mxu0 0.0
    %10482 = vmatpush1.msra.mxu0 0.0
    %10483 = vmatprep.subr.mxu0 0.0
    %10484 = vmatpush1.msra.mxu0 0.0
    %10485 = vmatprep.subr.mxu0 0.0
    %10486 = vmatpush1.msra.mxu0 0.0
    %10487 = vmatprep.subr.mxu0 0.0
    %10488 = vmatpush1.msra.mxu0 0.0
    %10489 = vmatprep.subr.mxu0 0.0
    %10490 = vmatpush1.msra.mxu0 0.0
    %10491 = vmatprep.subr.mxu0 0.0
    %10492 = vmatpush1.msra.mxu0 0.0
    %10493 = vmatprep.subr.mxu0 0.0
    %10494 = vmatpush1.msra.mxu0 0.0
    %10495 = vmatprep.subr.mxu0 0.0
    %10496 = vmatpush1.msra.mxu0 0.0
    %10497 = vmatprep.subr.mxu0 0.0
    %10498 = vmatpush1.msra.mxu0 0.0
    %10499 = vmatprep.subr.mxu0 0.0
    %10500 = vmatpush1.msra.mxu0 0.0
    %10501 = vmatprep.subr.mxu0 0.0
    %10502 = vmatpush1.msra.mxu0 0.0
    %10503 = vmatprep.subr.mxu0 0.0
    %10504 = vmatpush1.msra.mxu0 0.0
    %10505 = vmatprep.subr.mxu0 0.0
    %10506 = vmatpush1.msra.mxu0 0.0
    %10507 = vmatprep.subr.mxu0 0.0
    %10508 = vmatpush1.msra.mxu0 0.0
    %10509 = vmatprep.subr.mxu0 0.0
    %10510 = vmatpush1.msra.mxu0 0.0
    %10511 = vmatprep.mubr.f32.mxu0 0.0
    %10512 = vmatmul.mubr.f32.gmra.mrb[0].mxu0 %v10374
    %v10513 = vpop.f32.mrb[0].mxu0
    %v10514 = vadd.f32 %v10371, %v10513
    %v10515 = vpop.f32.mrb[0].mxu0
    %v10516 = vadd.f32 %v10371, %v10515
    %10517 = vdwg.mxu0
    %v10518 = vld [vmem:[#allocation25 + $0x1] sm:$0x1]
    %v10519 = vld [vmem:[%s14 + $0x1] sm:$0x1]
    %10521 = vset.pattern.permute.xlu0 0
    %10522 = vperm.xlu0 %10521, %v10519
    %v10523 = vpop.permute.xlu0 %10522
    %v10526 = vsel %vm2450, %v10518, 0
    %10528 = vmatprep.subr.mxu0 %v10363
    %10529 = vmatpush1.msra.mxu0 %v10362
    %10530 = vmatprep.subr.mxu0 0.0
    %10531 = vmatpush1.msra.mxu0 0.0
    %10532 = vmatprep.subr.mxu0 0.0
    %10533 = vmatpush1.msra.mxu0 0.0
    %10534 = vmatprep.subr.mxu0 0.0
    %10535 = vmatpush1.msra.mxu0 0.0
    %10536 = vmatprep.subr.mxu0 0.0
    %10537 = vmatpush1.msra.mxu0 0.0
    %10538 = vmatprep.subr.mxu0 0.0
    %10539 = vmatpush1.msra.mxu0 0.0
    %10540 = vmatprep.subr.mxu0 0.0
    %10541 = vmatpush1.msra.mxu0 0.0
    %10542 = vmatprep.subr.mxu0 0.0
    %10543 = vmatpush1.msra.mxu0 0.0
    %10544 = vmatprep.subr.mxu0 0.0
    %10545 = vmatpush1.msra.mxu0 0.0
    %10546 = vmatprep.subr.mxu0 0.0
    %10547 = vmatpush1.msra.mxu0 0.0
    %10548 = vmatprep.subr.mxu0 0.0
    %10549 = vmatpush1.msra.mxu0 0.0
    %10550 = vmatprep.subr.mxu0 0.0
    %10551 = vmatpush1.msra.mxu0 0.0
    %10552 = vmatprep.subr.mxu0 0.0
    %10553 = vmatpush1.msra.mxu0 0.0
    %10554 = vmatprep.subr.mxu0 0.0
    %10555 = vmatpush1.msra.mxu0 0.0
    %10556 = vmatprep.subr.mxu0 0.0
    %10557 = vmatpush1.msra.mxu0 0.0
    %10558 = vmatprep.subr.mxu0 0.0
    %10559 = vmatpush1.msra.mxu0 0.0
    %10560 = vmatprep.subr.mxu0 0.0
    %10561 = vmatpush1.msra.mxu0 0.0
    %10562 = vmatprep.subr.mxu0 0.0
    %10563 = vmatpush1.msra.mxu0 0.0
    %10564 = vmatprep.subr.mxu0 0.0
    %10565 = vmatpush1.msra.mxu0 0.0
    %10566 = vmatprep.subr.mxu0 0.0
    %10567 = vmatpush1.msra.mxu0 0.0
    %10568 = vmatprep.subr.mxu0 0.0
    %10569 = vmatpush1.msra.mxu0 0.0
    %10570 = vmatprep.subr.mxu0 0.0
    %10571 = vmatpush1.msra.mxu0 0.0
    %10572 = vmatprep.subr.mxu0 0.0
    %10573 = vmatpush1.msra.mxu0 0.0
    %10574 = vmatprep.subr.mxu0 0.0
    %10575 = vmatpush1.msra.mxu0 0.0
    %10576 = vmatprep.subr.mxu0 0.0
    %10577 = vmatpush1.msra.mxu0 0.0
    %10578 = vmatprep.subr.mxu0 0.0
    %10579 = vmatpush1.msra.mxu0 0.0
    %10580 = vmatprep.subr.mxu0 0.0
    %10581 = vmatpush1.msra.mxu0 0.0
    %10582 = vmatprep.subr.mxu0 0.0
    %10583 = vmatpush1.msra.mxu0 0.0
    %10584 = vmatprep.subr.mxu0 0.0
    %10585 = vmatpush1.msra.mxu0 0.0
    %10586 = vmatprep.subr.mxu0 0.0
    %10587 = vmatpush1.msra.mxu0 0.0
    %10588 = vmatprep.subr.mxu0 0.0
    %10589 = vmatpush1.msra.mxu0 0.0
    %10590 = vmatprep.subr.mxu0 0.0
    %10591 = vmatpush1.msra.mxu0 0.0
    %10592 = vmatprep.mubr.f32.mxu0 0.0
    %10593 = vmatmul.mubr.f32.gmra.mrb[0].mxu0 %v10526
    %v10594 = vpop.f32.mrb[0].mxu0
    %v10595 = vadd.f32 %v10523, %v10594
    %v10596 = vpop.f32.mrb[0].mxu0
    %v10597 = vadd.f32 %v10523, %v10596
    %10598 = vdwg.mxu0
    %10599 = vmatprep.subr.mxu0 %v10365
    %10600 = vmatpush1.msra.mxu0 %v10364
    %10601 = vmatprep.subr.mxu0 0.0
    %10602 = vmatpush1.msra.mxu0 0.0
    %10603 = vmatprep.subr.mxu0 0.0
    %10604 = vmatpush1.msra.mxu0 0.0
    %10605 = vmatprep.subr.mxu0 0.0
    %10606 = vmatpush1.msra.mxu0 0.0
    %10607 = vmatprep.subr.mxu0 0.0
    %10608 = vmatpush1.msra.mxu0 0.0
    %10609 = vmatprep.subr.mxu0 0.0
    %10610 = vmatpush1.msra.mxu0 0.0
    %10611 = vmatprep.subr.mxu0 0.0
    %10612 = vmatpush1.msra.mxu0 0.0
    %10613 = vmatprep.subr.mxu0 0.0
    %10614 = vmatpush1.msra.mxu0 0.0
    %10615 = vmatprep.subr.mxu0 0.0
    %10616 = vmatpush1.msra.mxu0 0.0
    %10617 = vmatprep.subr.mxu0 0.0
    %10618 = vmatpush1.msra.mxu0 0.0
    %10619 = vmatprep.subr.mxu0 0.0
    %10620 = vmatpush1.msra.mxu0 0.0
    %10621 = vmatprep.subr.mxu0 0.0
    %10622 = vmatpush1.msra.mxu0 0.0
    %10623 = vmatprep.subr.mxu0 0.0
    %10624 = vmatpush1.msra.mxu0 0.0
    %10625 = vmatprep.subr.mxu0 0.0
    %10626 = vmatpush1.msra.mxu0 0.0
    %10627 = vmatprep.subr.mxu0 0.0
    %10628 = vmatpush1.msra.mxu0 0.0
    %10629 = vmatprep.subr.mxu0 0.0
    %10630 = vmatpush1.msra.mxu0 0.0
    %10631 = vmatprep.subr.mxu0 0.0
    %10632 = vmatpush1.msra.mxu0 0.0
    %10633 = vmatprep.subr.mxu0 0.0
    %10634 = vmatpush1.msra.mxu0 0.0
    %10635 = vmatprep.subr.mxu0 0.0
    %10636 = vmatpush1.msra.mxu0 0.0
    %10637 = vmatprep.subr.mxu0 0.0
    %10638 = vmatpush1.msra.mxu0 0.0
    %10639 = vmatprep.subr.mxu0 0.0
    %10640 = vmatpush1.msra.mxu0 0.0
    %10641 = vmatprep.subr.mxu0 0.0
    %10642 = vmatpush1.msra.mxu0 0.0
    %10643 = vmatprep.subr.mxu0 0.0
    %10644 = vmatpush1.msra.mxu0 0.0
    %10645 = vmatprep.subr.mxu0 0.0
    %10646 = vmatpush1.msra.mxu0 0.0
    %10647 = vmatprep.subr.mxu0 0.0
    %10648 = vmatpush1.msra.mxu0 0.0
    %10649 = vmatprep.subr.mxu0 0.0
    %10650 = vmatpush1.msra.mxu0 0.0
    %10651 = vmatprep.subr.mxu0 0.0
    %10652 = vmatpush1.msra.mxu0 0.0
    %10653 = vmatprep.subr.mxu0 0.0
    %10654 = vmatpush1.msra.mxu0 0.0
    %10655 = vmatprep.subr.mxu0 0.0
    %10656 = vmatpush1.msra.mxu0 0.0
    %10657 = vmatprep.subr.mxu0 0.0
    %10658 = vmatpush1.msra.mxu0 0.0
    %10659 = vmatprep.subr.mxu0 0.0
    %10660 = vmatpush1.msra.mxu0 0.0
    %10661 = vmatprep.subr.mxu0 0.0
    %10662 = vmatpush1.msra.mxu0 0.0
    %10663 = vmatprep.mubr.f32.mxu0 0.0
    %10664 = vmatmul.mubr.f32.gmra.mrb[0].mxu0 %v10526
    %v10665 = vpop.f32.mrb[0].mxu0
    %v10666 = vadd.f32 %v10523, %v10665
    %v10667 = vpop.f32.mrb[0].mxu0
    %v10668 = vadd.f32 %v10523, %v10667
    %10669 = vdwg.mxu0
    %v10670 = vld [vmem:[#allocation25 + $0x2] sm:$0x1]
    %v10671 = vld [vmem:[%s14 + $0x2] sm:$0x1]
    %10673 = vset.pattern.permute.xlu0 0
    %10674 = vperm.xlu0 %10673, %v10671
    %v10675 = vpop.permute.xlu0 %10674
    %v10678 = vsel %vm2450, %v10670, 0
    %10680 = vmatprep.subr.mxu0 %v10363
    %10681 = vmatpush1.msra.mxu0 %v10362
    %10682 = vmatprep.subr.mxu0 0.0
    %10683 = vmatpush1.msra.mxu0 0.0
    %10684 = vmatprep.subr.mxu0 0.0
    %10685 = vmatpush1.msra.mxu0 0.0
    %10686 = vmatprep.subr.mxu0 0.0
    %10687 = vmatpush1.msra.mxu0 0.0
    %10688 = vmatprep.subr.mxu0 0.0
    %10689 = vmatpush1.msra.mxu0 0.0
    %10690 = vmatprep.subr.mxu0 0.0
    %10691 = vmatpush1.msra.mxu0 0.0
    %10692 = vmatprep.subr.mxu0 0.0
    %10693 = vmatpush1.msra.mxu0 0.0
    %10694 = vmatprep.subr.mxu0 0.0
    %10695 = vmatpush1.msra.mxu0 0.0
    %10696 = vmatprep.subr.mxu0 0.0
    %10697 = vmatpush1.msra.mxu0 0.0
    %10698 = vmatprep.subr.mxu0 0.0
    %10699 = vmatpush1.msra.mxu0 0.0
    %10700 = vmatprep.subr.mxu0 0.0
    %10701 = vmatpush1.msra.mxu0 0.0
    %10702 = vmatprep.subr.mxu0 0.0
    %10703 = vmatpush1.msra.mxu0 0.0
    %10704 = vmatprep.subr.mxu0 0.0
    %10705 = vmatpush1.msra.mxu0 0.0
    %10706 = vmatprep.subr.mxu0 0.0
    %10707 = vmatpush1.msra.mxu0 0.0
    %10708 = vmatprep.subr.mxu0 0.0
    %10709 = vmatpush1.msra.mxu0 0.0
    %10710 = vmatprep.subr.mxu0 0.0
    %10711 = vmatpush1.msra.mxu0 0.0
    %10712 = vmatprep.subr.mxu0 0.0
    %10713 = vmatpush1.msra.mxu0 0.0
    %10714 = vmatprep.subr.mxu0 0.0
    %10715 = vmatpush1.msra.mxu0 0.0
    %10716 = vmatprep.subr.mxu0 0.0
    %10717 = vmatpush1.msra.mxu0 0.0
    %10718 = vmatprep.subr.mxu0 0.0
    %10719 = vmatpush1.msra.mxu0 0.0
    %10720 = vmatprep.subr.mxu0 0.0
    %10721 = vmatpush1.msra.mxu0 0.0
    %10722 = vmatprep.subr.mxu0 0.0
    %10723 = vmatpush1.msra.mxu0 0.0
    %10724 = vmatprep.subr.mxu0 0.0
    %10725 = vmatpush1.msra.mxu0 0.0
    %10726 = vmatprep.subr.mxu0 0.0
    %10727 = vmatpush1.msra.mxu0 0.0
    %10728 = vmatprep.subr.mxu0 0.0
    %10729 = vmatpush1.msra.mxu0 0.0
    %10730 = vmatprep.subr.mxu0 0.0
    %10731 = vmatpush1.msra.mxu0 0.0
    %10732 = vmatprep.subr.mxu0 0.0
    %10733 = vmatpush1.msra.mxu0 0.0
    %10734 = vmatprep.subr.mxu0 0.0
    %10735 = vmatpush1.msra.mxu0 0.0
    %10736 = vmatprep.subr.mxu0 0.0
    %10737 = vmatpush1.msra.mxu0 0.0
    %10738 = vmatprep.subr.mxu0 0.0
    %10739 = vmatpush1.msra.mxu0 0.0
    %10740 = vmatprep.subr.mxu0 0.0
    %10741 = vmatpush1.msra.mxu0 0.0
    %10742 = vmatprep.subr.mxu0 0.0
    %10743 = vmatpush1.msra.mxu0 0.0
    %10744 = vmatprep.mubr.f32.mxu0 0.0
    %10745 = vmatmul.mubr.f32.gmra.mrb[0].mxu0 %v10678
    %v10746 = vpop.f32.mrb[0].mxu0
    %v10747 = vadd.f32 %v10675, %v10746
    %v10748 = vpop.f32.mrb[0].mxu0
    %v10749 = vadd.f32 %v10675, %v10748
    %10750 = vdwg.mxu0
    %10751 = vmatprep.subr.mxu0 %v10365
    %10752 = vmatpush1.msra.mxu0 %v10364
    %10753 = vmatprep.subr.mxu0 0.0
    %10754 = vmatpush1.msra.mxu0 0.0
    %10755 = vmatprep.subr.mxu0 0.0
    %10756 = vmatpush1.msra.mxu0 0.0
    %10757 = vmatprep.subr.mxu0 0.0
    %10758 = vmatpush1.msra.mxu0 0.0
    %10759 = vmatprep.subr.mxu0 0.0
    %10760 = vmatpush1.msra.mxu0 0.0
    %10761 = vmatprep.subr.mxu0 0.0
    %10762 = vmatpush1.msra.mxu0 0.0
    %10763 = vmatprep.subr.mxu0 0.0
    %10764 = vmatpush1.msra.mxu0 0.0
    %10765 = vmatprep.subr.mxu0 0.0
    %10766 = vmatpush1.msra.mxu0 0.0
    %10767 = vmatprep.subr.mxu0 0.0
    %10768 = vmatpush1.msra.mxu0 0.0
    %10769 = vmatprep.subr.mxu0 0.0
    %10770 = vmatpush1.msra.mxu0 0.0
    %10771 = vmatprep.subr.mxu0 0.0
    %10772 = vmatpush1.msra.mxu0 0.0
    %10773 = vmatprep.subr.mxu0 0.0
    %10774 = vmatpush1.msra.mxu0 0.0
    %10775 = vmatprep.subr.mxu0 0.0
    %10776 = vmatpush1.msra.mxu0 0.0
    %10777 = vmatprep.subr.mxu0 0.0
    %10778 = vmatpush1.msra.mxu0 0.0
    %10779 = vmatprep.subr.mxu0 0.0
    %10780 = vmatpush1.msra.mxu0 0.0
    %10781 = vmatprep.subr.mxu0 0.0
    %10782 = vmatpush1.msra.mxu0 0.0
    %10783 = vmatprep.subr.mxu0 0.0
    %10784 = vmatpush1.msra.mxu0 0.0
    %10785 = vmatprep.subr.mxu0 0.0
    %10786 = vmatpush1.msra.mxu0 0.0
    %10787 = vmatprep.subr.mxu0 0.0
    %10788 = vmatpush1.msra.mxu0 0.0
    %10789 = vmatprep.subr.mxu0 0.0
    %10790 = vmatpush1.msra.mxu0 0.0
    %10791 = vmatprep.subr.mxu0 0.0
    %10792 = vmatpush1.msra.mxu0 0.0
    %10793 = vmatprep.subr.mxu0 0.0
    %10794 = vmatpush1.msra.mxu0 0.0
    %10795 = vmatprep.subr.mxu0 0.0
    %10796 = vmatpush1.msra.mxu0 0.0
    %10797 = vmatprep.subr.mxu0 0.0
    %10798 = vmatpush1.msra.mxu0 0.0
    %10799 = vmatprep.subr.mxu0 0.0
    %10800 = vmatpush1.msra.mxu0 0.0
    %10801 = vmatprep.subr.mxu0 0.0
    %10802 = vmatpush1.msra.mxu0 0.0
    %10803 = vmatprep.subr.mxu0 0.0
    %10804 = vmatpush1.msra.mxu0 0.0
    %10805 = vmatprep.subr.mxu0 0.0
    %10806 = vmatpush1.msra.mxu0 0.0
    %10807 = vmatprep.subr.mxu0 0.0
    %10808 = vmatpush1.msra.mxu0 0.0
    %10809 = vmatprep.subr.mxu0 0.0
    %10810 = vmatpush1.msra.mxu0 0.0
    %10811 = vmatprep.subr.mxu0 0.0
    %10812 = vmatpush1.msra.mxu0 0.0
    %10813 = vmatprep.subr.mxu0 0.0
    %10814 = vmatpush1.msra.mxu0 0.0
    %10815 = vmatprep.mubr.f32.mxu0 0.0
    %10816 = vmatmul.mubr.f32.gmra.mrb[0].mxu0 %v10678
    %v10817 = vpop.f32.mrb[0].mxu0
    %v10818 = vadd.f32 %v10675, %v10817
    %v10819 = vpop.f32.mrb[0].mxu0
    %v10820 = vadd.f32 %v10675, %v10819
    %10821 = vdwg.mxu0
    %v10822 = vmax.f32 %v10443, %v10595
    %v10823 = vmax.f32 %v10445, %v10597
    %v10824 = vmax.f32 %v10514, %v10666
    %v10825 = vmax.f32 %v10516, %v10668
    %v10826 = vmax.f32 %v10822, %v10747
    %v10827 = vmax.f32 %v10823, %v10749
    %v10828 = vmax.f32 %v10824, %v10818
    %v10829 = vmax.f32 %v10825, %v10820
    %v10830 = vsub.f32 %v10443, %v10826
    %v10831 = vsub.f32 %v10445, %v10827
    %v10832 = vsub.f32 %v10514, %v10828
    %v10833 = vsub.f32 %v10516, %v10829
    %v10834 = vmul.f32 %v10830, 1.442695
    %v10835 = vpow.pop %v10834
    %v10836 = vmul.f32 %v10831, 1.442695
    %v10837 = vpow.pop %v10836
    %v10838 = vmul.f32 %v10832, 1.442695
    %v10839 = vpow.pop %v10838
    %v10840 = vmul.f32 %v10833, 1.442695
    %v10841 = vpow.pop %v10840
    %v10842 = vsub.f32 %v10595, %v10826
    %v10843 = vsub.f32 %v10597, %v10827
    %v10844 = vsub.f32 %v10666, %v10828
    %v10845 = vsub.f32 %v10668, %v10829
    %v10846 = vmul.f32 %v10842, 1.442695
    %v10847 = vpow.pop %v10846
    %v10848 = vmul.f32 %v10843, 1.442695
    %v10849 = vpow.pop %v10848
    %v10850 = vmul.f32 %v10844, 1.442695
    %v10851 = vpow.pop %v10850
    %v10852 = vmul.f32 %v10845, 1.442695
    %v10853 = vpow.pop %v10852
    %v10854 = vsub.f32 %v10747, %v10826
    %v10855 = vsub.f32 %v10749, %v10827
    %v10856 = vsub.f32 %v10818, %v10828
    %v10857 = vsub.f32 %v10820, %v10829
    %v10858 = vmul.f32 %v10854, 1.442695
    %v10859 = vpow.pop %v10858
    %v10860 = vmul.f32 %v10855, 1.442695
    %v10861 = vpow.pop %v10860
    %v10862 = vmul.f32 %v10856, 1.442695
    %v10863 = vpow.pop %v10862
    %v10864 = vmul.f32 %v10857, 1.442695
    %v10865 = vpow.pop %v10864
    %v10866 = vadd.f32 %v10835, %v10847
    %v10867 = vadd.f32 %v10837, %v10849
    %v10868 = vadd.f32 %v10839, %v10851
    %v10869 = vadd.f32 %v10841, %v10853
    %v10870 = vadd.f32 %v10866, %v10859
    %v10871 = vadd.f32 %v10867, %v10861
    %v10872 = vadd.f32 %v10868, %v10863
    %v10873 = vadd.f32 %v10869, %v10865
    %v10874 = vrcp.pop %v10870
    %v10875 = vrcp.pop %v10871
    %v10876 = vrcp.pop %v10872
    %v10877 = vrcp.pop %v10873
    %v10878 = vmul.f32 %v10870, %v10874
    %v10879 = vmul.f32 %v10871, %v10875
    %v10880 = vmul.f32 %v10872, %v10876
    %v10881 = vmul.f32 %v10873, %v10877
    %v10882 = vsub.f32 2.0, %v10878
    %v10883 = vsub.f32 2.0, %v10879
    %v10884 = vsub.f32 2.0, %v10880
    %v10885 = vsub.f32 2.0, %v10881
    %v10886 = vmul.f32 %v10874, %v10882
    %v10887 = vmul.f32 %v10875, %v10883
    %v10888 = vmul.f32 %v10876, %v10884
    %v10889 = vmul.f32 %v10877, %v10885
    %v10890 = vmul.f32 %v10835, %v10886
    %v10891 = vmul.f32 %v10837, %v10887
    %v10892 = vmul.f32 %v10839, %v10888
    %v10893 = vmul.f32 %v10841, %v10889
    %v10898 = vcombine.low %v10890, %v10891
    %v10899 = vcombine.low %v10892, %v10893
    %v10901 = vunpack.c.l.s4 1966171168
    %v10902 = vunpack.c.0.s8 %v10901
    %v10903 = vlaneseq
    %v10904 = vshrl.u32 %v10903, 7
    %v10905 = vsub.s32 %v10902, %v10904
    %v10906 = vrot.slane %v10898, %v10905
    %v10908 = vunpack.c.l.s4 1966171168
    %v10909 = vunpack.c.0.s8 %v10908
    %v10910 = vlaneseq
    %v10911 = vshrl.u32 %v10910, 7
    %v10912 = vsub.s32 %v10909, %v10911
    %v10913 = vrot.slane %v10899, %v10912
    %v10914 = vcombine.low %v10906, %v10913
    %v10916 = vunpack.c.l.s4 1966171168
    %v10917 = vunpack.c.0.s8 %v10916
    %v10918 = vlaneseq
    %v10919 = vshrl.u32 %v10918, 7
    %v10920 = vsub.s32 %v10917, %v10919
    %v10921 = vrot.slane %v10914, %v10920
    %v10923 = vlaneseq
    %vm10924 = vcmp.ge.s32.totalorder %v10923, 0
    %vm10925 = vcmp.lt.s32.totalorder %v10923, 512
    %vm10926 = vmand %vm10924, %vm10925
    %10927 = vst.msk [vmem:[%s22] ss:$4 sm:$0xf] %vm10926, %v10921
    %v10928 = vmul.f32 %v10847, %v10886
    %v10929 = vmul.f32 %v10849, %v10887
    %v10930 = vmul.f32 %v10851, %v10888
    %v10931 = vmul.f32 %v10853, %v10889
    %v10936 = vcombine.low %v10928, %v10929
    %v10937 = vcombine.low %v10930, %v10931
    %v10939 = vunpack.c.l.s4 1966171168
    %v10940 = vunpack.c.0.s8 %v10939
    %v10941 = vlaneseq
    %v10942 = vshrl.u32 %v10941, 7
    %v10943 = vsub.s32 %v10940, %v10942
    %v10944 = vrot.slane %v10936, %v10943
    %v10946 = vunpack.c.l.s4 1966171168
    %v10947 = vunpack.c.0.s8 %v10946
    %v10948 = vlaneseq
    %v10949 = vshrl.u32 %v10948, 7
    %v10950 = vsub.s32 %v10947, %v10949
    %v10951 = vrot.slane %v10937, %v10950
    %v10952 = vcombine.low %v10944, %v10951
    %v10954 = vunpack.c.l.s4 1966171168
    %v10955 = vunpack.c.0.s8 %v10954
    %v10956 = vlaneseq
    %v10957 = vshrl.u32 %v10956, 7
    %v10958 = vsub.s32 %v10955, %v10957
    %v10959 = vrot.slane %v10952, %v10958
    %s10961 = scalar_lea.vmem %s22, 1
    %10962 = vst.msk [vmem:[%s10961] ss:$4 sm:$0xf] %vm10926, %v10959
    %v10963 = vmul.f32 %v10859, %v10886
    %v10964 = vmul.f32 %v10861, %v10887
    %v10965 = vmul.f32 %v10863, %v10888
    %v10966 = vmul.f32 %v10865, %v10889
    %v10971 = vcombine.low %v10963, %v10964
    %v10972 = vcombine.low %v10965, %v10966
    %v10974 = vunpack.c.l.s4 1966171168
    %v10975 = vunpack.c.0.s8 %v10974
    %v10976 = vlaneseq
    %v10977 = vshrl.u32 %v10976, 7
    %v10978 = vsub.s32 %v10975, %v10977
    %v10979 = vrot.slane %v10971, %v10978
    %v10981 = vunpack.c.l.s4 1966171168
    %v10982 = vunpack.c.0.s8 %v10981
    %v10983 = vlaneseq
    %v10984 = vshrl.u32 %v10983, 7
    %v10985 = vsub.s32 %v10982, %v10984
    %v10986 = vrot.slane %v10972, %v10985
    %v10987 = vcombine.low %v10979, %v10986
    %v10989 = vunpack.c.l.s4 1966171168
    %v10990 = vunpack.c.0.s8 %v10989
    %v10991 = vlaneseq
    %v10992 = vshrl.u32 %v10991, 7
    %v10993 = vsub.s32 %v10990, %v10992
    %v10994 = vrot.slane %v10987, %v10993
    %s10996 = scalar_lea.vmem %s22, 2
    %10997 = vst.msk [vmem:[%s10996] ss:$4 sm:$0xf] %vm10926, %v10994
    // Predicated region
    $region162: #{unet_pallas_forward.1} parent=1 // pred_check
      _
    $region163: #{unet_pallas_forward.1} parent=1 // pred_check_branch
      %10999 = sbr.rel (0) target = $region165
    $region164: #{unet_pallas_forward.1} parent=1 // pred_region
      _
    $region165: #{unet_pallas_forward.1} parent=1 // pred_fallthru
      _
    // Predicated region
    $region166: #{unet_pallas_forward.1} parent=1 // pred_check
      _
    $region167: #{unet_pallas_forward.1} parent=1 // pred_check_branch
      %11001 = sbr.rel (0) target = $region169
    $region168: #{unet_pallas_forward.1} parent=1 // pred_region
      _
    $region169: #{unet_pallas_forward.1} parent=1 // pred_fallthru
      _
    %11002 = vsyncpa [#allocation9], 1
    %11003 = vsyncpa [#allocation11], 1
    %11004 = vsyncpa [#allocation14], 1
    %11005 = vsyncpa [#allocation17], 1
    %11006 = vsyncpa [#allocation20], 1
    %11007 = vsyncpa [#allocation23], 1
    %11008 = vsyncpa [#allocation26], 1
    %11009 = vsyncpa [#allocation29], 1
    %11010 = vsyncpa [#allocation32], 1
    %11011 = vsyncpa [#allocation35], 1

</llo_original>
